<compile_context>
chip_gen: v5e
topology: v5e:2x2
jax: 0.10.0
libtpu: 0.0.40
codegen_flags: <defaults>
</compile_context>

<pallas_src>
import functools

import jax
import jax.numpy as jnp
from jax.experimental import pallas as pl
from jax.experimental.pallas import tpu as pltpu

NF = 32            # self.nf
KSIZE = 3          # 3x3 convs
BN_EPS = 1e-5
LRELU_SLOPE = 0.2
COUT_LAST = 3
OUT_PAD = 128      # last-layer output columns padded to a lane-dense width


# ----------------------------------------------------------------------------
# In-kernel constant matrices (0/1) for BN channel reduction / broadcast.
# ----------------------------------------------------------------------------
def _block_sum_mat(rows, nf):
    # bsum[r, c] = 1.0 iff (r % nf) == c      (nf is a power of two -> use AND)
    r = jax.lax.broadcasted_iota(jnp.int32, (rows, nf), 0)
    c = jax.lax.broadcasted_iota(jnp.int32, (rows, nf), 1)
    return ((r & (nf - 1)) == c).astype(jnp.float32)


def _block_bcast_mat(nf, cols):
    # bbc[r, c] = 1.0 iff r == (c % nf)
    r = jax.lax.broadcasted_iota(jnp.int32, (nf, cols), 0)
    c = jax.lax.broadcasted_iota(jnp.int32, (nf, cols), 1)
    return (r == (c & (nf - 1))).astype(jnp.float32)


# ----------------------------------------------------------------------------
# Fused Pallas kernel: whole 5-layer sub-generator, VMEM resident.
# ----------------------------------------------------------------------------
def _fused_generator_kernel(x_ref, tw0_ref, gamma_ref, beta_ref, blast_ref,
                            tw1_hbm, tw2_hbm, tw3_hbm, tw4_hbm,
                            out_ref,
                            tw1_v, tw2_v, tw3_v, tw4_v, sems,
                            *, n_batch, h0):
    """Activations are a single 2-D slab (n_batch*h, w*c), channel-minor lanes,
    batches stacked along sublanes with per-batch row stride h.

    A 3x3 VALID conv is ONE matmul: the three kh-shifted row windows are lane
    concatenated per batch and all batches sublane-stacked, then multiplied by a
    kh-stacked block-Toeplitz weight matrix (built host-side)."""
    # Kick off ALL later-layer weight DMAs now; layer-0 needs only x and tw0
    # (already VMEM resident), so these transfers hide behind early compute.
    copies = []
    for i, (src, dst) in enumerate(((tw1_hbm, tw1_v), (tw2_hbm, tw2_v),
                                    (tw3_hbm, tw3_v), (tw4_hbm, tw4_v))):
        cp = pltpu.make_async_copy(src, dst, sems.at[i])
        cp.start()
        copies.append(cp)

    gamma = gamma_ref[...]                         # (4, NF)
    beta = beta_ref[...]                           # (4, NF)

    def conv_matmul(slab, h, tw):
        # slab: (n_batch*h, w*cin); tw: (KSIZE*w*cin, wo*cout)
        # TODO(synk): the kh>0 row windows are sublane-unaligned slices; a
        # pltpu.roll-based shift would move that copy onto the XLU slot.
        ho = h - (KSIZE - 1)
        per_batch = []
        for b in range(n_batch):
            base = b * h
            per_batch.append(jnp.concatenate(
                [slab[base + kh:base + kh + ho, :] for kh in range(KSIZE)], axis=1))
        a_all = per_batch[0] if n_batch == 1 else jnp.concatenate(per_batch, axis=0)
        return jnp.dot(a_all, tw, preferred_element_type=jnp.float32), ho

    slab = x_ref[...]                              # (n*h0, w0*3)
    h = h0
    stages = ((None, tw0_ref), (copies[0], tw1_v), (copies[1], tw2_v),
              (copies[2], tw3_v))
    for l, (cp, tw_ref) in enumerate(stages):
        if cp is not None:
            cp.wait()                              # weight DMA for this layer done
        tw = tw_ref[...]
        # Conv bias omitted on purpose: it is exactly cancelled by the train-mode
        # BatchNorm mean subtraction.
        conv, ho = conv_matmul(slab, h, tw)        # (n*ho, wo*NF)
        wo = tw.shape[1] // NF

        # BN statistics: row reduce, then per-channel block reduce as ONE matmul
        # against a 0/1 block-sum matrix ({sum, sum-of-squares} share the matmul).
        s_wide = jnp.concatenate(
            [jnp.sum(conv, axis=0, keepdims=True),
             jnp.sum(conv * conv, axis=0, keepdims=True)], axis=0)   # (2, wo*NF)
        st = jnp.dot(s_wide, _block_sum_mat(wo * NF, NF),
                     preferred_element_type=jnp.float32)             # (2, NF)
        inv_m = 1.0 / float(n_batch * ho * wo)
        mean = st[0:1, :] * inv_m
        var = jnp.maximum(st[1:2, :] * inv_m - mean * mean, 0.0)     # clamp f32 cancellation
        scale = gamma[l:l + 1, :] * jax.lax.rsqrt(var + BN_EPS)      # (1, NF)
        shift = beta[l:l + 1, :] - mean * scale                      # (1, NF)

        # Broadcast {scale, shift} to wo*NF lanes with ONE matmul (instead of a
        # wo-long lane-concat chain), then fused FMA + LeakyReLU(0.2).
        ss = jnp.dot(jnp.concatenate([scale, shift], axis=0),
                     _block_bcast_mat(NF, wo * NF),
                     preferred_element_type=jnp.float32)             # (2, wo*NF)
        y = conv * ss[0:1, :] + ss[1:2, :]
        slab = jnp.where(y >= 0.0, y, LRELU_SLOPE * y)
        h = ho

    # Last layer: Conv -> + bias -> Tanh, columns zero-padded to OUT_PAD lanes so
    # the final store is a full unmasked vst.
    copies[3].wait()
    conv, _ = conv_matmul(slab, h, tw4_v[...])                        # (n*ho5, OUT_PAD)
    out_ref[...] = jnp.tanh(conv + blast_ref[...])


def _full_spec(shape):
    # whole-array block (no grid) -> no (8,128) divisibility constraint
    return pl.BlockSpec(shape, lambda: tuple(0 for _ in shape))


# ----------------------------------------------------------------------------
# Parameter construction & host-side weight preprocessing
# ----------------------------------------------------------------------------
def init_params(key):
    """Deterministic synthetic parameters (shapes mirror Generator.__init__)."""
    params = []
    cins = [3, NF, NF, NF]
    keys = jax.random.split(key, 18)
    ki = 0
    for cin in cins:  # 4x (Conv -> BN -> LeakyReLU)
        w = 0.1 * jax.random.normal(keys[ki], (KSIZE, KSIZE, cin, NF), jnp.float32); ki += 1
        b = 0.05 * jax.random.normal(keys[ki], (1, NF), jnp.float32); ki += 1
        gamma = 1.0 + 0.01 * jax.random.normal(keys[ki], (1, NF), jnp.float32); ki += 1
        beta = 0.01 * jax.random.normal(keys[ki], (1, NF), jnp.float32); ki += 1
        params.append(dict(w=w, b=b, gamma=gamma, beta=beta))
    # last layer: Conv(NF, 3) -> Tanh
    w = 0.1 * jax.random.normal(keys[ki], (KSIZE, KSIZE, NF, COUT_LAST), jnp.float32); ki += 1
    b = 0.05 * jax.random.normal(keys[ki], (1, COUT_LAST), jnp.float32)
    params.append(dict(w=w, b=b))
    return params


def _make_toeplitz_stacked(w_hwio, w_in, pad_cols=None):
    """kh-stacked block-Toeplitz matrix of shape (KSIZE*w_in*Cin, wo*Cout) with
    B[kh*(w_in*Cin)+jj*Cin+ci, j*Cout+co] = w[kh, jj-j, ci, co] for 0 <= jj-j < KSIZE.
    Matches the in-kernel im2col lane order [kh | jj | ci]."""
    kh, kw, cin, cout = w_hwio.shape
    wo = w_in - kw + 1
    jj = jnp.arange(w_in)[:, None]
    j = jnp.arange(wo)[None, :]
    d = jj - j
    valid = ((d >= 0) & (d < kw)).astype(w_hwio.dtype)
    d_cl = jnp.clip(d, 0, kw - 1)
    wk = w_hwio[:, d_cl, :, :]                          # (kh, w_in, wo, cin, cout)
    wk = wk * valid[None, :, :, None, None]
    b = jnp.transpose(wk, (0, 1, 3, 2, 4)).reshape(kh * w_in * cin, wo * cout)
    if pad_cols is not None and pad_cols > wo * cout:
        b = jnp.pad(b, ((0, 0), (0, pad_cols - wo * cout)))
    return b


def prepare_params(params, width):
    """One-time host-side prep: kh-stacked Toeplitz conv matrices + stacked BN
    affines + pre-tiled (and lane-padded) last-layer bias row.  Conv biases for
    the BN layers are dropped (exactly cancelled by train-mode BN)."""
    tws = []
    w_in = width
    for i, lyr in enumerate(params):
        pad = OUT_PAD if i == 4 else None
        tws.append(_make_toeplitz_stacked(lyr["w"], w_in, pad_cols=pad))
        w_in -= (KSIZE - 1)
    gamma = jnp.concatenate([params[l]["gamma"] for l in range(4)], axis=0)  # (4, NF)
    beta = jnp.concatenate([params[l]["beta"] for l in range(4)], axis=0)    # (4, NF)
    wo5 = width - 5 * (KSIZE - 1)
    blast_row = jnp.concatenate([params[4]["b"]] * wo5, axis=1)              # (1, wo5*3)
    blast_row = jnp.pad(blast_row, ((0, 0), (0, OUT_PAD - wo5 * COUT_LAST)))
    return {"tw": tws, "gamma": gamma, "beta": beta, "b_last_row": blast_row}


# ----------------------------------------------------------------------------
# Jitted forward (single fused pallas_call)
# ----------------------------------------------------------------------------
@jax.jit
def generator_forward(z0_nchw, prep):
    """Forward of Generator at current_scale=0.  z0_nchw: (N, 3, H, W) float32.
    Returns [x_first] in NCHW with spatial shrunk by 10 (5 VALID 3x3 convs)."""
    N, C, H, W = z0_nchw.shape
    x2d = jnp.transpose(z0_nchw, (0, 2, 3, 1)).reshape(N * H, W * C)  # (N*H, W*C)
    tw0, tw1, tw2, tw3, tw4 = prep["tw"]
    gamma, beta, blast = prep["gamma"], prep["beta"], prep["b_last_row"]
    ho5, wo5 = H - 5 * (KSIZE - 1), W - 5 * (KSIZE - 1)

    kernel = functools.partial(_fused_generator_kernel, n_batch=N, h0=H)

    out2d = pl.pallas_call(
        kernel,
        out_shape=jax.ShapeDtypeStruct((N * ho5, OUT_PAD), jnp.float32),
        in_specs=[_full_spec(x2d.shape),
                  _full_spec(tw0.shape),
                  _full_spec(gamma.shape),
                  _full_spec(beta.shape),
                  _full_spec(blast.shape),
                  pl.BlockSpec(memory_space=pl.ANY),    # tw1 stays in HBM
                  pl.BlockSpec(memory_space=pl.ANY),    # tw2
                  pl.BlockSpec(memory_space=pl.ANY),    # tw3
                  pl.BlockSpec(memory_space=pl.ANY)],   # tw4
        out_specs=_full_spec((N * ho5, OUT_PAD)),
        scratch_shapes=[pltpu.VMEM(tw1.shape, jnp.float32),
                        pltpu.VMEM(tw2.shape, jnp.float32),
                        pltpu.VMEM(tw3.shape, jnp.float32),
                        pltpu.VMEM(tw4.shape, jnp.float32),
                        pltpu.SemaphoreType.DMA((4,))],
        compiler_params=pltpu.CompilerParams(vmem_limit_bytes=24 * 1024 * 1024),
    )(x2d, tw0, gamma, beta, blast, tw1, tw2, tw3, tw4)

    out = out2d[:, :wo5 * COUT_LAST].reshape(N, ho5, wo5, COUT_LAST)
    x_first = jnp.transpose(out, (0, 3, 1, 2))
    # current_scale == 0 -> the multi-scale loop body never executes.
    # TODO(synk): scales i>=1 (bilinear upsample + pad + residual sub-generators)
    # are not exercised by the freshly-constructed module and are omitted here.
    return [x_first]


# ----------------------------------------------------------------------------
# Pure-JAX reference (faithful to the PyTorch math, incl. conv biases)
# ----------------------------------------------------------------------------
def _reference_forward(z0_nchw, params):
    x = jnp.transpose(z0_nchw, (0, 2, 3, 1))
    hp = jax.lax.Precision.HIGHEST
    for lyr in params[:4]:
        y = jax.lax.conv_general_dilated(
            x, lyr["w"], (1, 1), "VALID",
            dimension_numbers=("NHWC", "HWIO", "NHWC"), precision=hp) + lyr["b"][0]
        mean = jnp.mean(y, axis=(0, 1, 2), keepdims=True)
        var = jnp.mean((y - mean) ** 2, axis=(0, 1, 2), keepdims=True)
        y = (y - mean) * jax.lax.rsqrt(var + BN_EPS) * lyr["gamma"][0] + lyr["beta"][0]
        x = jnp.where(y >= 0.0, y, LRELU_SLOPE * y)
    y = jax.lax.conv_general_dilated(
        x, params[4]["w"], (1, 1), "VALID",
        dimension_numbers=("NHWC", "HWIO", "NHWC"), precision=hp) + params[4]["b"][0]
    return jnp.transpose(jnp.tanh(y), (0, 3, 1, 2))


if __name__ == "__main__":
    key = jax.random.PRNGKey(0)
    k_param, k_z = jax.random.split(key)

    params = init_params(k_param)

    # z is a list in the PyTorch module; only z[0] is used at current_scale=0.
    N, C, H, W = 2, 3, 16, 16
    z0 = jax.random.normal(k_z, (N, C, H, W), jnp.float32)

    prep = prepare_params(params, W)              # one-time weight preprocessing
    out_list = generator_forward(z0, prep)
    x_first = jax.block_until_ready(out_list[0])

    assert x_first.shape == (N, 3, H - 10, W - 10), x_first.shape

    ref = jax.block_until_ready(_reference_forward(z0, params))
    max_err = float(jnp.max(jnp.abs(x_first - ref)))
    assert jnp.allclose(x_first, ref, atol=2e-4, rtol=2e-4), max_err

    print("KERNEL_OK")
</pallas_src>

<mosaic_0001>
module attributes {stable_mosaic.version = 11 : i64} {
  func.func @_fused_generator_kernel(%arg0: memref<32x48xf32, #tpu.memory_space<vmem>>, %arg1: memref<144x448xf32, #tpu.memory_space<vmem>>, %arg2: memref<4x32xf32, #tpu.memory_space<vmem>>, %arg3: memref<4x32xf32, #tpu.memory_space<vmem>>, %arg4: memref<1x128xf32, #tpu.memory_space<vmem>>, %arg5: memref<1344x384xf32, #tpu.memory_space<any>>, %arg6: memref<1152x320xf32, #tpu.memory_space<any>>, %arg7: memref<960x256xf32, #tpu.memory_space<any>>, %arg8: memref<768x128xf32, #tpu.memory_space<any>>, %arg9: memref<12x128xf32, #tpu.memory_space<vmem>>, %arg10: memref<1344x384xf32, #tpu.memory_space<vmem>>, %arg11: memref<1152x320xf32, #tpu.memory_space<vmem>>, %arg12: memref<960x256xf32, #tpu.memory_space<vmem>>, %arg13: memref<768x128xf32, #tpu.memory_space<vmem>>, %arg14: memref<4x!tpu.dma_semaphore, #tpu.memory_space<semaphore_mem>>) attributes {dimension_semantics = [], scalar_prefetch = 0 : i64, scratch_operands = 5 : i64, tpu.core_type = #tpu.core_type<tc>} {
    %c0_i32 = arith.constant 0 : i32
    %0 = tpu.memref_slice %arg14[%c0_i32] : memref<4x!tpu.dma_semaphore, #tpu.memory_space<semaphore_mem>> -> memref<1x!tpu.dma_semaphore, #tpu.memory_space<semaphore_mem>>
    %1 = tpu.memref_squeeze %0 : memref<1x!tpu.dma_semaphore, #tpu.memory_space<semaphore_mem>> -> memref<!tpu.dma_semaphore, #tpu.memory_space<semaphore_mem>>
    tpu.enqueue_dma source(%arg5 : memref<1344x384xf32, #tpu.memory_space<any>>) target(%arg10 : memref<1344x384xf32, #tpu.memory_space<vmem>>) target_semaphore(%1 : memref<!tpu.dma_semaphore, #tpu.memory_space<semaphore_mem>>)
    %c1_i32 = arith.constant 1 : i32
    %2 = tpu.memref_slice %arg14[%c1_i32] : memref<4x!tpu.dma_semaphore, #tpu.memory_space<semaphore_mem>> -> memref<1x!tpu.dma_semaphore, #tpu.memory_space<semaphore_mem>>
    %3 = tpu.memref_squeeze %2 : memref<1x!tpu.dma_semaphore, #tpu.memory_space<semaphore_mem>> -> memref<!tpu.dma_semaphore, #tpu.memory_space<semaphore_mem>>
    tpu.enqueue_dma source(%arg6 : memref<1152x320xf32, #tpu.memory_space<any>>) target(%arg11 : memref<1152x320xf32, #tpu.memory_space<vmem>>) target_semaphore(%3 : memref<!tpu.dma_semaphore, #tpu.memory_space<semaphore_mem>>)
    %c2_i32 = arith.constant 2 : i32
    %4 = tpu.memref_slice %arg14[%c2_i32] : memref<4x!tpu.dma_semaphore, #tpu.memory_space<semaphore_mem>> -> memref<1x!tpu.dma_semaphore, #tpu.memory_space<semaphore_mem>>
    %5 = tpu.memref_squeeze %4 : memref<1x!tpu.dma_semaphore, #tpu.memory_space<semaphore_mem>> -> memref<!tpu.dma_semaphore, #tpu.memory_space<semaphore_mem>>
    tpu.enqueue_dma source(%arg7 : memref<960x256xf32, #tpu.memory_space<any>>) target(%arg12 : memref<960x256xf32, #tpu.memory_space<vmem>>) target_semaphore(%5 : memref<!tpu.dma_semaphore, #tpu.memory_space<semaphore_mem>>)
    %c3_i32 = arith.constant 3 : i32
    %6 = tpu.memref_slice %arg14[%c3_i32] : memref<4x!tpu.dma_semaphore, #tpu.memory_space<semaphore_mem>> -> memref<1x!tpu.dma_semaphore, #tpu.memory_space<semaphore_mem>>
    %7 = tpu.memref_squeeze %6 : memref<1x!tpu.dma_semaphore, #tpu.memory_space<semaphore_mem>> -> memref<!tpu.dma_semaphore, #tpu.memory_space<semaphore_mem>>
    tpu.enqueue_dma source(%arg8 : memref<768x128xf32, #tpu.memory_space<any>>) target(%arg13 : memref<768x128xf32, #tpu.memory_space<vmem>>) target_semaphore(%7 : memref<!tpu.dma_semaphore, #tpu.memory_space<semaphore_mem>>)
    %c0 = arith.constant 0 : index
    %c0_0 = arith.constant 0 : index
    %8 = vector.load %arg2[%c0, %c0_0] : memref<4x32xf32, #tpu.memory_space<vmem>>, vector<4x32xf32>
    %c0_1 = arith.constant 0 : index
    %c0_2 = arith.constant 0 : index
    %9 = vector.load %arg3[%c0_1, %c0_2] : memref<4x32xf32, #tpu.memory_space<vmem>>, vector<4x32xf32>
    %c0_3 = arith.constant 0 : index
    %c0_4 = arith.constant 0 : index
    %10 = vector.load %arg0[%c0_3, %c0_4] : memref<32x48xf32, #tpu.memory_space<vmem>>, vector<32x48xf32>
    %c0_5 = arith.constant 0 : index
    %c0_6 = arith.constant 0 : index
    %11 = vector.load %arg1[%c0_5, %c0_6] : memref<144x448xf32, #tpu.memory_space<vmem>>, vector<144x448xf32>
    %12 = vector.extract_strided_slice %10 {offsets = [0, 0], sizes = [14, 48], strides = [1, 1]} : vector<32x48xf32> to vector<14x48xf32>
    %13 = vector.extract_strided_slice %10 {offsets = [1, 0], sizes = [14, 48], strides = [1, 1]} : vector<32x48xf32> to vector<14x48xf32>
    %14 = vector.extract_strided_slice %10 {offsets = [2, 0], sizes = [14, 48], strides = [1, 1]} : vector<32x48xf32> to vector<14x48xf32>
    %15 = tpu.concatenate %12, %13, %14 in 1 : vector<14x48xf32>, vector<14x48xf32>, vector<14x48xf32> -> vector<14x144xf32>
    %16 = vector.extract_strided_slice %10 {offsets = [16, 0], sizes = [14, 48], strides = [1, 1]} : vector<32x48xf32> to vector<14x48xf32>
    %17 = vector.extract_strided_slice %10 {offsets = [17, 0], sizes = [14, 48], strides = [1, 1]} : vector<32x48xf32> to vector<14x48xf32>
    %18 = vector.extract_strided_slice %10 {offsets = [18, 0], sizes = [14, 48], strides = [1, 1]} : vector<32x48xf32> to vector<14x48xf32>
    %19 = tpu.concatenate %16, %17, %18 in 1 : vector<14x48xf32>, vector<14x48xf32>, vector<14x48xf32> -> vector<14x144xf32>
    %20 = tpu.concatenate %15, %19 in 0 : vector<14x144xf32>, vector<14x144xf32> -> vector<28x144xf32>
    %cst = arith.constant dense<0.000000e+00> : vector<28x448xf32>
    %21 = tpu.matmul %20, %11, %cst {dimension_numbers = #tpu.dot_dimension_numbers<[1], [0], [0], [1], [0, 0, 1, 1], [], []>} : vector<28x144xf32>, vector<144x448xf32>, vector<28x448xf32> -> vector<28x448xf32>
    %cst_7 = arith.constant dense<0.000000e+00> : vector<448xf32>
    %22 = vector.multi_reduction <add>, %21, %cst_7 [0] : vector<28x448xf32> to vector<448xf32>
    %23 = vector.shape_cast %22 : vector<448xf32> to vector<1x448xf32>
    %24 = arith.mulf %21, %21 : vector<28x448xf32>
    %cst_8 = arith.constant dense<0.000000e+00> : vector<448xf32>
    %25 = vector.multi_reduction <add>, %24, %cst_8 [0] : vector<28x448xf32> to vector<448xf32>
    %26 = vector.shape_cast %25 : vector<448xf32> to vector<1x448xf32>
    %27 = tpu.concatenate %23, %26 in 0 : vector<1x448xf32>, vector<1x448xf32> -> vector<2x448xf32>
    %28 = tpu.iota {dimensions = array<i32: 0>} : vector<448x32xi32>
    %29 = tpu.iota {dimensions = array<i32: 1>} : vector<448x32xi32>
    %c31_i32 = arith.constant 31 : i32
    %30 = vector.broadcast %c31_i32 : i32 to vector<448x32xi32>
    %31 = arith.andi %28, %30 : vector<448x32xi32>
    %32 = arith.cmpi eq, %31, %29 : vector<448x32xi32>
    %33 = arith.extui %32 : vector<448x32xi1> to vector<448x32xi32>
    %34 = arith.sitofp %33 : vector<448x32xi32> to vector<448x32xf32>
    %cst_9 = arith.constant dense<0.000000e+00> : vector<2x32xf32>
    %35 = tpu.matmul %27, %34, %cst_9 {dimension_numbers = #tpu.dot_dimension_numbers<[1], [0], [0], [1], [0, 0, 1, 1], [], []>} : vector<2x448xf32>, vector<448x32xf32>, vector<2x32xf32> -> vector<2x32xf32>
    %36 = vector.extract_strided_slice %35 {offsets = [0, 0], sizes = [1, 32], strides = [1, 1]} : vector<2x32xf32> to vector<1x32xf32>
    %cst_10 = arith.constant 0.00255102036 : f32
    %37 = vector.broadcast %cst_10 : f32 to vector<1x32xf32>
    %38 = arith.mulf %36, %37 : vector<1x32xf32>
    %39 = vector.extract_strided_slice %35 {offsets = [1, 0], sizes = [1, 32], strides = [1, 1]} : vector<2x32xf32> to vector<1x32xf32>
    %cst_11 = arith.constant 0.00255102036 : f32
    %40 = vector.broadcast %cst_11 : f32 to vector<1x32xf32>
    %41 = arith.mulf %39, %40 : vector<1x32xf32>
    %42 = arith.mulf %38, %38 : vector<1x32xf32>
    %43 = arith.subf %41, %42 : vector<1x32xf32>
    %cst_12 = arith.constant 0.000000e+00 : f32
    %44 = vector.broadcast %cst_12 : f32 to vector<1x32xf32>
    %45 = arith.maximumf %43, %44 : vector<1x32xf32>
    %46 = vector.extract_strided_slice %8 {offsets = [0, 0], sizes = [1, 32], strides = [1, 1]} : vector<4x32xf32> to vector<1x32xf32>
    %cst_13 = arith.constant 9.99999974E-6 : f32
    %47 = vector.broadcast %cst_13 : f32 to vector<1x32xf32>
    %48 = arith.addf %45, %47 : vector<1x32xf32>
    %49 = math.rsqrt %48 : vector<1x32xf32>
    %50 = arith.mulf %46, %49 : vector<1x32xf32>
    %51 = vector.extract_strided_slice %9 {offsets = [0, 0], sizes = [1, 32], strides = [1, 1]} : vector<4x32xf32> to vector<1x32xf32>
    %52 = arith.mulf %38, %50 : vector<1x32xf32>
    %53 = arith.subf %51, %52 : vector<1x32xf32>
    %54 = tpu.concatenate %50, %53 in 0 : vector<1x32xf32>, vector<1x32xf32> -> vector<2x32xf32>
    %55 = tpu.iota {dimensions = array<i32: 0>} : vector<32x448xi32>
    %56 = tpu.iota {dimensions = array<i32: 1>} : vector<32x448xi32>
    %c31_i32_14 = arith.constant 31 : i32
    %57 = vector.broadcast %c31_i32_14 : i32 to vector<32x448xi32>
    %58 = arith.andi %56, %57 : vector<32x448xi32>
    %59 = arith.cmpi eq, %55, %58 : vector<32x448xi32>
    %60 = arith.extui %59 : vector<32x448xi1> to vector<32x448xi32>
    %61 = arith.sitofp %60 : vector<32x448xi32> to vector<32x448xf32>
    %cst_15 = arith.constant dense<0.000000e+00> : vector<2x448xf32>
    %62 = tpu.matmul %54, %61, %cst_15 {dimension_numbers = #tpu.dot_dimension_numbers<[1], [0], [0], [1], [0, 0, 1, 1], [], []>} : vector<2x32xf32>, vector<32x448xf32>, vector<2x448xf32> -> vector<2x448xf32>
    %63 = vector.extract_strided_slice %62 {offsets = [0, 0], sizes = [1, 448], strides = [1, 1]} : vector<2x448xf32> to vector<1x448xf32>
    %64 = vector.broadcast %63 : vector<1x448xf32> to vector<28x448xf32>
    %65 = arith.mulf %21, %64 : vector<28x448xf32>
    %66 = vector.extract_strided_slice %62 {offsets = [1, 0], sizes = [1, 448], strides = [1, 1]} : vector<2x448xf32> to vector<1x448xf32>
    %67 = vector.broadcast %66 : vector<1x448xf32> to vector<28x448xf32>
    %68 = arith.addf %65, %67 : vector<28x448xf32>
    %cst_16 = arith.constant 0.000000e+00 : f32
    %69 = vector.broadcast %cst_16 : f32 to vector<28x448xf32>
    %70 = arith.cmpf oge, %68, %69 : vector<28x448xf32>
    %cst_17 = arith.constant 2.000000e-01 : f32
    %71 = vector.broadcast %cst_17 : f32 to vector<28x448xf32>
    %72 = arith.mulf %71, %68 : vector<28x448xf32>
    %73 = arith.select %70, %68, %72 : vector<28x448xi1>, vector<28x448xf32>
    %c0_i32_18 = arith.constant 0 : i32
    %74 = tpu.memref_slice %arg14[%c0_i32_18] : memref<4x!tpu.dma_semaphore, #tpu.memory_space<semaphore_mem>> -> memref<1x!tpu.dma_semaphore, #tpu.memory_space<semaphore_mem>>
    %75 = tpu.memref_squeeze %74 : memref<1x!tpu.dma_semaphore, #tpu.memory_space<semaphore_mem>> -> memref<!tpu.dma_semaphore, #tpu.memory_space<semaphore_mem>>
    tpu.wait_dma2 semaphore(%75 : memref<!tpu.dma_semaphore, #tpu.memory_space<semaphore_mem>>) src(%arg5 : memref<1344x384xf32, #tpu.memory_space<any>>) dst(%arg10 : memref<1344x384xf32, #tpu.memory_space<vmem>>)
    %c0_19 = arith.constant 0 : index
    %c0_20 = arith.constant 0 : index
    %76 = vector.load %arg10[%c0_19, %c0_20] : memref<1344x384xf32, #tpu.memory_space<vmem>>, vector<1344x384xf32>
    %77 = vector.extract_strided_slice %73 {offsets = [0, 0], sizes = [12, 448], strides = [1, 1]} : vector<28x448xf32> to vector<12x448xf32>
    %78 = vector.extract_strided_slice %73 {offsets = [1, 0], sizes = [12, 448], strides = [1, 1]} : vector<28x448xf32> to vector<12x448xf32>
    %79 = vector.extract_strided_slice %73 {offsets = [2, 0], sizes = [12, 448], strides = [1, 1]} : vector<28x448xf32> to vector<12x448xf32>
    %80 = tpu.concatenate %77, %78, %79 in 1 : vector<12x448xf32>, vector<12x448xf32>, vector<12x448xf32> -> vector<12x1344xf32>
    %81 = vector.extract_strided_slice %73 {offsets = [14, 0], sizes = [12, 448], strides = [1, 1]} : vector<28x448xf32> to vector<12x448xf32>
    %82 = vector.extract_strided_slice %73 {offsets = [15, 0], sizes = [12, 448], strides = [1, 1]} : vector<28x448xf32> to vector<12x448xf32>
    %83 = vector.extract_strided_slice %73 {offsets = [16, 0], sizes = [12, 448], strides = [1, 1]} : vector<28x448xf32> to vector<12x448xf32>
    %84 = tpu.concatenate %81, %82, %83 in 1 : vector<12x448xf32>, vector<12x448xf32>, vector<12x448xf32> -> vector<12x1344xf32>
    %85 = tpu.concatenate %80, %84 in 0 : vector<12x1344xf32>, vector<12x1344xf32> -> vector<24x1344xf32>
    %cst_21 = arith.constant dense<0.000000e+00> : vector<24x384xf32>
    %86 = tpu.matmul %85, %76, %cst_21 {dimension_numbers = #tpu.dot_dimension_numbers<[1], [0], [0], [1], [0, 0, 1, 1], [], []>} : vector<24x1344xf32>, vector<1344x384xf32>, vector<24x384xf32> -> vector<24x384xf32>
    %cst_22 = arith.constant dense<0.000000e+00> : vector<384xf32>
    %87 = vector.multi_reduction <add>, %86, %cst_22 [0] : vector<24x384xf32> to vector<384xf32>
    %88 = vector.shape_cast %87 : vector<384xf32> to vector<1x384xf32>
    %89 = arith.mulf %86, %86 : vector<24x384xf32>
    %cst_23 = arith.constant dense<0.000000e+00> : vector<384xf32>
    %90 = vector.multi_reduction <add>, %89, %cst_23 [0] : vector<24x384xf32> to vector<384xf32>
    %91 = vector.shape_cast %90 : vector<384xf32> to vector<1x384xf32>
    %92 = tpu.concatenate %88, %91 in 0 : vector<1x384xf32>, vector<1x384xf32> -> vector<2x384xf32>
    %93 = tpu.iota {dimensions = array<i32: 0>} : vector<384x32xi32>
    %94 = tpu.iota {dimensions = array<i32: 1>} : vector<384x32xi32>
    %c31_i32_24 = arith.constant 31 : i32
    %95 = vector.broadcast %c31_i32_24 : i32 to vector<384x32xi32>
    %96 = arith.andi %93, %95 : vector<384x32xi32>
    %97 = arith.cmpi eq, %96, %94 : vector<384x32xi32>
    %98 = arith.extui %97 : vector<384x32xi1> to vector<384x32xi32>
    %99 = arith.sitofp %98 : vector<384x32xi32> to vector<384x32xf32>
    %cst_25 = arith.constant dense<0.000000e+00> : vector<2x32xf32>
    %100 = tpu.matmul %92, %99, %cst_25 {dimension_numbers = #tpu.dot_dimension_numbers<[1], [0], [0], [1], [0, 0, 1, 1], [], []>} : vector<2x384xf32>, vector<384x32xf32>, vector<2x32xf32> -> vector<2x32xf32>
    %101 = vector.extract_strided_slice %100 {offsets = [0, 0], sizes = [1, 32], strides = [1, 1]} : vector<2x32xf32> to vector<1x32xf32>
    %cst_26 = arith.constant 0.00347222225 : f32
    %102 = vector.broadcast %cst_26 : f32 to vector<1x32xf32>
    %103 = arith.mulf %101, %102 : vector<1x32xf32>
    %104 = vector.extract_strided_slice %100 {offsets = [1, 0], sizes = [1, 32], strides = [1, 1]} : vector<2x32xf32> to vector<1x32xf32>
    %cst_27 = arith.constant 0.00347222225 : f32
    %105 = vector.broadcast %cst_27 : f32 to vector<1x32xf32>
    %106 = arith.mulf %104, %105 : vector<1x32xf32>
    %107 = arith.mulf %103, %103 : vector<1x32xf32>
    %108 = arith.subf %106, %107 : vector<1x32xf32>
    %cst_28 = arith.constant 0.000000e+00 : f32
    %109 = vector.broadcast %cst_28 : f32 to vector<1x32xf32>
    %110 = arith.maximumf %108, %109 : vector<1x32xf32>
    %111 = vector.extract_strided_slice %8 {offsets = [1, 0], sizes = [1, 32], strides = [1, 1]} : vector<4x32xf32> to vector<1x32xf32>
    %cst_29 = arith.constant 9.99999974E-6 : f32
    %112 = vector.broadcast %cst_29 : f32 to vector<1x32xf32>
    %113 = arith.addf %110, %112 : vector<1x32xf32>
    %114 = math.rsqrt %113 : vector<1x32xf32>
    %115 = arith.mulf %111, %114 : vector<1x32xf32>
    %116 = vector.extract_strided_slice %9 {offsets = [1, 0], sizes = [1, 32], strides = [1, 1]} : vector<4x32xf32> to vector<1x32xf32>
    %117 = arith.mulf %103, %115 : vector<1x32xf32>
    %118 = arith.subf %116, %117 : vector<1x32xf32>
    %119 = tpu.concatenate %115, %118 in 0 : vector<1x32xf32>, vector<1x32xf32> -> vector<2x32xf32>
    %120 = tpu.iota {dimensions = array<i32: 0>} : vector<32x384xi32>
    %121 = tpu.iota {dimensions = array<i32: 1>} : vector<32x384xi32>
    %c31_i32_30 = arith.constant 31 : i32
    %122 = vector.broadcast %c31_i32_30 : i32 to vector<32x384xi32>
    %123 = arith.andi %121, %122 : vector<32x384xi32>
    %124 = arith.cmpi eq, %120, %123 : vector<32x384xi32>
    %125 = arith.extui %124 : vector<32x384xi1> to vector<32x384xi32>
    %126 = arith.sitofp %125 : vector<32x384xi32> to vector<32x384xf32>
    %cst_31 = arith.constant dense<0.000000e+00> : vector<2x384xf32>
    %127 = tpu.matmul %119, %126, %cst_31 {dimension_numbers = #tpu.dot_dimension_numbers<[1], [0], [0], [1], [0, 0, 1, 1], [], []>} : vector<2x32xf32>, vector<32x384xf32>, vector<2x384xf32> -> vector<2x384xf32>
    %128 = vector.extract_strided_slice %127 {offsets = [0, 0], sizes = [1, 384], strides = [1, 1]} : vector<2x384xf32> to vector<1x384xf32>
    %129 = vector.broadcast %128 : vector<1x384xf32> to vector<24x384xf32>
    %130 = arith.mulf %86, %129 : vector<24x384xf32>
    %131 = vector.extract_strided_slice %127 {offsets = [1, 0], sizes = [1, 384], strides = [1, 1]} : vector<2x384xf32> to vector<1x384xf32>
    %132 = vector.broadcast %131 : vector<1x384xf32> to vector<24x384xf32>
    %133 = arith.addf %130, %132 : vector<24x384xf32>
    %cst_32 = arith.constant 0.000000e+00 : f32
    %134 = vector.broadcast %cst_32 : f32 to vector<24x384xf32>
    %135 = arith.cmpf oge, %133, %134 : vector<24x384xf32>
    %cst_33 = arith.constant 2.000000e-01 : f32
    %136 = vector.broadcast %cst_33 : f32 to vector<24x384xf32>
    %137 = arith.mulf %136, %133 : vector<24x384xf32>
    %138 = arith.select %135, %133, %137 : vector<24x384xi1>, vector<24x384xf32>
    %c1_i32_34 = arith.constant 1 : i32
    %139 = tpu.memref_slice %arg14[%c1_i32_34] : memref<4x!tpu.dma_semaphore, #tpu.memory_space<semaphore_mem>> -> memref<1x!tpu.dma_semaphore, #tpu.memory_space<semaphore_mem>>
    %140 = tpu.memref_squeeze %139 : memref<1x!tpu.dma_semaphore, #tpu.memory_space<semaphore_mem>> -> memref<!tpu.dma_semaphore, #tpu.memory_space<semaphore_mem>>
    tpu.wait_dma2 semaphore(%140 : memref<!tpu.dma_semaphore, #tpu.memory_space<semaphore_mem>>) src(%arg6 : memref<1152x320xf32, #tpu.memory_space<any>>) dst(%arg11 : memref<1152x320xf32, #tpu.memory_space<vmem>>)
    %c0_35 = arith.constant 0 : index
    %c0_36 = arith.constant 0 : index
    %141 = vector.load %arg11[%c0_35, %c0_36] : memref<1152x320xf32, #tpu.memory_space<vmem>>, vector<1152x320xf32>
    %142 = vector.extract_strided_slice %138 {offsets = [0, 0], sizes = [10, 384], strides = [1, 1]} : vector<24x384xf32> to vector<10x384xf32>
    %143 = vector.extract_strided_slice %138 {offsets = [1, 0], sizes = [10, 384], strides = [1, 1]} : vector<24x384xf32> to vector<10x384xf32>
    %144 = vector.extract_strided_slice %138 {offsets = [2, 0], sizes = [10, 384], strides = [1, 1]} : vector<24x384xf32> to vector<10x384xf32>
    %145 = tpu.concatenate %142, %143, %144 in 1 : vector<10x384xf32>, vector<10x384xf32>, vector<10x384xf32> -> vector<10x1152xf32>
    %146 = vector.extract_strided_slice %138 {offsets = [12, 0], sizes = [10, 384], strides = [1, 1]} : vector<24x384xf32> to vector<10x384xf32>
    %147 = vector.extract_strided_slice %138 {offsets = [13, 0], sizes = [10, 384], strides = [1, 1]} : vector<24x384xf32> to vector<10x384xf32>
    %148 = vector.extract_strided_slice %138 {offsets = [14, 0], sizes = [10, 384], strides = [1, 1]} : vector<24x384xf32> to vector<10x384xf32>
    %149 = tpu.concatenate %146, %147, %148 in 1 : vector<10x384xf32>, vector<10x384xf32>, vector<10x384xf32> -> vector<10x1152xf32>
    %150 = tpu.concatenate %145, %149 in 0 : vector<10x1152xf32>, vector<10x1152xf32> -> vector<20x1152xf32>
    %cst_37 = arith.constant dense<0.000000e+00> : vector<20x320xf32>
    %151 = tpu.matmul %150, %141, %cst_37 {dimension_numbers = #tpu.dot_dimension_numbers<[1], [0], [0], [1], [0, 0, 1, 1], [], []>} : vector<20x1152xf32>, vector<1152x320xf32>, vector<20x320xf32> -> vector<20x320xf32>
    %cst_38 = arith.constant dense<0.000000e+00> : vector<320xf32>
    %152 = vector.multi_reduction <add>, %151, %cst_38 [0] : vector<20x320xf32> to vector<320xf32>
    %153 = vector.shape_cast %152 : vector<320xf32> to vector<1x320xf32>
    %154 = arith.mulf %151, %151 : vector<20x320xf32>
    %cst_39 = arith.constant dense<0.000000e+00> : vector<320xf32>
    %155 = vector.multi_reduction <add>, %154, %cst_39 [0] : vector<20x320xf32> to vector<320xf32>
    %156 = vector.shape_cast %155 : vector<320xf32> to vector<1x320xf32>
    %157 = tpu.concatenate %153, %156 in 0 : vector<1x320xf32>, vector<1x320xf32> -> vector<2x320xf32>
    %158 = tpu.iota {dimensions = array<i32: 0>} : vector<320x32xi32>
    %159 = tpu.iota {dimensions = array<i32: 1>} : vector<320x32xi32>
    %c31_i32_40 = arith.constant 31 : i32
    %160 = vector.broadcast %c31_i32_40 : i32 to vector<320x32xi32>
    %161 = arith.andi %158, %160 : vector<320x32xi32>
    %162 = arith.cmpi eq, %161, %159 : vector<320x32xi32>
    %163 = arith.extui %162 : vector<320x32xi1> to vector<320x32xi32>
    %164 = arith.sitofp %163 : vector<320x32xi32> to vector<320x32xf32>
    %cst_41 = arith.constant dense<0.000000e+00> : vector<2x32xf32>
    %165 = tpu.matmul %157, %164, %cst_41 {dimension_numbers = #tpu.dot_dimension_numbers<[1], [0], [0], [1], [0, 0, 1, 1], [], []>} : vector<2x320xf32>, vector<320x32xf32>, vector<2x32xf32> -> vector<2x32xf32>
    %166 = vector.extract_strided_slice %165 {offsets = [0, 0], sizes = [1, 32], strides = [1, 1]} : vector<2x32xf32> to vector<1x32xf32>
    %cst_42 = arith.constant 5.000000e-03 : f32
    %167 = vector.broadcast %cst_42 : f32 to vector<1x32xf32>
    %168 = arith.mulf %166, %167 : vector<1x32xf32>
    %169 = vector.extract_strided_slice %165 {offsets = [1, 0], sizes = [1, 32], strides = [1, 1]} : vector<2x32xf32> to vector<1x32xf32>
    %cst_43 = arith.constant 5.000000e-03 : f32
    %170 = vector.broadcast %cst_43 : f32 to vector<1x32xf32>
    %171 = arith.mulf %169, %170 : vector<1x32xf32>
    %172 = arith.mulf %168, %168 : vector<1x32xf32>
    %173 = arith.subf %171, %172 : vector<1x32xf32>
    %cst_44 = arith.constant 0.000000e+00 : f32
    %174 = vector.broadcast %cst_44 : f32 to vector<1x32xf32>
    %175 = arith.maximumf %173, %174 : vector<1x32xf32>
    %176 = vector.extract_strided_slice %8 {offsets = [2, 0], sizes = [1, 32], strides = [1, 1]} : vector<4x32xf32> to vector<1x32xf32>
    %cst_45 = arith.constant 9.99999974E-6 : f32
    %177 = vector.broadcast %cst_45 : f32 to vector<1x32xf32>
    %178 = arith.addf %175, %177 : vector<1x32xf32>
    %179 = math.rsqrt %178 : vector<1x32xf32>
    %180 = arith.mulf %176, %179 : vector<1x32xf32>
    %181 = vector.extract_strided_slice %9 {offsets = [2, 0], sizes = [1, 32], strides = [1, 1]} : vector<4x32xf32> to vector<1x32xf32>
    %182 = arith.mulf %168, %180 : vector<1x32xf32>
    %183 = arith.subf %181, %182 : vector<1x32xf32>
    %184 = tpu.concatenate %180, %183 in 0 : vector<1x32xf32>, vector<1x32xf32> -> vector<2x32xf32>
    %185 = tpu.iota {dimensions = array<i32: 0>} : vector<32x320xi32>
    %186 = tpu.iota {dimensions = array<i32: 1>} : vector<32x320xi32>
    %c31_i32_46 = arith.constant 31 : i32
    %187 = vector.broadcast %c31_i32_46 : i32 to vector<32x320xi32>
    %188 = arith.andi %186, %187 : vector<32x320xi32>
    %189 = arith.cmpi eq, %185, %188 : vector<32x320xi32>
    %190 = arith.extui %189 : vector<32x320xi1> to vector<32x320xi32>
    %191 = arith.sitofp %190 : vector<32x320xi32> to vector<32x320xf32>
    %cst_47 = arith.constant dense<0.000000e+00> : vector<2x320xf32>
    %192 = tpu.matmul %184, %191, %cst_47 {dimension_numbers = #tpu.dot_dimension_numbers<[1], [0], [0], [1], [0, 0, 1, 1], [], []>} : vector<2x32xf32>, vector<32x320xf32>, vector<2x320xf32> -> vector<2x320xf32>
    %193 = vector.extract_strided_slice %192 {offsets = [0, 0], sizes = [1, 320], strides = [1, 1]} : vector<2x320xf32> to vector<1x320xf32>
    %194 = vector.broadcast %193 : vector<1x320xf32> to vector<20x320xf32>
    %195 = arith.mulf %151, %194 : vector<20x320xf32>
    %196 = vector.extract_strided_slice %192 {offsets = [1, 0], sizes = [1, 320], strides = [1, 1]} : vector<2x320xf32> to vector<1x320xf32>
    %197 = vector.broadcast %196 : vector<1x320xf32> to vector<20x320xf32>
    %198 = arith.addf %195, %197 : vector<20x320xf32>
    %cst_48 = arith.constant 0.000000e+00 : f32
    %199 = vector.broadcast %cst_48 : f32 to vector<20x320xf32>
    %200 = arith.cmpf oge, %198, %199 : vector<20x320xf32>
    %cst_49 = arith.constant 2.000000e-01 : f32
    %201 = vector.broadcast %cst_49 : f32 to vector<20x320xf32>
    %202 = arith.mulf %201, %198 : vector<20x320xf32>
    %203 = arith.select %200, %198, %202 : vector<20x320xi1>, vector<20x320xf32>
    %c2_i32_50 = arith.constant 2 : i32
    %204 = tpu.memref_slice %arg14[%c2_i32_50] : memref<4x!tpu.dma_semaphore, #tpu.memory_space<semaphore_mem>> -> memref<1x!tpu.dma_semaphore, #tpu.memory_space<semaphore_mem>>
    %205 = tpu.memref_squeeze %204 : memref<1x!tpu.dma_semaphore, #tpu.memory_space<semaphore_mem>> -> memref<!tpu.dma_semaphore, #tpu.memory_space<semaphore_mem>>
    tpu.wait_dma2 semaphore(%205 : memref<!tpu.dma_semaphore, #tpu.memory_space<semaphore_mem>>) src(%arg7 : memref<960x256xf32, #tpu.memory_space<any>>) dst(%arg12 : memref<960x256xf32, #tpu.memory_space<vmem>>)
    %c0_51 = arith.constant 0 : index
    %c0_52 = arith.constant 0 : index
    %206 = vector.load %arg12[%c0_51, %c0_52] : memref<960x256xf32, #tpu.memory_space<vmem>>, vector<960x256xf32>
    %207 = vector.extract_strided_slice %203 {offsets = [0, 0], sizes = [8, 320], strides = [1, 1]} : vector<20x320xf32> to vector<8x320xf32>
    %208 = vector.extract_strided_slice %203 {offsets = [1, 0], sizes = [8, 320], strides = [1, 1]} : vector<20x320xf32> to vector<8x320xf32>
    %209 = vector.extract_strided_slice %203 {offsets = [2, 0], sizes = [8, 320], strides = [1, 1]} : vector<20x320xf32> to vector<8x320xf32>
    %210 = tpu.concatenate %207, %208, %209 in 1 : vector<8x320xf32>, vector<8x320xf32>, vector<8x320xf32> -> vector<8x960xf32>
    %211 = vector.extract_strided_slice %203 {offsets = [10, 0], sizes = [8, 320], strides = [1, 1]} : vector<20x320xf32> to vector<8x320xf32>
    %212 = vector.extract_strided_slice %203 {offsets = [11, 0], sizes = [8, 320], strides = [1, 1]} : vector<20x320xf32> to vector<8x320xf32>
    %213 = vector.extract_strided_slice %203 {offsets = [12, 0], sizes = [8, 320], strides = [1, 1]} : vector<20x320xf32> to vector<8x320xf32>
    %214 = tpu.concatenate %211, %212, %213 in 1 : vector<8x320xf32>, vector<8x320xf32>, vector<8x320xf32> -> vector<8x960xf32>
    %215 = tpu.concatenate %210, %214 in 0 : vector<8x960xf32>, vector<8x960xf32> -> vector<16x960xf32>
    %cst_53 = arith.constant dense<0.000000e+00> : vector<16x256xf32>
    %216 = tpu.matmul %215, %206, %cst_53 {dimension_numbers = #tpu.dot_dimension_numbers<[1], [0], [0], [1], [0, 0, 1, 1], [], []>} : vector<16x960xf32>, vector<960x256xf32>, vector<16x256xf32> -> vector<16x256xf32>
    %cst_54 = arith.constant dense<0.000000e+00> : vector<256xf32>
    %217 = vector.multi_reduction <add>, %216, %cst_54 [0] : vector<16x256xf32> to vector<256xf32>
    %218 = vector.shape_cast %217 : vector<256xf32> to vector<1x256xf32>
    %219 = arith.mulf %216, %216 : vector<16x256xf32>
    %cst_55 = arith.constant dense<0.000000e+00> : vector<256xf32>
    %220 = vector.multi_reduction <add>, %219, %cst_55 [0] : vector<16x256xf32> to vector<256xf32>
    %221 = vector.shape_cast %220 : vector<256xf32> to vector<1x256xf32>
    %222 = tpu.concatenate %218, %221 in 0 : vector<1x256xf32>, vector<1x256xf32> -> vector<2x256xf32>
    %223 = tpu.iota {dimensions = array<i32: 0>} : vector<256x32xi32>
    %224 = tpu.iota {dimensions = array<i32: 1>} : vector<256x32xi32>
    %c31_i32_56 = arith.constant 31 : i32
    %225 = vector.broadcast %c31_i32_56 : i32 to vector<256x32xi32>
    %226 = arith.andi %223, %225 : vector<256x32xi32>
    %227 = arith.cmpi eq, %226, %224 : vector<256x32xi32>
    %228 = arith.extui %227 : vector<256x32xi1> to vector<256x32xi32>
    %229 = arith.sitofp %228 : vector<256x32xi32> to vector<256x32xf32>
    %cst_57 = arith.constant dense<0.000000e+00> : vector<2x32xf32>
    %230 = tpu.matmul %222, %229, %cst_57 {dimension_numbers = #tpu.dot_dimension_numbers<[1], [0], [0], [1], [0, 0, 1, 1], [], []>} : vector<2x256xf32>, vector<256x32xf32>, vector<2x32xf32> -> vector<2x32xf32>
    %231 = vector.extract_strided_slice %230 {offsets = [0, 0], sizes = [1, 32], strides = [1, 1]} : vector<2x32xf32> to vector<1x32xf32>
    %cst_58 = arith.constant 7.812500e-03 : f32
    %232 = vector.broadcast %cst_58 : f32 to vector<1x32xf32>
    %233 = arith.mulf %231, %232 : vector<1x32xf32>
    %234 = vector.extract_strided_slice %230 {offsets = [1, 0], sizes = [1, 32], strides = [1, 1]} : vector<2x32xf32> to vector<1x32xf32>
    %cst_59 = arith.constant 7.812500e-03 : f32
    %235 = vector.broadcast %cst_59 : f32 to vector<1x32xf32>
    %236 = arith.mulf %234, %235 : vector<1x32xf32>
    %237 = arith.mulf %233, %233 : vector<1x32xf32>
    %238 = arith.subf %236, %237 : vector<1x32xf32>
    %cst_60 = arith.constant 0.000000e+00 : f32
    %239 = vector.broadcast %cst_60 : f32 to vector<1x32xf32>
    %240 = arith.maximumf %238, %239 : vector<1x32xf32>
    %241 = vector.extract_strided_slice %8 {offsets = [3, 0], sizes = [1, 32], strides = [1, 1]} : vector<4x32xf32> to vector<1x32xf32>
    %cst_61 = arith.constant 9.99999974E-6 : f32
    %242 = vector.broadcast %cst_61 : f32 to vector<1x32xf32>
    %243 = arith.addf %240, %242 : vector<1x32xf32>
    %244 = math.rsqrt %243 : vector<1x32xf32>
    %245 = arith.mulf %241, %244 : vector<1x32xf32>
    %246 = vector.extract_strided_slice %9 {offsets = [3, 0], sizes = [1, 32], strides = [1, 1]} : vector<4x32xf32> to vector<1x32xf32>
    %247 = arith.mulf %233, %245 : vector<1x32xf32>
    %248 = arith.subf %246, %247 : vector<1x32xf32>
    %249 = tpu.concatenate %245, %248 in 0 : vector<1x32xf32>, vector<1x32xf32> -> vector<2x32xf32>
    %250 = tpu.iota {dimensions = array<i32: 0>} : vector<32x256xi32>
    %251 = tpu.iota {dimensions = array<i32: 1>} : vector<32x256xi32>
    %c31_i32_62 = arith.constant 31 : i32
    %252 = vector.broadcast %c31_i32_62 : i32 to vector<32x256xi32>
    %253 = arith.andi %251, %252 : vector<32x256xi32>
    %254 = arith.cmpi eq, %250, %253 : vector<32x256xi32>
    %255 = arith.extui %254 : vector<32x256xi1> to vector<32x256xi32>
    %256 = arith.sitofp %255 : vector<32x256xi32> to vector<32x256xf32>
    %cst_63 = arith.constant dense<0.000000e+00> : vector<2x256xf32>
    %257 = tpu.matmul %249, %256, %cst_63 {dimension_numbers = #tpu.dot_dimension_numbers<[1], [0], [0], [1], [0, 0, 1, 1], [], []>} : vector<2x32xf32>, vector<32x256xf32>, vector<2x256xf32> -> vector<2x256xf32>
    %258 = vector.extract_strided_slice %257 {offsets = [0, 0], sizes = [1, 256], strides = [1, 1]} : vector<2x256xf32> to vector<1x256xf32>
    %259 = vector.broadcast %258 : vector<1x256xf32> to vector<16x256xf32>
    %260 = arith.mulf %216, %259 : vector<16x256xf32>
    %261 = vector.extract_strided_slice %257 {offsets = [1, 0], sizes = [1, 256], strides = [1, 1]} : vector<2x256xf32> to vector<1x256xf32>
    %262 = vector.broadcast %261 : vector<1x256xf32> to vector<16x256xf32>
    %263 = arith.addf %260, %262 : vector<16x256xf32>
    %cst_64 = arith.constant 0.000000e+00 : f32
    %264 = vector.broadcast %cst_64 : f32 to vector<16x256xf32>
    %265 = arith.cmpf oge, %263, %264 : vector<16x256xf32>
    %cst_65 = arith.constant 2.000000e-01 : f32
    %266 = vector.broadcast %cst_65 : f32 to vector<16x256xf32>
    %267 = arith.mulf %266, %263 : vector<16x256xf32>
    %268 = arith.select %265, %263, %267 : vector<16x256xi1>, vector<16x256xf32>
    %c3_i32_66 = arith.constant 3 : i32
    %269 = tpu.memref_slice %arg14[%c3_i32_66] : memref<4x!tpu.dma_semaphore, #tpu.memory_space<semaphore_mem>> -> memref<1x!tpu.dma_semaphore, #tpu.memory_space<semaphore_mem>>
    %270 = tpu.memref_squeeze %269 : memref<1x!tpu.dma_semaphore, #tpu.memory_space<semaphore_mem>> -> memref<!tpu.dma_semaphore, #tpu.memory_space<semaphore_mem>>
    tpu.wait_dma2 semaphore(%270 : memref<!tpu.dma_semaphore, #tpu.memory_space<semaphore_mem>>) src(%arg8 : memref<768x128xf32, #tpu.memory_space<any>>) dst(%arg13 : memref<768x128xf32, #tpu.memory_space<vmem>>)
    %c0_67 = arith.constant 0 : index
    %c0_68 = arith.constant 0 : index
    %271 = vector.load %arg13[%c0_67, %c0_68] : memref<768x128xf32, #tpu.memory_space<vmem>>, vector<768x128xf32>
    %272 = vector.extract_strided_slice %268 {offsets = [0, 0], sizes = [6, 256], strides = [1, 1]} : vector<16x256xf32> to vector<6x256xf32>
    %273 = vector.extract_strided_slice %268 {offsets = [1, 0], sizes = [6, 256], strides = [1, 1]} : vector<16x256xf32> to vector<6x256xf32>
    %274 = vector.extract_strided_slice %268 {offsets = [2, 0], sizes = [6, 256], strides = [1, 1]} : vector<16x256xf32> to vector<6x256xf32>
    %275 = tpu.concatenate %272, %273, %274 in 1 : vector<6x256xf32>, vector<6x256xf32>, vector<6x256xf32> -> vector<6x768xf32>
    %276 = vector.extract_strided_slice %268 {offsets = [8, 0], sizes = [6, 256], strides = [1, 1]} : vector<16x256xf32> to vector<6x256xf32>
    %277 = vector.extract_strided_slice %268 {offsets = [9, 0], sizes = [6, 256], strides = [1, 1]} : vector<16x256xf32> to vector<6x256xf32>
    %278 = vector.extract_strided_slice %268 {offsets = [10, 0], sizes = [6, 256], strides = [1, 1]} : vector<16x256xf32> to vector<6x256xf32>
    %279 = tpu.concatenate %276, %277, %278 in 1 : vector<6x256xf32>, vector<6x256xf32>, vector<6x256xf32> -> vector<6x768xf32>
    %280 = tpu.concatenate %275, %279 in 0 : vector<6x768xf32>, vector<6x768xf32> -> vector<12x768xf32>
    %cst_69 = arith.constant dense<0.000000e+00> : vector<12x128xf32>
    %281 = tpu.matmul %280, %271, %cst_69 {dimension_numbers = #tpu.dot_dimension_numbers<[1], [0], [0], [1], [0, 0, 1, 1], [], []>} : vector<12x768xf32>, vector<768x128xf32>, vector<12x128xf32> -> vector<12x128xf32>
    %c0_70 = arith.constant 0 : index
    %c0_71 = arith.constant 0 : index
    %282 = vector.load %arg4[%c0_70, %c0_71] : memref<1x128xf32, #tpu.memory_space<vmem>>, vector<1x128xf32>
    %283 = vector.broadcast %282 : vector<1x128xf32> to vector<12x128xf32>
    %284 = arith.addf %281, %283 : vector<12x128xf32>
    %285 = math.tanh %284 : vector<12x128xf32>
    %c0_72 = arith.constant 0 : index
    %c0_73 = arith.constant 0 : index
    %286 = vector.load %arg9[%c0_72, %c0_73] : memref<12x128xf32, #tpu.memory_space<vmem>>, vector<12x128xf32>
    tpu.vector_store %arg9[%c0_72, %c0_73], %285 {strides = array<i32>} : memref<12x128xf32, #tpu.memory_space<vmem>>, vector<12x128xf32>,
    return
  }
}

</mosaic_0001>

<llo_original>
// kernel: generator_forward.1
$region0: #{generator_forward.1}
  #allocation0 [shape = 'u32[]', space=smem, size = 0x4, offset = 0x4, fixed_abs, tag = 'smem constant byte address 0x4 - core index']
  #allocation1 [shape = 'u32[72,128]{1,0:T(1,128)}', space=vmem, size = 0x9000, scoped, tag = 'internal scratch']
  #allocation2 [shape = 'f32[1344,384]{1,0:T(8,128)}', space=vmem, size = 0x1f8000, scoped, tag = 'scratch operand']
  #allocation3 [shape = 'f32[1152,320]{1,0:T(8,128)}', space=vmem, size = 0x1b0000, scoped, tag = 'scratch operand']
  #allocation4 [shape = 'f32[960,256]{1,0:T(8,128)}', space=vmem, size = 0xf0000, scoped, tag = 'scratch operand']
  #allocation5 [shape = 'f32[768,128]{1,0:T(8,128)}', space=vmem, size = 0x60000, scoped, tag = 'scratch operand']
  #allocation6 [shape = 's32[4]{0}', space=sflag, size = 0x10, scoped, tag = 'scratch operand']
  #allocation9 [shape = 's32[]', space=sflag, size = 0x4, offset = 0, fixed_abs, tag = 'sflag constant byte address 0x0 - dummy sync flag']
  #allocation10 [shape = 's32[]', space=sflag, size = 0x4, offset = 0, fixed_abs, tag = 'sflag constant byte address 0x0 - dummy sync flag']
  #allocation11 [shape = 's32[]', space=sflag, size = 0x4, offset = 0, fixed_abs, tag = 'sflag constant byte address 0x0 - dummy sync flag']
  #allocation12 [shape = 's32[]', space=sflag, size = 0x4, offset = 0, fixed_abs, tag = 'sflag constant byte address 0x0 - dummy sync flag']
  %s0 = inlined_call_operand.vmem [shape: f32[32,48], index: 0, kind: input, shape index: {}]
  %s1 = inlined_call_operand.hbm [shape: f32[144,448], index: 1, kind: input, shape index: {}]
  %s2 = inlined_call_operand.vmem [shape: f32[4,32], index: 2, kind: input, shape index: {}]
  %s3 = inlined_call_operand.vmem [shape: f32[4,32], index: 3, kind: input, shape index: {}]
  %s4 = inlined_call_operand.vmem [shape: f32[1,128], index: 4, kind: input, shape index: {}]
  %s5 = inlined_call_operand.vmem [shape: f32[1344,384], index: 5, kind: input, shape index: {}]
  %s6 = inlined_call_operand.vmem [shape: f32[1152,320], index: 6, kind: input, shape index: {}]
  %s7 = inlined_call_operand.vmem [shape: f32[960,256], index: 7, kind: input, shape index: {}]
  %s8 = inlined_call_operand.vmem [shape: f32[768,128], index: 8, kind: input, shape index: {}]
  %s9 = inlined_call_operand.vmem [shape: f32[12,128], index: 9, kind: output, shape index: {}]
  %s10 = sld [smem:[#allocation0]]
  $region110: #{generator_forward.1} parent=0
    _
  %s12 = ssub.s32 1, %s10
  %s13 = scalar_select 0, %s12, %s10
  $region1: #{generator_forward.1} parent=0
    #allocation7 [shape = 'u8[294912]{0}', space=vmem, size = 0x48000, scoped, tag = 'input window, operand 1, single buffered']
    #allocation8 [shape = 's32[1]{0}', space=sflag, size = 0x4, scoped, tag = 'scoped memory for generator_forward.1']
    %14 = vsyncpa [#allocation8], 0
    // Predicated region
    $region2: #{generator_forward.1} parent=1 // pred_check
      _
    $region3: #{generator_forward.1} parent=1 // pred_check_branch
      %16 = sbr.rel (0) target = $region5
    $region4: #{generator_forward.1} parent=1 // pred_region
      _
    $region5: #{generator_forward.1} parent=1 // pred_fallthru
      _
    // Predicated region
    $region6: #{generator_forward.1} parent=1 // pred_check
      _
    $region7: #{generator_forward.1} parent=1 // pred_check_branch
      %18 = sbr.rel (0) target = $region9
    $region8: #{generator_forward.1} parent=1 // pred_region
      %20 = vsyncadd [#allocation8], 0
      %s21 = sshll.u32 %s1, 4
      %s22 = int_to_ptr.hbm [resolvable:$true] %s21
      %s23 = sshll.u32 [#allocation7], 4
      %s24 = int_to_ptr.vmem [resolvable:$true] %s23
      %29 = dma.hbm_to_vmem [thread:$0]  %s22, 9216, %s24, [#allocation8], 512, 512, 32
    $region9: #{generator_forward.1} parent=1 // pred_fallthru
      _
    // Predicated region
    $region10: #{generator_forward.1} parent=1 // pred_check
      _
    $region11: #{generator_forward.1} parent=1 // pred_check_branch
      %31 = sbr.rel (0) target = $region13
    $region12: #{generator_forward.1} parent=1 // pred_region
      _
    $region13: #{generator_forward.1} parent=1 // pred_fallthru
      _
    // Predicated region
    $region14: #{generator_forward.1} parent=1 // pred_check
      _
    $region15: #{generator_forward.1} parent=1 // pred_check_branch
      %33 = sbr.rel (0) target = $region17
    $region16: #{generator_forward.1} parent=1 // pred_region
      _
    $region17: #{generator_forward.1} parent=1 // pred_fallthru
      _
    // Predicated region
    $region18: #{generator_forward.1} parent=1 // pred_check
      _
    $region19: #{generator_forward.1} parent=1 // pred_check_branch
      %35 = sbr.rel (0) target = $region21
    $region20: #{generator_forward.1} parent=1 // pred_region
      _
    $region21: #{generator_forward.1} parent=1 // pred_fallthru
      _
    // Predicated region
    $region22: #{generator_forward.1} parent=1 // pred_check
      _
    $region23: #{generator_forward.1} parent=1 // pred_check_branch
      %37 = sbr.rel (0) target = $region25
    $region24: #{generator_forward.1} parent=1 // pred_region
      %39 = dma.done [#allocation8], 9216
    $region25: #{generator_forward.1} parent=1 // pred_fallthru
      _
    // Predicated region
    $region26: #{generator_forward.1} parent=1 // pred_check
      _
    $region27: #{generator_forward.1} parent=1 // pred_check_branch
      %41 = sbr.rel (0) target = $region29
    $region28: #{generator_forward.1} parent=1 // pred_region
      loop: start=0, step=1, limit=1
      $region30: #{generator_forward.1} parent=28 // loop_pre_header
        _
      $region31: #{generator_forward.1} parent=28 // loop_header
        %s43 = sphi 0, %s47
        %p44 = scmp.ge.s32.totalorder %s43, 1
        %s48 = sphi %s5, %s5
        %s49 = sphi [#allocation2], [#allocation2]
      $region32: #{generator_forward.1} parent=28 // loop_header_branch
        %46 = sbr.rel (%p44) target = $region36
      $region33: #{generator_forward.1} parent=28 // loop_body
        %v50 = vld [vmem:[%s48] sm:$0xff]
        %51 = vst [vmem:[%s49] sm:$0xff] %v50
        %v52 = vld [vmem:[%s48 + $0x8] sm:$0xff]
        %53 = vst [vmem:[%s49 + $0x8] sm:$0xff] %v52
        %v54 = vld [vmem:[%s48 + $0x10] sm:$0xff]
        %55 = vst [vmem:[%s49 + $0x10] sm:$0xff] %v54
        %v56 = vld [vmem:[%s48 + $0x18] sm:$0xff]
        %57 = vst [vmem:[%s49 + $0x18] sm:$0xff] %v56
        %v58 = vld [vmem:[%s48 + $0x20] sm:$0xff]
        %59 = vst [vmem:[%s49 + $0x20] sm:$0xff] %v58
        %v60 = vld [vmem:[%s48 + $0x28] sm:$0xff]
        %61 = vst [vmem:[%s49 + $0x28] sm:$0xff] %v60
        %v62 = vld [vmem:[%s48 + $0x30] sm:$0xff]
        %63 = vst [vmem:[%s49 + $0x30] sm:$0xff] %v62
        %v64 = vld [vmem:[%s48 + $0x38] sm:$0xff]
        %65 = vst [vmem:[%s49 + $0x38] sm:$0xff] %v64
        %v66 = vld [vmem:[%s48 + $0x40] sm:$0xff]
        %67 = vst [vmem:[%s49 + $0x40] sm:$0xff] %v66
        %v68 = vld [vmem:[%s48 + $0x48] sm:$0xff]
        %69 = vst [vmem:[%s49 + $0x48] sm:$0xff] %v68
        %v70 = vld [vmem:[%s48 + $0x50] sm:$0xff]
        %71 = vst [vmem:[%s49 + $0x50] sm:$0xff] %v70
        %v72 = vld [vmem:[%s48 + $0x58] sm:$0xff]
        %73 = vst [vmem:[%s49 + $0x58] sm:$0xff] %v72
        %v74 = vld [vmem:[%s48 + $0x60] sm:$0xff]
        %75 = vst [vmem:[%s49 + $0x60] sm:$0xff] %v74
        %v76 = vld [vmem:[%s48 + $0x68] sm:$0xff]
        %77 = vst [vmem:[%s49 + $0x68] sm:$0xff] %v76
        %v78 = vld [vmem:[%s48 + $0x70] sm:$0xff]
        %79 = vst [vmem:[%s49 + $0x70] sm:$0xff] %v78
        %v80 = vld [vmem:[%s48 + $0x78] sm:$0xff]
        %81 = vst [vmem:[%s49 + $0x78] sm:$0xff] %v80
        %v82 = vld [vmem:[%s48 + $0x80] sm:$0xff]
        %83 = vst [vmem:[%s49 + $0x80] sm:$0xff] %v82
        %v84 = vld [vmem:[%s48 + $0x88] sm:$0xff]
        %85 = vst [vmem:[%s49 + $0x88] sm:$0xff] %v84
        %v86 = vld [vmem:[%s48 + $0x90] sm:$0xff]
        %87 = vst [vmem:[%s49 + $0x90] sm:$0xff] %v86
        %v88 = vld [vmem:[%s48 + $0x98] sm:$0xff]
        %89 = vst [vmem:[%s49 + $0x98] sm:$0xff] %v88
        %v90 = vld [vmem:[%s48 + $0xa0] sm:$0xff]
        %91 = vst [vmem:[%s49 + $0xa0] sm:$0xff] %v90
        %v92 = vld [vmem:[%s48 + $0xa8] sm:$0xff]
        %93 = vst [vmem:[%s49 + $0xa8] sm:$0xff] %v92
        %v94 = vld [vmem:[%s48 + $0xb0] sm:$0xff]
        %95 = vst [vmem:[%s49 + $0xb0] sm:$0xff] %v94
        %v96 = vld [vmem:[%s48 + $0xb8] sm:$0xff]
        %97 = vst [vmem:[%s49 + $0xb8] sm:$0xff] %v96
        %v98 = vld [vmem:[%s48 + $0xc0] sm:$0xff]
        %99 = vst [vmem:[%s49 + $0xc0] sm:$0xff] %v98
        %v100 = vld [vmem:[%s48 + $0xc8] sm:$0xff]
        %101 = vst [vmem:[%s49 + $0xc8] sm:$0xff] %v100
        %v102 = vld [vmem:[%s48 + $0xd0] sm:$0xff]
        %103 = vst [vmem:[%s49 + $0xd0] sm:$0xff] %v102
        %v104 = vld [vmem:[%s48 + $0xd8] sm:$0xff]
        %105 = vst [vmem:[%s49 + $0xd8] sm:$0xff] %v104
        %v106 = vld [vmem:[%s48 + $0xe0] sm:$0xff]
        %107 = vst [vmem:[%s49 + $0xe0] sm:$0xff] %v106
        %v108 = vld [vmem:[%s48 + $0xe8] sm:$0xff]
        %109 = vst [vmem:[%s49 + $0xe8] sm:$0xff] %v108
        %v110 = vld [vmem:[%s48 + $0xf0] sm:$0xff]
        %111 = vst [vmem:[%s49 + $0xf0] sm:$0xff] %v110
        %v112 = vld [vmem:[%s48 + $0xf8] sm:$0xff]
        %113 = vst [vmem:[%s49 + $0xf8] sm:$0xff] %v112
        %v114 = vld [vmem:[%s48 + $0x100] sm:$0xff]
        %115 = vst [vmem:[%s49 + $0x100] sm:$0xff] %v114
        %v116 = vld [vmem:[%s48 + $0x108] sm:$0xff]
        %117 = vst [vmem:[%s49 + $0x108] sm:$0xff] %v116
        %v118 = vld [vmem:[%s48 + $0x110] sm:$0xff]
        %119 = vst [vmem:[%s49 + $0x110] sm:$0xff] %v118
        %v120 = vld [vmem:[%s48 + $0x118] sm:$0xff]
        %121 = vst [vmem:[%s49 + $0x118] sm:$0xff] %v120
        %v122 = vld [vmem:[%s48 + $0x120] sm:$0xff]
        %123 = vst [vmem:[%s49 + $0x120] sm:$0xff] %v122
        %v124 = vld [vmem:[%s48 + $0x128] sm:$0xff]
        %125 = vst [vmem:[%s49 + $0x128] sm:$0xff] %v124
        %v126 = vld [vmem:[%s48 + $0x130] sm:$0xff]
        %127 = vst [vmem:[%s49 + $0x130] sm:$0xff] %v126
        %v128 = vld [vmem:[%s48 + $0x138] sm:$0xff]
        %129 = vst [vmem:[%s49 + $0x138] sm:$0xff] %v128
        %v130 = vld [vmem:[%s48 + $0x140] sm:$0xff]
        %131 = vst [vmem:[%s49 + $0x140] sm:$0xff] %v130
        %v132 = vld [vmem:[%s48 + $0x148] sm:$0xff]
        %133 = vst [vmem:[%s49 + $0x148] sm:$0xff] %v132
        %v134 = vld [vmem:[%s48 + $0x150] sm:$0xff]
        %135 = vst [vmem:[%s49 + $0x150] sm:$0xff] %v134
        %v136 = vld [vmem:[%s48 + $0x158] sm:$0xff]
        %137 = vst [vmem:[%s49 + $0x158] sm:$0xff] %v136
        %v138 = vld [vmem:[%s48 + $0x160] sm:$0xff]
        %139 = vst [vmem:[%s49 + $0x160] sm:$0xff] %v138
        %v140 = vld [vmem:[%s48 + $0x168] sm:$0xff]
        %141 = vst [vmem:[%s49 + $0x168] sm:$0xff] %v140
        %v142 = vld [vmem:[%s48 + $0x170] sm:$0xff]
        %143 = vst [vmem:[%s49 + $0x170] sm:$0xff] %v142
        %v144 = vld [vmem:[%s48 + $0x178] sm:$0xff]
        %145 = vst [vmem:[%s49 + $0x178] sm:$0xff] %v144
        %v146 = vld [vmem:[%s48 + $0x180] sm:$0xff]
        %147 = vst [vmem:[%s49 + $0x180] sm:$0xff] %v146
        %v148 = vld [vmem:[%s48 + $0x188] sm:$0xff]
        %149 = vst [vmem:[%s49 + $0x188] sm:$0xff] %v148
        %v150 = vld [vmem:[%s48 + $0x190] sm:$0xff]
        %151 = vst [vmem:[%s49 + $0x190] sm:$0xff] %v150
        %v152 = vld [vmem:[%s48 + $0x198] sm:$0xff]
        %153 = vst [vmem:[%s49 + $0x198] sm:$0xff] %v152
        %v154 = vld [vmem:[%s48 + $0x1a0] sm:$0xff]
        %155 = vst [vmem:[%s49 + $0x1a0] sm:$0xff] %v154
        %v156 = vld [vmem:[%s48 + $0x1a8] sm:$0xff]
        %157 = vst [vmem:[%s49 + $0x1a8] sm:$0xff] %v156
        %v158 = vld [vmem:[%s48 + $0x1b0] sm:$0xff]
        %159 = vst [vmem:[%s49 + $0x1b0] sm:$0xff] %v158
        %v160 = vld [vmem:[%s48 + $0x1b8] sm:$0xff]
        %161 = vst [vmem:[%s49 + $0x1b8] sm:$0xff] %v160
        %v162 = vld [vmem:[%s48 + $0x1c0] sm:$0xff]
        %163 = vst [vmem:[%s49 + $0x1c0] sm:$0xff] %v162
        %v164 = vld [vmem:[%s48 + $0x1c8] sm:$0xff]
        %165 = vst [vmem:[%s49 + $0x1c8] sm:$0xff] %v164
        %v166 = vld [vmem:[%s48 + $0x1d0] sm:$0xff]
        %167 = vst [vmem:[%s49 + $0x1d0] sm:$0xff] %v166
        %v168 = vld [vmem:[%s48 + $0x1d8] sm:$0xff]
        %169 = vst [vmem:[%s49 + $0x1d8] sm:$0xff] %v168
        %v170 = vld [vmem:[%s48 + $0x1e0] sm:$0xff]
        %171 = vst [vmem:[%s49 + $0x1e0] sm:$0xff] %v170
        %v172 = vld [vmem:[%s48 + $0x1e8] sm:$0xff]
        %173 = vst [vmem:[%s49 + $0x1e8] sm:$0xff] %v172
        %v174 = vld [vmem:[%s48 + $0x1f0] sm:$0xff]
        %175 = vst [vmem:[%s49 + $0x1f0] sm:$0xff] %v174
        %v176 = vld [vmem:[%s48 + $0x1f8] sm:$0xff]
        %177 = vst [vmem:[%s49 + $0x1f8] sm:$0xff] %v176
        %v178 = vld [vmem:[%s48 + $0x200] sm:$0xff]
        %179 = vst [vmem:[%s49 + $0x200] sm:$0xff] %v178
        %v180 = vld [vmem:[%s48 + $0x208] sm:$0xff]
        %181 = vst [vmem:[%s49 + $0x208] sm:$0xff] %v180
        %v182 = vld [vmem:[%s48 + $0x210] sm:$0xff]
        %183 = vst [vmem:[%s49 + $0x210] sm:$0xff] %v182
        %v184 = vld [vmem:[%s48 + $0x218] sm:$0xff]
        %185 = vst [vmem:[%s49 + $0x218] sm:$0xff] %v184
        %v186 = vld [vmem:[%s48 + $0x220] sm:$0xff]
        %187 = vst [vmem:[%s49 + $0x220] sm:$0xff] %v186
        %v188 = vld [vmem:[%s48 + $0x228] sm:$0xff]
        %189 = vst [vmem:[%s49 + $0x228] sm:$0xff] %v188
        %v190 = vld [vmem:[%s48 + $0x230] sm:$0xff]
        %191 = vst [vmem:[%s49 + $0x230] sm:$0xff] %v190
        %v192 = vld [vmem:[%s48 + $0x238] sm:$0xff]
        %193 = vst [vmem:[%s49 + $0x238] sm:$0xff] %v192
        %v194 = vld [vmem:[%s48 + $0x240] sm:$0xff]
        %195 = vst [vmem:[%s49 + $0x240] sm:$0xff] %v194
        %v196 = vld [vmem:[%s48 + $0x248] sm:$0xff]
        %197 = vst [vmem:[%s49 + $0x248] sm:$0xff] %v196
        %v198 = vld [vmem:[%s48 + $0x250] sm:$0xff]
        %199 = vst [vmem:[%s49 + $0x250] sm:$0xff] %v198
        %v200 = vld [vmem:[%s48 + $0x258] sm:$0xff]
        %201 = vst [vmem:[%s49 + $0x258] sm:$0xff] %v200
        %v202 = vld [vmem:[%s48 + $0x260] sm:$0xff]
        %203 = vst [vmem:[%s49 + $0x260] sm:$0xff] %v202
        %v204 = vld [vmem:[%s48 + $0x268] sm:$0xff]
        %205 = vst [vmem:[%s49 + $0x268] sm:$0xff] %v204
        %v206 = vld [vmem:[%s48 + $0x270] sm:$0xff]
        %207 = vst [vmem:[%s49 + $0x270] sm:$0xff] %v206
        %v208 = vld [vmem:[%s48 + $0x278] sm:$0xff]
        %209 = vst [vmem:[%s49 + $0x278] sm:$0xff] %v208
        %v210 = vld [vmem:[%s48 + $0x280] sm:$0xff]
        %211 = vst [vmem:[%s49 + $0x280] sm:$0xff] %v210
        %v212 = vld [vmem:[%s48 + $0x288] sm:$0xff]
        %213 = vst [vmem:[%s49 + $0x288] sm:$0xff] %v212
        %v214 = vld [vmem:[%s48 + $0x290] sm:$0xff]
        %215 = vst [vmem:[%s49 + $0x290] sm:$0xff] %v214
        %v216 = vld [vmem:[%s48 + $0x298] sm:$0xff]
        %217 = vst [vmem:[%s49 + $0x298] sm:$0xff] %v216
        %v218 = vld [vmem:[%s48 + $0x2a0] sm:$0xff]
        %219 = vst [vmem:[%s49 + $0x2a0] sm:$0xff] %v218
        %v220 = vld [vmem:[%s48 + $0x2a8] sm:$0xff]
        %221 = vst [vmem:[%s49 + $0x2a8] sm:$0xff] %v220
        %v222 = vld [vmem:[%s48 + $0x2b0] sm:$0xff]
        %223 = vst [vmem:[%s49 + $0x2b0] sm:$0xff] %v222
        %v224 = vld [vmem:[%s48 + $0x2b8] sm:$0xff]
        %225 = vst [vmem:[%s49 + $0x2b8] sm:$0xff] %v224
        %v226 = vld [vmem:[%s48 + $0x2c0] sm:$0xff]
        %227 = vst [vmem:[%s49 + $0x2c0] sm:$0xff] %v226
        %v228 = vld [vmem:[%s48 + $0x2c8] sm:$0xff]
        %229 = vst [vmem:[%s49 + $0x2c8] sm:$0xff] %v228
        %v230 = vld [vmem:[%s48 + $0x2d0] sm:$0xff]
        %231 = vst [vmem:[%s49 + $0x2d0] sm:$0xff] %v230
        %v232 = vld [vmem:[%s48 + $0x2d8] sm:$0xff]
        %233 = vst [vmem:[%s49 + $0x2d8] sm:$0xff] %v232
        %v234 = vld [vmem:[%s48 + $0x2e0] sm:$0xff]
        %235 = vst [vmem:[%s49 + $0x2e0] sm:$0xff] %v234
        %v236 = vld [vmem:[%s48 + $0x2e8] sm:$0xff]
        %237 = vst [vmem:[%s49 + $0x2e8] sm:$0xff] %v236
        %v238 = vld [vmem:[%s48 + $0x2f0] sm:$0xff]
        %239 = vst [vmem:[%s49 + $0x2f0] sm:$0xff] %v238
        %v240 = vld [vmem:[%s48 + $0x2f8] sm:$0xff]
        %241 = vst [vmem:[%s49 + $0x2f8] sm:$0xff] %v240
        %v242 = vld [vmem:[%s48 + $0x300] sm:$0xff]
        %243 = vst [vmem:[%s49 + $0x300] sm:$0xff] %v242
        %v244 = vld [vmem:[%s48 + $0x308] sm:$0xff]
        %245 = vst [vmem:[%s49 + $0x308] sm:$0xff] %v244
        %v246 = vld [vmem:[%s48 + $0x310] sm:$0xff]
        %247 = vst [vmem:[%s49 + $0x310] sm:$0xff] %v246
        %v248 = vld [vmem:[%s48 + $0x318] sm:$0xff]
        %249 = vst [vmem:[%s49 + $0x318] sm:$0xff] %v248
        %v250 = vld [vmem:[%s48 + $0x320] sm:$0xff]
        %251 = vst [vmem:[%s49 + $0x320] sm:$0xff] %v250
        %v252 = vld [vmem:[%s48 + $0x328] sm:$0xff]
        %253 = vst [vmem:[%s49 + $0x328] sm:$0xff] %v252
        %v254 = vld [vmem:[%s48 + $0x330] sm:$0xff]
        %255 = vst [vmem:[%s49 + $0x330] sm:$0xff] %v254
        %v256 = vld [vmem:[%s48 + $0x338] sm:$0xff]
        %257 = vst [vmem:[%s49 + $0x338] sm:$0xff] %v256
        %v258 = vld [vmem:[%s48 + $0x340] sm:$0xff]
        %259 = vst [vmem:[%s49 + $0x340] sm:$0xff] %v258
        %v260 = vld [vmem:[%s48 + $0x348] sm:$0xff]
        %261 = vst [vmem:[%s49 + $0x348] sm:$0xff] %v260
        %v262 = vld [vmem:[%s48 + $0x350] sm:$0xff]
        %263 = vst [vmem:[%s49 + $0x350] sm:$0xff] %v262
        %v264 = vld [vmem:[%s48 + $0x358] sm:$0xff]
        %265 = vst [vmem:[%s49 + $0x358] sm:$0xff] %v264
        %v266 = vld [vmem:[%s48 + $0x360] sm:$0xff]
        %267 = vst [vmem:[%s49 + $0x360] sm:$0xff] %v266
        %v268 = vld [vmem:[%s48 + $0x368] sm:$0xff]
        %269 = vst [vmem:[%s49 + $0x368] sm:$0xff] %v268
        %v270 = vld [vmem:[%s48 + $0x370] sm:$0xff]
        %271 = vst [vmem:[%s49 + $0x370] sm:$0xff] %v270
        %v272 = vld [vmem:[%s48 + $0x378] sm:$0xff]
        %273 = vst [vmem:[%s49 + $0x378] sm:$0xff] %v272
        %v274 = vld [vmem:[%s48 + $0x380] sm:$0xff]
        %275 = vst [vmem:[%s49 + $0x380] sm:$0xff] %v274
        %v276 = vld [vmem:[%s48 + $0x388] sm:$0xff]
        %277 = vst [vmem:[%s49 + $0x388] sm:$0xff] %v276
        %v278 = vld [vmem:[%s48 + $0x390] sm:$0xff]
        %279 = vst [vmem:[%s49 + $0x390] sm:$0xff] %v278
        %v280 = vld [vmem:[%s48 + $0x398] sm:$0xff]
        %281 = vst [vmem:[%s49 + $0x398] sm:$0xff] %v280
        %v282 = vld [vmem:[%s48 + $0x3a0] sm:$0xff]
        %283 = vst [vmem:[%s49 + $0x3a0] sm:$0xff] %v282
        %v284 = vld [vmem:[%s48 + $0x3a8] sm:$0xff]
        %285 = vst [vmem:[%s49 + $0x3a8] sm:$0xff] %v284
        %v286 = vld [vmem:[%s48 + $0x3b0] sm:$0xff]
        %287 = vst [vmem:[%s49 + $0x3b0] sm:$0xff] %v286
        %v288 = vld [vmem:[%s48 + $0x3b8] sm:$0xff]
        %289 = vst [vmem:[%s49 + $0x3b8] sm:$0xff] %v288
        %v290 = vld [vmem:[%s48 + $0x3c0] sm:$0xff]
        %291 = vst [vmem:[%s49 + $0x3c0] sm:$0xff] %v290
        %v292 = vld [vmem:[%s48 + $0x3c8] sm:$0xff]
        %293 = vst [vmem:[%s49 + $0x3c8] sm:$0xff] %v292
        %v294 = vld [vmem:[%s48 + $0x3d0] sm:$0xff]
        %295 = vst [vmem:[%s49 + $0x3d0] sm:$0xff] %v294
        %v296 = vld [vmem:[%s48 + $0x3d8] sm:$0xff]
        %297 = vst [vmem:[%s49 + $0x3d8] sm:$0xff] %v296
        %v298 = vld [vmem:[%s48 + $0x3e0] sm:$0xff]
        %299 = vst [vmem:[%s49 + $0x3e0] sm:$0xff] %v298
        %v300 = vld [vmem:[%s48 + $0x3e8] sm:$0xff]
        %301 = vst [vmem:[%s49 + $0x3e8] sm:$0xff] %v300
        %v302 = vld [vmem:[%s48 + $0x3f0] sm:$0xff]
        %303 = vst [vmem:[%s49 + $0x3f0] sm:$0xff] %v302
        %v304 = vld [vmem:[%s48 + $0x3f8] sm:$0xff]
        %305 = vst [vmem:[%s49 + $0x3f8] sm:$0xff] %v304
        %v306 = vld [vmem:[%s48 + $0x400] sm:$0xff]
        %307 = vst [vmem:[%s49 + $0x400] sm:$0xff] %v306
        %v308 = vld [vmem:[%s48 + $0x408] sm:$0xff]
        %309 = vst [vmem:[%s49 + $0x408] sm:$0xff] %v308
        %v310 = vld [vmem:[%s48 + $0x410] sm:$0xff]
        %311 = vst [vmem:[%s49 + $0x410] sm:$0xff] %v310
        %v312 = vld [vmem:[%s48 + $0x418] sm:$0xff]
        %313 = vst [vmem:[%s49 + $0x418] sm:$0xff] %v312
        %v314 = vld [vmem:[%s48 + $0x420] sm:$0xff]
        %315 = vst [vmem:[%s49 + $0x420] sm:$0xff] %v314
        %v316 = vld [vmem:[%s48 + $0x428] sm:$0xff]
        %317 = vst [vmem:[%s49 + $0x428] sm:$0xff] %v316
        %v318 = vld [vmem:[%s48 + $0x430] sm:$0xff]
        %319 = vst [vmem:[%s49 + $0x430] sm:$0xff] %v318
        %v320 = vld [vmem:[%s48 + $0x438] sm:$0xff]
        %321 = vst [vmem:[%s49 + $0x438] sm:$0xff] %v320
        %v322 = vld [vmem:[%s48 + $0x440] sm:$0xff]
        %323 = vst [vmem:[%s49 + $0x440] sm:$0xff] %v322
        %v324 = vld [vmem:[%s48 + $0x448] sm:$0xff]
        %325 = vst [vmem:[%s49 + $0x448] sm:$0xff] %v324
        %v326 = vld [vmem:[%s48 + $0x450] sm:$0xff]
        %327 = vst [vmem:[%s49 + $0x450] sm:$0xff] %v326
        %v328 = vld [vmem:[%s48 + $0x458] sm:$0xff]
        %329 = vst [vmem:[%s49 + $0x458] sm:$0xff] %v328
        %v330 = vld [vmem:[%s48 + $0x460] sm:$0xff]
        %331 = vst [vmem:[%s49 + $0x460] sm:$0xff] %v330
        %v332 = vld [vmem:[%s48 + $0x468] sm:$0xff]
        %333 = vst [vmem:[%s49 + $0x468] sm:$0xff] %v332
        %v334 = vld [vmem:[%s48 + $0x470] sm:$0xff]
        %335 = vst [vmem:[%s49 + $0x470] sm:$0xff] %v334
        %v336 = vld [vmem:[%s48 + $0x478] sm:$0xff]
        %337 = vst [vmem:[%s49 + $0x478] sm:$0xff] %v336
        %v338 = vld [vmem:[%s48 + $0x480] sm:$0xff]
        %339 = vst [vmem:[%s49 + $0x480] sm:$0xff] %v338
        %v340 = vld [vmem:[%s48 + $0x488] sm:$0xff]
        %341 = vst [vmem:[%s49 + $0x488] sm:$0xff] %v340
        %v342 = vld [vmem:[%s48 + $0x490] sm:$0xff]
        %343 = vst [vmem:[%s49 + $0x490] sm:$0xff] %v342
        %v344 = vld [vmem:[%s48 + $0x498] sm:$0xff]
        %345 = vst [vmem:[%s49 + $0x498] sm:$0xff] %v344
        %v346 = vld [vmem:[%s48 + $0x4a0] sm:$0xff]
        %347 = vst [vmem:[%s49 + $0x4a0] sm:$0xff] %v346
        %v348 = vld [vmem:[%s48 + $0x4a8] sm:$0xff]
        %349 = vst [vmem:[%s49 + $0x4a8] sm:$0xff] %v348
        %v350 = vld [vmem:[%s48 + $0x4b0] sm:$0xff]
        %351 = vst [vmem:[%s49 + $0x4b0] sm:$0xff] %v350
        %v352 = vld [vmem:[%s48 + $0x4b8] sm:$0xff]
        %353 = vst [vmem:[%s49 + $0x4b8] sm:$0xff] %v352
        %v354 = vld [vmem:[%s48 + $0x4c0] sm:$0xff]
        %355 = vst [vmem:[%s49 + $0x4c0] sm:$0xff] %v354
        %v356 = vld [vmem:[%s48 + $0x4c8] sm:$0xff]
        %357 = vst [vmem:[%s49 + $0x4c8] sm:$0xff] %v356
        %v358 = vld [vmem:[%s48 + $0x4d0] sm:$0xff]
        %359 = vst [vmem:[%s49 + $0x4d0] sm:$0xff] %v358
        %v360 = vld [vmem:[%s48 + $0x4d8] sm:$0xff]
        %361 = vst [vmem:[%s49 + $0x4d8] sm:$0xff] %v360
        %v362 = vld [vmem:[%s48 + $0x4e0] sm:$0xff]
        %363 = vst [vmem:[%s49 + $0x4e0] sm:$0xff] %v362
        %v364 = vld [vmem:[%s48 + $0x4e8] sm:$0xff]
        %365 = vst [vmem:[%s49 + $0x4e8] sm:$0xff] %v364
        %v366 = vld [vmem:[%s48 + $0x4f0] sm:$0xff]
        %367 = vst [vmem:[%s49 + $0x4f0] sm:$0xff] %v366
        %v368 = vld [vmem:[%s48 + $0x4f8] sm:$0xff]
        %369 = vst [vmem:[%s49 + $0x4f8] sm:$0xff] %v368
        %v370 = vld [vmem:[%s48 + $0x500] sm:$0xff]
        %371 = vst [vmem:[%s49 + $0x500] sm:$0xff] %v370
        %v372 = vld [vmem:[%s48 + $0x508] sm:$0xff]
        %373 = vst [vmem:[%s49 + $0x508] sm:$0xff] %v372
        %v374 = vld [vmem:[%s48 + $0x510] sm:$0xff]
        %375 = vst [vmem:[%s49 + $0x510] sm:$0xff] %v374
        %v376 = vld [vmem:[%s48 + $0x518] sm:$0xff]
        %377 = vst [vmem:[%s49 + $0x518] sm:$0xff] %v376
        %v378 = vld [vmem:[%s48 + $0x520] sm:$0xff]
        %379 = vst [vmem:[%s49 + $0x520] sm:$0xff] %v378
        %v380 = vld [vmem:[%s48 + $0x528] sm:$0xff]
        %381 = vst [vmem:[%s49 + $0x528] sm:$0xff] %v380
        %v382 = vld [vmem:[%s48 + $0x530] sm:$0xff]
        %383 = vst [vmem:[%s49 + $0x530] sm:$0xff] %v382
        %v384 = vld [vmem:[%s48 + $0x538] sm:$0xff]
        %385 = vst [vmem:[%s49 + $0x538] sm:$0xff] %v384
        %v386 = vld [vmem:[%s48 + $0x540] sm:$0xff]
        %387 = vst [vmem:[%s49 + $0x540] sm:$0xff] %v386
        %v388 = vld [vmem:[%s48 + $0x548] sm:$0xff]
        %389 = vst [vmem:[%s49 + $0x548] sm:$0xff] %v388
        %v390 = vld [vmem:[%s48 + $0x550] sm:$0xff]
        %391 = vst [vmem:[%s49 + $0x550] sm:$0xff] %v390
        %v392 = vld [vmem:[%s48 + $0x558] sm:$0xff]
        %393 = vst [vmem:[%s49 + $0x558] sm:$0xff] %v392
        %v394 = vld [vmem:[%s48 + $0x560] sm:$0xff]
        %395 = vst [vmem:[%s49 + $0x560] sm:$0xff] %v394
        %v396 = vld [vmem:[%s48 + $0x568] sm:$0xff]
        %397 = vst [vmem:[%s49 + $0x568] sm:$0xff] %v396
        %v398 = vld [vmem:[%s48 + $0x570] sm:$0xff]
        %399 = vst [vmem:[%s49 + $0x570] sm:$0xff] %v398
        %v400 = vld [vmem:[%s48 + $0x578] sm:$0xff]
        %401 = vst [vmem:[%s49 + $0x578] sm:$0xff] %v400
        %v402 = vld [vmem:[%s48 + $0x580] sm:$0xff]
        %403 = vst [vmem:[%s49 + $0x580] sm:$0xff] %v402
        %v404 = vld [vmem:[%s48 + $0x588] sm:$0xff]
        %405 = vst [vmem:[%s49 + $0x588] sm:$0xff] %v404
        %v406 = vld [vmem:[%s48 + $0x590] sm:$0xff]
        %407 = vst [vmem:[%s49 + $0x590] sm:$0xff] %v406
        %v408 = vld [vmem:[%s48 + $0x598] sm:$0xff]
        %409 = vst [vmem:[%s49 + $0x598] sm:$0xff] %v408
        %v410 = vld [vmem:[%s48 + $0x5a0] sm:$0xff]
        %411 = vst [vmem:[%s49 + $0x5a0] sm:$0xff] %v410
        %v412 = vld [vmem:[%s48 + $0x5a8] sm:$0xff]
        %413 = vst [vmem:[%s49 + $0x5a8] sm:$0xff] %v412
        %v414 = vld [vmem:[%s48 + $0x5b0] sm:$0xff]
        %415 = vst [vmem:[%s49 + $0x5b0] sm:$0xff] %v414
        %v416 = vld [vmem:[%s48 + $0x5b8] sm:$0xff]
        %417 = vst [vmem:[%s49 + $0x5b8] sm:$0xff] %v416
        %v418 = vld [vmem:[%s48 + $0x5c0] sm:$0xff]
        %419 = vst [vmem:[%s49 + $0x5c0] sm:$0xff] %v418
        %v420 = vld [vmem:[%s48 + $0x5c8] sm:$0xff]
        %421 = vst [vmem:[%s49 + $0x5c8] sm:$0xff] %v420
        %v422 = vld [vmem:[%s48 + $0x5d0] sm:$0xff]
        %423 = vst [vmem:[%s49 + $0x5d0] sm:$0xff] %v422
        %v424 = vld [vmem:[%s48 + $0x5d8] sm:$0xff]
        %425 = vst [vmem:[%s49 + $0x5d8] sm:$0xff] %v424
        %v426 = vld [vmem:[%s48 + $0x5e0] sm:$0xff]
        %427 = vst [vmem:[%s49 + $0x5e0] sm:$0xff] %v426
        %v428 = vld [vmem:[%s48 + $0x5e8] sm:$0xff]
        %429 = vst [vmem:[%s49 + $0x5e8] sm:$0xff] %v428
        %v430 = vld [vmem:[%s48 + $0x5f0] sm:$0xff]
        %431 = vst [vmem:[%s49 + $0x5f0] sm:$0xff] %v430
        %v432 = vld [vmem:[%s48 + $0x5f8] sm:$0xff]
        %433 = vst [vmem:[%s49 + $0x5f8] sm:$0xff] %v432
        %v434 = vld [vmem:[%s48 + $0x600] sm:$0xff]
        %435 = vst [vmem:[%s49 + $0x600] sm:$0xff] %v434
        %v436 = vld [vmem:[%s48 + $0x608] sm:$0xff]
        %437 = vst [vmem:[%s49 + $0x608] sm:$0xff] %v436
        %v438 = vld [vmem:[%s48 + $0x610] sm:$0xff]
        %439 = vst [vmem:[%s49 + $0x610] sm:$0xff] %v438
        %v440 = vld [vmem:[%s48 + $0x618] sm:$0xff]
        %441 = vst [vmem:[%s49 + $0x618] sm:$0xff] %v440
        %v442 = vld [vmem:[%s48 + $0x620] sm:$0xff]
        %443 = vst [vmem:[%s49 + $0x620] sm:$0xff] %v442
        %v444 = vld [vmem:[%s48 + $0x628] sm:$0xff]
        %445 = vst [vmem:[%s49 + $0x628] sm:$0xff] %v444
        %v446 = vld [vmem:[%s48 + $0x630] sm:$0xff]
        %447 = vst [vmem:[%s49 + $0x630] sm:$0xff] %v446
        %v448 = vld [vmem:[%s48 + $0x638] sm:$0xff]
        %449 = vst [vmem:[%s49 + $0x638] sm:$0xff] %v448
        %v450 = vld [vmem:[%s48 + $0x640] sm:$0xff]
        %451 = vst [vmem:[%s49 + $0x640] sm:$0xff] %v450
        %v452 = vld [vmem:[%s48 + $0x648] sm:$0xff]
        %453 = vst [vmem:[%s49 + $0x648] sm:$0xff] %v452
        %v454 = vld [vmem:[%s48 + $0x650] sm:$0xff]
        %455 = vst [vmem:[%s49 + $0x650] sm:$0xff] %v454
        %v456 = vld [vmem:[%s48 + $0x658] sm:$0xff]
        %457 = vst [vmem:[%s49 + $0x658] sm:$0xff] %v456
        %v458 = vld [vmem:[%s48 + $0x660] sm:$0xff]
        %459 = vst [vmem:[%s49 + $0x660] sm:$0xff] %v458
        %v460 = vld [vmem:[%s48 + $0x668] sm:$0xff]
        %461 = vst [vmem:[%s49 + $0x668] sm:$0xff] %v460
        %v462 = vld [vmem:[%s48 + $0x670] sm:$0xff]
        %463 = vst [vmem:[%s49 + $0x670] sm:$0xff] %v462
        %v464 = vld [vmem:[%s48 + $0x678] sm:$0xff]
        %465 = vst [vmem:[%s49 + $0x678] sm:$0xff] %v464
        %v466 = vld [vmem:[%s48 + $0x680] sm:$0xff]
        %467 = vst [vmem:[%s49 + $0x680] sm:$0xff] %v466
        %v468 = vld [vmem:[%s48 + $0x688] sm:$0xff]
        %469 = vst [vmem:[%s49 + $0x688] sm:$0xff] %v468
        %v470 = vld [vmem:[%s48 + $0x690] sm:$0xff]
        %471 = vst [vmem:[%s49 + $0x690] sm:$0xff] %v470
        %v472 = vld [vmem:[%s48 + $0x698] sm:$0xff]
        %473 = vst [vmem:[%s49 + $0x698] sm:$0xff] %v472
        %v474 = vld [vmem:[%s48 + $0x6a0] sm:$0xff]
        %475 = vst [vmem:[%s49 + $0x6a0] sm:$0xff] %v474
        %v476 = vld [vmem:[%s48 + $0x6a8] sm:$0xff]
        %477 = vst [vmem:[%s49 + $0x6a8] sm:$0xff] %v476
        %v478 = vld [vmem:[%s48 + $0x6b0] sm:$0xff]
        %479 = vst [vmem:[%s49 + $0x6b0] sm:$0xff] %v478
        %v480 = vld [vmem:[%s48 + $0x6b8] sm:$0xff]
        %481 = vst [vmem:[%s49 + $0x6b8] sm:$0xff] %v480
        %v482 = vld [vmem:[%s48 + $0x6c0] sm:$0xff]
        %483 = vst [vmem:[%s49 + $0x6c0] sm:$0xff] %v482
        %v484 = vld [vmem:[%s48 + $0x6c8] sm:$0xff]
        %485 = vst [vmem:[%s49 + $0x6c8] sm:$0xff] %v484
        %v486 = vld [vmem:[%s48 + $0x6d0] sm:$0xff]
        %487 = vst [vmem:[%s49 + $0x6d0] sm:$0xff] %v486
        %v488 = vld [vmem:[%s48 + $0x6d8] sm:$0xff]
        %489 = vst [vmem:[%s49 + $0x6d8] sm:$0xff] %v488
        %v490 = vld [vmem:[%s48 + $0x6e0] sm:$0xff]
        %491 = vst [vmem:[%s49 + $0x6e0] sm:$0xff] %v490
        %v492 = vld [vmem:[%s48 + $0x6e8] sm:$0xff]
        %493 = vst [vmem:[%s49 + $0x6e8] sm:$0xff] %v492
        %v494 = vld [vmem:[%s48 + $0x6f0] sm:$0xff]
        %495 = vst [vmem:[%s49 + $0x6f0] sm:$0xff] %v494
        %v496 = vld [vmem:[%s48 + $0x6f8] sm:$0xff]
        %497 = vst [vmem:[%s49 + $0x6f8] sm:$0xff] %v496
        %v498 = vld [vmem:[%s48 + $0x700] sm:$0xff]
        %499 = vst [vmem:[%s49 + $0x700] sm:$0xff] %v498
        %v500 = vld [vmem:[%s48 + $0x708] sm:$0xff]
        %501 = vst [vmem:[%s49 + $0x708] sm:$0xff] %v500
        %v502 = vld [vmem:[%s48 + $0x710] sm:$0xff]
        %503 = vst [vmem:[%s49 + $0x710] sm:$0xff] %v502
        %v504 = vld [vmem:[%s48 + $0x718] sm:$0xff]
        %505 = vst [vmem:[%s49 + $0x718] sm:$0xff] %v504
        %v506 = vld [vmem:[%s48 + $0x720] sm:$0xff]
        %507 = vst [vmem:[%s49 + $0x720] sm:$0xff] %v506
        %v508 = vld [vmem:[%s48 + $0x728] sm:$0xff]
        %509 = vst [vmem:[%s49 + $0x728] sm:$0xff] %v508
        %v510 = vld [vmem:[%s48 + $0x730] sm:$0xff]
        %511 = vst [vmem:[%s49 + $0x730] sm:$0xff] %v510
        %v512 = vld [vmem:[%s48 + $0x738] sm:$0xff]
        %513 = vst [vmem:[%s49 + $0x738] sm:$0xff] %v512
        %v514 = vld [vmem:[%s48 + $0x740] sm:$0xff]
        %515 = vst [vmem:[%s49 + $0x740] sm:$0xff] %v514
        %v516 = vld [vmem:[%s48 + $0x748] sm:$0xff]
        %517 = vst [vmem:[%s49 + $0x748] sm:$0xff] %v516
        %v518 = vld [vmem:[%s48 + $0x750] sm:$0xff]
        %519 = vst [vmem:[%s49 + $0x750] sm:$0xff] %v518
        %v520 = vld [vmem:[%s48 + $0x758] sm:$0xff]
        %521 = vst [vmem:[%s49 + $0x758] sm:$0xff] %v520
        %v522 = vld [vmem:[%s48 + $0x760] sm:$0xff]
        %523 = vst [vmem:[%s49 + $0x760] sm:$0xff] %v522
        %v524 = vld [vmem:[%s48 + $0x768] sm:$0xff]
        %525 = vst [vmem:[%s49 + $0x768] sm:$0xff] %v524
        %v526 = vld [vmem:[%s48 + $0x770] sm:$0xff]
        %527 = vst [vmem:[%s49 + $0x770] sm:$0xff] %v526
        %v528 = vld [vmem:[%s48 + $0x778] sm:$0xff]
        %529 = vst [vmem:[%s49 + $0x778] sm:$0xff] %v528
        %v530 = vld [vmem:[%s48 + $0x780] sm:$0xff]
        %531 = vst [vmem:[%s49 + $0x780] sm:$0xff] %v530
        %v532 = vld [vmem:[%s48 + $0x788] sm:$0xff]
        %533 = vst [vmem:[%s49 + $0x788] sm:$0xff] %v532
        %v534 = vld [vmem:[%s48 + $0x790] sm:$0xff]
        %535 = vst [vmem:[%s49 + $0x790] sm:$0xff] %v534
        %v536 = vld [vmem:[%s48 + $0x798] sm:$0xff]
        %537 = vst [vmem:[%s49 + $0x798] sm:$0xff] %v536
        %v538 = vld [vmem:[%s48 + $0x7a0] sm:$0xff]
        %539 = vst [vmem:[%s49 + $0x7a0] sm:$0xff] %v538
        %v540 = vld [vmem:[%s48 + $0x7a8] sm:$0xff]
        %541 = vst [vmem:[%s49 + $0x7a8] sm:$0xff] %v540
        %v542 = vld [vmem:[%s48 + $0x7b0] sm:$0xff]
        %543 = vst [vmem:[%s49 + $0x7b0] sm:$0xff] %v542
        %v544 = vld [vmem:[%s48 + $0x7b8] sm:$0xff]
        %545 = vst [vmem:[%s49 + $0x7b8] sm:$0xff] %v544
        %v546 = vld [vmem:[%s48 + $0x7c0] sm:$0xff]
        %547 = vst [vmem:[%s49 + $0x7c0] sm:$0xff] %v546
        %v548 = vld [vmem:[%s48 + $0x7c8] sm:$0xff]
        %549 = vst [vmem:[%s49 + $0x7c8] sm:$0xff] %v548
        %v550 = vld [vmem:[%s48 + $0x7d0] sm:$0xff]
        %551 = vst [vmem:[%s49 + $0x7d0] sm:$0xff] %v550
        %v552 = vld [vmem:[%s48 + $0x7d8] sm:$0xff]
        %553 = vst [vmem:[%s49 + $0x7d8] sm:$0xff] %v552
        %v554 = vld [vmem:[%s48 + $0x7e0] sm:$0xff]
        %555 = vst [vmem:[%s49 + $0x7e0] sm:$0xff] %v554
        %v556 = vld [vmem:[%s48 + $0x7e8] sm:$0xff]
        %557 = vst [vmem:[%s49 + $0x7e8] sm:$0xff] %v556
        %v558 = vld [vmem:[%s48 + $0x7f0] sm:$0xff]
        %559 = vst [vmem:[%s49 + $0x7f0] sm:$0xff] %v558
        %v560 = vld [vmem:[%s48 + $0x7f8] sm:$0xff]
        %561 = vst [vmem:[%s49 + $0x7f8] sm:$0xff] %v560
        %v562 = vld [vmem:[%s48 + $0x800] sm:$0xff]
        %563 = vst [vmem:[%s49 + $0x800] sm:$0xff] %v562
        %v564 = vld [vmem:[%s48 + $0x808] sm:$0xff]
        %565 = vst [vmem:[%s49 + $0x808] sm:$0xff] %v564
        %v566 = vld [vmem:[%s48 + $0x810] sm:$0xff]
        %567 = vst [vmem:[%s49 + $0x810] sm:$0xff] %v566
        %v568 = vld [vmem:[%s48 + $0x818] sm:$0xff]
        %569 = vst [vmem:[%s49 + $0x818] sm:$0xff] %v568
        %v570 = vld [vmem:[%s48 + $0x820] sm:$0xff]
        %571 = vst [vmem:[%s49 + $0x820] sm:$0xff] %v570
        %v572 = vld [vmem:[%s48 + $0x828] sm:$0xff]
        %573 = vst [vmem:[%s49 + $0x828] sm:$0xff] %v572
        %v574 = vld [vmem:[%s48 + $0x830] sm:$0xff]
        %575 = vst [vmem:[%s49 + $0x830] sm:$0xff] %v574
        %v576 = vld [vmem:[%s48 + $0x838] sm:$0xff]
        %577 = vst [vmem:[%s49 + $0x838] sm:$0xff] %v576
        %v578 = vld [vmem:[%s48 + $0x840] sm:$0xff]
        %579 = vst [vmem:[%s49 + $0x840] sm:$0xff] %v578
        %v580 = vld [vmem:[%s48 + $0x848] sm:$0xff]
        %581 = vst [vmem:[%s49 + $0x848] sm:$0xff] %v580
        %v582 = vld [vmem:[%s48 + $0x850] sm:$0xff]
        %583 = vst [vmem:[%s49 + $0x850] sm:$0xff] %v582
        %v584 = vld [vmem:[%s48 + $0x858] sm:$0xff]
        %585 = vst [vmem:[%s49 + $0x858] sm:$0xff] %v584
        %v586 = vld [vmem:[%s48 + $0x860] sm:$0xff]
        %587 = vst [vmem:[%s49 + $0x860] sm:$0xff] %v586
        %v588 = vld [vmem:[%s48 + $0x868] sm:$0xff]
        %589 = vst [vmem:[%s49 + $0x868] sm:$0xff] %v588
        %v590 = vld [vmem:[%s48 + $0x870] sm:$0xff]
        %591 = vst [vmem:[%s49 + $0x870] sm:$0xff] %v590
        %v592 = vld [vmem:[%s48 + $0x878] sm:$0xff]
        %593 = vst [vmem:[%s49 + $0x878] sm:$0xff] %v592
        %v594 = vld [vmem:[%s48 + $0x880] sm:$0xff]
        %595 = vst [vmem:[%s49 + $0x880] sm:$0xff] %v594
        %v596 = vld [vmem:[%s48 + $0x888] sm:$0xff]
        %597 = vst [vmem:[%s49 + $0x888] sm:$0xff] %v596
        %v598 = vld [vmem:[%s48 + $0x890] sm:$0xff]
        %599 = vst [vmem:[%s49 + $0x890] sm:$0xff] %v598
        %v600 = vld [vmem:[%s48 + $0x898] sm:$0xff]
        %601 = vst [vmem:[%s49 + $0x898] sm:$0xff] %v600
        %v602 = vld [vmem:[%s48 + $0x8a0] sm:$0xff]
        %603 = vst [vmem:[%s49 + $0x8a0] sm:$0xff] %v602
        %v604 = vld [vmem:[%s48 + $0x8a8] sm:$0xff]
        %605 = vst [vmem:[%s49 + $0x8a8] sm:$0xff] %v604
        %v606 = vld [vmem:[%s48 + $0x8b0] sm:$0xff]
        %607 = vst [vmem:[%s49 + $0x8b0] sm:$0xff] %v606
        %v608 = vld [vmem:[%s48 + $0x8b8] sm:$0xff]
        %609 = vst [vmem:[%s49 + $0x8b8] sm:$0xff] %v608
        %v610 = vld [vmem:[%s48 + $0x8c0] sm:$0xff]
        %611 = vst [vmem:[%s49 + $0x8c0] sm:$0xff] %v610
        %v612 = vld [vmem:[%s48 + $0x8c8] sm:$0xff]
        %613 = vst [vmem:[%s49 + $0x8c8] sm:$0xff] %v612
        %v614 = vld [vmem:[%s48 + $0x8d0] sm:$0xff]
        %615 = vst [vmem:[%s49 + $0x8d0] sm:$0xff] %v614
        %v616 = vld [vmem:[%s48 + $0x8d8] sm:$0xff]
        %617 = vst [vmem:[%s49 + $0x8d8] sm:$0xff] %v616
        %v618 = vld [vmem:[%s48 + $0x8e0] sm:$0xff]
        %619 = vst [vmem:[%s49 + $0x8e0] sm:$0xff] %v618
        %v620 = vld [vmem:[%s48 + $0x8e8] sm:$0xff]
        %621 = vst [vmem:[%s49 + $0x8e8] sm:$0xff] %v620
        %v622 = vld [vmem:[%s48 + $0x8f0] sm:$0xff]
        %623 = vst [vmem:[%s49 + $0x8f0] sm:$0xff] %v622
        %v624 = vld [vmem:[%s48 + $0x8f8] sm:$0xff]
        %625 = vst [vmem:[%s49 + $0x8f8] sm:$0xff] %v624
        %v626 = vld [vmem:[%s48 + $0x900] sm:$0xff]
        %627 = vst [vmem:[%s49 + $0x900] sm:$0xff] %v626
        %v628 = vld [vmem:[%s48 + $0x908] sm:$0xff]
        %629 = vst [vmem:[%s49 + $0x908] sm:$0xff] %v628
        %v630 = vld [vmem:[%s48 + $0x910] sm:$0xff]
        %631 = vst [vmem:[%s49 + $0x910] sm:$0xff] %v630
        %v632 = vld [vmem:[%s48 + $0x918] sm:$0xff]
        %633 = vst [vmem:[%s49 + $0x918] sm:$0xff] %v632
        %v634 = vld [vmem:[%s48 + $0x920] sm:$0xff]
        %635 = vst [vmem:[%s49 + $0x920] sm:$0xff] %v634
        %v636 = vld [vmem:[%s48 + $0x928] sm:$0xff]
        %637 = vst [vmem:[%s49 + $0x928] sm:$0xff] %v636
        %v638 = vld [vmem:[%s48 + $0x930] sm:$0xff]
        %639 = vst [vmem:[%s49 + $0x930] sm:$0xff] %v638
        %v640 = vld [vmem:[%s48 + $0x938] sm:$0xff]
        %641 = vst [vmem:[%s49 + $0x938] sm:$0xff] %v640
        %v642 = vld [vmem:[%s48 + $0x940] sm:$0xff]
        %643 = vst [vmem:[%s49 + $0x940] sm:$0xff] %v642
        %v644 = vld [vmem:[%s48 + $0x948] sm:$0xff]
        %645 = vst [vmem:[%s49 + $0x948] sm:$0xff] %v644
        %v646 = vld [vmem:[%s48 + $0x950] sm:$0xff]
        %647 = vst [vmem:[%s49 + $0x950] sm:$0xff] %v646
        %v648 = vld [vmem:[%s48 + $0x958] sm:$0xff]
        %649 = vst [vmem:[%s49 + $0x958] sm:$0xff] %v648
        %v650 = vld [vmem:[%s48 + $0x960] sm:$0xff]
        %651 = vst [vmem:[%s49 + $0x960] sm:$0xff] %v650
        %v652 = vld [vmem:[%s48 + $0x968] sm:$0xff]
        %653 = vst [vmem:[%s49 + $0x968] sm:$0xff] %v652
        %v654 = vld [vmem:[%s48 + $0x970] sm:$0xff]
        %655 = vst [vmem:[%s49 + $0x970] sm:$0xff] %v654
        %v656 = vld [vmem:[%s48 + $0x978] sm:$0xff]
        %657 = vst [vmem:[%s49 + $0x978] sm:$0xff] %v656
        %v658 = vld [vmem:[%s48 + $0x980] sm:$0xff]
        %659 = vst [vmem:[%s49 + $0x980] sm:$0xff] %v658
        %v660 = vld [vmem:[%s48 + $0x988] sm:$0xff]
        %661 = vst [vmem:[%s49 + $0x988] sm:$0xff] %v660
        %v662 = vld [vmem:[%s48 + $0x990] sm:$0xff]
        %663 = vst [vmem:[%s49 + $0x990] sm:$0xff] %v662
        %v664 = vld [vmem:[%s48 + $0x998] sm:$0xff]
        %665 = vst [vmem:[%s49 + $0x998] sm:$0xff] %v664
        %v666 = vld [vmem:[%s48 + $0x9a0] sm:$0xff]
        %667 = vst [vmem:[%s49 + $0x9a0] sm:$0xff] %v666
        %v668 = vld [vmem:[%s48 + $0x9a8] sm:$0xff]
        %669 = vst [vmem:[%s49 + $0x9a8] sm:$0xff] %v668
        %v670 = vld [vmem:[%s48 + $0x9b0] sm:$0xff]
        %671 = vst [vmem:[%s49 + $0x9b0] sm:$0xff] %v670
        %v672 = vld [vmem:[%s48 + $0x9b8] sm:$0xff]
        %673 = vst [vmem:[%s49 + $0x9b8] sm:$0xff] %v672
        %v674 = vld [vmem:[%s48 + $0x9c0] sm:$0xff]
        %675 = vst [vmem:[%s49 + $0x9c0] sm:$0xff] %v674
        %v676 = vld [vmem:[%s48 + $0x9c8] sm:$0xff]
        %677 = vst [vmem:[%s49 + $0x9c8] sm:$0xff] %v676
        %v678 = vld [vmem:[%s48 + $0x9d0] sm:$0xff]
        %679 = vst [vmem:[%s49 + $0x9d0] sm:$0xff] %v678
        %v680 = vld [vmem:[%s48 + $0x9d8] sm:$0xff]
        %681 = vst [vmem:[%s49 + $0x9d8] sm:$0xff] %v680
        %v682 = vld [vmem:[%s48 + $0x9e0] sm:$0xff]
        %683 = vst [vmem:[%s49 + $0x9e0] sm:$0xff] %v682
        %v684 = vld [vmem:[%s48 + $0x9e8] sm:$0xff]
        %685 = vst [vmem:[%s49 + $0x9e8] sm:$0xff] %v684
        %v686 = vld [vmem:[%s48 + $0x9f0] sm:$0xff]
        %687 = vst [vmem:[%s49 + $0x9f0] sm:$0xff] %v686
        %v688 = vld [vmem:[%s48 + $0x9f8] sm:$0xff]
        %689 = vst [vmem:[%s49 + $0x9f8] sm:$0xff] %v688
        %v690 = vld [vmem:[%s48 + $0xa00] sm:$0xff]
        %691 = vst [vmem:[%s49 + $0xa00] sm:$0xff] %v690
        %v692 = vld [vmem:[%s48 + $0xa08] sm:$0xff]
        %693 = vst [vmem:[%s49 + $0xa08] sm:$0xff] %v692
        %v694 = vld [vmem:[%s48 + $0xa10] sm:$0xff]
        %695 = vst [vmem:[%s49 + $0xa10] sm:$0xff] %v694
        %v696 = vld [vmem:[%s48 + $0xa18] sm:$0xff]
        %697 = vst [vmem:[%s49 + $0xa18] sm:$0xff] %v696
        %v698 = vld [vmem:[%s48 + $0xa20] sm:$0xff]
        %699 = vst [vmem:[%s49 + $0xa20] sm:$0xff] %v698
        %v700 = vld [vmem:[%s48 + $0xa28] sm:$0xff]
        %701 = vst [vmem:[%s49 + $0xa28] sm:$0xff] %v700
        %v702 = vld [vmem:[%s48 + $0xa30] sm:$0xff]
        %703 = vst [vmem:[%s49 + $0xa30] sm:$0xff] %v702
        %v704 = vld [vmem:[%s48 + $0xa38] sm:$0xff]
        %705 = vst [vmem:[%s49 + $0xa38] sm:$0xff] %v704
        %v706 = vld [vmem:[%s48 + $0xa40] sm:$0xff]
        %707 = vst [vmem:[%s49 + $0xa40] sm:$0xff] %v706
        %v708 = vld [vmem:[%s48 + $0xa48] sm:$0xff]
        %709 = vst [vmem:[%s49 + $0xa48] sm:$0xff] %v708
        %v710 = vld [vmem:[%s48 + $0xa50] sm:$0xff]
        %711 = vst [vmem:[%s49 + $0xa50] sm:$0xff] %v710
        %v712 = vld [vmem:[%s48 + $0xa58] sm:$0xff]
        %713 = vst [vmem:[%s49 + $0xa58] sm:$0xff] %v712
        %v714 = vld [vmem:[%s48 + $0xa60] sm:$0xff]
        %715 = vst [vmem:[%s49 + $0xa60] sm:$0xff] %v714
        %v716 = vld [vmem:[%s48 + $0xa68] sm:$0xff]
        %717 = vst [vmem:[%s49 + $0xa68] sm:$0xff] %v716
        %v718 = vld [vmem:[%s48 + $0xa70] sm:$0xff]
        %719 = vst [vmem:[%s49 + $0xa70] sm:$0xff] %v718
        %v720 = vld [vmem:[%s48 + $0xa78] sm:$0xff]
        %721 = vst [vmem:[%s49 + $0xa78] sm:$0xff] %v720
        %v722 = vld [vmem:[%s48 + $0xa80] sm:$0xff]
        %723 = vst [vmem:[%s49 + $0xa80] sm:$0xff] %v722
        %v724 = vld [vmem:[%s48 + $0xa88] sm:$0xff]
        %725 = vst [vmem:[%s49 + $0xa88] sm:$0xff] %v724
        %v726 = vld [vmem:[%s48 + $0xa90] sm:$0xff]
        %727 = vst [vmem:[%s49 + $0xa90] sm:$0xff] %v726
        %v728 = vld [vmem:[%s48 + $0xa98] sm:$0xff]
        %729 = vst [vmem:[%s49 + $0xa98] sm:$0xff] %v728
        %v730 = vld [vmem:[%s48 + $0xaa0] sm:$0xff]
        %731 = vst [vmem:[%s49 + $0xaa0] sm:$0xff] %v730
        %v732 = vld [vmem:[%s48 + $0xaa8] sm:$0xff]
        %733 = vst [vmem:[%s49 + $0xaa8] sm:$0xff] %v732
        %v734 = vld [vmem:[%s48 + $0xab0] sm:$0xff]
        %735 = vst [vmem:[%s49 + $0xab0] sm:$0xff] %v734
        %v736 = vld [vmem:[%s48 + $0xab8] sm:$0xff]
        %737 = vst [vmem:[%s49 + $0xab8] sm:$0xff] %v736
        %v738 = vld [vmem:[%s48 + $0xac0] sm:$0xff]
        %739 = vst [vmem:[%s49 + $0xac0] sm:$0xff] %v738
        %v740 = vld [vmem:[%s48 + $0xac8] sm:$0xff]
        %741 = vst [vmem:[%s49 + $0xac8] sm:$0xff] %v740
        %v742 = vld [vmem:[%s48 + $0xad0] sm:$0xff]
        %743 = vst [vmem:[%s49 + $0xad0] sm:$0xff] %v742
        %v744 = vld [vmem:[%s48 + $0xad8] sm:$0xff]
        %745 = vst [vmem:[%s49 + $0xad8] sm:$0xff] %v744
        %v746 = vld [vmem:[%s48 + $0xae0] sm:$0xff]
        %747 = vst [vmem:[%s49 + $0xae0] sm:$0xff] %v746
        %v748 = vld [vmem:[%s48 + $0xae8] sm:$0xff]
        %749 = vst [vmem:[%s49 + $0xae8] sm:$0xff] %v748
        %v750 = vld [vmem:[%s48 + $0xaf0] sm:$0xff]
        %751 = vst [vmem:[%s49 + $0xaf0] sm:$0xff] %v750
        %v752 = vld [vmem:[%s48 + $0xaf8] sm:$0xff]
        %753 = vst [vmem:[%s49 + $0xaf8] sm:$0xff] %v752
        %v754 = vld [vmem:[%s48 + $0xb00] sm:$0xff]
        %755 = vst [vmem:[%s49 + $0xb00] sm:$0xff] %v754
        %v756 = vld [vmem:[%s48 + $0xb08] sm:$0xff]
        %757 = vst [vmem:[%s49 + $0xb08] sm:$0xff] %v756
        %v758 = vld [vmem:[%s48 + $0xb10] sm:$0xff]
        %759 = vst [vmem:[%s49 + $0xb10] sm:$0xff] %v758
        %v760 = vld [vmem:[%s48 + $0xb18] sm:$0xff]
        %761 = vst [vmem:[%s49 + $0xb18] sm:$0xff] %v760
        %v762 = vld [vmem:[%s48 + $0xb20] sm:$0xff]
        %763 = vst [vmem:[%s49 + $0xb20] sm:$0xff] %v762
        %v764 = vld [vmem:[%s48 + $0xb28] sm:$0xff]
        %765 = vst [vmem:[%s49 + $0xb28] sm:$0xff] %v764
        %v766 = vld [vmem:[%s48 + $0xb30] sm:$0xff]
        %767 = vst [vmem:[%s49 + $0xb30] sm:$0xff] %v766
        %v768 = vld [vmem:[%s48 + $0xb38] sm:$0xff]
        %769 = vst [vmem:[%s49 + $0xb38] sm:$0xff] %v768
        %v770 = vld [vmem:[%s48 + $0xb40] sm:$0xff]
        %771 = vst [vmem:[%s49 + $0xb40] sm:$0xff] %v770
        %v772 = vld [vmem:[%s48 + $0xb48] sm:$0xff]
        %773 = vst [vmem:[%s49 + $0xb48] sm:$0xff] %v772
        %v774 = vld [vmem:[%s48 + $0xb50] sm:$0xff]
        %775 = vst [vmem:[%s49 + $0xb50] sm:$0xff] %v774
        %v776 = vld [vmem:[%s48 + $0xb58] sm:$0xff]
        %777 = vst [vmem:[%s49 + $0xb58] sm:$0xff] %v776
        %v778 = vld [vmem:[%s48 + $0xb60] sm:$0xff]
        %779 = vst [vmem:[%s49 + $0xb60] sm:$0xff] %v778
        %v780 = vld [vmem:[%s48 + $0xb68] sm:$0xff]
        %781 = vst [vmem:[%s49 + $0xb68] sm:$0xff] %v780
        %v782 = vld [vmem:[%s48 + $0xb70] sm:$0xff]
        %783 = vst [vmem:[%s49 + $0xb70] sm:$0xff] %v782
        %v784 = vld [vmem:[%s48 + $0xb78] sm:$0xff]
        %785 = vst [vmem:[%s49 + $0xb78] sm:$0xff] %v784
        %v786 = vld [vmem:[%s48 + $0xb80] sm:$0xff]
        %787 = vst [vmem:[%s49 + $0xb80] sm:$0xff] %v786
        %v788 = vld [vmem:[%s48 + $0xb88] sm:$0xff]
        %789 = vst [vmem:[%s49 + $0xb88] sm:$0xff] %v788
        %v790 = vld [vmem:[%s48 + $0xb90] sm:$0xff]
        %791 = vst [vmem:[%s49 + $0xb90] sm:$0xff] %v790
        %v792 = vld [vmem:[%s48 + $0xb98] sm:$0xff]
        %793 = vst [vmem:[%s49 + $0xb98] sm:$0xff] %v792
        %v794 = vld [vmem:[%s48 + $0xba0] sm:$0xff]
        %795 = vst [vmem:[%s49 + $0xba0] sm:$0xff] %v794
        %v796 = vld [vmem:[%s48 + $0xba8] sm:$0xff]
        %797 = vst [vmem:[%s49 + $0xba8] sm:$0xff] %v796
        %v798 = vld [vmem:[%s48 + $0xbb0] sm:$0xff]
        %799 = vst [vmem:[%s49 + $0xbb0] sm:$0xff] %v798
        %v800 = vld [vmem:[%s48 + $0xbb8] sm:$0xff]
        %801 = vst [vmem:[%s49 + $0xbb8] sm:$0xff] %v800
        %v802 = vld [vmem:[%s48 + $0xbc0] sm:$0xff]
        %803 = vst [vmem:[%s49 + $0xbc0] sm:$0xff] %v802
        %v804 = vld [vmem:[%s48 + $0xbc8] sm:$0xff]
        %805 = vst [vmem:[%s49 + $0xbc8] sm:$0xff] %v804
        %v806 = vld [vmem:[%s48 + $0xbd0] sm:$0xff]
        %807 = vst [vmem:[%s49 + $0xbd0] sm:$0xff] %v806
        %v808 = vld [vmem:[%s48 + $0xbd8] sm:$0xff]
        %809 = vst [vmem:[%s49 + $0xbd8] sm:$0xff] %v808
        %v810 = vld [vmem:[%s48 + $0xbe0] sm:$0xff]
        %811 = vst [vmem:[%s49 + $0xbe0] sm:$0xff] %v810
        %v812 = vld [vmem:[%s48 + $0xbe8] sm:$0xff]
        %813 = vst [vmem:[%s49 + $0xbe8] sm:$0xff] %v812
        %v814 = vld [vmem:[%s48 + $0xbf0] sm:$0xff]
        %815 = vst [vmem:[%s49 + $0xbf0] sm:$0xff] %v814
        %v816 = vld [vmem:[%s48 + $0xbf8] sm:$0xff]
        %817 = vst [vmem:[%s49 + $0xbf8] sm:$0xff] %v816
        %v818 = vld [vmem:[%s48 + $0xc00] sm:$0xff]
        %819 = vst [vmem:[%s49 + $0xc00] sm:$0xff] %v818
        %v820 = vld [vmem:[%s48 + $0xc08] sm:$0xff]
        %821 = vst [vmem:[%s49 + $0xc08] sm:$0xff] %v820
        %v822 = vld [vmem:[%s48 + $0xc10] sm:$0xff]
        %823 = vst [vmem:[%s49 + $0xc10] sm:$0xff] %v822
        %v824 = vld [vmem:[%s48 + $0xc18] sm:$0xff]
        %825 = vst [vmem:[%s49 + $0xc18] sm:$0xff] %v824
        %v826 = vld [vmem:[%s48 + $0xc20] sm:$0xff]
        %827 = vst [vmem:[%s49 + $0xc20] sm:$0xff] %v826
        %v828 = vld [vmem:[%s48 + $0xc28] sm:$0xff]
        %829 = vst [vmem:[%s49 + $0xc28] sm:$0xff] %v828
        %v830 = vld [vmem:[%s48 + $0xc30] sm:$0xff]
        %831 = vst [vmem:[%s49 + $0xc30] sm:$0xff] %v830
        %v832 = vld [vmem:[%s48 + $0xc38] sm:$0xff]
        %833 = vst [vmem:[%s49 + $0xc38] sm:$0xff] %v832
        %v834 = vld [vmem:[%s48 + $0xc40] sm:$0xff]
        %835 = vst [vmem:[%s49 + $0xc40] sm:$0xff] %v834
        %v836 = vld [vmem:[%s48 + $0xc48] sm:$0xff]
        %837 = vst [vmem:[%s49 + $0xc48] sm:$0xff] %v836
        %v838 = vld [vmem:[%s48 + $0xc50] sm:$0xff]
        %839 = vst [vmem:[%s49 + $0xc50] sm:$0xff] %v838
        %v840 = vld [vmem:[%s48 + $0xc58] sm:$0xff]
        %841 = vst [vmem:[%s49 + $0xc58] sm:$0xff] %v840
        %v842 = vld [vmem:[%s48 + $0xc60] sm:$0xff]
        %843 = vst [vmem:[%s49 + $0xc60] sm:$0xff] %v842
        %v844 = vld [vmem:[%s48 + $0xc68] sm:$0xff]
        %845 = vst [vmem:[%s49 + $0xc68] sm:$0xff] %v844
        %v846 = vld [vmem:[%s48 + $0xc70] sm:$0xff]
        %847 = vst [vmem:[%s49 + $0xc70] sm:$0xff] %v846
        %v848 = vld [vmem:[%s48 + $0xc78] sm:$0xff]
        %849 = vst [vmem:[%s49 + $0xc78] sm:$0xff] %v848
        %v850 = vld [vmem:[%s48 + $0xc80] sm:$0xff]
        %851 = vst [vmem:[%s49 + $0xc80] sm:$0xff] %v850
        %v852 = vld [vmem:[%s48 + $0xc88] sm:$0xff]
        %853 = vst [vmem:[%s49 + $0xc88] sm:$0xff] %v852
        %v854 = vld [vmem:[%s48 + $0xc90] sm:$0xff]
        %855 = vst [vmem:[%s49 + $0xc90] sm:$0xff] %v854
        %v856 = vld [vmem:[%s48 + $0xc98] sm:$0xff]
        %857 = vst [vmem:[%s49 + $0xc98] sm:$0xff] %v856
        %v858 = vld [vmem:[%s48 + $0xca0] sm:$0xff]
        %859 = vst [vmem:[%s49 + $0xca0] sm:$0xff] %v858
        %v860 = vld [vmem:[%s48 + $0xca8] sm:$0xff]
        %861 = vst [vmem:[%s49 + $0xca8] sm:$0xff] %v860
        %v862 = vld [vmem:[%s48 + $0xcb0] sm:$0xff]
        %863 = vst [vmem:[%s49 + $0xcb0] sm:$0xff] %v862
        %v864 = vld [vmem:[%s48 + $0xcb8] sm:$0xff]
        %865 = vst [vmem:[%s49 + $0xcb8] sm:$0xff] %v864
        %v866 = vld [vmem:[%s48 + $0xcc0] sm:$0xff]
        %867 = vst [vmem:[%s49 + $0xcc0] sm:$0xff] %v866
        %v868 = vld [vmem:[%s48 + $0xcc8] sm:$0xff]
        %869 = vst [vmem:[%s49 + $0xcc8] sm:$0xff] %v868
        %v870 = vld [vmem:[%s48 + $0xcd0] sm:$0xff]
        %871 = vst [vmem:[%s49 + $0xcd0] sm:$0xff] %v870
        %v872 = vld [vmem:[%s48 + $0xcd8] sm:$0xff]
        %873 = vst [vmem:[%s49 + $0xcd8] sm:$0xff] %v872
        %v874 = vld [vmem:[%s48 + $0xce0] sm:$0xff]
        %875 = vst [vmem:[%s49 + $0xce0] sm:$0xff] %v874
        %v876 = vld [vmem:[%s48 + $0xce8] sm:$0xff]
        %877 = vst [vmem:[%s49 + $0xce8] sm:$0xff] %v876
        %v878 = vld [vmem:[%s48 + $0xcf0] sm:$0xff]
        %879 = vst [vmem:[%s49 + $0xcf0] sm:$0xff] %v878
        %v880 = vld [vmem:[%s48 + $0xcf8] sm:$0xff]
        %881 = vst [vmem:[%s49 + $0xcf8] sm:$0xff] %v880
        %v882 = vld [vmem:[%s48 + $0xd00] sm:$0xff]
        %883 = vst [vmem:[%s49 + $0xd00] sm:$0xff] %v882
        %v884 = vld [vmem:[%s48 + $0xd08] sm:$0xff]
        %885 = vst [vmem:[%s49 + $0xd08] sm:$0xff] %v884
        %v886 = vld [vmem:[%s48 + $0xd10] sm:$0xff]
        %887 = vst [vmem:[%s49 + $0xd10] sm:$0xff] %v886
        %v888 = vld [vmem:[%s48 + $0xd18] sm:$0xff]
        %889 = vst [vmem:[%s49 + $0xd18] sm:$0xff] %v888
        %v890 = vld [vmem:[%s48 + $0xd20] sm:$0xff]
        %891 = vst [vmem:[%s49 + $0xd20] sm:$0xff] %v890
        %v892 = vld [vmem:[%s48 + $0xd28] sm:$0xff]
        %893 = vst [vmem:[%s49 + $0xd28] sm:$0xff] %v892
        %v894 = vld [vmem:[%s48 + $0xd30] sm:$0xff]
        %895 = vst [vmem:[%s49 + $0xd30] sm:$0xff] %v894
        %v896 = vld [vmem:[%s48 + $0xd38] sm:$0xff]
        %897 = vst [vmem:[%s49 + $0xd38] sm:$0xff] %v896
        %v898 = vld [vmem:[%s48 + $0xd40] sm:$0xff]
        %899 = vst [vmem:[%s49 + $0xd40] sm:$0xff] %v898
        %v900 = vld [vmem:[%s48 + $0xd48] sm:$0xff]
        %901 = vst [vmem:[%s49 + $0xd48] sm:$0xff] %v900
        %v902 = vld [vmem:[%s48 + $0xd50] sm:$0xff]
        %903 = vst [vmem:[%s49 + $0xd50] sm:$0xff] %v902
        %v904 = vld [vmem:[%s48 + $0xd58] sm:$0xff]
        %905 = vst [vmem:[%s49 + $0xd58] sm:$0xff] %v904
        %v906 = vld [vmem:[%s48 + $0xd60] sm:$0xff]
        %907 = vst [vmem:[%s49 + $0xd60] sm:$0xff] %v906
        %v908 = vld [vmem:[%s48 + $0xd68] sm:$0xff]
        %909 = vst [vmem:[%s49 + $0xd68] sm:$0xff] %v908
        %v910 = vld [vmem:[%s48 + $0xd70] sm:$0xff]
        %911 = vst [vmem:[%s49 + $0xd70] sm:$0xff] %v910
        %v912 = vld [vmem:[%s48 + $0xd78] sm:$0xff]
        %913 = vst [vmem:[%s49 + $0xd78] sm:$0xff] %v912
        %v914 = vld [vmem:[%s48 + $0xd80] sm:$0xff]
        %915 = vst [vmem:[%s49 + $0xd80] sm:$0xff] %v914
        %v916 = vld [vmem:[%s48 + $0xd88] sm:$0xff]
        %917 = vst [vmem:[%s49 + $0xd88] sm:$0xff] %v916
        %v918 = vld [vmem:[%s48 + $0xd90] sm:$0xff]
        %919 = vst [vmem:[%s49 + $0xd90] sm:$0xff] %v918
        %v920 = vld [vmem:[%s48 + $0xd98] sm:$0xff]
        %921 = vst [vmem:[%s49 + $0xd98] sm:$0xff] %v920
        %v922 = vld [vmem:[%s48 + $0xda0] sm:$0xff]
        %923 = vst [vmem:[%s49 + $0xda0] sm:$0xff] %v922
        %v924 = vld [vmem:[%s48 + $0xda8] sm:$0xff]
        %925 = vst [vmem:[%s49 + $0xda8] sm:$0xff] %v924
        %v926 = vld [vmem:[%s48 + $0xdb0] sm:$0xff]
        %927 = vst [vmem:[%s49 + $0xdb0] sm:$0xff] %v926
        %v928 = vld [vmem:[%s48 + $0xdb8] sm:$0xff]
        %929 = vst [vmem:[%s49 + $0xdb8] sm:$0xff] %v928
        %v930 = vld [vmem:[%s48 + $0xdc0] sm:$0xff]
        %931 = vst [vmem:[%s49 + $0xdc0] sm:$0xff] %v930
        %v932 = vld [vmem:[%s48 + $0xdc8] sm:$0xff]
        %933 = vst [vmem:[%s49 + $0xdc8] sm:$0xff] %v932
        %v934 = vld [vmem:[%s48 + $0xdd0] sm:$0xff]
        %935 = vst [vmem:[%s49 + $0xdd0] sm:$0xff] %v934
        %v936 = vld [vmem:[%s48 + $0xdd8] sm:$0xff]
        %937 = vst [vmem:[%s49 + $0xdd8] sm:$0xff] %v936
        %v938 = vld [vmem:[%s48 + $0xde0] sm:$0xff]
        %939 = vst [vmem:[%s49 + $0xde0] sm:$0xff] %v938
        %v940 = vld [vmem:[%s48 + $0xde8] sm:$0xff]
        %941 = vst [vmem:[%s49 + $0xde8] sm:$0xff] %v940
        %v942 = vld [vmem:[%s48 + $0xdf0] sm:$0xff]
        %943 = vst [vmem:[%s49 + $0xdf0] sm:$0xff] %v942
        %v944 = vld [vmem:[%s48 + $0xdf8] sm:$0xff]
        %945 = vst [vmem:[%s49 + $0xdf8] sm:$0xff] %v944
        %v946 = vld [vmem:[%s48 + $0xe00] sm:$0xff]
        %947 = vst [vmem:[%s49 + $0xe00] sm:$0xff] %v946
        %v948 = vld [vmem:[%s48 + $0xe08] sm:$0xff]
        %949 = vst [vmem:[%s49 + $0xe08] sm:$0xff] %v948
        %v950 = vld [vmem:[%s48 + $0xe10] sm:$0xff]
        %951 = vst [vmem:[%s49 + $0xe10] sm:$0xff] %v950
        %v952 = vld [vmem:[%s48 + $0xe18] sm:$0xff]
        %953 = vst [vmem:[%s49 + $0xe18] sm:$0xff] %v952
        %v954 = vld [vmem:[%s48 + $0xe20] sm:$0xff]
        %955 = vst [vmem:[%s49 + $0xe20] sm:$0xff] %v954
        %v956 = vld [vmem:[%s48 + $0xe28] sm:$0xff]
        %957 = vst [vmem:[%s49 + $0xe28] sm:$0xff] %v956
        %v958 = vld [vmem:[%s48 + $0xe30] sm:$0xff]
        %959 = vst [vmem:[%s49 + $0xe30] sm:$0xff] %v958
        %v960 = vld [vmem:[%s48 + $0xe38] sm:$0xff]
        %961 = vst [vmem:[%s49 + $0xe38] sm:$0xff] %v960
        %v962 = vld [vmem:[%s48 + $0xe40] sm:$0xff]
        %963 = vst [vmem:[%s49 + $0xe40] sm:$0xff] %v962
        %v964 = vld [vmem:[%s48 + $0xe48] sm:$0xff]
        %965 = vst [vmem:[%s49 + $0xe48] sm:$0xff] %v964
        %v966 = vld [vmem:[%s48 + $0xe50] sm:$0xff]
        %967 = vst [vmem:[%s49 + $0xe50] sm:$0xff] %v966
        %v968 = vld [vmem:[%s48 + $0xe58] sm:$0xff]
        %969 = vst [vmem:[%s49 + $0xe58] sm:$0xff] %v968
        %v970 = vld [vmem:[%s48 + $0xe60] sm:$0xff]
        %971 = vst [vmem:[%s49 + $0xe60] sm:$0xff] %v970
        %v972 = vld [vmem:[%s48 + $0xe68] sm:$0xff]
        %973 = vst [vmem:[%s49 + $0xe68] sm:$0xff] %v972
        %v974 = vld [vmem:[%s48 + $0xe70] sm:$0xff]
        %975 = vst [vmem:[%s49 + $0xe70] sm:$0xff] %v974
        %v976 = vld [vmem:[%s48 + $0xe78] sm:$0xff]
        %977 = vst [vmem:[%s49 + $0xe78] sm:$0xff] %v976
        %v978 = vld [vmem:[%s48 + $0xe80] sm:$0xff]
        %979 = vst [vmem:[%s49 + $0xe80] sm:$0xff] %v978
        %v980 = vld [vmem:[%s48 + $0xe88] sm:$0xff]
        %981 = vst [vmem:[%s49 + $0xe88] sm:$0xff] %v980
        %v982 = vld [vmem:[%s48 + $0xe90] sm:$0xff]
        %983 = vst [vmem:[%s49 + $0xe90] sm:$0xff] %v982
        %v984 = vld [vmem:[%s48 + $0xe98] sm:$0xff]
        %985 = vst [vmem:[%s49 + $0xe98] sm:$0xff] %v984
        %v986 = vld [vmem:[%s48 + $0xea0] sm:$0xff]
        %987 = vst [vmem:[%s49 + $0xea0] sm:$0xff] %v986
        %v988 = vld [vmem:[%s48 + $0xea8] sm:$0xff]
        %989 = vst [vmem:[%s49 + $0xea8] sm:$0xff] %v988
        %v990 = vld [vmem:[%s48 + $0xeb0] sm:$0xff]
        %991 = vst [vmem:[%s49 + $0xeb0] sm:$0xff] %v990
        %v992 = vld [vmem:[%s48 + $0xeb8] sm:$0xff]
        %993 = vst [vmem:[%s49 + $0xeb8] sm:$0xff] %v992
        %v994 = vld [vmem:[%s48 + $0xec0] sm:$0xff]
        %995 = vst [vmem:[%s49 + $0xec0] sm:$0xff] %v994
        %v996 = vld [vmem:[%s48 + $0xec8] sm:$0xff]
        %997 = vst [vmem:[%s49 + $0xec8] sm:$0xff] %v996
        %v998 = vld [vmem:[%s48 + $0xed0] sm:$0xff]
        %999 = vst [vmem:[%s49 + $0xed0] sm:$0xff] %v998
        %v1000 = vld [vmem:[%s48 + $0xed8] sm:$0xff]
        %1001 = vst [vmem:[%s49 + $0xed8] sm:$0xff] %v1000
        %v1002 = vld [vmem:[%s48 + $0xee0] sm:$0xff]
        %1003 = vst [vmem:[%s49 + $0xee0] sm:$0xff] %v1002
        %v1004 = vld [vmem:[%s48 + $0xee8] sm:$0xff]
        %1005 = vst [vmem:[%s49 + $0xee8] sm:$0xff] %v1004
        %v1006 = vld [vmem:[%s48 + $0xef0] sm:$0xff]
        %1007 = vst [vmem:[%s49 + $0xef0] sm:$0xff] %v1006
        %v1008 = vld [vmem:[%s48 + $0xef8] sm:$0xff]
        %1009 = vst [vmem:[%s49 + $0xef8] sm:$0xff] %v1008
        %v1010 = vld [vmem:[%s48 + $0xf00] sm:$0xff]
        %1011 = vst [vmem:[%s49 + $0xf00] sm:$0xff] %v1010
        %v1012 = vld [vmem:[%s48 + $0xf08] sm:$0xff]
        %1013 = vst [vmem:[%s49 + $0xf08] sm:$0xff] %v1012
        %v1014 = vld [vmem:[%s48 + $0xf10] sm:$0xff]
        %1015 = vst [vmem:[%s49 + $0xf10] sm:$0xff] %v1014
        %v1016 = vld [vmem:[%s48 + $0xf18] sm:$0xff]
        %1017 = vst [vmem:[%s49 + $0xf18] sm:$0xff] %v1016
        %v1018 = vld [vmem:[%s48 + $0xf20] sm:$0xff]
        %1019 = vst [vmem:[%s49 + $0xf20] sm:$0xff] %v1018
        %v1020 = vld [vmem:[%s48 + $0xf28] sm:$0xff]
        %1021 = vst [vmem:[%s49 + $0xf28] sm:$0xff] %v1020
        %v1022 = vld [vmem:[%s48 + $0xf30] sm:$0xff]
        %1023 = vst [vmem:[%s49 + $0xf30] sm:$0xff] %v1022
        %v1024 = vld [vmem:[%s48 + $0xf38] sm:$0xff]
        %1025 = vst [vmem:[%s49 + $0xf38] sm:$0xff] %v1024
        %v1026 = vld [vmem:[%s48 + $0xf40] sm:$0xff]
        %1027 = vst [vmem:[%s49 + $0xf40] sm:$0xff] %v1026
        %v1028 = vld [vmem:[%s48 + $0xf48] sm:$0xff]
        %1029 = vst [vmem:[%s49 + $0xf48] sm:$0xff] %v1028
        %v1030 = vld [vmem:[%s48 + $0xf50] sm:$0xff]
        %1031 = vst [vmem:[%s49 + $0xf50] sm:$0xff] %v1030
        %v1032 = vld [vmem:[%s48 + $0xf58] sm:$0xff]
        %1033 = vst [vmem:[%s49 + $0xf58] sm:$0xff] %v1032
        %v1034 = vld [vmem:[%s48 + $0xf60] sm:$0xff]
        %1035 = vst [vmem:[%s49 + $0xf60] sm:$0xff] %v1034
        %v1036 = vld [vmem:[%s48 + $0xf68] sm:$0xff]
        %1037 = vst [vmem:[%s49 + $0xf68] sm:$0xff] %v1036
        %v1038 = vld [vmem:[%s48 + $0xf70] sm:$0xff]
        %1039 = vst [vmem:[%s49 + $0xf70] sm:$0xff] %v1038
        %v1040 = vld [vmem:[%s48 + $0xf78] sm:$0xff]
        %1041 = vst [vmem:[%s49 + $0xf78] sm:$0xff] %v1040
        %v1042 = vld [vmem:[%s48 + $0xf80] sm:$0xff]
        %1043 = vst [vmem:[%s49 + $0xf80] sm:$0xff] %v1042
        %v1044 = vld [vmem:[%s48 + $0xf88] sm:$0xff]
        %1045 = vst [vmem:[%s49 + $0xf88] sm:$0xff] %v1044
        %v1046 = vld [vmem:[%s48 + $0xf90] sm:$0xff]
        %1047 = vst [vmem:[%s49 + $0xf90] sm:$0xff] %v1046
        %v1048 = vld [vmem:[%s48 + $0xf98] sm:$0xff]
        %1049 = vst [vmem:[%s49 + $0xf98] sm:$0xff] %v1048
        %v1050 = vld [vmem:[%s48 + $0xfa0] sm:$0xff]
        %1051 = vst [vmem:[%s49 + $0xfa0] sm:$0xff] %v1050
        %v1052 = vld [vmem:[%s48 + $0xfa8] sm:$0xff]
        %1053 = vst [vmem:[%s49 + $0xfa8] sm:$0xff] %v1052
        %v1054 = vld [vmem:[%s48 + $0xfb0] sm:$0xff]
        %1055 = vst [vmem:[%s49 + $0xfb0] sm:$0xff] %v1054
        %v1056 = vld [vmem:[%s48 + $0xfb8] sm:$0xff]
        %1057 = vst [vmem:[%s49 + $0xfb8] sm:$0xff] %v1056
      $region34: #{generator_forward.1} parent=28 // loop_footer
        %s47 = sadd.s32 1, %s43
      $region35: #{generator_forward.1} parent=28 // loop_footer_branch
        %42 = sbr.rel target = $region31
      $region36: #{generator_forward.1} parent=28 // loop_exit
        _
    $region29: #{generator_forward.1} parent=1 // pred_fallthru
      _
    // Predicated region
    $region37: #{generator_forward.1} parent=1 // pred_check
      _
    $region38: #{generator_forward.1} parent=1 // pred_check_branch
      %1059 = sbr.rel target = $region40
    $region39: #{generator_forward.1} parent=1 // pred_region
      _
    $region40: #{generator_forward.1} parent=1 // pred_fallthru
      _
    // Predicated region
    $region41: #{generator_forward.1} parent=1 // pred_check
      _
    $region42: #{generator_forward.1} parent=1 // pred_check_branch
      %1062 = sbr.rel (0) target = $region44
    $region43: #{generator_forward.1} parent=1 // pred_region
      %1063 = vsyncadd [#allocation6], 64512
    $region44: #{generator_forward.1} parent=1 // pred_fallthru
      _
    %s1064 = scalar_lea.sflag [#allocation6], 1
    // Predicated region
    $region45: #{generator_forward.1} parent=1 // pred_check
      _
    $region46: #{generator_forward.1} parent=1 // pred_check_branch
      %1066 = sbr.rel (0) target = $region48
    $region47: #{generator_forward.1} parent=1 // pred_region
      loop: start=0, step=1, limit=1
      $region49: #{generator_forward.1} parent=47 // loop_pre_header
        _
      $region50: #{generator_forward.1} parent=47 // loop_header
        %s1068 = sphi 0, %s1072
        %p1069 = scmp.ge.s32.totalorder %s1068, 1
        %s1073 = sphi %s6, %s6
        %s1074 = sphi [#allocation3], [#allocation3]
      $region51: #{generator_forward.1} parent=47 // loop_header_branch
        %1071 = sbr.rel (%p1069) target = $region55
      $region52: #{generator_forward.1} parent=47 // loop_body
        %v1075 = vld [vmem:[%s1073] sm:$0xff]
        %1076 = vst [vmem:[%s1074] sm:$0xff] %v1075
        %v1077 = vld [vmem:[%s1073 + $0x8] sm:$0xff]
        %1078 = vst [vmem:[%s1074 + $0x8] sm:$0xff] %v1077
        %v1079 = vld [vmem:[%s1073 + $0x10] sm:$0xff]
        %1080 = vst [vmem:[%s1074 + $0x10] sm:$0xff] %v1079
        %v1081 = vld [vmem:[%s1073 + $0x18] sm:$0xff]
        %1082 = vst [vmem:[%s1074 + $0x18] sm:$0xff] %v1081
        %v1083 = vld [vmem:[%s1073 + $0x20] sm:$0xff]
        %1084 = vst [vmem:[%s1074 + $0x20] sm:$0xff] %v1083
        %v1085 = vld [vmem:[%s1073 + $0x28] sm:$0xff]
        %1086 = vst [vmem:[%s1074 + $0x28] sm:$0xff] %v1085
        %v1087 = vld [vmem:[%s1073 + $0x30] sm:$0xff]
        %1088 = vst [vmem:[%s1074 + $0x30] sm:$0xff] %v1087
        %v1089 = vld [vmem:[%s1073 + $0x38] sm:$0xff]
        %1090 = vst [vmem:[%s1074 + $0x38] sm:$0xff] %v1089
        %v1091 = vld [vmem:[%s1073 + $0x40] sm:$0xff]
        %1092 = vst [vmem:[%s1074 + $0x40] sm:$0xff] %v1091
        %v1093 = vld [vmem:[%s1073 + $0x48] sm:$0xff]
        %1094 = vst [vmem:[%s1074 + $0x48] sm:$0xff] %v1093
        %v1095 = vld [vmem:[%s1073 + $0x50] sm:$0xff]
        %1096 = vst [vmem:[%s1074 + $0x50] sm:$0xff] %v1095
        %v1097 = vld [vmem:[%s1073 + $0x58] sm:$0xff]
        %1098 = vst [vmem:[%s1074 + $0x58] sm:$0xff] %v1097
        %v1099 = vld [vmem:[%s1073 + $0x60] sm:$0xff]
        %1100 = vst [vmem:[%s1074 + $0x60] sm:$0xff] %v1099
        %v1101 = vld [vmem:[%s1073 + $0x68] sm:$0xff]
        %1102 = vst [vmem:[%s1074 + $0x68] sm:$0xff] %v1101
        %v1103 = vld [vmem:[%s1073 + $0x70] sm:$0xff]
        %1104 = vst [vmem:[%s1074 + $0x70] sm:$0xff] %v1103
        %v1105 = vld [vmem:[%s1073 + $0x78] sm:$0xff]
        %1106 = vst [vmem:[%s1074 + $0x78] sm:$0xff] %v1105
        %v1107 = vld [vmem:[%s1073 + $0x80] sm:$0xff]
        %1108 = vst [vmem:[%s1074 + $0x80] sm:$0xff] %v1107
        %v1109 = vld [vmem:[%s1073 + $0x88] sm:$0xff]
        %1110 = vst [vmem:[%s1074 + $0x88] sm:$0xff] %v1109
        %v1111 = vld [vmem:[%s1073 + $0x90] sm:$0xff]
        %1112 = vst [vmem:[%s1074 + $0x90] sm:$0xff] %v1111
        %v1113 = vld [vmem:[%s1073 + $0x98] sm:$0xff]
        %1114 = vst [vmem:[%s1074 + $0x98] sm:$0xff] %v1113
        %v1115 = vld [vmem:[%s1073 + $0xa0] sm:$0xff]
        %1116 = vst [vmem:[%s1074 + $0xa0] sm:$0xff] %v1115
        %v1117 = vld [vmem:[%s1073 + $0xa8] sm:$0xff]
        %1118 = vst [vmem:[%s1074 + $0xa8] sm:$0xff] %v1117
        %v1119 = vld [vmem:[%s1073 + $0xb0] sm:$0xff]
        %1120 = vst [vmem:[%s1074 + $0xb0] sm:$0xff] %v1119
        %v1121 = vld [vmem:[%s1073 + $0xb8] sm:$0xff]
        %1122 = vst [vmem:[%s1074 + $0xb8] sm:$0xff] %v1121
        %v1123 = vld [vmem:[%s1073 + $0xc0] sm:$0xff]
        %1124 = vst [vmem:[%s1074 + $0xc0] sm:$0xff] %v1123
        %v1125 = vld [vmem:[%s1073 + $0xc8] sm:$0xff]
        %1126 = vst [vmem:[%s1074 + $0xc8] sm:$0xff] %v1125
        %v1127 = vld [vmem:[%s1073 + $0xd0] sm:$0xff]
        %1128 = vst [vmem:[%s1074 + $0xd0] sm:$0xff] %v1127
        %v1129 = vld [vmem:[%s1073 + $0xd8] sm:$0xff]
        %1130 = vst [vmem:[%s1074 + $0xd8] sm:$0xff] %v1129
        %v1131 = vld [vmem:[%s1073 + $0xe0] sm:$0xff]
        %1132 = vst [vmem:[%s1074 + $0xe0] sm:$0xff] %v1131
        %v1133 = vld [vmem:[%s1073 + $0xe8] sm:$0xff]
        %1134 = vst [vmem:[%s1074 + $0xe8] sm:$0xff] %v1133
        %v1135 = vld [vmem:[%s1073 + $0xf0] sm:$0xff]
        %1136 = vst [vmem:[%s1074 + $0xf0] sm:$0xff] %v1135
        %v1137 = vld [vmem:[%s1073 + $0xf8] sm:$0xff]
        %1138 = vst [vmem:[%s1074 + $0xf8] sm:$0xff] %v1137
        %v1139 = vld [vmem:[%s1073 + $0x100] sm:$0xff]
        %1140 = vst [vmem:[%s1074 + $0x100] sm:$0xff] %v1139
        %v1141 = vld [vmem:[%s1073 + $0x108] sm:$0xff]
        %1142 = vst [vmem:[%s1074 + $0x108] sm:$0xff] %v1141
        %v1143 = vld [vmem:[%s1073 + $0x110] sm:$0xff]
        %1144 = vst [vmem:[%s1074 + $0x110] sm:$0xff] %v1143
        %v1145 = vld [vmem:[%s1073 + $0x118] sm:$0xff]
        %1146 = vst [vmem:[%s1074 + $0x118] sm:$0xff] %v1145
        %v1147 = vld [vmem:[%s1073 + $0x120] sm:$0xff]
        %1148 = vst [vmem:[%s1074 + $0x120] sm:$0xff] %v1147
        %v1149 = vld [vmem:[%s1073 + $0x128] sm:$0xff]
        %1150 = vst [vmem:[%s1074 + $0x128] sm:$0xff] %v1149
        %v1151 = vld [vmem:[%s1073 + $0x130] sm:$0xff]
        %1152 = vst [vmem:[%s1074 + $0x130] sm:$0xff] %v1151
        %v1153 = vld [vmem:[%s1073 + $0x138] sm:$0xff]
        %1154 = vst [vmem:[%s1074 + $0x138] sm:$0xff] %v1153
        %v1155 = vld [vmem:[%s1073 + $0x140] sm:$0xff]
        %1156 = vst [vmem:[%s1074 + $0x140] sm:$0xff] %v1155
        %v1157 = vld [vmem:[%s1073 + $0x148] sm:$0xff]
        %1158 = vst [vmem:[%s1074 + $0x148] sm:$0xff] %v1157
        %v1159 = vld [vmem:[%s1073 + $0x150] sm:$0xff]
        %1160 = vst [vmem:[%s1074 + $0x150] sm:$0xff] %v1159
        %v1161 = vld [vmem:[%s1073 + $0x158] sm:$0xff]
        %1162 = vst [vmem:[%s1074 + $0x158] sm:$0xff] %v1161
        %v1163 = vld [vmem:[%s1073 + $0x160] sm:$0xff]
        %1164 = vst [vmem:[%s1074 + $0x160] sm:$0xff] %v1163
        %v1165 = vld [vmem:[%s1073 + $0x168] sm:$0xff]
        %1166 = vst [vmem:[%s1074 + $0x168] sm:$0xff] %v1165
        %v1167 = vld [vmem:[%s1073 + $0x170] sm:$0xff]
        %1168 = vst [vmem:[%s1074 + $0x170] sm:$0xff] %v1167
        %v1169 = vld [vmem:[%s1073 + $0x178] sm:$0xff]
        %1170 = vst [vmem:[%s1074 + $0x178] sm:$0xff] %v1169
        %v1171 = vld [vmem:[%s1073 + $0x180] sm:$0xff]
        %1172 = vst [vmem:[%s1074 + $0x180] sm:$0xff] %v1171
        %v1173 = vld [vmem:[%s1073 + $0x188] sm:$0xff]
        %1174 = vst [vmem:[%s1074 + $0x188] sm:$0xff] %v1173
        %v1175 = vld [vmem:[%s1073 + $0x190] sm:$0xff]
        %1176 = vst [vmem:[%s1074 + $0x190] sm:$0xff] %v1175
        %v1177 = vld [vmem:[%s1073 + $0x198] sm:$0xff]
        %1178 = vst [vmem:[%s1074 + $0x198] sm:$0xff] %v1177
        %v1179 = vld [vmem:[%s1073 + $0x1a0] sm:$0xff]
        %1180 = vst [vmem:[%s1074 + $0x1a0] sm:$0xff] %v1179
        %v1181 = vld [vmem:[%s1073 + $0x1a8] sm:$0xff]
        %1182 = vst [vmem:[%s1074 + $0x1a8] sm:$0xff] %v1181
        %v1183 = vld [vmem:[%s1073 + $0x1b0] sm:$0xff]
        %1184 = vst [vmem:[%s1074 + $0x1b0] sm:$0xff] %v1183
        %v1185 = vld [vmem:[%s1073 + $0x1b8] sm:$0xff]
        %1186 = vst [vmem:[%s1074 + $0x1b8] sm:$0xff] %v1185
        %v1187 = vld [vmem:[%s1073 + $0x1c0] sm:$0xff]
        %1188 = vst [vmem:[%s1074 + $0x1c0] sm:$0xff] %v1187
        %v1189 = vld [vmem:[%s1073 + $0x1c8] sm:$0xff]
        %1190 = vst [vmem:[%s1074 + $0x1c8] sm:$0xff] %v1189
        %v1191 = vld [vmem:[%s1073 + $0x1d0] sm:$0xff]
        %1192 = vst [vmem:[%s1074 + $0x1d0] sm:$0xff] %v1191
        %v1193 = vld [vmem:[%s1073 + $0x1d8] sm:$0xff]
        %1194 = vst [vmem:[%s1074 + $0x1d8] sm:$0xff] %v1193
        %v1195 = vld [vmem:[%s1073 + $0x1e0] sm:$0xff]
        %1196 = vst [vmem:[%s1074 + $0x1e0] sm:$0xff] %v1195
        %v1197 = vld [vmem:[%s1073 + $0x1e8] sm:$0xff]
        %1198 = vst [vmem:[%s1074 + $0x1e8] sm:$0xff] %v1197
        %v1199 = vld [vmem:[%s1073 + $0x1f0] sm:$0xff]
        %1200 = vst [vmem:[%s1074 + $0x1f0] sm:$0xff] %v1199
        %v1201 = vld [vmem:[%s1073 + $0x1f8] sm:$0xff]
        %1202 = vst [vmem:[%s1074 + $0x1f8] sm:$0xff] %v1201
        %v1203 = vld [vmem:[%s1073 + $0x200] sm:$0xff]
        %1204 = vst [vmem:[%s1074 + $0x200] sm:$0xff] %v1203
        %v1205 = vld [vmem:[%s1073 + $0x208] sm:$0xff]
        %1206 = vst [vmem:[%s1074 + $0x208] sm:$0xff] %v1205
        %v1207 = vld [vmem:[%s1073 + $0x210] sm:$0xff]
        %1208 = vst [vmem:[%s1074 + $0x210] sm:$0xff] %v1207
        %v1209 = vld [vmem:[%s1073 + $0x218] sm:$0xff]
        %1210 = vst [vmem:[%s1074 + $0x218] sm:$0xff] %v1209
        %v1211 = vld [vmem:[%s1073 + $0x220] sm:$0xff]
        %1212 = vst [vmem:[%s1074 + $0x220] sm:$0xff] %v1211
        %v1213 = vld [vmem:[%s1073 + $0x228] sm:$0xff]
        %1214 = vst [vmem:[%s1074 + $0x228] sm:$0xff] %v1213
        %v1215 = vld [vmem:[%s1073 + $0x230] sm:$0xff]
        %1216 = vst [vmem:[%s1074 + $0x230] sm:$0xff] %v1215
        %v1217 = vld [vmem:[%s1073 + $0x238] sm:$0xff]
        %1218 = vst [vmem:[%s1074 + $0x238] sm:$0xff] %v1217
        %v1219 = vld [vmem:[%s1073 + $0x240] sm:$0xff]
        %1220 = vst [vmem:[%s1074 + $0x240] sm:$0xff] %v1219
        %v1221 = vld [vmem:[%s1073 + $0x248] sm:$0xff]
        %1222 = vst [vmem:[%s1074 + $0x248] sm:$0xff] %v1221
        %v1223 = vld [vmem:[%s1073 + $0x250] sm:$0xff]
        %1224 = vst [vmem:[%s1074 + $0x250] sm:$0xff] %v1223
        %v1225 = vld [vmem:[%s1073 + $0x258] sm:$0xff]
        %1226 = vst [vmem:[%s1074 + $0x258] sm:$0xff] %v1225
        %v1227 = vld [vmem:[%s1073 + $0x260] sm:$0xff]
        %1228 = vst [vmem:[%s1074 + $0x260] sm:$0xff] %v1227
        %v1229 = vld [vmem:[%s1073 + $0x268] sm:$0xff]
        %1230 = vst [vmem:[%s1074 + $0x268] sm:$0xff] %v1229
        %v1231 = vld [vmem:[%s1073 + $0x270] sm:$0xff]
        %1232 = vst [vmem:[%s1074 + $0x270] sm:$0xff] %v1231
        %v1233 = vld [vmem:[%s1073 + $0x278] sm:$0xff]
        %1234 = vst [vmem:[%s1074 + $0x278] sm:$0xff] %v1233
        %v1235 = vld [vmem:[%s1073 + $0x280] sm:$0xff]
        %1236 = vst [vmem:[%s1074 + $0x280] sm:$0xff] %v1235
        %v1237 = vld [vmem:[%s1073 + $0x288] sm:$0xff]
        %1238 = vst [vmem:[%s1074 + $0x288] sm:$0xff] %v1237
        %v1239 = vld [vmem:[%s1073 + $0x290] sm:$0xff]
        %1240 = vst [vmem:[%s1074 + $0x290] sm:$0xff] %v1239
        %v1241 = vld [vmem:[%s1073 + $0x298] sm:$0xff]
        %1242 = vst [vmem:[%s1074 + $0x298] sm:$0xff] %v1241
        %v1243 = vld [vmem:[%s1073 + $0x2a0] sm:$0xff]
        %1244 = vst [vmem:[%s1074 + $0x2a0] sm:$0xff] %v1243
        %v1245 = vld [vmem:[%s1073 + $0x2a8] sm:$0xff]
        %1246 = vst [vmem:[%s1074 + $0x2a8] sm:$0xff] %v1245
        %v1247 = vld [vmem:[%s1073 + $0x2b0] sm:$0xff]
        %1248 = vst [vmem:[%s1074 + $0x2b0] sm:$0xff] %v1247
        %v1249 = vld [vmem:[%s1073 + $0x2b8] sm:$0xff]
        %1250 = vst [vmem:[%s1074 + $0x2b8] sm:$0xff] %v1249
        %v1251 = vld [vmem:[%s1073 + $0x2c0] sm:$0xff]
        %1252 = vst [vmem:[%s1074 + $0x2c0] sm:$0xff] %v1251
        %v1253 = vld [vmem:[%s1073 + $0x2c8] sm:$0xff]
        %1254 = vst [vmem:[%s1074 + $0x2c8] sm:$0xff] %v1253
        %v1255 = vld [vmem:[%s1073 + $0x2d0] sm:$0xff]
        %1256 = vst [vmem:[%s1074 + $0x2d0] sm:$0xff] %v1255
        %v1257 = vld [vmem:[%s1073 + $0x2d8] sm:$0xff]
        %1258 = vst [vmem:[%s1074 + $0x2d8] sm:$0xff] %v1257
        %v1259 = vld [vmem:[%s1073 + $0x2e0] sm:$0xff]
        %1260 = vst [vmem:[%s1074 + $0x2e0] sm:$0xff] %v1259
        %v1261 = vld [vmem:[%s1073 + $0x2e8] sm:$0xff]
        %1262 = vst [vmem:[%s1074 + $0x2e8] sm:$0xff] %v1261
        %v1263 = vld [vmem:[%s1073 + $0x2f0] sm:$0xff]
        %1264 = vst [vmem:[%s1074 + $0x2f0] sm:$0xff] %v1263
        %v1265 = vld [vmem:[%s1073 + $0x2f8] sm:$0xff]
        %1266 = vst [vmem:[%s1074 + $0x2f8] sm:$0xff] %v1265
        %v1267 = vld [vmem:[%s1073 + $0x300] sm:$0xff]
        %1268 = vst [vmem:[%s1074 + $0x300] sm:$0xff] %v1267
        %v1269 = vld [vmem:[%s1073 + $0x308] sm:$0xff]
        %1270 = vst [vmem:[%s1074 + $0x308] sm:$0xff] %v1269
        %v1271 = vld [vmem:[%s1073 + $0x310] sm:$0xff]
        %1272 = vst [vmem:[%s1074 + $0x310] sm:$0xff] %v1271
        %v1273 = vld [vmem:[%s1073 + $0x318] sm:$0xff]
        %1274 = vst [vmem:[%s1074 + $0x318] sm:$0xff] %v1273
        %v1275 = vld [vmem:[%s1073 + $0x320] sm:$0xff]
        %1276 = vst [vmem:[%s1074 + $0x320] sm:$0xff] %v1275
        %v1277 = vld [vmem:[%s1073 + $0x328] sm:$0xff]
        %1278 = vst [vmem:[%s1074 + $0x328] sm:$0xff] %v1277
        %v1279 = vld [vmem:[%s1073 + $0x330] sm:$0xff]
        %1280 = vst [vmem:[%s1074 + $0x330] sm:$0xff] %v1279
        %v1281 = vld [vmem:[%s1073 + $0x338] sm:$0xff]
        %1282 = vst [vmem:[%s1074 + $0x338] sm:$0xff] %v1281
        %v1283 = vld [vmem:[%s1073 + $0x340] sm:$0xff]
        %1284 = vst [vmem:[%s1074 + $0x340] sm:$0xff] %v1283
        %v1285 = vld [vmem:[%s1073 + $0x348] sm:$0xff]
        %1286 = vst [vmem:[%s1074 + $0x348] sm:$0xff] %v1285
        %v1287 = vld [vmem:[%s1073 + $0x350] sm:$0xff]
        %1288 = vst [vmem:[%s1074 + $0x350] sm:$0xff] %v1287
        %v1289 = vld [vmem:[%s1073 + $0x358] sm:$0xff]
        %1290 = vst [vmem:[%s1074 + $0x358] sm:$0xff] %v1289
        %v1291 = vld [vmem:[%s1073 + $0x360] sm:$0xff]
        %1292 = vst [vmem:[%s1074 + $0x360] sm:$0xff] %v1291
        %v1293 = vld [vmem:[%s1073 + $0x368] sm:$0xff]
        %1294 = vst [vmem:[%s1074 + $0x368] sm:$0xff] %v1293
        %v1295 = vld [vmem:[%s1073 + $0x370] sm:$0xff]
        %1296 = vst [vmem:[%s1074 + $0x370] sm:$0xff] %v1295
        %v1297 = vld [vmem:[%s1073 + $0x378] sm:$0xff]
        %1298 = vst [vmem:[%s1074 + $0x378] sm:$0xff] %v1297
        %v1299 = vld [vmem:[%s1073 + $0x380] sm:$0xff]
        %1300 = vst [vmem:[%s1074 + $0x380] sm:$0xff] %v1299
        %v1301 = vld [vmem:[%s1073 + $0x388] sm:$0xff]
        %1302 = vst [vmem:[%s1074 + $0x388] sm:$0xff] %v1301
        %v1303 = vld [vmem:[%s1073 + $0x390] sm:$0xff]
        %1304 = vst [vmem:[%s1074 + $0x390] sm:$0xff] %v1303
        %v1305 = vld [vmem:[%s1073 + $0x398] sm:$0xff]
        %1306 = vst [vmem:[%s1074 + $0x398] sm:$0xff] %v1305
        %v1307 = vld [vmem:[%s1073 + $0x3a0] sm:$0xff]
        %1308 = vst [vmem:[%s1074 + $0x3a0] sm:$0xff] %v1307
        %v1309 = vld [vmem:[%s1073 + $0x3a8] sm:$0xff]
        %1310 = vst [vmem:[%s1074 + $0x3a8] sm:$0xff] %v1309
        %v1311 = vld [vmem:[%s1073 + $0x3b0] sm:$0xff]
        %1312 = vst [vmem:[%s1074 + $0x3b0] sm:$0xff] %v1311
        %v1313 = vld [vmem:[%s1073 + $0x3b8] sm:$0xff]
        %1314 = vst [vmem:[%s1074 + $0x3b8] sm:$0xff] %v1313
        %v1315 = vld [vmem:[%s1073 + $0x3c0] sm:$0xff]
        %1316 = vst [vmem:[%s1074 + $0x3c0] sm:$0xff] %v1315
        %v1317 = vld [vmem:[%s1073 + $0x3c8] sm:$0xff]
        %1318 = vst [vmem:[%s1074 + $0x3c8] sm:$0xff] %v1317
        %v1319 = vld [vmem:[%s1073 + $0x3d0] sm:$0xff]
        %1320 = vst [vmem:[%s1074 + $0x3d0] sm:$0xff] %v1319
        %v1321 = vld [vmem:[%s1073 + $0x3d8] sm:$0xff]
        %1322 = vst [vmem:[%s1074 + $0x3d8] sm:$0xff] %v1321
        %v1323 = vld [vmem:[%s1073 + $0x3e0] sm:$0xff]
        %1324 = vst [vmem:[%s1074 + $0x3e0] sm:$0xff] %v1323
        %v1325 = vld [vmem:[%s1073 + $0x3e8] sm:$0xff]
        %1326 = vst [vmem:[%s1074 + $0x3e8] sm:$0xff] %v1325
        %v1327 = vld [vmem:[%s1073 + $0x3f0] sm:$0xff]
        %1328 = vst [vmem:[%s1074 + $0x3f0] sm:$0xff] %v1327
        %v1329 = vld [vmem:[%s1073 + $0x3f8] sm:$0xff]
        %1330 = vst [vmem:[%s1074 + $0x3f8] sm:$0xff] %v1329
        %v1331 = vld [vmem:[%s1073 + $0x400] sm:$0xff]
        %1332 = vst [vmem:[%s1074 + $0x400] sm:$0xff] %v1331
        %v1333 = vld [vmem:[%s1073 + $0x408] sm:$0xff]
        %1334 = vst [vmem:[%s1074 + $0x408] sm:$0xff] %v1333
        %v1335 = vld [vmem:[%s1073 + $0x410] sm:$0xff]
        %1336 = vst [vmem:[%s1074 + $0x410] sm:$0xff] %v1335
        %v1337 = vld [vmem:[%s1073 + $0x418] sm:$0xff]
        %1338 = vst [vmem:[%s1074 + $0x418] sm:$0xff] %v1337
        %v1339 = vld [vmem:[%s1073 + $0x420] sm:$0xff]
        %1340 = vst [vmem:[%s1074 + $0x420] sm:$0xff] %v1339
        %v1341 = vld [vmem:[%s1073 + $0x428] sm:$0xff]
        %1342 = vst [vmem:[%s1074 + $0x428] sm:$0xff] %v1341
        %v1343 = vld [vmem:[%s1073 + $0x430] sm:$0xff]
        %1344 = vst [vmem:[%s1074 + $0x430] sm:$0xff] %v1343
        %v1345 = vld [vmem:[%s1073 + $0x438] sm:$0xff]
        %1346 = vst [vmem:[%s1074 + $0x438] sm:$0xff] %v1345
        %v1347 = vld [vmem:[%s1073 + $0x440] sm:$0xff]
        %1348 = vst [vmem:[%s1074 + $0x440] sm:$0xff] %v1347
        %v1349 = vld [vmem:[%s1073 + $0x448] sm:$0xff]
        %1350 = vst [vmem:[%s1074 + $0x448] sm:$0xff] %v1349
        %v1351 = vld [vmem:[%s1073 + $0x450] sm:$0xff]
        %1352 = vst [vmem:[%s1074 + $0x450] sm:$0xff] %v1351
        %v1353 = vld [vmem:[%s1073 + $0x458] sm:$0xff]
        %1354 = vst [vmem:[%s1074 + $0x458] sm:$0xff] %v1353
        %v1355 = vld [vmem:[%s1073 + $0x460] sm:$0xff]
        %1356 = vst [vmem:[%s1074 + $0x460] sm:$0xff] %v1355
        %v1357 = vld [vmem:[%s1073 + $0x468] sm:$0xff]
        %1358 = vst [vmem:[%s1074 + $0x468] sm:$0xff] %v1357
        %v1359 = vld [vmem:[%s1073 + $0x470] sm:$0xff]
        %1360 = vst [vmem:[%s1074 + $0x470] sm:$0xff] %v1359
        %v1361 = vld [vmem:[%s1073 + $0x478] sm:$0xff]
        %1362 = vst [vmem:[%s1074 + $0x478] sm:$0xff] %v1361
        %v1363 = vld [vmem:[%s1073 + $0x480] sm:$0xff]
        %1364 = vst [vmem:[%s1074 + $0x480] sm:$0xff] %v1363
        %v1365 = vld [vmem:[%s1073 + $0x488] sm:$0xff]
        %1366 = vst [vmem:[%s1074 + $0x488] sm:$0xff] %v1365
        %v1367 = vld [vmem:[%s1073 + $0x490] sm:$0xff]
        %1368 = vst [vmem:[%s1074 + $0x490] sm:$0xff] %v1367
        %v1369 = vld [vmem:[%s1073 + $0x498] sm:$0xff]
        %1370 = vst [vmem:[%s1074 + $0x498] sm:$0xff] %v1369
        %v1371 = vld [vmem:[%s1073 + $0x4a0] sm:$0xff]
        %1372 = vst [vmem:[%s1074 + $0x4a0] sm:$0xff] %v1371
        %v1373 = vld [vmem:[%s1073 + $0x4a8] sm:$0xff]
        %1374 = vst [vmem:[%s1074 + $0x4a8] sm:$0xff] %v1373
        %v1375 = vld [vmem:[%s1073 + $0x4b0] sm:$0xff]
        %1376 = vst [vmem:[%s1074 + $0x4b0] sm:$0xff] %v1375
        %v1377 = vld [vmem:[%s1073 + $0x4b8] sm:$0xff]
        %1378 = vst [vmem:[%s1074 + $0x4b8] sm:$0xff] %v1377
        %v1379 = vld [vmem:[%s1073 + $0x4c0] sm:$0xff]
        %1380 = vst [vmem:[%s1074 + $0x4c0] sm:$0xff] %v1379
        %v1381 = vld [vmem:[%s1073 + $0x4c8] sm:$0xff]
        %1382 = vst [vmem:[%s1074 + $0x4c8] sm:$0xff] %v1381
        %v1383 = vld [vmem:[%s1073 + $0x4d0] sm:$0xff]
        %1384 = vst [vmem:[%s1074 + $0x4d0] sm:$0xff] %v1383
        %v1385 = vld [vmem:[%s1073 + $0x4d8] sm:$0xff]
        %1386 = vst [vmem:[%s1074 + $0x4d8] sm:$0xff] %v1385
        %v1387 = vld [vmem:[%s1073 + $0x4e0] sm:$0xff]
        %1388 = vst [vmem:[%s1074 + $0x4e0] sm:$0xff] %v1387
        %v1389 = vld [vmem:[%s1073 + $0x4e8] sm:$0xff]
        %1390 = vst [vmem:[%s1074 + $0x4e8] sm:$0xff] %v1389
        %v1391 = vld [vmem:[%s1073 + $0x4f0] sm:$0xff]
        %1392 = vst [vmem:[%s1074 + $0x4f0] sm:$0xff] %v1391
        %v1393 = vld [vmem:[%s1073 + $0x4f8] sm:$0xff]
        %1394 = vst [vmem:[%s1074 + $0x4f8] sm:$0xff] %v1393
        %v1395 = vld [vmem:[%s1073 + $0x500] sm:$0xff]
        %1396 = vst [vmem:[%s1074 + $0x500] sm:$0xff] %v1395
        %v1397 = vld [vmem:[%s1073 + $0x508] sm:$0xff]
        %1398 = vst [vmem:[%s1074 + $0x508] sm:$0xff] %v1397
        %v1399 = vld [vmem:[%s1073 + $0x510] sm:$0xff]
        %1400 = vst [vmem:[%s1074 + $0x510] sm:$0xff] %v1399
        %v1401 = vld [vmem:[%s1073 + $0x518] sm:$0xff]
        %1402 = vst [vmem:[%s1074 + $0x518] sm:$0xff] %v1401
        %v1403 = vld [vmem:[%s1073 + $0x520] sm:$0xff]
        %1404 = vst [vmem:[%s1074 + $0x520] sm:$0xff] %v1403
        %v1405 = vld [vmem:[%s1073 + $0x528] sm:$0xff]
        %1406 = vst [vmem:[%s1074 + $0x528] sm:$0xff] %v1405
        %v1407 = vld [vmem:[%s1073 + $0x530] sm:$0xff]
        %1408 = vst [vmem:[%s1074 + $0x530] sm:$0xff] %v1407
        %v1409 = vld [vmem:[%s1073 + $0x538] sm:$0xff]
        %1410 = vst [vmem:[%s1074 + $0x538] sm:$0xff] %v1409
        %v1411 = vld [vmem:[%s1073 + $0x540] sm:$0xff]
        %1412 = vst [vmem:[%s1074 + $0x540] sm:$0xff] %v1411
        %v1413 = vld [vmem:[%s1073 + $0x548] sm:$0xff]
        %1414 = vst [vmem:[%s1074 + $0x548] sm:$0xff] %v1413
        %v1415 = vld [vmem:[%s1073 + $0x550] sm:$0xff]
        %1416 = vst [vmem:[%s1074 + $0x550] sm:$0xff] %v1415
        %v1417 = vld [vmem:[%s1073 + $0x558] sm:$0xff]
        %1418 = vst [vmem:[%s1074 + $0x558] sm:$0xff] %v1417
        %v1419 = vld [vmem:[%s1073 + $0x560] sm:$0xff]
        %1420 = vst [vmem:[%s1074 + $0x560] sm:$0xff] %v1419
        %v1421 = vld [vmem:[%s1073 + $0x568] sm:$0xff]
        %1422 = vst [vmem:[%s1074 + $0x568] sm:$0xff] %v1421
        %v1423 = vld [vmem:[%s1073 + $0x570] sm:$0xff]
        %1424 = vst [vmem:[%s1074 + $0x570] sm:$0xff] %v1423
        %v1425 = vld [vmem:[%s1073 + $0x578] sm:$0xff]
        %1426 = vst [vmem:[%s1074 + $0x578] sm:$0xff] %v1425
        %v1427 = vld [vmem:[%s1073 + $0x580] sm:$0xff]
        %1428 = vst [vmem:[%s1074 + $0x580] sm:$0xff] %v1427
        %v1429 = vld [vmem:[%s1073 + $0x588] sm:$0xff]
        %1430 = vst [vmem:[%s1074 + $0x588] sm:$0xff] %v1429
        %v1431 = vld [vmem:[%s1073 + $0x590] sm:$0xff]
        %1432 = vst [vmem:[%s1074 + $0x590] sm:$0xff] %v1431
        %v1433 = vld [vmem:[%s1073 + $0x598] sm:$0xff]
        %1434 = vst [vmem:[%s1074 + $0x598] sm:$0xff] %v1433
        %v1435 = vld [vmem:[%s1073 + $0x5a0] sm:$0xff]
        %1436 = vst [vmem:[%s1074 + $0x5a0] sm:$0xff] %v1435
        %v1437 = vld [vmem:[%s1073 + $0x5a8] sm:$0xff]
        %1438 = vst [vmem:[%s1074 + $0x5a8] sm:$0xff] %v1437
        %v1439 = vld [vmem:[%s1073 + $0x5b0] sm:$0xff]
        %1440 = vst [vmem:[%s1074 + $0x5b0] sm:$0xff] %v1439
        %v1441 = vld [vmem:[%s1073 + $0x5b8] sm:$0xff]
        %1442 = vst [vmem:[%s1074 + $0x5b8] sm:$0xff] %v1441
        %v1443 = vld [vmem:[%s1073 + $0x5c0] sm:$0xff]
        %1444 = vst [vmem:[%s1074 + $0x5c0] sm:$0xff] %v1443
        %v1445 = vld [vmem:[%s1073 + $0x5c8] sm:$0xff]
        %1446 = vst [vmem:[%s1074 + $0x5c8] sm:$0xff] %v1445
        %v1447 = vld [vmem:[%s1073 + $0x5d0] sm:$0xff]
        %1448 = vst [vmem:[%s1074 + $0x5d0] sm:$0xff] %v1447
        %v1449 = vld [vmem:[%s1073 + $0x5d8] sm:$0xff]
        %1450 = vst [vmem:[%s1074 + $0x5d8] sm:$0xff] %v1449
        %v1451 = vld [vmem:[%s1073 + $0x5e0] sm:$0xff]
        %1452 = vst [vmem:[%s1074 + $0x5e0] sm:$0xff] %v1451
        %v1453 = vld [vmem:[%s1073 + $0x5e8] sm:$0xff]
        %1454 = vst [vmem:[%s1074 + $0x5e8] sm:$0xff] %v1453
        %v1455 = vld [vmem:[%s1073 + $0x5f0] sm:$0xff]
        %1456 = vst [vmem:[%s1074 + $0x5f0] sm:$0xff] %v1455
        %v1457 = vld [vmem:[%s1073 + $0x5f8] sm:$0xff]
        %1458 = vst [vmem:[%s1074 + $0x5f8] sm:$0xff] %v1457
        %v1459 = vld [vmem:[%s1073 + $0x600] sm:$0xff]
        %1460 = vst [vmem:[%s1074 + $0x600] sm:$0xff] %v1459
        %v1461 = vld [vmem:[%s1073 + $0x608] sm:$0xff]
        %1462 = vst [vmem:[%s1074 + $0x608] sm:$0xff] %v1461
        %v1463 = vld [vmem:[%s1073 + $0x610] sm:$0xff]
        %1464 = vst [vmem:[%s1074 + $0x610] sm:$0xff] %v1463
        %v1465 = vld [vmem:[%s1073 + $0x618] sm:$0xff]
        %1466 = vst [vmem:[%s1074 + $0x618] sm:$0xff] %v1465
        %v1467 = vld [vmem:[%s1073 + $0x620] sm:$0xff]
        %1468 = vst [vmem:[%s1074 + $0x620] sm:$0xff] %v1467
        %v1469 = vld [vmem:[%s1073 + $0x628] sm:$0xff]
        %1470 = vst [vmem:[%s1074 + $0x628] sm:$0xff] %v1469
        %v1471 = vld [vmem:[%s1073 + $0x630] sm:$0xff]
        %1472 = vst [vmem:[%s1074 + $0x630] sm:$0xff] %v1471
        %v1473 = vld [vmem:[%s1073 + $0x638] sm:$0xff]
        %1474 = vst [vmem:[%s1074 + $0x638] sm:$0xff] %v1473
        %v1475 = vld [vmem:[%s1073 + $0x640] sm:$0xff]
        %1476 = vst [vmem:[%s1074 + $0x640] sm:$0xff] %v1475
        %v1477 = vld [vmem:[%s1073 + $0x648] sm:$0xff]
        %1478 = vst [vmem:[%s1074 + $0x648] sm:$0xff] %v1477
        %v1479 = vld [vmem:[%s1073 + $0x650] sm:$0xff]
        %1480 = vst [vmem:[%s1074 + $0x650] sm:$0xff] %v1479
        %v1481 = vld [vmem:[%s1073 + $0x658] sm:$0xff]
        %1482 = vst [vmem:[%s1074 + $0x658] sm:$0xff] %v1481
        %v1483 = vld [vmem:[%s1073 + $0x660] sm:$0xff]
        %1484 = vst [vmem:[%s1074 + $0x660] sm:$0xff] %v1483
        %v1485 = vld [vmem:[%s1073 + $0x668] sm:$0xff]
        %1486 = vst [vmem:[%s1074 + $0x668] sm:$0xff] %v1485
        %v1487 = vld [vmem:[%s1073 + $0x670] sm:$0xff]
        %1488 = vst [vmem:[%s1074 + $0x670] sm:$0xff] %v1487
        %v1489 = vld [vmem:[%s1073 + $0x678] sm:$0xff]
        %1490 = vst [vmem:[%s1074 + $0x678] sm:$0xff] %v1489
        %v1491 = vld [vmem:[%s1073 + $0x680] sm:$0xff]
        %1492 = vst [vmem:[%s1074 + $0x680] sm:$0xff] %v1491
        %v1493 = vld [vmem:[%s1073 + $0x688] sm:$0xff]
        %1494 = vst [vmem:[%s1074 + $0x688] sm:$0xff] %v1493
        %v1495 = vld [vmem:[%s1073 + $0x690] sm:$0xff]
        %1496 = vst [vmem:[%s1074 + $0x690] sm:$0xff] %v1495
        %v1497 = vld [vmem:[%s1073 + $0x698] sm:$0xff]
        %1498 = vst [vmem:[%s1074 + $0x698] sm:$0xff] %v1497
        %v1499 = vld [vmem:[%s1073 + $0x6a0] sm:$0xff]
        %1500 = vst [vmem:[%s1074 + $0x6a0] sm:$0xff] %v1499
        %v1501 = vld [vmem:[%s1073 + $0x6a8] sm:$0xff]
        %1502 = vst [vmem:[%s1074 + $0x6a8] sm:$0xff] %v1501
        %v1503 = vld [vmem:[%s1073 + $0x6b0] sm:$0xff]
        %1504 = vst [vmem:[%s1074 + $0x6b0] sm:$0xff] %v1503
        %v1505 = vld [vmem:[%s1073 + $0x6b8] sm:$0xff]
        %1506 = vst [vmem:[%s1074 + $0x6b8] sm:$0xff] %v1505
        %v1507 = vld [vmem:[%s1073 + $0x6c0] sm:$0xff]
        %1508 = vst [vmem:[%s1074 + $0x6c0] sm:$0xff] %v1507
        %v1509 = vld [vmem:[%s1073 + $0x6c8] sm:$0xff]
        %1510 = vst [vmem:[%s1074 + $0x6c8] sm:$0xff] %v1509
        %v1511 = vld [vmem:[%s1073 + $0x6d0] sm:$0xff]
        %1512 = vst [vmem:[%s1074 + $0x6d0] sm:$0xff] %v1511
        %v1513 = vld [vmem:[%s1073 + $0x6d8] sm:$0xff]
        %1514 = vst [vmem:[%s1074 + $0x6d8] sm:$0xff] %v1513
        %v1515 = vld [vmem:[%s1073 + $0x6e0] sm:$0xff]
        %1516 = vst [vmem:[%s1074 + $0x6e0] sm:$0xff] %v1515
        %v1517 = vld [vmem:[%s1073 + $0x6e8] sm:$0xff]
        %1518 = vst [vmem:[%s1074 + $0x6e8] sm:$0xff] %v1517
        %v1519 = vld [vmem:[%s1073 + $0x6f0] sm:$0xff]
        %1520 = vst [vmem:[%s1074 + $0x6f0] sm:$0xff] %v1519
        %v1521 = vld [vmem:[%s1073 + $0x6f8] sm:$0xff]
        %1522 = vst [vmem:[%s1074 + $0x6f8] sm:$0xff] %v1521
        %v1523 = vld [vmem:[%s1073 + $0x700] sm:$0xff]
        %1524 = vst [vmem:[%s1074 + $0x700] sm:$0xff] %v1523
        %v1525 = vld [vmem:[%s1073 + $0x708] sm:$0xff]
        %1526 = vst [vmem:[%s1074 + $0x708] sm:$0xff] %v1525
        %v1527 = vld [vmem:[%s1073 + $0x710] sm:$0xff]
        %1528 = vst [vmem:[%s1074 + $0x710] sm:$0xff] %v1527
        %v1529 = vld [vmem:[%s1073 + $0x718] sm:$0xff]
        %1530 = vst [vmem:[%s1074 + $0x718] sm:$0xff] %v1529
        %v1531 = vld [vmem:[%s1073 + $0x720] sm:$0xff]
        %1532 = vst [vmem:[%s1074 + $0x720] sm:$0xff] %v1531
        %v1533 = vld [vmem:[%s1073 + $0x728] sm:$0xff]
        %1534 = vst [vmem:[%s1074 + $0x728] sm:$0xff] %v1533
        %v1535 = vld [vmem:[%s1073 + $0x730] sm:$0xff]
        %1536 = vst [vmem:[%s1074 + $0x730] sm:$0xff] %v1535
        %v1537 = vld [vmem:[%s1073 + $0x738] sm:$0xff]
        %1538 = vst [vmem:[%s1074 + $0x738] sm:$0xff] %v1537
        %v1539 = vld [vmem:[%s1073 + $0x740] sm:$0xff]
        %1540 = vst [vmem:[%s1074 + $0x740] sm:$0xff] %v1539
        %v1541 = vld [vmem:[%s1073 + $0x748] sm:$0xff]
        %1542 = vst [vmem:[%s1074 + $0x748] sm:$0xff] %v1541
        %v1543 = vld [vmem:[%s1073 + $0x750] sm:$0xff]
        %1544 = vst [vmem:[%s1074 + $0x750] sm:$0xff] %v1543
        %v1545 = vld [vmem:[%s1073 + $0x758] sm:$0xff]
        %1546 = vst [vmem:[%s1074 + $0x758] sm:$0xff] %v1545
        %v1547 = vld [vmem:[%s1073 + $0x760] sm:$0xff]
        %1548 = vst [vmem:[%s1074 + $0x760] sm:$0xff] %v1547
        %v1549 = vld [vmem:[%s1073 + $0x768] sm:$0xff]
        %1550 = vst [vmem:[%s1074 + $0x768] sm:$0xff] %v1549
        %v1551 = vld [vmem:[%s1073 + $0x770] sm:$0xff]
        %1552 = vst [vmem:[%s1074 + $0x770] sm:$0xff] %v1551
        %v1553 = vld [vmem:[%s1073 + $0x778] sm:$0xff]
        %1554 = vst [vmem:[%s1074 + $0x778] sm:$0xff] %v1553
        %v1555 = vld [vmem:[%s1073 + $0x780] sm:$0xff]
        %1556 = vst [vmem:[%s1074 + $0x780] sm:$0xff] %v1555
        %v1557 = vld [vmem:[%s1073 + $0x788] sm:$0xff]
        %1558 = vst [vmem:[%s1074 + $0x788] sm:$0xff] %v1557
        %v1559 = vld [vmem:[%s1073 + $0x790] sm:$0xff]
        %1560 = vst [vmem:[%s1074 + $0x790] sm:$0xff] %v1559
        %v1561 = vld [vmem:[%s1073 + $0x798] sm:$0xff]
        %1562 = vst [vmem:[%s1074 + $0x798] sm:$0xff] %v1561
        %v1563 = vld [vmem:[%s1073 + $0x7a0] sm:$0xff]
        %1564 = vst [vmem:[%s1074 + $0x7a0] sm:$0xff] %v1563
        %v1565 = vld [vmem:[%s1073 + $0x7a8] sm:$0xff]
        %1566 = vst [vmem:[%s1074 + $0x7a8] sm:$0xff] %v1565
        %v1567 = vld [vmem:[%s1073 + $0x7b0] sm:$0xff]
        %1568 = vst [vmem:[%s1074 + $0x7b0] sm:$0xff] %v1567
        %v1569 = vld [vmem:[%s1073 + $0x7b8] sm:$0xff]
        %1570 = vst [vmem:[%s1074 + $0x7b8] sm:$0xff] %v1569
        %v1571 = vld [vmem:[%s1073 + $0x7c0] sm:$0xff]
        %1572 = vst [vmem:[%s1074 + $0x7c0] sm:$0xff] %v1571
        %v1573 = vld [vmem:[%s1073 + $0x7c8] sm:$0xff]
        %1574 = vst [vmem:[%s1074 + $0x7c8] sm:$0xff] %v1573
        %v1575 = vld [vmem:[%s1073 + $0x7d0] sm:$0xff]
        %1576 = vst [vmem:[%s1074 + $0x7d0] sm:$0xff] %v1575
        %v1577 = vld [vmem:[%s1073 + $0x7d8] sm:$0xff]
        %1578 = vst [vmem:[%s1074 + $0x7d8] sm:$0xff] %v1577
        %v1579 = vld [vmem:[%s1073 + $0x7e0] sm:$0xff]
        %1580 = vst [vmem:[%s1074 + $0x7e0] sm:$0xff] %v1579
        %v1581 = vld [vmem:[%s1073 + $0x7e8] sm:$0xff]
        %1582 = vst [vmem:[%s1074 + $0x7e8] sm:$0xff] %v1581
        %v1583 = vld [vmem:[%s1073 + $0x7f0] sm:$0xff]
        %1584 = vst [vmem:[%s1074 + $0x7f0] sm:$0xff] %v1583
        %v1585 = vld [vmem:[%s1073 + $0x7f8] sm:$0xff]
        %1586 = vst [vmem:[%s1074 + $0x7f8] sm:$0xff] %v1585
        %v1587 = vld [vmem:[%s1073 + $0x800] sm:$0xff]
        %1588 = vst [vmem:[%s1074 + $0x800] sm:$0xff] %v1587
        %v1589 = vld [vmem:[%s1073 + $0x808] sm:$0xff]
        %1590 = vst [vmem:[%s1074 + $0x808] sm:$0xff] %v1589
        %v1591 = vld [vmem:[%s1073 + $0x810] sm:$0xff]
        %1592 = vst [vmem:[%s1074 + $0x810] sm:$0xff] %v1591
        %v1593 = vld [vmem:[%s1073 + $0x818] sm:$0xff]
        %1594 = vst [vmem:[%s1074 + $0x818] sm:$0xff] %v1593
        %v1595 = vld [vmem:[%s1073 + $0x820] sm:$0xff]
        %1596 = vst [vmem:[%s1074 + $0x820] sm:$0xff] %v1595
        %v1597 = vld [vmem:[%s1073 + $0x828] sm:$0xff]
        %1598 = vst [vmem:[%s1074 + $0x828] sm:$0xff] %v1597
        %v1599 = vld [vmem:[%s1073 + $0x830] sm:$0xff]
        %1600 = vst [vmem:[%s1074 + $0x830] sm:$0xff] %v1599
        %v1601 = vld [vmem:[%s1073 + $0x838] sm:$0xff]
        %1602 = vst [vmem:[%s1074 + $0x838] sm:$0xff] %v1601
        %v1603 = vld [vmem:[%s1073 + $0x840] sm:$0xff]
        %1604 = vst [vmem:[%s1074 + $0x840] sm:$0xff] %v1603
        %v1605 = vld [vmem:[%s1073 + $0x848] sm:$0xff]
        %1606 = vst [vmem:[%s1074 + $0x848] sm:$0xff] %v1605
        %v1607 = vld [vmem:[%s1073 + $0x850] sm:$0xff]
        %1608 = vst [vmem:[%s1074 + $0x850] sm:$0xff] %v1607
        %v1609 = vld [vmem:[%s1073 + $0x858] sm:$0xff]
        %1610 = vst [vmem:[%s1074 + $0x858] sm:$0xff] %v1609
        %v1611 = vld [vmem:[%s1073 + $0x860] sm:$0xff]
        %1612 = vst [vmem:[%s1074 + $0x860] sm:$0xff] %v1611
        %v1613 = vld [vmem:[%s1073 + $0x868] sm:$0xff]
        %1614 = vst [vmem:[%s1074 + $0x868] sm:$0xff] %v1613
        %v1615 = vld [vmem:[%s1073 + $0x870] sm:$0xff]
        %1616 = vst [vmem:[%s1074 + $0x870] sm:$0xff] %v1615
        %v1617 = vld [vmem:[%s1073 + $0x878] sm:$0xff]
        %1618 = vst [vmem:[%s1074 + $0x878] sm:$0xff] %v1617
        %v1619 = vld [vmem:[%s1073 + $0x880] sm:$0xff]
        %1620 = vst [vmem:[%s1074 + $0x880] sm:$0xff] %v1619
        %v1621 = vld [vmem:[%s1073 + $0x888] sm:$0xff]
        %1622 = vst [vmem:[%s1074 + $0x888] sm:$0xff] %v1621
        %v1623 = vld [vmem:[%s1073 + $0x890] sm:$0xff]
        %1624 = vst [vmem:[%s1074 + $0x890] sm:$0xff] %v1623
        %v1625 = vld [vmem:[%s1073 + $0x898] sm:$0xff]
        %1626 = vst [vmem:[%s1074 + $0x898] sm:$0xff] %v1625
        %v1627 = vld [vmem:[%s1073 + $0x8a0] sm:$0xff]
        %1628 = vst [vmem:[%s1074 + $0x8a0] sm:$0xff] %v1627
        %v1629 = vld [vmem:[%s1073 + $0x8a8] sm:$0xff]
        %1630 = vst [vmem:[%s1074 + $0x8a8] sm:$0xff] %v1629
        %v1631 = vld [vmem:[%s1073 + $0x8b0] sm:$0xff]
        %1632 = vst [vmem:[%s1074 + $0x8b0] sm:$0xff] %v1631
        %v1633 = vld [vmem:[%s1073 + $0x8b8] sm:$0xff]
        %1634 = vst [vmem:[%s1074 + $0x8b8] sm:$0xff] %v1633
        %v1635 = vld [vmem:[%s1073 + $0x8c0] sm:$0xff]
        %1636 = vst [vmem:[%s1074 + $0x8c0] sm:$0xff] %v1635
        %v1637 = vld [vmem:[%s1073 + $0x8c8] sm:$0xff]
        %1638 = vst [vmem:[%s1074 + $0x8c8] sm:$0xff] %v1637
        %v1639 = vld [vmem:[%s1073 + $0x8d0] sm:$0xff]
        %1640 = vst [vmem:[%s1074 + $0x8d0] sm:$0xff] %v1639
        %v1641 = vld [vmem:[%s1073 + $0x8d8] sm:$0xff]
        %1642 = vst [vmem:[%s1074 + $0x8d8] sm:$0xff] %v1641
        %v1643 = vld [vmem:[%s1073 + $0x8e0] sm:$0xff]
        %1644 = vst [vmem:[%s1074 + $0x8e0] sm:$0xff] %v1643
        %v1645 = vld [vmem:[%s1073 + $0x8e8] sm:$0xff]
        %1646 = vst [vmem:[%s1074 + $0x8e8] sm:$0xff] %v1645
        %v1647 = vld [vmem:[%s1073 + $0x8f0] sm:$0xff]
        %1648 = vst [vmem:[%s1074 + $0x8f0] sm:$0xff] %v1647
        %v1649 = vld [vmem:[%s1073 + $0x8f8] sm:$0xff]
        %1650 = vst [vmem:[%s1074 + $0x8f8] sm:$0xff] %v1649
        %v1651 = vld [vmem:[%s1073 + $0x900] sm:$0xff]
        %1652 = vst [vmem:[%s1074 + $0x900] sm:$0xff] %v1651
        %v1653 = vld [vmem:[%s1073 + $0x908] sm:$0xff]
        %1654 = vst [vmem:[%s1074 + $0x908] sm:$0xff] %v1653
        %v1655 = vld [vmem:[%s1073 + $0x910] sm:$0xff]
        %1656 = vst [vmem:[%s1074 + $0x910] sm:$0xff] %v1655
        %v1657 = vld [vmem:[%s1073 + $0x918] sm:$0xff]
        %1658 = vst [vmem:[%s1074 + $0x918] sm:$0xff] %v1657
        %v1659 = vld [vmem:[%s1073 + $0x920] sm:$0xff]
        %1660 = vst [vmem:[%s1074 + $0x920] sm:$0xff] %v1659
        %v1661 = vld [vmem:[%s1073 + $0x928] sm:$0xff]
        %1662 = vst [vmem:[%s1074 + $0x928] sm:$0xff] %v1661
        %v1663 = vld [vmem:[%s1073 + $0x930] sm:$0xff]
        %1664 = vst [vmem:[%s1074 + $0x930] sm:$0xff] %v1663
        %v1665 = vld [vmem:[%s1073 + $0x938] sm:$0xff]
        %1666 = vst [vmem:[%s1074 + $0x938] sm:$0xff] %v1665
        %v1667 = vld [vmem:[%s1073 + $0x940] sm:$0xff]
        %1668 = vst [vmem:[%s1074 + $0x940] sm:$0xff] %v1667
        %v1669 = vld [vmem:[%s1073 + $0x948] sm:$0xff]
        %1670 = vst [vmem:[%s1074 + $0x948] sm:$0xff] %v1669
        %v1671 = vld [vmem:[%s1073 + $0x950] sm:$0xff]
        %1672 = vst [vmem:[%s1074 + $0x950] sm:$0xff] %v1671
        %v1673 = vld [vmem:[%s1073 + $0x958] sm:$0xff]
        %1674 = vst [vmem:[%s1074 + $0x958] sm:$0xff] %v1673
        %v1675 = vld [vmem:[%s1073 + $0x960] sm:$0xff]
        %1676 = vst [vmem:[%s1074 + $0x960] sm:$0xff] %v1675
        %v1677 = vld [vmem:[%s1073 + $0x968] sm:$0xff]
        %1678 = vst [vmem:[%s1074 + $0x968] sm:$0xff] %v1677
        %v1679 = vld [vmem:[%s1073 + $0x970] sm:$0xff]
        %1680 = vst [vmem:[%s1074 + $0x970] sm:$0xff] %v1679
        %v1681 = vld [vmem:[%s1073 + $0x978] sm:$0xff]
        %1682 = vst [vmem:[%s1074 + $0x978] sm:$0xff] %v1681
        %v1683 = vld [vmem:[%s1073 + $0x980] sm:$0xff]
        %1684 = vst [vmem:[%s1074 + $0x980] sm:$0xff] %v1683
        %v1685 = vld [vmem:[%s1073 + $0x988] sm:$0xff]
        %1686 = vst [vmem:[%s1074 + $0x988] sm:$0xff] %v1685
        %v1687 = vld [vmem:[%s1073 + $0x990] sm:$0xff]
        %1688 = vst [vmem:[%s1074 + $0x990] sm:$0xff] %v1687
        %v1689 = vld [vmem:[%s1073 + $0x998] sm:$0xff]
        %1690 = vst [vmem:[%s1074 + $0x998] sm:$0xff] %v1689
        %v1691 = vld [vmem:[%s1073 + $0x9a0] sm:$0xff]
        %1692 = vst [vmem:[%s1074 + $0x9a0] sm:$0xff] %v1691
        %v1693 = vld [vmem:[%s1073 + $0x9a8] sm:$0xff]
        %1694 = vst [vmem:[%s1074 + $0x9a8] sm:$0xff] %v1693
        %v1695 = vld [vmem:[%s1073 + $0x9b0] sm:$0xff]
        %1696 = vst [vmem:[%s1074 + $0x9b0] sm:$0xff] %v1695
        %v1697 = vld [vmem:[%s1073 + $0x9b8] sm:$0xff]
        %1698 = vst [vmem:[%s1074 + $0x9b8] sm:$0xff] %v1697
        %v1699 = vld [vmem:[%s1073 + $0x9c0] sm:$0xff]
        %1700 = vst [vmem:[%s1074 + $0x9c0] sm:$0xff] %v1699
        %v1701 = vld [vmem:[%s1073 + $0x9c8] sm:$0xff]
        %1702 = vst [vmem:[%s1074 + $0x9c8] sm:$0xff] %v1701
        %v1703 = vld [vmem:[%s1073 + $0x9d0] sm:$0xff]
        %1704 = vst [vmem:[%s1074 + $0x9d0] sm:$0xff] %v1703
        %v1705 = vld [vmem:[%s1073 + $0x9d8] sm:$0xff]
        %1706 = vst [vmem:[%s1074 + $0x9d8] sm:$0xff] %v1705
        %v1707 = vld [vmem:[%s1073 + $0x9e0] sm:$0xff]
        %1708 = vst [vmem:[%s1074 + $0x9e0] sm:$0xff] %v1707
        %v1709 = vld [vmem:[%s1073 + $0x9e8] sm:$0xff]
        %1710 = vst [vmem:[%s1074 + $0x9e8] sm:$0xff] %v1709
        %v1711 = vld [vmem:[%s1073 + $0x9f0] sm:$0xff]
        %1712 = vst [vmem:[%s1074 + $0x9f0] sm:$0xff] %v1711
        %v1713 = vld [vmem:[%s1073 + $0x9f8] sm:$0xff]
        %1714 = vst [vmem:[%s1074 + $0x9f8] sm:$0xff] %v1713
        %v1715 = vld [vmem:[%s1073 + $0xa00] sm:$0xff]
        %1716 = vst [vmem:[%s1074 + $0xa00] sm:$0xff] %v1715
        %v1717 = vld [vmem:[%s1073 + $0xa08] sm:$0xff]
        %1718 = vst [vmem:[%s1074 + $0xa08] sm:$0xff] %v1717
        %v1719 = vld [vmem:[%s1073 + $0xa10] sm:$0xff]
        %1720 = vst [vmem:[%s1074 + $0xa10] sm:$0xff] %v1719
        %v1721 = vld [vmem:[%s1073 + $0xa18] sm:$0xff]
        %1722 = vst [vmem:[%s1074 + $0xa18] sm:$0xff] %v1721
        %v1723 = vld [vmem:[%s1073 + $0xa20] sm:$0xff]
        %1724 = vst [vmem:[%s1074 + $0xa20] sm:$0xff] %v1723
        %v1725 = vld [vmem:[%s1073 + $0xa28] sm:$0xff]
        %1726 = vst [vmem:[%s1074 + $0xa28] sm:$0xff] %v1725
        %v1727 = vld [vmem:[%s1073 + $0xa30] sm:$0xff]
        %1728 = vst [vmem:[%s1074 + $0xa30] sm:$0xff] %v1727
        %v1729 = vld [vmem:[%s1073 + $0xa38] sm:$0xff]
        %1730 = vst [vmem:[%s1074 + $0xa38] sm:$0xff] %v1729
        %v1731 = vld [vmem:[%s1073 + $0xa40] sm:$0xff]
        %1732 = vst [vmem:[%s1074 + $0xa40] sm:$0xff] %v1731
        %v1733 = vld [vmem:[%s1073 + $0xa48] sm:$0xff]
        %1734 = vst [vmem:[%s1074 + $0xa48] sm:$0xff] %v1733
        %v1735 = vld [vmem:[%s1073 + $0xa50] sm:$0xff]
        %1736 = vst [vmem:[%s1074 + $0xa50] sm:$0xff] %v1735
        %v1737 = vld [vmem:[%s1073 + $0xa58] sm:$0xff]
        %1738 = vst [vmem:[%s1074 + $0xa58] sm:$0xff] %v1737
        %v1739 = vld [vmem:[%s1073 + $0xa60] sm:$0xff]
        %1740 = vst [vmem:[%s1074 + $0xa60] sm:$0xff] %v1739
        %v1741 = vld [vmem:[%s1073 + $0xa68] sm:$0xff]
        %1742 = vst [vmem:[%s1074 + $0xa68] sm:$0xff] %v1741
        %v1743 = vld [vmem:[%s1073 + $0xa70] sm:$0xff]
        %1744 = vst [vmem:[%s1074 + $0xa70] sm:$0xff] %v1743
        %v1745 = vld [vmem:[%s1073 + $0xa78] sm:$0xff]
        %1746 = vst [vmem:[%s1074 + $0xa78] sm:$0xff] %v1745
        %v1747 = vld [vmem:[%s1073 + $0xa80] sm:$0xff]
        %1748 = vst [vmem:[%s1074 + $0xa80] sm:$0xff] %v1747
        %v1749 = vld [vmem:[%s1073 + $0xa88] sm:$0xff]
        %1750 = vst [vmem:[%s1074 + $0xa88] sm:$0xff] %v1749
        %v1751 = vld [vmem:[%s1073 + $0xa90] sm:$0xff]
        %1752 = vst [vmem:[%s1074 + $0xa90] sm:$0xff] %v1751
        %v1753 = vld [vmem:[%s1073 + $0xa98] sm:$0xff]
        %1754 = vst [vmem:[%s1074 + $0xa98] sm:$0xff] %v1753
        %v1755 = vld [vmem:[%s1073 + $0xaa0] sm:$0xff]
        %1756 = vst [vmem:[%s1074 + $0xaa0] sm:$0xff] %v1755
        %v1757 = vld [vmem:[%s1073 + $0xaa8] sm:$0xff]
        %1758 = vst [vmem:[%s1074 + $0xaa8] sm:$0xff] %v1757
        %v1759 = vld [vmem:[%s1073 + $0xab0] sm:$0xff]
        %1760 = vst [vmem:[%s1074 + $0xab0] sm:$0xff] %v1759
        %v1761 = vld [vmem:[%s1073 + $0xab8] sm:$0xff]
        %1762 = vst [vmem:[%s1074 + $0xab8] sm:$0xff] %v1761
        %v1763 = vld [vmem:[%s1073 + $0xac0] sm:$0xff]
        %1764 = vst [vmem:[%s1074 + $0xac0] sm:$0xff] %v1763
        %v1765 = vld [vmem:[%s1073 + $0xac8] sm:$0xff]
        %1766 = vst [vmem:[%s1074 + $0xac8] sm:$0xff] %v1765
        %v1767 = vld [vmem:[%s1073 + $0xad0] sm:$0xff]
        %1768 = vst [vmem:[%s1074 + $0xad0] sm:$0xff] %v1767
        %v1769 = vld [vmem:[%s1073 + $0xad8] sm:$0xff]
        %1770 = vst [vmem:[%s1074 + $0xad8] sm:$0xff] %v1769
        %v1771 = vld [vmem:[%s1073 + $0xae0] sm:$0xff]
        %1772 = vst [vmem:[%s1074 + $0xae0] sm:$0xff] %v1771
        %v1773 = vld [vmem:[%s1073 + $0xae8] sm:$0xff]
        %1774 = vst [vmem:[%s1074 + $0xae8] sm:$0xff] %v1773
        %v1775 = vld [vmem:[%s1073 + $0xaf0] sm:$0xff]
        %1776 = vst [vmem:[%s1074 + $0xaf0] sm:$0xff] %v1775
        %v1777 = vld [vmem:[%s1073 + $0xaf8] sm:$0xff]
        %1778 = vst [vmem:[%s1074 + $0xaf8] sm:$0xff] %v1777
        %v1779 = vld [vmem:[%s1073 + $0xb00] sm:$0xff]
        %1780 = vst [vmem:[%s1074 + $0xb00] sm:$0xff] %v1779
        %v1781 = vld [vmem:[%s1073 + $0xb08] sm:$0xff]
        %1782 = vst [vmem:[%s1074 + $0xb08] sm:$0xff] %v1781
        %v1783 = vld [vmem:[%s1073 + $0xb10] sm:$0xff]
        %1784 = vst [vmem:[%s1074 + $0xb10] sm:$0xff] %v1783
        %v1785 = vld [vmem:[%s1073 + $0xb18] sm:$0xff]
        %1786 = vst [vmem:[%s1074 + $0xb18] sm:$0xff] %v1785
        %v1787 = vld [vmem:[%s1073 + $0xb20] sm:$0xff]
        %1788 = vst [vmem:[%s1074 + $0xb20] sm:$0xff] %v1787
        %v1789 = vld [vmem:[%s1073 + $0xb28] sm:$0xff]
        %1790 = vst [vmem:[%s1074 + $0xb28] sm:$0xff] %v1789
        %v1791 = vld [vmem:[%s1073 + $0xb30] sm:$0xff]
        %1792 = vst [vmem:[%s1074 + $0xb30] sm:$0xff] %v1791
        %v1793 = vld [vmem:[%s1073 + $0xb38] sm:$0xff]
        %1794 = vst [vmem:[%s1074 + $0xb38] sm:$0xff] %v1793
        %v1795 = vld [vmem:[%s1073 + $0xb40] sm:$0xff]
        %1796 = vst [vmem:[%s1074 + $0xb40] sm:$0xff] %v1795
        %v1797 = vld [vmem:[%s1073 + $0xb48] sm:$0xff]
        %1798 = vst [vmem:[%s1074 + $0xb48] sm:$0xff] %v1797
        %v1799 = vld [vmem:[%s1073 + $0xb50] sm:$0xff]
        %1800 = vst [vmem:[%s1074 + $0xb50] sm:$0xff] %v1799
        %v1801 = vld [vmem:[%s1073 + $0xb58] sm:$0xff]
        %1802 = vst [vmem:[%s1074 + $0xb58] sm:$0xff] %v1801
        %v1803 = vld [vmem:[%s1073 + $0xb60] sm:$0xff]
        %1804 = vst [vmem:[%s1074 + $0xb60] sm:$0xff] %v1803
        %v1805 = vld [vmem:[%s1073 + $0xb68] sm:$0xff]
        %1806 = vst [vmem:[%s1074 + $0xb68] sm:$0xff] %v1805
        %v1807 = vld [vmem:[%s1073 + $0xb70] sm:$0xff]
        %1808 = vst [vmem:[%s1074 + $0xb70] sm:$0xff] %v1807
        %v1809 = vld [vmem:[%s1073 + $0xb78] sm:$0xff]
        %1810 = vst [vmem:[%s1074 + $0xb78] sm:$0xff] %v1809
        %v1811 = vld [vmem:[%s1073 + $0xb80] sm:$0xff]
        %1812 = vst [vmem:[%s1074 + $0xb80] sm:$0xff] %v1811
        %v1813 = vld [vmem:[%s1073 + $0xb88] sm:$0xff]
        %1814 = vst [vmem:[%s1074 + $0xb88] sm:$0xff] %v1813
        %v1815 = vld [vmem:[%s1073 + $0xb90] sm:$0xff]
        %1816 = vst [vmem:[%s1074 + $0xb90] sm:$0xff] %v1815
        %v1817 = vld [vmem:[%s1073 + $0xb98] sm:$0xff]
        %1818 = vst [vmem:[%s1074 + $0xb98] sm:$0xff] %v1817
        %v1819 = vld [vmem:[%s1073 + $0xba0] sm:$0xff]
        %1820 = vst [vmem:[%s1074 + $0xba0] sm:$0xff] %v1819
        %v1821 = vld [vmem:[%s1073 + $0xba8] sm:$0xff]
        %1822 = vst [vmem:[%s1074 + $0xba8] sm:$0xff] %v1821
        %v1823 = vld [vmem:[%s1073 + $0xbb0] sm:$0xff]
        %1824 = vst [vmem:[%s1074 + $0xbb0] sm:$0xff] %v1823
        %v1825 = vld [vmem:[%s1073 + $0xbb8] sm:$0xff]
        %1826 = vst [vmem:[%s1074 + $0xbb8] sm:$0xff] %v1825
        %v1827 = vld [vmem:[%s1073 + $0xbc0] sm:$0xff]
        %1828 = vst [vmem:[%s1074 + $0xbc0] sm:$0xff] %v1827
        %v1829 = vld [vmem:[%s1073 + $0xbc8] sm:$0xff]
        %1830 = vst [vmem:[%s1074 + $0xbc8] sm:$0xff] %v1829
        %v1831 = vld [vmem:[%s1073 + $0xbd0] sm:$0xff]
        %1832 = vst [vmem:[%s1074 + $0xbd0] sm:$0xff] %v1831
        %v1833 = vld [vmem:[%s1073 + $0xbd8] sm:$0xff]
        %1834 = vst [vmem:[%s1074 + $0xbd8] sm:$0xff] %v1833
        %v1835 = vld [vmem:[%s1073 + $0xbe0] sm:$0xff]
        %1836 = vst [vmem:[%s1074 + $0xbe0] sm:$0xff] %v1835
        %v1837 = vld [vmem:[%s1073 + $0xbe8] sm:$0xff]
        %1838 = vst [vmem:[%s1074 + $0xbe8] sm:$0xff] %v1837
        %v1839 = vld [vmem:[%s1073 + $0xbf0] sm:$0xff]
        %1840 = vst [vmem:[%s1074 + $0xbf0] sm:$0xff] %v1839
        %v1841 = vld [vmem:[%s1073 + $0xbf8] sm:$0xff]
        %1842 = vst [vmem:[%s1074 + $0xbf8] sm:$0xff] %v1841
        %v1843 = vld [vmem:[%s1073 + $0xc00] sm:$0xff]
        %1844 = vst [vmem:[%s1074 + $0xc00] sm:$0xff] %v1843
        %v1845 = vld [vmem:[%s1073 + $0xc08] sm:$0xff]
        %1846 = vst [vmem:[%s1074 + $0xc08] sm:$0xff] %v1845
        %v1847 = vld [vmem:[%s1073 + $0xc10] sm:$0xff]
        %1848 = vst [vmem:[%s1074 + $0xc10] sm:$0xff] %v1847
        %v1849 = vld [vmem:[%s1073 + $0xc18] sm:$0xff]
        %1850 = vst [vmem:[%s1074 + $0xc18] sm:$0xff] %v1849
        %v1851 = vld [vmem:[%s1073 + $0xc20] sm:$0xff]
        %1852 = vst [vmem:[%s1074 + $0xc20] sm:$0xff] %v1851
        %v1853 = vld [vmem:[%s1073 + $0xc28] sm:$0xff]
        %1854 = vst [vmem:[%s1074 + $0xc28] sm:$0xff] %v1853
        %v1855 = vld [vmem:[%s1073 + $0xc30] sm:$0xff]
        %1856 = vst [vmem:[%s1074 + $0xc30] sm:$0xff] %v1855
        %v1857 = vld [vmem:[%s1073 + $0xc38] sm:$0xff]
        %1858 = vst [vmem:[%s1074 + $0xc38] sm:$0xff] %v1857
        %v1859 = vld [vmem:[%s1073 + $0xc40] sm:$0xff]
        %1860 = vst [vmem:[%s1074 + $0xc40] sm:$0xff] %v1859
        %v1861 = vld [vmem:[%s1073 + $0xc48] sm:$0xff]
        %1862 = vst [vmem:[%s1074 + $0xc48] sm:$0xff] %v1861
        %v1863 = vld [vmem:[%s1073 + $0xc50] sm:$0xff]
        %1864 = vst [vmem:[%s1074 + $0xc50] sm:$0xff] %v1863
        %v1865 = vld [vmem:[%s1073 + $0xc58] sm:$0xff]
        %1866 = vst [vmem:[%s1074 + $0xc58] sm:$0xff] %v1865
        %v1867 = vld [vmem:[%s1073 + $0xc60] sm:$0xff]
        %1868 = vst [vmem:[%s1074 + $0xc60] sm:$0xff] %v1867
        %v1869 = vld [vmem:[%s1073 + $0xc68] sm:$0xff]
        %1870 = vst [vmem:[%s1074 + $0xc68] sm:$0xff] %v1869
        %v1871 = vld [vmem:[%s1073 + $0xc70] sm:$0xff]
        %1872 = vst [vmem:[%s1074 + $0xc70] sm:$0xff] %v1871
        %v1873 = vld [vmem:[%s1073 + $0xc78] sm:$0xff]
        %1874 = vst [vmem:[%s1074 + $0xc78] sm:$0xff] %v1873
        %v1875 = vld [vmem:[%s1073 + $0xc80] sm:$0xff]
        %1876 = vst [vmem:[%s1074 + $0xc80] sm:$0xff] %v1875
        %v1877 = vld [vmem:[%s1073 + $0xc88] sm:$0xff]
        %1878 = vst [vmem:[%s1074 + $0xc88] sm:$0xff] %v1877
        %v1879 = vld [vmem:[%s1073 + $0xc90] sm:$0xff]
        %1880 = vst [vmem:[%s1074 + $0xc90] sm:$0xff] %v1879
        %v1881 = vld [vmem:[%s1073 + $0xc98] sm:$0xff]
        %1882 = vst [vmem:[%s1074 + $0xc98] sm:$0xff] %v1881
        %v1883 = vld [vmem:[%s1073 + $0xca0] sm:$0xff]
        %1884 = vst [vmem:[%s1074 + $0xca0] sm:$0xff] %v1883
        %v1885 = vld [vmem:[%s1073 + $0xca8] sm:$0xff]
        %1886 = vst [vmem:[%s1074 + $0xca8] sm:$0xff] %v1885
        %v1887 = vld [vmem:[%s1073 + $0xcb0] sm:$0xff]
        %1888 = vst [vmem:[%s1074 + $0xcb0] sm:$0xff] %v1887
        %v1889 = vld [vmem:[%s1073 + $0xcb8] sm:$0xff]
        %1890 = vst [vmem:[%s1074 + $0xcb8] sm:$0xff] %v1889
        %v1891 = vld [vmem:[%s1073 + $0xcc0] sm:$0xff]
        %1892 = vst [vmem:[%s1074 + $0xcc0] sm:$0xff] %v1891
        %v1893 = vld [vmem:[%s1073 + $0xcc8] sm:$0xff]
        %1894 = vst [vmem:[%s1074 + $0xcc8] sm:$0xff] %v1893
        %v1895 = vld [vmem:[%s1073 + $0xcd0] sm:$0xff]
        %1896 = vst [vmem:[%s1074 + $0xcd0] sm:$0xff] %v1895
        %v1897 = vld [vmem:[%s1073 + $0xcd8] sm:$0xff]
        %1898 = vst [vmem:[%s1074 + $0xcd8] sm:$0xff] %v1897
        %v1899 = vld [vmem:[%s1073 + $0xce0] sm:$0xff]
        %1900 = vst [vmem:[%s1074 + $0xce0] sm:$0xff] %v1899
        %v1901 = vld [vmem:[%s1073 + $0xce8] sm:$0xff]
        %1902 = vst [vmem:[%s1074 + $0xce8] sm:$0xff] %v1901
        %v1903 = vld [vmem:[%s1073 + $0xcf0] sm:$0xff]
        %1904 = vst [vmem:[%s1074 + $0xcf0] sm:$0xff] %v1903
        %v1905 = vld [vmem:[%s1073 + $0xcf8] sm:$0xff]
        %1906 = vst [vmem:[%s1074 + $0xcf8] sm:$0xff] %v1905
        %v1907 = vld [vmem:[%s1073 + $0xd00] sm:$0xff]
        %1908 = vst [vmem:[%s1074 + $0xd00] sm:$0xff] %v1907
        %v1909 = vld [vmem:[%s1073 + $0xd08] sm:$0xff]
        %1910 = vst [vmem:[%s1074 + $0xd08] sm:$0xff] %v1909
        %v1911 = vld [vmem:[%s1073 + $0xd10] sm:$0xff]
        %1912 = vst [vmem:[%s1074 + $0xd10] sm:$0xff] %v1911
        %v1913 = vld [vmem:[%s1073 + $0xd18] sm:$0xff]
        %1914 = vst [vmem:[%s1074 + $0xd18] sm:$0xff] %v1913
        %v1915 = vld [vmem:[%s1073 + $0xd20] sm:$0xff]
        %1916 = vst [vmem:[%s1074 + $0xd20] sm:$0xff] %v1915
        %v1917 = vld [vmem:[%s1073 + $0xd28] sm:$0xff]
        %1918 = vst [vmem:[%s1074 + $0xd28] sm:$0xff] %v1917
        %v1919 = vld [vmem:[%s1073 + $0xd30] sm:$0xff]
        %1920 = vst [vmem:[%s1074 + $0xd30] sm:$0xff] %v1919
        %v1921 = vld [vmem:[%s1073 + $0xd38] sm:$0xff]
        %1922 = vst [vmem:[%s1074 + $0xd38] sm:$0xff] %v1921
        %v1923 = vld [vmem:[%s1073 + $0xd40] sm:$0xff]
        %1924 = vst [vmem:[%s1074 + $0xd40] sm:$0xff] %v1923
        %v1925 = vld [vmem:[%s1073 + $0xd48] sm:$0xff]
        %1926 = vst [vmem:[%s1074 + $0xd48] sm:$0xff] %v1925
        %v1927 = vld [vmem:[%s1073 + $0xd50] sm:$0xff]
        %1928 = vst [vmem:[%s1074 + $0xd50] sm:$0xff] %v1927
        %v1929 = vld [vmem:[%s1073 + $0xd58] sm:$0xff]
        %1930 = vst [vmem:[%s1074 + $0xd58] sm:$0xff] %v1929
        %v1931 = vld [vmem:[%s1073 + $0xd60] sm:$0xff]
        %1932 = vst [vmem:[%s1074 + $0xd60] sm:$0xff] %v1931
        %v1933 = vld [vmem:[%s1073 + $0xd68] sm:$0xff]
        %1934 = vst [vmem:[%s1074 + $0xd68] sm:$0xff] %v1933
        %v1935 = vld [vmem:[%s1073 + $0xd70] sm:$0xff]
        %1936 = vst [vmem:[%s1074 + $0xd70] sm:$0xff] %v1935
        %v1937 = vld [vmem:[%s1073 + $0xd78] sm:$0xff]
        %1938 = vst [vmem:[%s1074 + $0xd78] sm:$0xff] %v1937
      $region53: #{generator_forward.1} parent=47 // loop_footer
        %s1072 = sadd.s32 1, %s1068
      $region54: #{generator_forward.1} parent=47 // loop_footer_branch
        %1067 = sbr.rel target = $region50
      $region55: #{generator_forward.1} parent=47 // loop_exit
        _
    $region48: #{generator_forward.1} parent=1 // pred_fallthru
      _
    // Predicated region
    $region56: #{generator_forward.1} parent=1 // pred_check
      _
    $region57: #{generator_forward.1} parent=1 // pred_check_branch
      %1940 = sbr.rel target = $region59
    $region58: #{generator_forward.1} parent=1 // pred_region
      _
    $region59: #{generator_forward.1} parent=1 // pred_fallthru
      _
    // Predicated region
    $region60: #{generator_forward.1} parent=1 // pred_check
      _
    $region61: #{generator_forward.1} parent=1 // pred_check_branch
      %1943 = sbr.rel (0) target = $region63
    $region62: #{generator_forward.1} parent=1 // pred_region
      %1944 = vsyncadd %s1064, 55296
    $region63: #{generator_forward.1} parent=1 // pred_fallthru
      _
    %s1945 = scalar_lea.sflag [#allocation6], 2
    // Predicated region
    $region64: #{generator_forward.1} parent=1 // pred_check
      _
    $region65: #{generator_forward.1} parent=1 // pred_check_branch
      %1947 = sbr.rel (0) target = $region67
    $region66: #{generator_forward.1} parent=1 // pred_region
      loop: start=0, step=1, limit=1
      $region68: #{generator_forward.1} parent=66 // loop_pre_header
        _
      $region69: #{generator_forward.1} parent=66 // loop_header
        %s1949 = sphi 0, %s1953
        %p1950 = scmp.ge.s32.totalorder %s1949, 1
        %s1954 = sphi %s7, %s7
        %s1955 = sphi [#allocation4], [#allocation4]
      $region70: #{generator_forward.1} parent=66 // loop_header_branch
        %1952 = sbr.rel (%p1950) target = $region74
      $region71: #{generator_forward.1} parent=66 // loop_body
        %v1956 = vld [vmem:[%s1954] sm:$0xff]
        %1957 = vst [vmem:[%s1955] sm:$0xff] %v1956
        %v1958 = vld [vmem:[%s1954 + $0x8] sm:$0xff]
        %1959 = vst [vmem:[%s1955 + $0x8] sm:$0xff] %v1958
        %v1960 = vld [vmem:[%s1954 + $0x10] sm:$0xff]
        %1961 = vst [vmem:[%s1955 + $0x10] sm:$0xff] %v1960
        %v1962 = vld [vmem:[%s1954 + $0x18] sm:$0xff]
        %1963 = vst [vmem:[%s1955 + $0x18] sm:$0xff] %v1962
        %v1964 = vld [vmem:[%s1954 + $0x20] sm:$0xff]
        %1965 = vst [vmem:[%s1955 + $0x20] sm:$0xff] %v1964
        %v1966 = vld [vmem:[%s1954 + $0x28] sm:$0xff]
        %1967 = vst [vmem:[%s1955 + $0x28] sm:$0xff] %v1966
        %v1968 = vld [vmem:[%s1954 + $0x30] sm:$0xff]
        %1969 = vst [vmem:[%s1955 + $0x30] sm:$0xff] %v1968
        %v1970 = vld [vmem:[%s1954 + $0x38] sm:$0xff]
        %1971 = vst [vmem:[%s1955 + $0x38] sm:$0xff] %v1970
        %v1972 = vld [vmem:[%s1954 + $0x40] sm:$0xff]
        %1973 = vst [vmem:[%s1955 + $0x40] sm:$0xff] %v1972
        %v1974 = vld [vmem:[%s1954 + $0x48] sm:$0xff]
        %1975 = vst [vmem:[%s1955 + $0x48] sm:$0xff] %v1974
        %v1976 = vld [vmem:[%s1954 + $0x50] sm:$0xff]
        %1977 = vst [vmem:[%s1955 + $0x50] sm:$0xff] %v1976
        %v1978 = vld [vmem:[%s1954 + $0x58] sm:$0xff]
        %1979 = vst [vmem:[%s1955 + $0x58] sm:$0xff] %v1978
        %v1980 = vld [vmem:[%s1954 + $0x60] sm:$0xff]
        %1981 = vst [vmem:[%s1955 + $0x60] sm:$0xff] %v1980
        %v1982 = vld [vmem:[%s1954 + $0x68] sm:$0xff]
        %1983 = vst [vmem:[%s1955 + $0x68] sm:$0xff] %v1982
        %v1984 = vld [vmem:[%s1954 + $0x70] sm:$0xff]
        %1985 = vst [vmem:[%s1955 + $0x70] sm:$0xff] %v1984
        %v1986 = vld [vmem:[%s1954 + $0x78] sm:$0xff]
        %1987 = vst [vmem:[%s1955 + $0x78] sm:$0xff] %v1986
        %v1988 = vld [vmem:[%s1954 + $0x80] sm:$0xff]
        %1989 = vst [vmem:[%s1955 + $0x80] sm:$0xff] %v1988
        %v1990 = vld [vmem:[%s1954 + $0x88] sm:$0xff]
        %1991 = vst [vmem:[%s1955 + $0x88] sm:$0xff] %v1990
        %v1992 = vld [vmem:[%s1954 + $0x90] sm:$0xff]
        %1993 = vst [vmem:[%s1955 + $0x90] sm:$0xff] %v1992
        %v1994 = vld [vmem:[%s1954 + $0x98] sm:$0xff]
        %1995 = vst [vmem:[%s1955 + $0x98] sm:$0xff] %v1994
        %v1996 = vld [vmem:[%s1954 + $0xa0] sm:$0xff]
        %1997 = vst [vmem:[%s1955 + $0xa0] sm:$0xff] %v1996
        %v1998 = vld [vmem:[%s1954 + $0xa8] sm:$0xff]
        %1999 = vst [vmem:[%s1955 + $0xa8] sm:$0xff] %v1998
        %v2000 = vld [vmem:[%s1954 + $0xb0] sm:$0xff]
        %2001 = vst [vmem:[%s1955 + $0xb0] sm:$0xff] %v2000
        %v2002 = vld [vmem:[%s1954 + $0xb8] sm:$0xff]
        %2003 = vst [vmem:[%s1955 + $0xb8] sm:$0xff] %v2002
        %v2004 = vld [vmem:[%s1954 + $0xc0] sm:$0xff]
        %2005 = vst [vmem:[%s1955 + $0xc0] sm:$0xff] %v2004
        %v2006 = vld [vmem:[%s1954 + $0xc8] sm:$0xff]
        %2007 = vst [vmem:[%s1955 + $0xc8] sm:$0xff] %v2006
        %v2008 = vld [vmem:[%s1954 + $0xd0] sm:$0xff]
        %2009 = vst [vmem:[%s1955 + $0xd0] sm:$0xff] %v2008
        %v2010 = vld [vmem:[%s1954 + $0xd8] sm:$0xff]
        %2011 = vst [vmem:[%s1955 + $0xd8] sm:$0xff] %v2010
        %v2012 = vld [vmem:[%s1954 + $0xe0] sm:$0xff]
        %2013 = vst [vmem:[%s1955 + $0xe0] sm:$0xff] %v2012
        %v2014 = vld [vmem:[%s1954 + $0xe8] sm:$0xff]
        %2015 = vst [vmem:[%s1955 + $0xe8] sm:$0xff] %v2014
        %v2016 = vld [vmem:[%s1954 + $0xf0] sm:$0xff]
        %2017 = vst [vmem:[%s1955 + $0xf0] sm:$0xff] %v2016
        %v2018 = vld [vmem:[%s1954 + $0xf8] sm:$0xff]
        %2019 = vst [vmem:[%s1955 + $0xf8] sm:$0xff] %v2018
        %v2020 = vld [vmem:[%s1954 + $0x100] sm:$0xff]
        %2021 = vst [vmem:[%s1955 + $0x100] sm:$0xff] %v2020
        %v2022 = vld [vmem:[%s1954 + $0x108] sm:$0xff]
        %2023 = vst [vmem:[%s1955 + $0x108] sm:$0xff] %v2022
        %v2024 = vld [vmem:[%s1954 + $0x110] sm:$0xff]
        %2025 = vst [vmem:[%s1955 + $0x110] sm:$0xff] %v2024
        %v2026 = vld [vmem:[%s1954 + $0x118] sm:$0xff]
        %2027 = vst [vmem:[%s1955 + $0x118] sm:$0xff] %v2026
        %v2028 = vld [vmem:[%s1954 + $0x120] sm:$0xff]
        %2029 = vst [vmem:[%s1955 + $0x120] sm:$0xff] %v2028
        %v2030 = vld [vmem:[%s1954 + $0x128] sm:$0xff]
        %2031 = vst [vmem:[%s1955 + $0x128] sm:$0xff] %v2030
        %v2032 = vld [vmem:[%s1954 + $0x130] sm:$0xff]
        %2033 = vst [vmem:[%s1955 + $0x130] sm:$0xff] %v2032
        %v2034 = vld [vmem:[%s1954 + $0x138] sm:$0xff]
        %2035 = vst [vmem:[%s1955 + $0x138] sm:$0xff] %v2034
        %v2036 = vld [vmem:[%s1954 + $0x140] sm:$0xff]
        %2037 = vst [vmem:[%s1955 + $0x140] sm:$0xff] %v2036
        %v2038 = vld [vmem:[%s1954 + $0x148] sm:$0xff]
        %2039 = vst [vmem:[%s1955 + $0x148] sm:$0xff] %v2038
        %v2040 = vld [vmem:[%s1954 + $0x150] sm:$0xff]
        %2041 = vst [vmem:[%s1955 + $0x150] sm:$0xff] %v2040
        %v2042 = vld [vmem:[%s1954 + $0x158] sm:$0xff]
        %2043 = vst [vmem:[%s1955 + $0x158] sm:$0xff] %v2042
        %v2044 = vld [vmem:[%s1954 + $0x160] sm:$0xff]
        %2045 = vst [vmem:[%s1955 + $0x160] sm:$0xff] %v2044
        %v2046 = vld [vmem:[%s1954 + $0x168] sm:$0xff]
        %2047 = vst [vmem:[%s1955 + $0x168] sm:$0xff] %v2046
        %v2048 = vld [vmem:[%s1954 + $0x170] sm:$0xff]
        %2049 = vst [vmem:[%s1955 + $0x170] sm:$0xff] %v2048
        %v2050 = vld [vmem:[%s1954 + $0x178] sm:$0xff]
        %2051 = vst [vmem:[%s1955 + $0x178] sm:$0xff] %v2050
        %v2052 = vld [vmem:[%s1954 + $0x180] sm:$0xff]
        %2053 = vst [vmem:[%s1955 + $0x180] sm:$0xff] %v2052
        %v2054 = vld [vmem:[%s1954 + $0x188] sm:$0xff]
        %2055 = vst [vmem:[%s1955 + $0x188] sm:$0xff] %v2054
        %v2056 = vld [vmem:[%s1954 + $0x190] sm:$0xff]
        %2057 = vst [vmem:[%s1955 + $0x190] sm:$0xff] %v2056
        %v2058 = vld [vmem:[%s1954 + $0x198] sm:$0xff]
        %2059 = vst [vmem:[%s1955 + $0x198] sm:$0xff] %v2058
        %v2060 = vld [vmem:[%s1954 + $0x1a0] sm:$0xff]
        %2061 = vst [vmem:[%s1955 + $0x1a0] sm:$0xff] %v2060
        %v2062 = vld [vmem:[%s1954 + $0x1a8] sm:$0xff]
        %2063 = vst [vmem:[%s1955 + $0x1a8] sm:$0xff] %v2062
        %v2064 = vld [vmem:[%s1954 + $0x1b0] sm:$0xff]
        %2065 = vst [vmem:[%s1955 + $0x1b0] sm:$0xff] %v2064
        %v2066 = vld [vmem:[%s1954 + $0x1b8] sm:$0xff]
        %2067 = vst [vmem:[%s1955 + $0x1b8] sm:$0xff] %v2066
        %v2068 = vld [vmem:[%s1954 + $0x1c0] sm:$0xff]
        %2069 = vst [vmem:[%s1955 + $0x1c0] sm:$0xff] %v2068
        %v2070 = vld [vmem:[%s1954 + $0x1c8] sm:$0xff]
        %2071 = vst [vmem:[%s1955 + $0x1c8] sm:$0xff] %v2070
        %v2072 = vld [vmem:[%s1954 + $0x1d0] sm:$0xff]
        %2073 = vst [vmem:[%s1955 + $0x1d0] sm:$0xff] %v2072
        %v2074 = vld [vmem:[%s1954 + $0x1d8] sm:$0xff]
        %2075 = vst [vmem:[%s1955 + $0x1d8] sm:$0xff] %v2074
        %v2076 = vld [vmem:[%s1954 + $0x1e0] sm:$0xff]
        %2077 = vst [vmem:[%s1955 + $0x1e0] sm:$0xff] %v2076
        %v2078 = vld [vmem:[%s1954 + $0x1e8] sm:$0xff]
        %2079 = vst [vmem:[%s1955 + $0x1e8] sm:$0xff] %v2078
        %v2080 = vld [vmem:[%s1954 + $0x1f0] sm:$0xff]
        %2081 = vst [vmem:[%s1955 + $0x1f0] sm:$0xff] %v2080
        %v2082 = vld [vmem:[%s1954 + $0x1f8] sm:$0xff]
        %2083 = vst [vmem:[%s1955 + $0x1f8] sm:$0xff] %v2082
        %v2084 = vld [vmem:[%s1954 + $0x200] sm:$0xff]
        %2085 = vst [vmem:[%s1955 + $0x200] sm:$0xff] %v2084
        %v2086 = vld [vmem:[%s1954 + $0x208] sm:$0xff]
        %2087 = vst [vmem:[%s1955 + $0x208] sm:$0xff] %v2086
        %v2088 = vld [vmem:[%s1954 + $0x210] sm:$0xff]
        %2089 = vst [vmem:[%s1955 + $0x210] sm:$0xff] %v2088
        %v2090 = vld [vmem:[%s1954 + $0x218] sm:$0xff]
        %2091 = vst [vmem:[%s1955 + $0x218] sm:$0xff] %v2090
        %v2092 = vld [vmem:[%s1954 + $0x220] sm:$0xff]
        %2093 = vst [vmem:[%s1955 + $0x220] sm:$0xff] %v2092
        %v2094 = vld [vmem:[%s1954 + $0x228] sm:$0xff]
        %2095 = vst [vmem:[%s1955 + $0x228] sm:$0xff] %v2094
        %v2096 = vld [vmem:[%s1954 + $0x230] sm:$0xff]
        %2097 = vst [vmem:[%s1955 + $0x230] sm:$0xff] %v2096
        %v2098 = vld [vmem:[%s1954 + $0x238] sm:$0xff]
        %2099 = vst [vmem:[%s1955 + $0x238] sm:$0xff] %v2098
        %v2100 = vld [vmem:[%s1954 + $0x240] sm:$0xff]
        %2101 = vst [vmem:[%s1955 + $0x240] sm:$0xff] %v2100
        %v2102 = vld [vmem:[%s1954 + $0x248] sm:$0xff]
        %2103 = vst [vmem:[%s1955 + $0x248] sm:$0xff] %v2102
        %v2104 = vld [vmem:[%s1954 + $0x250] sm:$0xff]
        %2105 = vst [vmem:[%s1955 + $0x250] sm:$0xff] %v2104
        %v2106 = vld [vmem:[%s1954 + $0x258] sm:$0xff]
        %2107 = vst [vmem:[%s1955 + $0x258] sm:$0xff] %v2106
        %v2108 = vld [vmem:[%s1954 + $0x260] sm:$0xff]
        %2109 = vst [vmem:[%s1955 + $0x260] sm:$0xff] %v2108
        %v2110 = vld [vmem:[%s1954 + $0x268] sm:$0xff]
        %2111 = vst [vmem:[%s1955 + $0x268] sm:$0xff] %v2110
        %v2112 = vld [vmem:[%s1954 + $0x270] sm:$0xff]
        %2113 = vst [vmem:[%s1955 + $0x270] sm:$0xff] %v2112
        %v2114 = vld [vmem:[%s1954 + $0x278] sm:$0xff]
        %2115 = vst [vmem:[%s1955 + $0x278] sm:$0xff] %v2114
        %v2116 = vld [vmem:[%s1954 + $0x280] sm:$0xff]
        %2117 = vst [vmem:[%s1955 + $0x280] sm:$0xff] %v2116
        %v2118 = vld [vmem:[%s1954 + $0x288] sm:$0xff]
        %2119 = vst [vmem:[%s1955 + $0x288] sm:$0xff] %v2118
        %v2120 = vld [vmem:[%s1954 + $0x290] sm:$0xff]
        %2121 = vst [vmem:[%s1955 + $0x290] sm:$0xff] %v2120
        %v2122 = vld [vmem:[%s1954 + $0x298] sm:$0xff]
        %2123 = vst [vmem:[%s1955 + $0x298] sm:$0xff] %v2122
        %v2124 = vld [vmem:[%s1954 + $0x2a0] sm:$0xff]
        %2125 = vst [vmem:[%s1955 + $0x2a0] sm:$0xff] %v2124
        %v2126 = vld [vmem:[%s1954 + $0x2a8] sm:$0xff]
        %2127 = vst [vmem:[%s1955 + $0x2a8] sm:$0xff] %v2126
        %v2128 = vld [vmem:[%s1954 + $0x2b0] sm:$0xff]
        %2129 = vst [vmem:[%s1955 + $0x2b0] sm:$0xff] %v2128
        %v2130 = vld [vmem:[%s1954 + $0x2b8] sm:$0xff]
        %2131 = vst [vmem:[%s1955 + $0x2b8] sm:$0xff] %v2130
        %v2132 = vld [vmem:[%s1954 + $0x2c0] sm:$0xff]
        %2133 = vst [vmem:[%s1955 + $0x2c0] sm:$0xff] %v2132
        %v2134 = vld [vmem:[%s1954 + $0x2c8] sm:$0xff]
        %2135 = vst [vmem:[%s1955 + $0x2c8] sm:$0xff] %v2134
        %v2136 = vld [vmem:[%s1954 + $0x2d0] sm:$0xff]
        %2137 = vst [vmem:[%s1955 + $0x2d0] sm:$0xff] %v2136
        %v2138 = vld [vmem:[%s1954 + $0x2d8] sm:$0xff]
        %2139 = vst [vmem:[%s1955 + $0x2d8] sm:$0xff] %v2138
        %v2140 = vld [vmem:[%s1954 + $0x2e0] sm:$0xff]
        %2141 = vst [vmem:[%s1955 + $0x2e0] sm:$0xff] %v2140
        %v2142 = vld [vmem:[%s1954 + $0x2e8] sm:$0xff]
        %2143 = vst [vmem:[%s1955 + $0x2e8] sm:$0xff] %v2142
        %v2144 = vld [vmem:[%s1954 + $0x2f0] sm:$0xff]
        %2145 = vst [vmem:[%s1955 + $0x2f0] sm:$0xff] %v2144
        %v2146 = vld [vmem:[%s1954 + $0x2f8] sm:$0xff]
        %2147 = vst [vmem:[%s1955 + $0x2f8] sm:$0xff] %v2146
        %v2148 = vld [vmem:[%s1954 + $0x300] sm:$0xff]
        %2149 = vst [vmem:[%s1955 + $0x300] sm:$0xff] %v2148
        %v2150 = vld [vmem:[%s1954 + $0x308] sm:$0xff]
        %2151 = vst [vmem:[%s1955 + $0x308] sm:$0xff] %v2150
        %v2152 = vld [vmem:[%s1954 + $0x310] sm:$0xff]
        %2153 = vst [vmem:[%s1955 + $0x310] sm:$0xff] %v2152
        %v2154 = vld [vmem:[%s1954 + $0x318] sm:$0xff]
        %2155 = vst [vmem:[%s1955 + $0x318] sm:$0xff] %v2154
        %v2156 = vld [vmem:[%s1954 + $0x320] sm:$0xff]
        %2157 = vst [vmem:[%s1955 + $0x320] sm:$0xff] %v2156
        %v2158 = vld [vmem:[%s1954 + $0x328] sm:$0xff]
        %2159 = vst [vmem:[%s1955 + $0x328] sm:$0xff] %v2158
        %v2160 = vld [vmem:[%s1954 + $0x330] sm:$0xff]
        %2161 = vst [vmem:[%s1955 + $0x330] sm:$0xff] %v2160
        %v2162 = vld [vmem:[%s1954 + $0x338] sm:$0xff]
        %2163 = vst [vmem:[%s1955 + $0x338] sm:$0xff] %v2162
        %v2164 = vld [vmem:[%s1954 + $0x340] sm:$0xff]
        %2165 = vst [vmem:[%s1955 + $0x340] sm:$0xff] %v2164
        %v2166 = vld [vmem:[%s1954 + $0x348] sm:$0xff]
        %2167 = vst [vmem:[%s1955 + $0x348] sm:$0xff] %v2166
        %v2168 = vld [vmem:[%s1954 + $0x350] sm:$0xff]
        %2169 = vst [vmem:[%s1955 + $0x350] sm:$0xff] %v2168
        %v2170 = vld [vmem:[%s1954 + $0x358] sm:$0xff]
        %2171 = vst [vmem:[%s1955 + $0x358] sm:$0xff] %v2170
        %v2172 = vld [vmem:[%s1954 + $0x360] sm:$0xff]
        %2173 = vst [vmem:[%s1955 + $0x360] sm:$0xff] %v2172
        %v2174 = vld [vmem:[%s1954 + $0x368] sm:$0xff]
        %2175 = vst [vmem:[%s1955 + $0x368] sm:$0xff] %v2174
        %v2176 = vld [vmem:[%s1954 + $0x370] sm:$0xff]
        %2177 = vst [vmem:[%s1955 + $0x370] sm:$0xff] %v2176
        %v2178 = vld [vmem:[%s1954 + $0x378] sm:$0xff]
        %2179 = vst [vmem:[%s1955 + $0x378] sm:$0xff] %v2178
        %v2180 = vld [vmem:[%s1954 + $0x380] sm:$0xff]
        %2181 = vst [vmem:[%s1955 + $0x380] sm:$0xff] %v2180
        %v2182 = vld [vmem:[%s1954 + $0x388] sm:$0xff]
        %2183 = vst [vmem:[%s1955 + $0x388] sm:$0xff] %v2182
        %v2184 = vld [vmem:[%s1954 + $0x390] sm:$0xff]
        %2185 = vst [vmem:[%s1955 + $0x390] sm:$0xff] %v2184
        %v2186 = vld [vmem:[%s1954 + $0x398] sm:$0xff]
        %2187 = vst [vmem:[%s1955 + $0x398] sm:$0xff] %v2186
        %v2188 = vld [vmem:[%s1954 + $0x3a0] sm:$0xff]
        %2189 = vst [vmem:[%s1955 + $0x3a0] sm:$0xff] %v2188
        %v2190 = vld [vmem:[%s1954 + $0x3a8] sm:$0xff]
        %2191 = vst [vmem:[%s1955 + $0x3a8] sm:$0xff] %v2190
        %v2192 = vld [vmem:[%s1954 + $0x3b0] sm:$0xff]
        %2193 = vst [vmem:[%s1955 + $0x3b0] sm:$0xff] %v2192
        %v2194 = vld [vmem:[%s1954 + $0x3b8] sm:$0xff]
        %2195 = vst [vmem:[%s1955 + $0x3b8] sm:$0xff] %v2194
        %v2196 = vld [vmem:[%s1954 + $0x3c0] sm:$0xff]
        %2197 = vst [vmem:[%s1955 + $0x3c0] sm:$0xff] %v2196
        %v2198 = vld [vmem:[%s1954 + $0x3c8] sm:$0xff]
        %2199 = vst [vmem:[%s1955 + $0x3c8] sm:$0xff] %v2198
        %v2200 = vld [vmem:[%s1954 + $0x3d0] sm:$0xff]
        %2201 = vst [vmem:[%s1955 + $0x3d0] sm:$0xff] %v2200
        %v2202 = vld [vmem:[%s1954 + $0x3d8] sm:$0xff]
        %2203 = vst [vmem:[%s1955 + $0x3d8] sm:$0xff] %v2202
        %v2204 = vld [vmem:[%s1954 + $0x3e0] sm:$0xff]
        %2205 = vst [vmem:[%s1955 + $0x3e0] sm:$0xff] %v2204
        %v2206 = vld [vmem:[%s1954 + $0x3e8] sm:$0xff]
        %2207 = vst [vmem:[%s1955 + $0x3e8] sm:$0xff] %v2206
        %v2208 = vld [vmem:[%s1954 + $0x3f0] sm:$0xff]
        %2209 = vst [vmem:[%s1955 + $0x3f0] sm:$0xff] %v2208
        %v2210 = vld [vmem:[%s1954 + $0x3f8] sm:$0xff]
        %2211 = vst [vmem:[%s1955 + $0x3f8] sm:$0xff] %v2210
        %v2212 = vld [vmem:[%s1954 + $0x400] sm:$0xff]
        %2213 = vst [vmem:[%s1955 + $0x400] sm:$0xff] %v2212
        %v2214 = vld [vmem:[%s1954 + $0x408] sm:$0xff]
        %2215 = vst [vmem:[%s1955 + $0x408] sm:$0xff] %v2214
        %v2216 = vld [vmem:[%s1954 + $0x410] sm:$0xff]
        %2217 = vst [vmem:[%s1955 + $0x410] sm:$0xff] %v2216
        %v2218 = vld [vmem:[%s1954 + $0x418] sm:$0xff]
        %2219 = vst [vmem:[%s1955 + $0x418] sm:$0xff] %v2218
        %v2220 = vld [vmem:[%s1954 + $0x420] sm:$0xff]
        %2221 = vst [vmem:[%s1955 + $0x420] sm:$0xff] %v2220
        %v2222 = vld [vmem:[%s1954 + $0x428] sm:$0xff]
        %2223 = vst [vmem:[%s1955 + $0x428] sm:$0xff] %v2222
        %v2224 = vld [vmem:[%s1954 + $0x430] sm:$0xff]
        %2225 = vst [vmem:[%s1955 + $0x430] sm:$0xff] %v2224
        %v2226 = vld [vmem:[%s1954 + $0x438] sm:$0xff]
        %2227 = vst [vmem:[%s1955 + $0x438] sm:$0xff] %v2226
        %v2228 = vld [vmem:[%s1954 + $0x440] sm:$0xff]
        %2229 = vst [vmem:[%s1955 + $0x440] sm:$0xff] %v2228
        %v2230 = vld [vmem:[%s1954 + $0x448] sm:$0xff]
        %2231 = vst [vmem:[%s1955 + $0x448] sm:$0xff] %v2230
        %v2232 = vld [vmem:[%s1954 + $0x450] sm:$0xff]
        %2233 = vst [vmem:[%s1955 + $0x450] sm:$0xff] %v2232
        %v2234 = vld [vmem:[%s1954 + $0x458] sm:$0xff]
        %2235 = vst [vmem:[%s1955 + $0x458] sm:$0xff] %v2234
        %v2236 = vld [vmem:[%s1954 + $0x460] sm:$0xff]
        %2237 = vst [vmem:[%s1955 + $0x460] sm:$0xff] %v2236
        %v2238 = vld [vmem:[%s1954 + $0x468] sm:$0xff]
        %2239 = vst [vmem:[%s1955 + $0x468] sm:$0xff] %v2238
        %v2240 = vld [vmem:[%s1954 + $0x470] sm:$0xff]
        %2241 = vst [vmem:[%s1955 + $0x470] sm:$0xff] %v2240
        %v2242 = vld [vmem:[%s1954 + $0x478] sm:$0xff]
        %2243 = vst [vmem:[%s1955 + $0x478] sm:$0xff] %v2242
        %v2244 = vld [vmem:[%s1954 + $0x480] sm:$0xff]
        %2245 = vst [vmem:[%s1955 + $0x480] sm:$0xff] %v2244
        %v2246 = vld [vmem:[%s1954 + $0x488] sm:$0xff]
        %2247 = vst [vmem:[%s1955 + $0x488] sm:$0xff] %v2246
        %v2248 = vld [vmem:[%s1954 + $0x490] sm:$0xff]
        %2249 = vst [vmem:[%s1955 + $0x490] sm:$0xff] %v2248
        %v2250 = vld [vmem:[%s1954 + $0x498] sm:$0xff]
        %2251 = vst [vmem:[%s1955 + $0x498] sm:$0xff] %v2250
        %v2252 = vld [vmem:[%s1954 + $0x4a0] sm:$0xff]
        %2253 = vst [vmem:[%s1955 + $0x4a0] sm:$0xff] %v2252
        %v2254 = vld [vmem:[%s1954 + $0x4a8] sm:$0xff]
        %2255 = vst [vmem:[%s1955 + $0x4a8] sm:$0xff] %v2254
        %v2256 = vld [vmem:[%s1954 + $0x4b0] sm:$0xff]
        %2257 = vst [vmem:[%s1955 + $0x4b0] sm:$0xff] %v2256
        %v2258 = vld [vmem:[%s1954 + $0x4b8] sm:$0xff]
        %2259 = vst [vmem:[%s1955 + $0x4b8] sm:$0xff] %v2258
        %v2260 = vld [vmem:[%s1954 + $0x4c0] sm:$0xff]
        %2261 = vst [vmem:[%s1955 + $0x4c0] sm:$0xff] %v2260
        %v2262 = vld [vmem:[%s1954 + $0x4c8] sm:$0xff]
        %2263 = vst [vmem:[%s1955 + $0x4c8] sm:$0xff] %v2262
        %v2264 = vld [vmem:[%s1954 + $0x4d0] sm:$0xff]
        %2265 = vst [vmem:[%s1955 + $0x4d0] sm:$0xff] %v2264
        %v2266 = vld [vmem:[%s1954 + $0x4d8] sm:$0xff]
        %2267 = vst [vmem:[%s1955 + $0x4d8] sm:$0xff] %v2266
        %v2268 = vld [vmem:[%s1954 + $0x4e0] sm:$0xff]
        %2269 = vst [vmem:[%s1955 + $0x4e0] sm:$0xff] %v2268
        %v2270 = vld [vmem:[%s1954 + $0x4e8] sm:$0xff]
        %2271 = vst [vmem:[%s1955 + $0x4e8] sm:$0xff] %v2270
        %v2272 = vld [vmem:[%s1954 + $0x4f0] sm:$0xff]
        %2273 = vst [vmem:[%s1955 + $0x4f0] sm:$0xff] %v2272
        %v2274 = vld [vmem:[%s1954 + $0x4f8] sm:$0xff]
        %2275 = vst [vmem:[%s1955 + $0x4f8] sm:$0xff] %v2274
        %v2276 = vld [vmem:[%s1954 + $0x500] sm:$0xff]
        %2277 = vst [vmem:[%s1955 + $0x500] sm:$0xff] %v2276
        %v2278 = vld [vmem:[%s1954 + $0x508] sm:$0xff]
        %2279 = vst [vmem:[%s1955 + $0x508] sm:$0xff] %v2278
        %v2280 = vld [vmem:[%s1954 + $0x510] sm:$0xff]
        %2281 = vst [vmem:[%s1955 + $0x510] sm:$0xff] %v2280
        %v2282 = vld [vmem:[%s1954 + $0x518] sm:$0xff]
        %2283 = vst [vmem:[%s1955 + $0x518] sm:$0xff] %v2282
        %v2284 = vld [vmem:[%s1954 + $0x520] sm:$0xff]
        %2285 = vst [vmem:[%s1955 + $0x520] sm:$0xff] %v2284
        %v2286 = vld [vmem:[%s1954 + $0x528] sm:$0xff]
        %2287 = vst [vmem:[%s1955 + $0x528] sm:$0xff] %v2286
        %v2288 = vld [vmem:[%s1954 + $0x530] sm:$0xff]
        %2289 = vst [vmem:[%s1955 + $0x530] sm:$0xff] %v2288
        %v2290 = vld [vmem:[%s1954 + $0x538] sm:$0xff]
        %2291 = vst [vmem:[%s1955 + $0x538] sm:$0xff] %v2290
        %v2292 = vld [vmem:[%s1954 + $0x540] sm:$0xff]
        %2293 = vst [vmem:[%s1955 + $0x540] sm:$0xff] %v2292
        %v2294 = vld [vmem:[%s1954 + $0x548] sm:$0xff]
        %2295 = vst [vmem:[%s1955 + $0x548] sm:$0xff] %v2294
        %v2296 = vld [vmem:[%s1954 + $0x550] sm:$0xff]
        %2297 = vst [vmem:[%s1955 + $0x550] sm:$0xff] %v2296
        %v2298 = vld [vmem:[%s1954 + $0x558] sm:$0xff]
        %2299 = vst [vmem:[%s1955 + $0x558] sm:$0xff] %v2298
        %v2300 = vld [vmem:[%s1954 + $0x560] sm:$0xff]
        %2301 = vst [vmem:[%s1955 + $0x560] sm:$0xff] %v2300
        %v2302 = vld [vmem:[%s1954 + $0x568] sm:$0xff]
        %2303 = vst [vmem:[%s1955 + $0x568] sm:$0xff] %v2302
        %v2304 = vld [vmem:[%s1954 + $0x570] sm:$0xff]
        %2305 = vst [vmem:[%s1955 + $0x570] sm:$0xff] %v2304
        %v2306 = vld [vmem:[%s1954 + $0x578] sm:$0xff]
        %2307 = vst [vmem:[%s1955 + $0x578] sm:$0xff] %v2306
        %v2308 = vld [vmem:[%s1954 + $0x580] sm:$0xff]
        %2309 = vst [vmem:[%s1955 + $0x580] sm:$0xff] %v2308
        %v2310 = vld [vmem:[%s1954 + $0x588] sm:$0xff]
        %2311 = vst [vmem:[%s1955 + $0x588] sm:$0xff] %v2310
        %v2312 = vld [vmem:[%s1954 + $0x590] sm:$0xff]
        %2313 = vst [vmem:[%s1955 + $0x590] sm:$0xff] %v2312
        %v2314 = vld [vmem:[%s1954 + $0x598] sm:$0xff]
        %2315 = vst [vmem:[%s1955 + $0x598] sm:$0xff] %v2314
        %v2316 = vld [vmem:[%s1954 + $0x5a0] sm:$0xff]
        %2317 = vst [vmem:[%s1955 + $0x5a0] sm:$0xff] %v2316
        %v2318 = vld [vmem:[%s1954 + $0x5a8] sm:$0xff]
        %2319 = vst [vmem:[%s1955 + $0x5a8] sm:$0xff] %v2318
        %v2320 = vld [vmem:[%s1954 + $0x5b0] sm:$0xff]
        %2321 = vst [vmem:[%s1955 + $0x5b0] sm:$0xff] %v2320
        %v2322 = vld [vmem:[%s1954 + $0x5b8] sm:$0xff]
        %2323 = vst [vmem:[%s1955 + $0x5b8] sm:$0xff] %v2322
        %v2324 = vld [vmem:[%s1954 + $0x5c0] sm:$0xff]
        %2325 = vst [vmem:[%s1955 + $0x5c0] sm:$0xff] %v2324
        %v2326 = vld [vmem:[%s1954 + $0x5c8] sm:$0xff]
        %2327 = vst [vmem:[%s1955 + $0x5c8] sm:$0xff] %v2326
        %v2328 = vld [vmem:[%s1954 + $0x5d0] sm:$0xff]
        %2329 = vst [vmem:[%s1955 + $0x5d0] sm:$0xff] %v2328
        %v2330 = vld [vmem:[%s1954 + $0x5d8] sm:$0xff]
        %2331 = vst [vmem:[%s1955 + $0x5d8] sm:$0xff] %v2330
        %v2332 = vld [vmem:[%s1954 + $0x5e0] sm:$0xff]
        %2333 = vst [vmem:[%s1955 + $0x5e0] sm:$0xff] %v2332
        %v2334 = vld [vmem:[%s1954 + $0x5e8] sm:$0xff]
        %2335 = vst [vmem:[%s1955 + $0x5e8] sm:$0xff] %v2334
        %v2336 = vld [vmem:[%s1954 + $0x5f0] sm:$0xff]
        %2337 = vst [vmem:[%s1955 + $0x5f0] sm:$0xff] %v2336
        %v2338 = vld [vmem:[%s1954 + $0x5f8] sm:$0xff]
        %2339 = vst [vmem:[%s1955 + $0x5f8] sm:$0xff] %v2338
        %v2340 = vld [vmem:[%s1954 + $0x600] sm:$0xff]
        %2341 = vst [vmem:[%s1955 + $0x600] sm:$0xff] %v2340
        %v2342 = vld [vmem:[%s1954 + $0x608] sm:$0xff]
        %2343 = vst [vmem:[%s1955 + $0x608] sm:$0xff] %v2342
        %v2344 = vld [vmem:[%s1954 + $0x610] sm:$0xff]
        %2345 = vst [vmem:[%s1955 + $0x610] sm:$0xff] %v2344
        %v2346 = vld [vmem:[%s1954 + $0x618] sm:$0xff]
        %2347 = vst [vmem:[%s1955 + $0x618] sm:$0xff] %v2346
        %v2348 = vld [vmem:[%s1954 + $0x620] sm:$0xff]
        %2349 = vst [vmem:[%s1955 + $0x620] sm:$0xff] %v2348
        %v2350 = vld [vmem:[%s1954 + $0x628] sm:$0xff]
        %2351 = vst [vmem:[%s1955 + $0x628] sm:$0xff] %v2350
        %v2352 = vld [vmem:[%s1954 + $0x630] sm:$0xff]
        %2353 = vst [vmem:[%s1955 + $0x630] sm:$0xff] %v2352
        %v2354 = vld [vmem:[%s1954 + $0x638] sm:$0xff]
        %2355 = vst [vmem:[%s1955 + $0x638] sm:$0xff] %v2354
        %v2356 = vld [vmem:[%s1954 + $0x640] sm:$0xff]
        %2357 = vst [vmem:[%s1955 + $0x640] sm:$0xff] %v2356
        %v2358 = vld [vmem:[%s1954 + $0x648] sm:$0xff]
        %2359 = vst [vmem:[%s1955 + $0x648] sm:$0xff] %v2358
        %v2360 = vld [vmem:[%s1954 + $0x650] sm:$0xff]
        %2361 = vst [vmem:[%s1955 + $0x650] sm:$0xff] %v2360
        %v2362 = vld [vmem:[%s1954 + $0x658] sm:$0xff]
        %2363 = vst [vmem:[%s1955 + $0x658] sm:$0xff] %v2362
        %v2364 = vld [vmem:[%s1954 + $0x660] sm:$0xff]
        %2365 = vst [vmem:[%s1955 + $0x660] sm:$0xff] %v2364
        %v2366 = vld [vmem:[%s1954 + $0x668] sm:$0xff]
        %2367 = vst [vmem:[%s1955 + $0x668] sm:$0xff] %v2366
        %v2368 = vld [vmem:[%s1954 + $0x670] sm:$0xff]
        %2369 = vst [vmem:[%s1955 + $0x670] sm:$0xff] %v2368
        %v2370 = vld [vmem:[%s1954 + $0x678] sm:$0xff]
        %2371 = vst [vmem:[%s1955 + $0x678] sm:$0xff] %v2370
        %v2372 = vld [vmem:[%s1954 + $0x680] sm:$0xff]
        %2373 = vst [vmem:[%s1955 + $0x680] sm:$0xff] %v2372
        %v2374 = vld [vmem:[%s1954 + $0x688] sm:$0xff]
        %2375 = vst [vmem:[%s1955 + $0x688] sm:$0xff] %v2374
        %v2376 = vld [vmem:[%s1954 + $0x690] sm:$0xff]
        %2377 = vst [vmem:[%s1955 + $0x690] sm:$0xff] %v2376
        %v2378 = vld [vmem:[%s1954 + $0x698] sm:$0xff]
        %2379 = vst [vmem:[%s1955 + $0x698] sm:$0xff] %v2378
        %v2380 = vld [vmem:[%s1954 + $0x6a0] sm:$0xff]
        %2381 = vst [vmem:[%s1955 + $0x6a0] sm:$0xff] %v2380
        %v2382 = vld [vmem:[%s1954 + $0x6a8] sm:$0xff]
        %2383 = vst [vmem:[%s1955 + $0x6a8] sm:$0xff] %v2382
        %v2384 = vld [vmem:[%s1954 + $0x6b0] sm:$0xff]
        %2385 = vst [vmem:[%s1955 + $0x6b0] sm:$0xff] %v2384
        %v2386 = vld [vmem:[%s1954 + $0x6b8] sm:$0xff]
        %2387 = vst [vmem:[%s1955 + $0x6b8] sm:$0xff] %v2386
        %v2388 = vld [vmem:[%s1954 + $0x6c0] sm:$0xff]
        %2389 = vst [vmem:[%s1955 + $0x6c0] sm:$0xff] %v2388
        %v2390 = vld [vmem:[%s1954 + $0x6c8] sm:$0xff]
        %2391 = vst [vmem:[%s1955 + $0x6c8] sm:$0xff] %v2390
        %v2392 = vld [vmem:[%s1954 + $0x6d0] sm:$0xff]
        %2393 = vst [vmem:[%s1955 + $0x6d0] sm:$0xff] %v2392
        %v2394 = vld [vmem:[%s1954 + $0x6d8] sm:$0xff]
        %2395 = vst [vmem:[%s1955 + $0x6d8] sm:$0xff] %v2394
        %v2396 = vld [vmem:[%s1954 + $0x6e0] sm:$0xff]
        %2397 = vst [vmem:[%s1955 + $0x6e0] sm:$0xff] %v2396
        %v2398 = vld [vmem:[%s1954 + $0x6e8] sm:$0xff]
        %2399 = vst [vmem:[%s1955 + $0x6e8] sm:$0xff] %v2398
        %v2400 = vld [vmem:[%s1954 + $0x6f0] sm:$0xff]
        %2401 = vst [vmem:[%s1955 + $0x6f0] sm:$0xff] %v2400
        %v2402 = vld [vmem:[%s1954 + $0x6f8] sm:$0xff]
        %2403 = vst [vmem:[%s1955 + $0x6f8] sm:$0xff] %v2402
        %v2404 = vld [vmem:[%s1954 + $0x700] sm:$0xff]
        %2405 = vst [vmem:[%s1955 + $0x700] sm:$0xff] %v2404
        %v2406 = vld [vmem:[%s1954 + $0x708] sm:$0xff]
        %2407 = vst [vmem:[%s1955 + $0x708] sm:$0xff] %v2406
        %v2408 = vld [vmem:[%s1954 + $0x710] sm:$0xff]
        %2409 = vst [vmem:[%s1955 + $0x710] sm:$0xff] %v2408
        %v2410 = vld [vmem:[%s1954 + $0x718] sm:$0xff]
        %2411 = vst [vmem:[%s1955 + $0x718] sm:$0xff] %v2410
        %v2412 = vld [vmem:[%s1954 + $0x720] sm:$0xff]
        %2413 = vst [vmem:[%s1955 + $0x720] sm:$0xff] %v2412
        %v2414 = vld [vmem:[%s1954 + $0x728] sm:$0xff]
        %2415 = vst [vmem:[%s1955 + $0x728] sm:$0xff] %v2414
        %v2416 = vld [vmem:[%s1954 + $0x730] sm:$0xff]
        %2417 = vst [vmem:[%s1955 + $0x730] sm:$0xff] %v2416
        %v2418 = vld [vmem:[%s1954 + $0x738] sm:$0xff]
        %2419 = vst [vmem:[%s1955 + $0x738] sm:$0xff] %v2418
        %v2420 = vld [vmem:[%s1954 + $0x740] sm:$0xff]
        %2421 = vst [vmem:[%s1955 + $0x740] sm:$0xff] %v2420
        %v2422 = vld [vmem:[%s1954 + $0x748] sm:$0xff]
        %2423 = vst [vmem:[%s1955 + $0x748] sm:$0xff] %v2422
        %v2424 = vld [vmem:[%s1954 + $0x750] sm:$0xff]
        %2425 = vst [vmem:[%s1955 + $0x750] sm:$0xff] %v2424
        %v2426 = vld [vmem:[%s1954 + $0x758] sm:$0xff]
        %2427 = vst [vmem:[%s1955 + $0x758] sm:$0xff] %v2426
        %v2428 = vld [vmem:[%s1954 + $0x760] sm:$0xff]
        %2429 = vst [vmem:[%s1955 + $0x760] sm:$0xff] %v2428
        %v2430 = vld [vmem:[%s1954 + $0x768] sm:$0xff]
        %2431 = vst [vmem:[%s1955 + $0x768] sm:$0xff] %v2430
        %v2432 = vld [vmem:[%s1954 + $0x770] sm:$0xff]
        %2433 = vst [vmem:[%s1955 + $0x770] sm:$0xff] %v2432
        %v2434 = vld [vmem:[%s1954 + $0x778] sm:$0xff]
        %2435 = vst [vmem:[%s1955 + $0x778] sm:$0xff] %v2434
      $region72: #{generator_forward.1} parent=66 // loop_footer
        %s1953 = sadd.s32 1, %s1949
      $region73: #{generator_forward.1} parent=66 // loop_footer_branch
        %1948 = sbr.rel target = $region69
      $region74: #{generator_forward.1} parent=66 // loop_exit
        _
    $region67: #{generator_forward.1} parent=1 // pred_fallthru
      _
    // Predicated region
    $region75: #{generator_forward.1} parent=1 // pred_check
      _
    $region76: #{generator_forward.1} parent=1 // pred_check_branch
      %2437 = sbr.rel target = $region78
    $region77: #{generator_forward.1} parent=1 // pred_region
      _
    $region78: #{generator_forward.1} parent=1 // pred_fallthru
      _
    // Predicated region
    $region79: #{generator_forward.1} parent=1 // pred_check
      _
    $region80: #{generator_forward.1} parent=1 // pred_check_branch
      %2440 = sbr.rel (0) target = $region82
    $region81: #{generator_forward.1} parent=1 // pred_region
      %2441 = vsyncadd %s1945, 30720
    $region82: #{generator_forward.1} parent=1 // pred_fallthru
      _
    %s2442 = scalar_lea.sflag [#allocation6], 3
    // Predicated region
    $region83: #{generator_forward.1} parent=1 // pred_check
      _
    $region84: #{generator_forward.1} parent=1 // pred_check_branch
      %2444 = sbr.rel (0) target = $region86
    $region85: #{generator_forward.1} parent=1 // pred_region
      loop: start=0, step=1, limit=1
      $region87: #{generator_forward.1} parent=85 // loop_pre_header
        _
      $region88: #{generator_forward.1} parent=85 // loop_header
        %s2446 = sphi 0, %s2450
        %p2447 = scmp.ge.s32.totalorder %s2446, 1
        %s2451 = sphi %s8, %s8
        %s2452 = sphi [#allocation5], [#allocation5]
      $region89: #{generator_forward.1} parent=85 // loop_header_branch
        %2449 = sbr.rel (%p2447) target = $region93
      $region90: #{generator_forward.1} parent=85 // loop_body
        %v2453 = vld [vmem:[%s2451] sm:$0xff]
        %2454 = vst [vmem:[%s2452] sm:$0xff] %v2453
        %v2455 = vld [vmem:[%s2451 + $0x8] sm:$0xff]
        %2456 = vst [vmem:[%s2452 + $0x8] sm:$0xff] %v2455
        %v2457 = vld [vmem:[%s2451 + $0x10] sm:$0xff]
        %2458 = vst [vmem:[%s2452 + $0x10] sm:$0xff] %v2457
        %v2459 = vld [vmem:[%s2451 + $0x18] sm:$0xff]
        %2460 = vst [vmem:[%s2452 + $0x18] sm:$0xff] %v2459
        %v2461 = vld [vmem:[%s2451 + $0x20] sm:$0xff]
        %2462 = vst [vmem:[%s2452 + $0x20] sm:$0xff] %v2461
        %v2463 = vld [vmem:[%s2451 + $0x28] sm:$0xff]
        %2464 = vst [vmem:[%s2452 + $0x28] sm:$0xff] %v2463
        %v2465 = vld [vmem:[%s2451 + $0x30] sm:$0xff]
        %2466 = vst [vmem:[%s2452 + $0x30] sm:$0xff] %v2465
        %v2467 = vld [vmem:[%s2451 + $0x38] sm:$0xff]
        %2468 = vst [vmem:[%s2452 + $0x38] sm:$0xff] %v2467
        %v2469 = vld [vmem:[%s2451 + $0x40] sm:$0xff]
        %2470 = vst [vmem:[%s2452 + $0x40] sm:$0xff] %v2469
        %v2471 = vld [vmem:[%s2451 + $0x48] sm:$0xff]
        %2472 = vst [vmem:[%s2452 + $0x48] sm:$0xff] %v2471
        %v2473 = vld [vmem:[%s2451 + $0x50] sm:$0xff]
        %2474 = vst [vmem:[%s2452 + $0x50] sm:$0xff] %v2473
        %v2475 = vld [vmem:[%s2451 + $0x58] sm:$0xff]
        %2476 = vst [vmem:[%s2452 + $0x58] sm:$0xff] %v2475
        %v2477 = vld [vmem:[%s2451 + $0x60] sm:$0xff]
        %2478 = vst [vmem:[%s2452 + $0x60] sm:$0xff] %v2477
        %v2479 = vld [vmem:[%s2451 + $0x68] sm:$0xff]
        %2480 = vst [vmem:[%s2452 + $0x68] sm:$0xff] %v2479
        %v2481 = vld [vmem:[%s2451 + $0x70] sm:$0xff]
        %2482 = vst [vmem:[%s2452 + $0x70] sm:$0xff] %v2481
        %v2483 = vld [vmem:[%s2451 + $0x78] sm:$0xff]
        %2484 = vst [vmem:[%s2452 + $0x78] sm:$0xff] %v2483
        %v2485 = vld [vmem:[%s2451 + $0x80] sm:$0xff]
        %2486 = vst [vmem:[%s2452 + $0x80] sm:$0xff] %v2485
        %v2487 = vld [vmem:[%s2451 + $0x88] sm:$0xff]
        %2488 = vst [vmem:[%s2452 + $0x88] sm:$0xff] %v2487
        %v2489 = vld [vmem:[%s2451 + $0x90] sm:$0xff]
        %2490 = vst [vmem:[%s2452 + $0x90] sm:$0xff] %v2489
        %v2491 = vld [vmem:[%s2451 + $0x98] sm:$0xff]
        %2492 = vst [vmem:[%s2452 + $0x98] sm:$0xff] %v2491
        %v2493 = vld [vmem:[%s2451 + $0xa0] sm:$0xff]
        %2494 = vst [vmem:[%s2452 + $0xa0] sm:$0xff] %v2493
        %v2495 = vld [vmem:[%s2451 + $0xa8] sm:$0xff]
        %2496 = vst [vmem:[%s2452 + $0xa8] sm:$0xff] %v2495
        %v2497 = vld [vmem:[%s2451 + $0xb0] sm:$0xff]
        %2498 = vst [vmem:[%s2452 + $0xb0] sm:$0xff] %v2497
        %v2499 = vld [vmem:[%s2451 + $0xb8] sm:$0xff]
        %2500 = vst [vmem:[%s2452 + $0xb8] sm:$0xff] %v2499
        %v2501 = vld [vmem:[%s2451 + $0xc0] sm:$0xff]
        %2502 = vst [vmem:[%s2452 + $0xc0] sm:$0xff] %v2501
        %v2503 = vld [vmem:[%s2451 + $0xc8] sm:$0xff]
        %2504 = vst [vmem:[%s2452 + $0xc8] sm:$0xff] %v2503
        %v2505 = vld [vmem:[%s2451 + $0xd0] sm:$0xff]
        %2506 = vst [vmem:[%s2452 + $0xd0] sm:$0xff] %v2505
        %v2507 = vld [vmem:[%s2451 + $0xd8] sm:$0xff]
        %2508 = vst [vmem:[%s2452 + $0xd8] sm:$0xff] %v2507
        %v2509 = vld [vmem:[%s2451 + $0xe0] sm:$0xff]
        %2510 = vst [vmem:[%s2452 + $0xe0] sm:$0xff] %v2509
        %v2511 = vld [vmem:[%s2451 + $0xe8] sm:$0xff]
        %2512 = vst [vmem:[%s2452 + $0xe8] sm:$0xff] %v2511
        %v2513 = vld [vmem:[%s2451 + $0xf0] sm:$0xff]
        %2514 = vst [vmem:[%s2452 + $0xf0] sm:$0xff] %v2513
        %v2515 = vld [vmem:[%s2451 + $0xf8] sm:$0xff]
        %2516 = vst [vmem:[%s2452 + $0xf8] sm:$0xff] %v2515
        %v2517 = vld [vmem:[%s2451 + $0x100] sm:$0xff]
        %2518 = vst [vmem:[%s2452 + $0x100] sm:$0xff] %v2517
        %v2519 = vld [vmem:[%s2451 + $0x108] sm:$0xff]
        %2520 = vst [vmem:[%s2452 + $0x108] sm:$0xff] %v2519
        %v2521 = vld [vmem:[%s2451 + $0x110] sm:$0xff]
        %2522 = vst [vmem:[%s2452 + $0x110] sm:$0xff] %v2521
        %v2523 = vld [vmem:[%s2451 + $0x118] sm:$0xff]
        %2524 = vst [vmem:[%s2452 + $0x118] sm:$0xff] %v2523
        %v2525 = vld [vmem:[%s2451 + $0x120] sm:$0xff]
        %2526 = vst [vmem:[%s2452 + $0x120] sm:$0xff] %v2525
        %v2527 = vld [vmem:[%s2451 + $0x128] sm:$0xff]
        %2528 = vst [vmem:[%s2452 + $0x128] sm:$0xff] %v2527
        %v2529 = vld [vmem:[%s2451 + $0x130] sm:$0xff]
        %2530 = vst [vmem:[%s2452 + $0x130] sm:$0xff] %v2529
        %v2531 = vld [vmem:[%s2451 + $0x138] sm:$0xff]
        %2532 = vst [vmem:[%s2452 + $0x138] sm:$0xff] %v2531
        %v2533 = vld [vmem:[%s2451 + $0x140] sm:$0xff]
        %2534 = vst [vmem:[%s2452 + $0x140] sm:$0xff] %v2533
        %v2535 = vld [vmem:[%s2451 + $0x148] sm:$0xff]
        %2536 = vst [vmem:[%s2452 + $0x148] sm:$0xff] %v2535
        %v2537 = vld [vmem:[%s2451 + $0x150] sm:$0xff]
        %2538 = vst [vmem:[%s2452 + $0x150] sm:$0xff] %v2537
        %v2539 = vld [vmem:[%s2451 + $0x158] sm:$0xff]
        %2540 = vst [vmem:[%s2452 + $0x158] sm:$0xff] %v2539
        %v2541 = vld [vmem:[%s2451 + $0x160] sm:$0xff]
        %2542 = vst [vmem:[%s2452 + $0x160] sm:$0xff] %v2541
        %v2543 = vld [vmem:[%s2451 + $0x168] sm:$0xff]
        %2544 = vst [vmem:[%s2452 + $0x168] sm:$0xff] %v2543
        %v2545 = vld [vmem:[%s2451 + $0x170] sm:$0xff]
        %2546 = vst [vmem:[%s2452 + $0x170] sm:$0xff] %v2545
        %v2547 = vld [vmem:[%s2451 + $0x178] sm:$0xff]
        %2548 = vst [vmem:[%s2452 + $0x178] sm:$0xff] %v2547
        %v2549 = vld [vmem:[%s2451 + $0x180] sm:$0xff]
        %2550 = vst [vmem:[%s2452 + $0x180] sm:$0xff] %v2549
        %v2551 = vld [vmem:[%s2451 + $0x188] sm:$0xff]
        %2552 = vst [vmem:[%s2452 + $0x188] sm:$0xff] %v2551
        %v2553 = vld [vmem:[%s2451 + $0x190] sm:$0xff]
        %2554 = vst [vmem:[%s2452 + $0x190] sm:$0xff] %v2553
        %v2555 = vld [vmem:[%s2451 + $0x198] sm:$0xff]
        %2556 = vst [vmem:[%s2452 + $0x198] sm:$0xff] %v2555
        %v2557 = vld [vmem:[%s2451 + $0x1a0] sm:$0xff]
        %2558 = vst [vmem:[%s2452 + $0x1a0] sm:$0xff] %v2557
        %v2559 = vld [vmem:[%s2451 + $0x1a8] sm:$0xff]
        %2560 = vst [vmem:[%s2452 + $0x1a8] sm:$0xff] %v2559
        %v2561 = vld [vmem:[%s2451 + $0x1b0] sm:$0xff]
        %2562 = vst [vmem:[%s2452 + $0x1b0] sm:$0xff] %v2561
        %v2563 = vld [vmem:[%s2451 + $0x1b8] sm:$0xff]
        %2564 = vst [vmem:[%s2452 + $0x1b8] sm:$0xff] %v2563
        %v2565 = vld [vmem:[%s2451 + $0x1c0] sm:$0xff]
        %2566 = vst [vmem:[%s2452 + $0x1c0] sm:$0xff] %v2565
        %v2567 = vld [vmem:[%s2451 + $0x1c8] sm:$0xff]
        %2568 = vst [vmem:[%s2452 + $0x1c8] sm:$0xff] %v2567
        %v2569 = vld [vmem:[%s2451 + $0x1d0] sm:$0xff]
        %2570 = vst [vmem:[%s2452 + $0x1d0] sm:$0xff] %v2569
        %v2571 = vld [vmem:[%s2451 + $0x1d8] sm:$0xff]
        %2572 = vst [vmem:[%s2452 + $0x1d8] sm:$0xff] %v2571
        %v2573 = vld [vmem:[%s2451 + $0x1e0] sm:$0xff]
        %2574 = vst [vmem:[%s2452 + $0x1e0] sm:$0xff] %v2573
        %v2575 = vld [vmem:[%s2451 + $0x1e8] sm:$0xff]
        %2576 = vst [vmem:[%s2452 + $0x1e8] sm:$0xff] %v2575
        %v2577 = vld [vmem:[%s2451 + $0x1f0] sm:$0xff]
        %2578 = vst [vmem:[%s2452 + $0x1f0] sm:$0xff] %v2577
        %v2579 = vld [vmem:[%s2451 + $0x1f8] sm:$0xff]
        %2580 = vst [vmem:[%s2452 + $0x1f8] sm:$0xff] %v2579
        %v2581 = vld [vmem:[%s2451 + $0x200] sm:$0xff]
        %2582 = vst [vmem:[%s2452 + $0x200] sm:$0xff] %v2581
        %v2583 = vld [vmem:[%s2451 + $0x208] sm:$0xff]
        %2584 = vst [vmem:[%s2452 + $0x208] sm:$0xff] %v2583
        %v2585 = vld [vmem:[%s2451 + $0x210] sm:$0xff]
        %2586 = vst [vmem:[%s2452 + $0x210] sm:$0xff] %v2585
        %v2587 = vld [vmem:[%s2451 + $0x218] sm:$0xff]
        %2588 = vst [vmem:[%s2452 + $0x218] sm:$0xff] %v2587
        %v2589 = vld [vmem:[%s2451 + $0x220] sm:$0xff]
        %2590 = vst [vmem:[%s2452 + $0x220] sm:$0xff] %v2589
        %v2591 = vld [vmem:[%s2451 + $0x228] sm:$0xff]
        %2592 = vst [vmem:[%s2452 + $0x228] sm:$0xff] %v2591
        %v2593 = vld [vmem:[%s2451 + $0x230] sm:$0xff]
        %2594 = vst [vmem:[%s2452 + $0x230] sm:$0xff] %v2593
        %v2595 = vld [vmem:[%s2451 + $0x238] sm:$0xff]
        %2596 = vst [vmem:[%s2452 + $0x238] sm:$0xff] %v2595
        %v2597 = vld [vmem:[%s2451 + $0x240] sm:$0xff]
        %2598 = vst [vmem:[%s2452 + $0x240] sm:$0xff] %v2597
        %v2599 = vld [vmem:[%s2451 + $0x248] sm:$0xff]
        %2600 = vst [vmem:[%s2452 + $0x248] sm:$0xff] %v2599
        %v2601 = vld [vmem:[%s2451 + $0x250] sm:$0xff]
        %2602 = vst [vmem:[%s2452 + $0x250] sm:$0xff] %v2601
        %v2603 = vld [vmem:[%s2451 + $0x258] sm:$0xff]
        %2604 = vst [vmem:[%s2452 + $0x258] sm:$0xff] %v2603
        %v2605 = vld [vmem:[%s2451 + $0x260] sm:$0xff]
        %2606 = vst [vmem:[%s2452 + $0x260] sm:$0xff] %v2605
        %v2607 = vld [vmem:[%s2451 + $0x268] sm:$0xff]
        %2608 = vst [vmem:[%s2452 + $0x268] sm:$0xff] %v2607
        %v2609 = vld [vmem:[%s2451 + $0x270] sm:$0xff]
        %2610 = vst [vmem:[%s2452 + $0x270] sm:$0xff] %v2609
        %v2611 = vld [vmem:[%s2451 + $0x278] sm:$0xff]
        %2612 = vst [vmem:[%s2452 + $0x278] sm:$0xff] %v2611
        %v2613 = vld [vmem:[%s2451 + $0x280] sm:$0xff]
        %2614 = vst [vmem:[%s2452 + $0x280] sm:$0xff] %v2613
        %v2615 = vld [vmem:[%s2451 + $0x288] sm:$0xff]
        %2616 = vst [vmem:[%s2452 + $0x288] sm:$0xff] %v2615
        %v2617 = vld [vmem:[%s2451 + $0x290] sm:$0xff]
        %2618 = vst [vmem:[%s2452 + $0x290] sm:$0xff] %v2617
        %v2619 = vld [vmem:[%s2451 + $0x298] sm:$0xff]
        %2620 = vst [vmem:[%s2452 + $0x298] sm:$0xff] %v2619
        %v2621 = vld [vmem:[%s2451 + $0x2a0] sm:$0xff]
        %2622 = vst [vmem:[%s2452 + $0x2a0] sm:$0xff] %v2621
        %v2623 = vld [vmem:[%s2451 + $0x2a8] sm:$0xff]
        %2624 = vst [vmem:[%s2452 + $0x2a8] sm:$0xff] %v2623
        %v2625 = vld [vmem:[%s2451 + $0x2b0] sm:$0xff]
        %2626 = vst [vmem:[%s2452 + $0x2b0] sm:$0xff] %v2625
        %v2627 = vld [vmem:[%s2451 + $0x2b8] sm:$0xff]
        %2628 = vst [vmem:[%s2452 + $0x2b8] sm:$0xff] %v2627
        %v2629 = vld [vmem:[%s2451 + $0x2c0] sm:$0xff]
        %2630 = vst [vmem:[%s2452 + $0x2c0] sm:$0xff] %v2629
        %v2631 = vld [vmem:[%s2451 + $0x2c8] sm:$0xff]
        %2632 = vst [vmem:[%s2452 + $0x2c8] sm:$0xff] %v2631
        %v2633 = vld [vmem:[%s2451 + $0x2d0] sm:$0xff]
        %2634 = vst [vmem:[%s2452 + $0x2d0] sm:$0xff] %v2633
        %v2635 = vld [vmem:[%s2451 + $0x2d8] sm:$0xff]
        %2636 = vst [vmem:[%s2452 + $0x2d8] sm:$0xff] %v2635
        %v2637 = vld [vmem:[%s2451 + $0x2e0] sm:$0xff]
        %2638 = vst [vmem:[%s2452 + $0x2e0] sm:$0xff] %v2637
        %v2639 = vld [vmem:[%s2451 + $0x2e8] sm:$0xff]
        %2640 = vst [vmem:[%s2452 + $0x2e8] sm:$0xff] %v2639
        %v2641 = vld [vmem:[%s2451 + $0x2f0] sm:$0xff]
        %2642 = vst [vmem:[%s2452 + $0x2f0] sm:$0xff] %v2641
        %v2643 = vld [vmem:[%s2451 + $0x2f8] sm:$0xff]
        %2644 = vst [vmem:[%s2452 + $0x2f8] sm:$0xff] %v2643
      $region91: #{generator_forward.1} parent=85 // loop_footer
        %s2450 = sadd.s32 1, %s2446
      $region92: #{generator_forward.1} parent=85 // loop_footer_branch
        %2445 = sbr.rel target = $region88
      $region93: #{generator_forward.1} parent=85 // loop_exit
        _
    $region86: #{generator_forward.1} parent=1 // pred_fallthru
      _
    // Predicated region
    $region94: #{generator_forward.1} parent=1 // pred_check
      _
    $region95: #{generator_forward.1} parent=1 // pred_check_branch
      %2646 = sbr.rel target = $region97
    $region96: #{generator_forward.1} parent=1 // pred_region
      _
    $region97: #{generator_forward.1} parent=1 // pred_fallthru
      _
    // Predicated region
    $region98: #{generator_forward.1} parent=1 // pred_check
      _
    $region99: #{generator_forward.1} parent=1 // pred_check_branch
      %2649 = sbr.rel (0) target = $region101
    $region100: #{generator_forward.1} parent=1 // pred_region
      %2650 = vsyncadd %s2442, 12288
    $region101: #{generator_forward.1} parent=1 // pred_fallthru
      _
    %v2651 = vld [vmem:[%s2] sm:$0xf]
    %v2652 = vld [vmem:[%s3] sm:$0xf]
    %v2653 = vld [vmem:[%s0] sm:$0xff]
    %v2654 = vld [vmem:[%s0 + $0x8] sm:$0xff]
    %v2655 = vld [vmem:[%s0 + $0x10] sm:$0xff]
    %v2656 = vld [vmem:[%s0 + $0x18] sm:$0xff]
    %v2657 = vld [vmem:[#allocation7] sm:$0xff]
    %v2658 = vld [vmem:[#allocation7 + $0x8] sm:$0xff]
    %v2659 = vld [vmem:[#allocation7 + $0x10] sm:$0xff]
    %v2660 = vld [vmem:[#allocation7 + $0x18] sm:$0xff]
    %v2661 = vld [vmem:[#allocation7 + $0x20] sm:$0xff]
    %v2662 = vld [vmem:[#allocation7 + $0x28] sm:$0xff]
    %v2663 = vld [vmem:[#allocation7 + $0x30] sm:$0xff]
    %v2664 = vld [vmem:[#allocation7 + $0x38] sm:$0xff]
    %v2665 = vld [vmem:[#allocation7 + $0x40] sm:$0xff]
    %v2666 = vld [vmem:[#allocation7 + $0x48] sm:$0xff]
    %v2667 = vld [vmem:[#allocation7 + $0x50] sm:$0xff]
    %v2668 = vld [vmem:[#allocation7 + $0x58] sm:$0xff]
    %v2669 = vld [vmem:[#allocation7 + $0x60] sm:$0xff]
    %v2670 = vld [vmem:[#allocation7 + $0x68] sm:$0xff]
    %v2671 = vld [vmem:[#allocation7 + $0x70] sm:$0xff]
    %v2672 = vld [vmem:[#allocation7 + $0x78] sm:$0xff]
    %v2673 = vld [vmem:[#allocation7 + $0x80] sm:$0xff]
    %v2674 = vld [vmem:[#allocation7 + $0x88] sm:$0xff]
    %v2675 = vld [vmem:[#allocation7 + $0x90] sm:$0xff]
    %v2676 = vld [vmem:[#allocation7 + $0x98] sm:$0xff]
    %v2677 = vld [vmem:[#allocation7 + $0xa0] sm:$0xff]
    %v2678 = vld [vmem:[#allocation7 + $0xa8] sm:$0xff]
    %v2679 = vld [vmem:[#allocation7 + $0xb0] sm:$0xff]
    %v2680 = vld [vmem:[#allocation7 + $0xb8] sm:$0xff]
    %v2681 = vld [vmem:[#allocation7 + $0xc0] sm:$0xff]
    %v2682 = vld [vmem:[#allocation7 + $0xc8] sm:$0xff]
    %v2683 = vld [vmem:[#allocation7 + $0xd0] sm:$0xff]
    %v2684 = vld [vmem:[#allocation7 + $0xd8] sm:$0xff]
    %v2685 = vld [vmem:[#allocation7 + $0xe0] sm:$0xff]
    %v2686 = vld [vmem:[#allocation7 + $0xe8] sm:$0xff]
    %v2687 = vld [vmem:[#allocation7 + $0xf0] sm:$0xff]
    %v2688 = vld [vmem:[#allocation7 + $0xf8] sm:$0xff]
    %v2689 = vld [vmem:[#allocation7 + $0x100] sm:$0xff]
    %v2690 = vld [vmem:[#allocation7 + $0x108] sm:$0xff]
    %v2691 = vld [vmem:[#allocation7 + $0x110] sm:$0xff]
    %v2692 = vld [vmem:[#allocation7 + $0x118] sm:$0xff]
    %v2693 = vld [vmem:[#allocation7 + $0x120] sm:$0xff]
    %v2694 = vld [vmem:[#allocation7 + $0x128] sm:$0xff]
    %v2695 = vld [vmem:[#allocation7 + $0x130] sm:$0xff]
    %v2696 = vld [vmem:[#allocation7 + $0x138] sm:$0xff]
    %v2697 = vld [vmem:[#allocation7 + $0x140] sm:$0xff]
    %v2698 = vld [vmem:[#allocation7 + $0x148] sm:$0xff]
    %v2699 = vld [vmem:[#allocation7 + $0x150] sm:$0xff]
    %v2700 = vld [vmem:[#allocation7 + $0x158] sm:$0xff]
    %v2701 = vld [vmem:[#allocation7 + $0x160] sm:$0xff]
    %v2702 = vld [vmem:[#allocation7 + $0x168] sm:$0xff]
    %v2703 = vld [vmem:[#allocation7 + $0x170] sm:$0xff]
    %v2704 = vld [vmem:[#allocation7 + $0x178] sm:$0xff]
    %v2705 = vld [vmem:[#allocation7 + $0x180] sm:$0xff]
    %v2706 = vld [vmem:[#allocation7 + $0x188] sm:$0xff]
    %v2707 = vld [vmem:[#allocation7 + $0x190] sm:$0xff]
    %v2708 = vld [vmem:[#allocation7 + $0x198] sm:$0xff]
    %v2709 = vld [vmem:[#allocation7 + $0x1a0] sm:$0xff]
    %v2710 = vld [vmem:[#allocation7 + $0x1a8] sm:$0xff]
    %v2711 = vld [vmem:[#allocation7 + $0x1b0] sm:$0xff]
    %v2712 = vld [vmem:[#allocation7 + $0x1b8] sm:$0xff]
    %v2713 = vld [vmem:[#allocation7 + $0x1c0] sm:$0xff]
    %v2714 = vld [vmem:[#allocation7 + $0x1c8] sm:$0xff]
    %v2715 = vld [vmem:[#allocation7 + $0x1d0] sm:$0xff]
    %v2716 = vld [vmem:[#allocation7 + $0x1d8] sm:$0xff]
    %v2717 = vld [vmem:[#allocation7 + $0x1e0] sm:$0xff]
    %v2718 = vld [vmem:[#allocation7 + $0x1e8] sm:$0xff]
    %v2719 = vld [vmem:[#allocation7 + $0x1f0] sm:$0xff]
    %v2720 = vld [vmem:[#allocation7 + $0x1f8] sm:$0xff]
    %v2721 = vld [vmem:[#allocation7 + $0x200] sm:$0xff]
    %v2722 = vld [vmem:[#allocation7 + $0x208] sm:$0xff]
    %v2723 = vld [vmem:[#allocation7 + $0x210] sm:$0xff]
    %v2724 = vld [vmem:[#allocation7 + $0x218] sm:$0xff]
    %v2725 = vld [vmem:[#allocation7 + $0x220] sm:$0xff]
    %v2726 = vld [vmem:[#allocation7 + $0x228] sm:$0xff]
    %v2727 = vld [vmem:[#allocation7 + $0x230] sm:$0xff]
    %v2728 = vld [vmem:[#allocation7 + $0x238] sm:$0xff]
    %vm2731 = vcmask 1046528
    %v2732 = vrot.slane %v2653, 1
    %v2733 = vrot.slane %v2654, 1
    %v2734 = vsel %vm2731, %v2732, %v2733
    %2735 = vrot.lane.b32.xlu0 %v2734, 48
    %v2736 = vpop.permute.xlu0 %2735
    %2737 = vrot.lane.b32.xlu0 %v2733, 48
    %v2738 = vpop.permute.xlu0 %2737
    %vm2741 = vcmask 1045504
    %v2742 = vrot.slane %v2653, 2
    %v2743 = vrot.slane %v2654, 2
    %v2744 = vsel %vm2741, %v2742, %v2743
    %2745 = vrot.lane.b32.xlu0 %v2744, 96
    %v2746 = vpop.permute.xlu0 %2745
    %2747 = vrot.lane.b32.xlu0 %v2743, 96
    %v2748 = vpop.permute.xlu0 %2747
    %vm2751 = vcmask 392192
    %v2752 = vsel %vm2751, %v2653, %v2736
    %v2753 = vsel %vm2751, %v2654, %v2738
    %vm2754 = vcmask 785408
    %v2755 = vsel %vm2754, %v2752, %v2746
    %v2756 = vsel %vm2754, %v2753, %v2748
    %v2759 = vrot.slane %v2655, 1
    %v2760 = vrot.slane %v2656, 1
    %v2761 = vsel %vm2731, %v2759, %v2760
    %2762 = vrot.lane.b32.xlu0 %v2761, 48
    %v2763 = vpop.permute.xlu0 %2762
    %2764 = vrot.lane.b32.xlu0 %v2760, 48
    %v2765 = vpop.permute.xlu0 %2764
    %v2768 = vrot.slane %v2655, 2
    %v2769 = vrot.slane %v2656, 2
    %v2770 = vsel %vm2741, %v2768, %v2769
    %2771 = vrot.lane.b32.xlu0 %v2770, 96
    %v2772 = vpop.permute.xlu0 %2771
    %2773 = vrot.lane.b32.xlu0 %v2769, 96
    %v2774 = vpop.permute.xlu0 %2773
    %v2777 = vsel %vm2751, %v2655, %v2763
    %v2778 = vsel %vm2751, %v2656, %v2765
    %v2779 = vsel %vm2754, %v2777, %v2772
    %v2780 = vsel %vm2754, %v2778, %v2774
    %v2783 = vrot.slane %v2779, 2
    %v2784 = vrot.slane %v2772, 2
    %v2785 = vrot.slane %v2780, 2
    %v2786 = vsel %vm2741, %v2783, %v2785
    %v2787 = vrot.slane %v2774, 2
    %v2788 = vsel %vm2741, %v2784, %v2787
    %v2793 = vsel %vm2741, %v2756, %v2783
    %v2794 = vsel %vm2741, %v2748, %v2784
    %vm2795 = vcmask 130048
    %v2796 = vsel %vm2795, %v2746, 0
    %v2799 = vsel %vm2795, %v2794, 0
    %v2801 = vsel %vm2795, %v2788, 0
    %v2803 = vsel %vm2795, %v2787, 0
    %2805 = vmatpush.msra.mxu0 %v2717
    %2806 = vmatpush.msra.mxu0 %v2713
    %2807 = vmatpush.msra.mxu0 %v2709
    %2808 = vmatpush.msra.mxu0 %v2705
    %2809 = vmatpush.msra.mxu0 %v2701
    %2810 = vmatpush.msra.mxu0 %v2697
    %2811 = vmatpush.msra.mxu0 %v2693
    %2812 = vmatpush.msra.mxu0 %v2689
    %2813 = vmatpush.msra.mxu0 %v2685
    %2814 = vmatpush.msra.mxu0 %v2681
    %2815 = vmatpush.msra.mxu0 %v2677
    %2816 = vmatpush.msra.mxu0 %v2673
    %2817 = vmatpush.msra.mxu0 %v2669
    %2818 = vmatpush.msra.mxu0 %v2665
    %2819 = vmatpush.msra.mxu0 %v2661
    %2820 = vmatpush.msra.mxu0 %v2657
    %2821 = vmatmul.f32.gmra.mxu0 %v2755
    %v2822 = vpop.f32.mrf.mxu0
    %v2823 = vadd.f32 0.0, %v2822
    %2824 = vmatmul.f32.gmra.mxu0 %v2793
    %v2825 = vpop.f32.mrf.mxu0
    %v2826 = vadd.f32 0.0, %v2825
    %2827 = vmatmul.f32.gmra.mxu0 %v2786
    %v2828 = vpop.f32.mrf.mxu0
    %v2829 = vadd.f32 0.0, %v2828
    %2830 = vmatmul.f32.gmra.mxu0 %v2785
    %v2831 = vpop.f32.mrf.mxu0
    %v2832 = vadd.f32 0.0, %v2831
    %2833 = vdwg.mxu0
    %2834 = vmatpush.msra.mxu0 0.0
    %2835 = vmatpush.msra.mxu0 0.0
    %2836 = vmatpush.msra.mxu0 0.0
    %2837 = vmatpush.msra.mxu0 0.0
    %2838 = vmatpush.msra.mxu0 0.0
    %2839 = vmatpush.msra.mxu0 0.0
    %2840 = vmatpush.msra.mxu0 0.0
    %2841 = vmatpush.msra.mxu0 0.0
    %2842 = vmatpush.msra.mxu0 0.0
    %2843 = vmatpush.msra.mxu0 0.0
    %2844 = vmatpush.msra.mxu0 0.0
    %2845 = vmatpush.msra.mxu0 0.0
    %2846 = vmatpush.msra.mxu0 0.0
    %2847 = vmatpush.msra.mxu0 0.0
    %2848 = vmatpush.msra.mxu0 %v2725
    %2849 = vmatpush.msra.mxu0 %v2721
    %2850 = vmatmul.f32.gmra.mxu0 %v2796
    %v2851 = vpop.f32.mrf.mxu0
    %v2852 = vadd.f32 %v2823, %v2851
    %2853 = vmatmul.f32.gmra.mxu0 %v2799
    %v2854 = vpop.f32.mrf.mxu0
    %v2855 = vadd.f32 %v2826, %v2854
    %2856 = vmatmul.f32.gmra.mxu0 %v2801
    %v2857 = vpop.f32.mrf.mxu0
    %v2858 = vadd.f32 %v2829, %v2857
    %2859 = vmatmul.f32.gmra.mxu0 %v2803
    %v2860 = vpop.f32.mrf.mxu0
    %v2861 = vadd.f32 %v2832, %v2860
    %2862 = vdwg.mxu0
    %2863 = vmatpush.msra.mxu0 %v2718
    %2864 = vmatpush.msra.mxu0 %v2714
    %2865 = vmatpush.msra.mxu0 %v2710
    %2866 = vmatpush.msra.mxu0 %v2706
    %2867 = vmatpush.msra.mxu0 %v2702
    %2868 = vmatpush.msra.mxu0 %v2698
    %2869 = vmatpush.msra.mxu0 %v2694
    %2870 = vmatpush.msra.mxu0 %v2690
    %2871 = vmatpush.msra.mxu0 %v2686
    %2872 = vmatpush.msra.mxu0 %v2682
    %2873 = vmatpush.msra.mxu0 %v2678
    %2874 = vmatpush.msra.mxu0 %v2674
    %2875 = vmatpush.msra.mxu0 %v2670
    %2876 = vmatpush.msra.mxu0 %v2666
    %2877 = vmatpush.msra.mxu0 %v2662
    %2878 = vmatpush.msra.mxu0 %v2658
    %2879 = vmatmul.f32.gmra.mxu0 %v2755
    %v2880 = vpop.f32.mrf.mxu0
    %v2881 = vadd.f32 0.0, %v2880
    %2882 = vmatmul.f32.gmra.mxu0 %v2793
    %v2883 = vpop.f32.mrf.mxu0
    %v2884 = vadd.f32 0.0, %v2883
    %2885 = vmatmul.f32.gmra.mxu0 %v2786
    %v2886 = vpop.f32.mrf.mxu0
    %v2887 = vadd.f32 0.0, %v2886
    %2888 = vmatmul.f32.gmra.mxu0 %v2785
    %v2889 = vpop.f32.mrf.mxu0
    %v2890 = vadd.f32 0.0, %v2889
    %2891 = vdwg.mxu0
    %2892 = vmatpush.msra.mxu0 0.0
    %2893 = vmatpush.msra.mxu0 0.0
    %2894 = vmatpush.msra.mxu0 0.0
    %2895 = vmatpush.msra.mxu0 0.0
    %2896 = vmatpush.msra.mxu0 0.0
    %2897 = vmatpush.msra.mxu0 0.0
    %2898 = vmatpush.msra.mxu0 0.0
    %2899 = vmatpush.msra.mxu0 0.0
    %2900 = vmatpush.msra.mxu0 0.0
    %2901 = vmatpush.msra.mxu0 0.0
    %2902 = vmatpush.msra.mxu0 0.0
    %2903 = vmatpush.msra.mxu0 0.0
    %2904 = vmatpush.msra.mxu0 0.0
    %2905 = vmatpush.msra.mxu0 0.0
    %2906 = vmatpush.msra.mxu0 %v2726
    %2907 = vmatpush.msra.mxu0 %v2722
    %2908 = vmatmul.f32.gmra.mxu0 %v2796
    %v2909 = vpop.f32.mrf.mxu0
    %v2910 = vadd.f32 %v2881, %v2909
    %2911 = vmatmul.f32.gmra.mxu0 %v2799
    %v2912 = vpop.f32.mrf.mxu0
    %v2913 = vadd.f32 %v2884, %v2912
    %2914 = vmatmul.f32.gmra.mxu0 %v2801
    %v2915 = vpop.f32.mrf.mxu0
    %v2916 = vadd.f32 %v2887, %v2915
    %2917 = vmatmul.f32.gmra.mxu0 %v2803
    %v2918 = vpop.f32.mrf.mxu0
    %v2919 = vadd.f32 %v2890, %v2918
    %2920 = vdwg.mxu0
    %2921 = vmatpush.msra.mxu0 %v2719
    %2922 = vmatpush.msra.mxu0 %v2715
    %2923 = vmatpush.msra.mxu0 %v2711
    %2924 = vmatpush.msra.mxu0 %v2707
    %2925 = vmatpush.msra.mxu0 %v2703
    %2926 = vmatpush.msra.mxu0 %v2699
    %2927 = vmatpush.msra.mxu0 %v2695
    %2928 = vmatpush.msra.mxu0 %v2691
    %2929 = vmatpush.msra.mxu0 %v2687
    %2930 = vmatpush.msra.mxu0 %v2683
    %2931 = vmatpush.msra.mxu0 %v2679
    %2932 = vmatpush.msra.mxu0 %v2675
    %2933 = vmatpush.msra.mxu0 %v2671
    %2934 = vmatpush.msra.mxu0 %v2667
    %2935 = vmatpush.msra.mxu0 %v2663
    %2936 = vmatpush.msra.mxu0 %v2659
    %2937 = vmatmul.f32.gmra.mxu0 %v2755
    %v2938 = vpop.f32.mrf.mxu0
    %v2939 = vadd.f32 0.0, %v2938
    %2940 = vmatmul.f32.gmra.mxu0 %v2793
    %v2941 = vpop.f32.mrf.mxu0
    %v2942 = vadd.f32 0.0, %v2941
    %2943 = vmatmul.f32.gmra.mxu0 %v2786
    %v2944 = vpop.f32.mrf.mxu0
    %v2945 = vadd.f32 0.0, %v2944
    %2946 = vmatmul.f32.gmra.mxu0 %v2785
    %v2947 = vpop.f32.mrf.mxu0
    %v2948 = vadd.f32 0.0, %v2947
    %2949 = vdwg.mxu0
    %2950 = vmatpush.msra.mxu0 0.0
    %2951 = vmatpush.msra.mxu0 0.0
    %2952 = vmatpush.msra.mxu0 0.0
    %2953 = vmatpush.msra.mxu0 0.0
    %2954 = vmatpush.msra.mxu0 0.0
    %2955 = vmatpush.msra.mxu0 0.0
    %2956 = vmatpush.msra.mxu0 0.0
    %2957 = vmatpush.msra.mxu0 0.0
    %2958 = vmatpush.msra.mxu0 0.0
    %2959 = vmatpush.msra.mxu0 0.0
    %2960 = vmatpush.msra.mxu0 0.0
    %2961 = vmatpush.msra.mxu0 0.0
    %2962 = vmatpush.msra.mxu0 0.0
    %2963 = vmatpush.msra.mxu0 0.0
    %2964 = vmatpush.msra.mxu0 %v2727
    %2965 = vmatpush.msra.mxu0 %v2723
    %2966 = vmatmul.f32.gmra.mxu0 %v2796
    %v2967 = vpop.f32.mrf.mxu0
    %v2968 = vadd.f32 %v2939, %v2967
    %2969 = vmatmul.f32.gmra.mxu0 %v2799
    %v2970 = vpop.f32.mrf.mxu0
    %v2971 = vadd.f32 %v2942, %v2970
    %2972 = vmatmul.f32.gmra.mxu0 %v2801
    %v2973 = vpop.f32.mrf.mxu0
    %v2974 = vadd.f32 %v2945, %v2973
    %2975 = vmatmul.f32.gmra.mxu0 %v2803
    %v2976 = vpop.f32.mrf.mxu0
    %v2977 = vadd.f32 %v2948, %v2976
    %2978 = vdwg.mxu0
    %2979 = vmatpush.msra.mxu0 %v2720
    %2980 = vmatpush.msra.mxu0 %v2716
    %2981 = vmatpush.msra.mxu0 %v2712
    %2982 = vmatpush.msra.mxu0 %v2708
    %2983 = vmatpush.msra.mxu0 %v2704
    %2984 = vmatpush.msra.mxu0 %v2700
    %2985 = vmatpush.msra.mxu0 %v2696
    %2986 = vmatpush.msra.mxu0 %v2692
    %2987 = vmatpush.msra.mxu0 %v2688
    %2988 = vmatpush.msra.mxu0 %v2684
    %2989 = vmatpush.msra.mxu0 %v2680
    %2990 = vmatpush.msra.mxu0 %v2676
    %2991 = vmatpush.msra.mxu0 %v2672
    %2992 = vmatpush.msra.mxu0 %v2668
    %2993 = vmatpush.msra.mxu0 %v2664
    %2994 = vmatpush.msra.mxu0 %v2660
    %2995 = vmatmul.f32.gmra.mxu0 %v2755
    %v2996 = vpop.f32.mrf.mxu0
    %v2997 = vadd.f32 0.0, %v2996
    %2998 = vmatmul.f32.gmra.mxu0 %v2793
    %v2999 = vpop.f32.mrf.mxu0
    %v3000 = vadd.f32 0.0, %v2999
    %3001 = vmatmul.f32.gmra.mxu0 %v2786
    %v3002 = vpop.f32.mrf.mxu0
    %v3003 = vadd.f32 0.0, %v3002
    %3004 = vmatmul.f32.gmra.mxu0 %v2785
    %v3005 = vpop.f32.mrf.mxu0
    %v3006 = vadd.f32 0.0, %v3005
    %3007 = vdwg.mxu0
    %3008 = vmatpush.msra.mxu0 0.0
    %3009 = vmatpush.msra.mxu0 0.0
    %3010 = vmatpush.msra.mxu0 0.0
    %3011 = vmatpush.msra.mxu0 0.0
    %3012 = vmatpush.msra.mxu0 0.0
    %3013 = vmatpush.msra.mxu0 0.0
    %3014 = vmatpush.msra.mxu0 0.0
    %3015 = vmatpush.msra.mxu0 0.0
    %3016 = vmatpush.msra.mxu0 0.0
    %3017 = vmatpush.msra.mxu0 0.0
    %3018 = vmatpush.msra.mxu0 0.0
    %3019 = vmatpush.msra.mxu0 0.0
    %3020 = vmatpush.msra.mxu0 0.0
    %3021 = vmatpush.msra.mxu0 0.0
    %3022 = vmatpush.msra.mxu0 %v2728
    %3023 = vmatpush.msra.mxu0 %v2724
    %3024 = vmatmul.f32.gmra.mxu0 %v2796
    %v3025 = vpop.f32.mrf.mxu0
    %v3026 = vadd.f32 %v2997, %v3025
    %3027 = vmatmul.f32.gmra.mxu0 %v2799
    %v3028 = vpop.f32.mrf.mxu0
    %v3029 = vadd.f32 %v3000, %v3028
    %3030 = vmatmul.f32.gmra.mxu0 %v2801
    %v3031 = vpop.f32.mrf.mxu0
    %v3032 = vadd.f32 %v3003, %v3031
    %3033 = vmatmul.f32.gmra.mxu0 %v2803
    %v3034 = vpop.f32.mrf.mxu0
    %v3035 = vadd.f32 %v3006, %v3034
    %3036 = vdwg.mxu0
    %v3037 = vadd.f32 %v2852, %v2855
    %v3038 = vadd.f32 %v3037, %v2858
    %vm3039 = vcmask 1043456
    %v3040 = vsel %vm3039, %v2861, 0.0
    %v3041 = vadd.f32 %v3038, %v3040
    %v3042 = vrot.slane %v3041, 4
    %v3043 = vadd.f32 %v3041, %v3042
    %v3044 = vrot.slane %v3043, 2
    %v3045 = vadd.f32 %v3043, %v3044
    %v3046 = vrot.slane %v3045, 1
    %v3047 = vadd.f32 %v3045, %v3046
    %v3048 = vadd.f32 %v2910, %v2913
    %v3049 = vadd.f32 %v3048, %v2916
    %v3050 = vsel %vm3039, %v2919, 0.0
    %v3051 = vadd.f32 %v3049, %v3050
    %v3052 = vrot.slane %v3051, 4
    %v3053 = vadd.f32 %v3051, %v3052
    %v3054 = vrot.slane %v3053, 2
    %v3055 = vadd.f32 %v3053, %v3054
    %v3056 = vrot.slane %v3055, 1
    %v3057 = vadd.f32 %v3055, %v3056
    %v3058 = vadd.f32 %v2968, %v2971
    %v3059 = vadd.f32 %v3058, %v2974
    %v3060 = vsel %vm3039, %v2977, 0.0
    %v3061 = vadd.f32 %v3059, %v3060
    %v3062 = vrot.slane %v3061, 4
    %v3063 = vadd.f32 %v3061, %v3062
    %v3064 = vrot.slane %v3063, 2
    %v3065 = vadd.f32 %v3063, %v3064
    %v3066 = vrot.slane %v3065, 1
    %v3067 = vadd.f32 %v3065, %v3066
    %vm3068 = vcmask 523264
    %v3069 = vsel %vm3068, %v3026, 0.0
    %v3070 = vsel %vm3068, %v3029, 0.0
    %v3071 = vadd.f32 %v3069, %v3070
    %v3072 = vsel %vm3068, %v3032, 0.0
    %v3073 = vadd.f32 %v3071, %v3072
    %vm3074 = vcmask 519168
    %v3075 = vsel %vm3074, %v3035, 0.0
    %v3076 = vadd.f32 %v3073, %v3075
    %v3077 = vrot.slane %v3076, 4
    %v3078 = vadd.f32 %v3076, %v3077
    %v3079 = vrot.slane %v3078, 2
    %v3080 = vadd.f32 %v3078, %v3079
    %v3081 = vrot.slane %v3080, 1
    %v3082 = vadd.f32 %v3080, %v3081
    %v3083 = vmul.f32 %v2852, %v2852
    %v3084 = vmul.f32 %v2910, %v2910
    %v3085 = vmul.f32 %v2968, %v2968
    %v3086 = vmul.f32 %v3026, %v3026
    %v3087 = vmul.f32 %v2855, %v2855
    %v3088 = vmul.f32 %v2913, %v2913
    %v3089 = vmul.f32 %v2971, %v2971
    %v3090 = vmul.f32 %v3029, %v3029
    %v3091 = vmul.f32 %v2858, %v2858
    %v3092 = vmul.f32 %v2916, %v2916
    %v3093 = vmul.f32 %v2974, %v2974
    %v3094 = vmul.f32 %v3032, %v3032
    %v3095 = vmul.f32 %v2861, %v2861
    %v3096 = vmul.f32 %v2919, %v2919
    %v3097 = vmul.f32 %v2977, %v2977
    %v3098 = vmul.f32 %v3035, %v3035
    %v3099 = vadd.f32 %v3083, %v3087
    %v3100 = vadd.f32 %v3099, %v3091
    %v3101 = vsel %vm3039, %v3095, 0.0
    %v3102 = vadd.f32 %v3100, %v3101
    %v3103 = vrot.slane %v3102, 4
    %v3104 = vadd.f32 %v3102, %v3103
    %v3105 = vrot.slane %v3104, 2
    %v3106 = vadd.f32 %v3104, %v3105
    %v3107 = vrot.slane %v3106, 1
    %v3108 = vadd.f32 %v3106, %v3107
    %v3109 = vadd.f32 %v3084, %v3088
    %v3110 = vadd.f32 %v3109, %v3092
    %v3111 = vsel %vm3039, %v3096, 0.0
    %v3112 = vadd.f32 %v3110, %v3111
    %v3113 = vrot.slane %v3112, 4
    %v3114 = vadd.f32 %v3112, %v3113
    %v3115 = vrot.slane %v3114, 2
    %v3116 = vadd.f32 %v3114, %v3115
    %v3117 = vrot.slane %v3116, 1
    %v3118 = vadd.f32 %v3116, %v3117
    %v3119 = vadd.f32 %v3085, %v3089
    %v3120 = vadd.f32 %v3119, %v3093
    %v3121 = vsel %vm3039, %v3097, 0.0
    %v3122 = vadd.f32 %v3120, %v3121
    %v3123 = vrot.slane %v3122, 4
    %v3124 = vadd.f32 %v3122, %v3123
    %v3125 = vrot.slane %v3124, 2
    %v3126 = vadd.f32 %v3124, %v3125
    %v3127 = vrot.slane %v3126, 1
    %v3128 = vadd.f32 %v3126, %v3127
    %v3129 = vsel %vm3068, %v3086, 0.0
    %v3130 = vsel %vm3068, %v3090, 0.0
    %v3131 = vadd.f32 %v3129, %v3130
    %v3132 = vsel %vm3068, %v3094, 0.0
    %v3133 = vadd.f32 %v3131, %v3132
    %v3134 = vsel %vm3074, %v3098, 0.0
    %v3135 = vadd.f32 %v3133, %v3134
    %v3136 = vrot.slane %v3135, 4
    %v3137 = vadd.f32 %v3135, %v3136
    %v3138 = vrot.slane %v3137, 2
    %v3139 = vadd.f32 %v3137, %v3138
    %v3140 = vrot.slane %v3139, 1
    %v3141 = vadd.f32 %v3139, %v3140
    %vm3142 = vcmask 1040384
    %v3143 = vsel %vm3142, %v3047, %v3108
    %v3144 = vsel %vm3142, %v3057, %v3118
    %v3145 = vsel %vm3142, %v3067, %v3128
    %v3146 = vsel %vm3142, %v3082, %v3141
    %v3147 = vlaneseq
    %v3148 = vshrl.u32 %v3147, 7
    %v3149 = vadd.s32 %v3148, 8
    %v3150 = vadd.s32 %v3148, 16
    %v3151 = vadd.s32 %v3148, 24
    %v3152 = vadd.s32 %v3148, 32
    %v3153 = vadd.s32 %v3148, 40
    %v3154 = vadd.s32 %v3148, 48
    %v3155 = vadd.s32 %v3148, 56
    %v3156 = vadd.s32 %v3148, 64
    %v3157 = vadd.s32 %v3148, 72
    %v3158 = vadd.s32 %v3148, 80
    %v3159 = vadd.s32 %v3148, 88
    %v3160 = vadd.s32 %v3148, 96
    %v3161 = vadd.s32 %v3148, 104
    %v3162 = vadd.s32 %v3148, 112
    %v3163 = vadd.s32 %v3148, 120
    %v3164 = vadd.s32 %v3148, 128
    %v3165 = vadd.s32 %v3148, 136
    %v3166 = vadd.s32 %v3148, 144
    %v3167 = vadd.s32 %v3148, 152
    %v3168 = vadd.s32 %v3148, 160
    %v3169 = vadd.s32 %v3148, 168
    %v3170 = vadd.s32 %v3148, 176
    %v3171 = vadd.s32 %v3148, 184
    %v3172 = vadd.s32 %v3148, 192
    %v3173 = vadd.s32 %v3148, 200
    %v3174 = vadd.s32 %v3148, 208
    %v3175 = vadd.s32 %v3148, 216
    %v3176 = vadd.s32 %v3148, 224
    %v3177 = vadd.s32 %v3148, 232
    %v3178 = vadd.s32 %v3148, 240
    %v3179 = vadd.s32 %v3148, 248
    %v3180 = vadd.s32 %v3148, 256
    %v3181 = vadd.s32 %v3148, 264
    %v3182 = vadd.s32 %v3148, 272
    %v3183 = vadd.s32 %v3148, 280
    %v3184 = vadd.s32 %v3148, 288
    %v3185 = vadd.s32 %v3148, 296
    %v3186 = vadd.s32 %v3148, 304
    %v3187 = vadd.s32 %v3148, 312
    %v3188 = vadd.s32 %v3148, 320
    %v3189 = vadd.s32 %v3148, 328
    %v3190 = vadd.s32 %v3148, 336
    %v3191 = vadd.s32 %v3148, 344
    %v3192 = vadd.s32 %v3148, 352
    %v3193 = vadd.s32 %v3148, 360
    %v3194 = vadd.s32 %v3148, 368
    %v3195 = vadd.s32 %v3148, 376
    %v3196 = vadd.s32 %v3148, 384
    %v3197 = vadd.s32 %v3148, 392
    %v3198 = vadd.s32 %v3148, 400
    %v3199 = vadd.s32 %v3148, 408
    %v3200 = vadd.s32 %v3148, 416
    %v3201 = vadd.s32 %v3148, 424
    %v3202 = vadd.s32 %v3148, 432
    %v3203 = vadd.s32 %v3148, 440
    %v3204 = vlaneseq
    %v3205 = vand.u32 %v3204, 127
    %v3206 = vand.u32 %v3148, 31
    %v3207 = vand.u32 %v3149, 31
    %v3208 = vand.u32 %v3150, 31
    %v3209 = vand.u32 %v3151, 31
    %v3210 = vand.u32 %v3152, 31
    %v3211 = vand.u32 %v3153, 31
    %v3212 = vand.u32 %v3154, 31
    %v3213 = vand.u32 %v3155, 31
    %v3214 = vand.u32 %v3156, 31
    %v3215 = vand.u32 %v3157, 31
    %v3216 = vand.u32 %v3158, 31
    %v3217 = vand.u32 %v3159, 31
    %v3218 = vand.u32 %v3160, 31
    %v3219 = vand.u32 %v3161, 31
    %v3220 = vand.u32 %v3162, 31
    %v3221 = vand.u32 %v3163, 31
    %v3222 = vand.u32 %v3164, 31
    %v3223 = vand.u32 %v3165, 31
    %v3224 = vand.u32 %v3166, 31
    %v3225 = vand.u32 %v3167, 31
    %v3226 = vand.u32 %v3168, 31
    %v3227 = vand.u32 %v3169, 31
    %v3228 = vand.u32 %v3170, 31
    %v3229 = vand.u32 %v3171, 31
    %v3230 = vand.u32 %v3172, 31
    %v3231 = vand.u32 %v3173, 31
    %v3232 = vand.u32 %v3174, 31
    %v3233 = vand.u32 %v3175, 31
    %v3234 = vand.u32 %v3176, 31
    %v3235 = vand.u32 %v3177, 31
    %v3236 = vand.u32 %v3178, 31
    %v3237 = vand.u32 %v3179, 31
    %v3238 = vand.u32 %v3180, 31
    %v3239 = vand.u32 %v3181, 31
    %v3240 = vand.u32 %v3182, 31
    %v3241 = vand.u32 %v3183, 31
    %v3242 = vand.u32 %v3184, 31
    %v3243 = vand.u32 %v3185, 31
    %v3244 = vand.u32 %v3186, 31
    %v3245 = vand.u32 %v3187, 31
    %v3246 = vand.u32 %v3188, 31
    %v3247 = vand.u32 %v3189, 31
    %v3248 = vand.u32 %v3190, 31
    %v3249 = vand.u32 %v3191, 31
    %v3250 = vand.u32 %v3192, 31
    %v3251 = vand.u32 %v3193, 31
    %v3252 = vand.u32 %v3194, 31
    %v3253 = vand.u32 %v3195, 31
    %v3254 = vand.u32 %v3196, 31
    %v3255 = vand.u32 %v3197, 31
    %v3256 = vand.u32 %v3198, 31
    %v3257 = vand.u32 %v3199, 31
    %v3258 = vand.u32 %v3200, 31
    %v3259 = vand.u32 %v3201, 31
    %v3260 = vand.u32 %v3202, 31
    %v3261 = vand.u32 %v3203, 31
    %vm3262 = vcmp.eq.s32.totalorder %v3206, %v3205
    %vm3263 = vcmp.eq.s32.totalorder %v3207, %v3205
    %vm3264 = vcmp.eq.s32.totalorder %v3208, %v3205
    %vm3265 = vcmp.eq.s32.totalorder %v3209, %v3205
    %vm3266 = vcmp.eq.s32.totalorder %v3210, %v3205
    %vm3267 = vcmp.eq.s32.totalorder %v3211, %v3205
    %vm3268 = vcmp.eq.s32.totalorder %v3212, %v3205
    %vm3269 = vcmp.eq.s32.totalorder %v3213, %v3205
    %vm3270 = vcmp.eq.s32.totalorder %v3214, %v3205
    %vm3271 = vcmp.eq.s32.totalorder %v3215, %v3205
    %vm3272 = vcmp.eq.s32.totalorder %v3216, %v3205
    %vm3273 = vcmp.eq.s32.totalorder %v3217, %v3205
    %vm3274 = vcmp.eq.s32.totalorder %v3218, %v3205
    %vm3275 = vcmp.eq.s32.totalorder %v3219, %v3205
    %vm3276 = vcmp.eq.s32.totalorder %v3220, %v3205
    %vm3277 = vcmp.eq.s32.totalorder %v3221, %v3205
    %vm3278 = vcmp.eq.s32.totalorder %v3222, %v3205
    %vm3279 = vcmp.eq.s32.totalorder %v3223, %v3205
    %vm3280 = vcmp.eq.s32.totalorder %v3224, %v3205
    %vm3281 = vcmp.eq.s32.totalorder %v3225, %v3205
    %vm3282 = vcmp.eq.s32.totalorder %v3226, %v3205
    %vm3283 = vcmp.eq.s32.totalorder %v3227, %v3205
    %vm3284 = vcmp.eq.s32.totalorder %v3228, %v3205
    %vm3285 = vcmp.eq.s32.totalorder %v3229, %v3205
    %vm3286 = vcmp.eq.s32.totalorder %v3230, %v3205
    %vm3287 = vcmp.eq.s32.totalorder %v3231, %v3205
    %vm3288 = vcmp.eq.s32.totalorder %v3232, %v3205
    %vm3289 = vcmp.eq.s32.totalorder %v3233, %v3205
    %vm3290 = vcmp.eq.s32.totalorder %v3234, %v3205
    %vm3291 = vcmp.eq.s32.totalorder %v3235, %v3205
    %vm3292 = vcmp.eq.s32.totalorder %v3236, %v3205
    %vm3293 = vcmp.eq.s32.totalorder %v3237, %v3205
    %vm3294 = vcmp.eq.s32.totalorder %v3238, %v3205
    %vm3295 = vcmp.eq.s32.totalorder %v3239, %v3205
    %vm3296 = vcmp.eq.s32.totalorder %v3240, %v3205
    %vm3297 = vcmp.eq.s32.totalorder %v3241, %v3205
    %vm3298 = vcmp.eq.s32.totalorder %v3242, %v3205
    %vm3299 = vcmp.eq.s32.totalorder %v3243, %v3205
    %vm3300 = vcmp.eq.s32.totalorder %v3244, %v3205
    %vm3301 = vcmp.eq.s32.totalorder %v3245, %v3205
    %vm3302 = vcmp.eq.s32.totalorder %v3246, %v3205
    %vm3303 = vcmp.eq.s32.totalorder %v3247, %v3205
    %vm3304 = vcmp.eq.s32.totalorder %v3248, %v3205
    %vm3305 = vcmp.eq.s32.totalorder %v3249, %v3205
    %vm3306 = vcmp.eq.s32.totalorder %v3250, %v3205
    %vm3307 = vcmp.eq.s32.totalorder %v3251, %v3205
    %vm3308 = vcmp.eq.s32.totalorder %v3252, %v3205
    %vm3309 = vcmp.eq.s32.totalorder %v3253, %v3205
    %vm3310 = vcmp.eq.s32.totalorder %v3254, %v3205
    %vm3311 = vcmp.eq.s32.totalorder %v3255, %v3205
    %vm3312 = vcmp.eq.s32.totalorder %v3256, %v3205
    %vm3313 = vcmp.eq.s32.totalorder %v3257, %v3205
    %vm3314 = vcmp.eq.s32.totalorder %v3258, %v3205
    %vm3315 = vcmp.eq.s32.totalorder %v3259, %v3205
    %vm3316 = vcmp.eq.s32.totalorder %v3260, %v3205
    %vm3317 = vcmp.eq.s32.totalorder %v3261, %v3205
    %v3318 = vsel %vm3262, 1, 0
    %v3319 = vsel %vm3263, 1, 0
    %v3320 = vsel %vm3264, 1, 0
    %v3321 = vsel %vm3265, 1, 0
    %v3322 = vsel %vm3266, 1, 0
    %v3323 = vsel %vm3267, 1, 0
    %v3324 = vsel %vm3268, 1, 0
    %v3325 = vsel %vm3269, 1, 0
    %v3326 = vsel %vm3270, 1, 0
    %v3327 = vsel %vm3271, 1, 0
    %v3328 = vsel %vm3272, 1, 0
    %v3329 = vsel %vm3273, 1, 0
    %v3330 = vsel %vm3274, 1, 0
    %v3331 = vsel %vm3275, 1, 0
    %v3332 = vsel %vm3276, 1, 0
    %v3333 = vsel %vm3277, 1, 0
    %v3334 = vsel %vm3278, 1, 0
    %v3335 = vsel %vm3279, 1, 0
    %v3336 = vsel %vm3280, 1, 0
    %v3337 = vsel %vm3281, 1, 0
    %v3338 = vsel %vm3282, 1, 0
    %v3339 = vsel %vm3283, 1, 0
    %v3340 = vsel %vm3284, 1, 0
    %v3341 = vsel %vm3285, 1, 0
    %v3342 = vsel %vm3286, 1, 0
    %v3343 = vsel %vm3287, 1, 0
    %v3344 = vsel %vm3288, 1, 0
    %v3345 = vsel %vm3289, 1, 0
    %v3346 = vsel %vm3290, 1, 0
    %v3347 = vsel %vm3291, 1, 0
    %v3348 = vsel %vm3292, 1, 0
    %v3349 = vsel %vm3293, 1, 0
    %v3350 = vsel %vm3294, 1, 0
    %v3351 = vsel %vm3295, 1, 0
    %v3352 = vsel %vm3296, 1, 0
    %v3353 = vsel %vm3297, 1, 0
    %v3354 = vsel %vm3298, 1, 0
    %v3355 = vsel %vm3299, 1, 0
    %v3356 = vsel %vm3300, 1, 0
    %v3357 = vsel %vm3301, 1, 0
    %v3358 = vsel %vm3302, 1, 0
    %v3359 = vsel %vm3303, 1, 0
    %v3360 = vsel %vm3304, 1, 0
    %v3361 = vsel %vm3305, 1, 0
    %v3362 = vsel %vm3306, 1, 0
    %v3363 = vsel %vm3307, 1, 0
    %v3364 = vsel %vm3308, 1, 0
    %v3365 = vsel %vm3309, 1, 0
    %v3366 = vsel %vm3310, 1, 0
    %v3367 = vsel %vm3311, 1, 0
    %v3368 = vsel %vm3312, 1, 0
    %v3369 = vsel %vm3313, 1, 0
    %v3370 = vsel %vm3314, 1, 0
    %v3371 = vsel %vm3315, 1, 0
    %v3372 = vsel %vm3316, 1, 0
    %v3373 = vsel %vm3317, 1, 0
    %v3374 = vcvt.s32.f32 %v3318
    %v3375 = vcvt.s32.f32 %v3319
    %v3376 = vcvt.s32.f32 %v3320
    %v3377 = vcvt.s32.f32 %v3321
    %v3378 = vcvt.s32.f32 %v3322
    %v3379 = vcvt.s32.f32 %v3323
    %v3380 = vcvt.s32.f32 %v3324
    %v3381 = vcvt.s32.f32 %v3325
    %v3382 = vcvt.s32.f32 %v3326
    %v3383 = vcvt.s32.f32 %v3327
    %v3384 = vcvt.s32.f32 %v3328
    %v3385 = vcvt.s32.f32 %v3329
    %v3386 = vcvt.s32.f32 %v3330
    %v3387 = vcvt.s32.f32 %v3331
    %v3388 = vcvt.s32.f32 %v3332
    %v3389 = vcvt.s32.f32 %v3333
    %v3390 = vcvt.s32.f32 %v3334
    %v3391 = vcvt.s32.f32 %v3335
    %v3392 = vcvt.s32.f32 %v3336
    %v3393 = vcvt.s32.f32 %v3337
    %v3394 = vcvt.s32.f32 %v3338
    %v3395 = vcvt.s32.f32 %v3339
    %v3396 = vcvt.s32.f32 %v3340
    %v3397 = vcvt.s32.f32 %v3341
    %v3398 = vcvt.s32.f32 %v3342
    %v3399 = vcvt.s32.f32 %v3343
    %v3400 = vcvt.s32.f32 %v3344
    %v3401 = vcvt.s32.f32 %v3345
    %v3402 = vcvt.s32.f32 %v3346
    %v3403 = vcvt.s32.f32 %v3347
    %v3404 = vcvt.s32.f32 %v3348
    %v3405 = vcvt.s32.f32 %v3349
    %v3406 = vcvt.s32.f32 %v3350
    %v3407 = vcvt.s32.f32 %v3351
    %v3408 = vcvt.s32.f32 %v3352
    %v3409 = vcvt.s32.f32 %v3353
    %v3410 = vcvt.s32.f32 %v3354
    %v3411 = vcvt.s32.f32 %v3355
    %v3412 = vcvt.s32.f32 %v3356
    %v3413 = vcvt.s32.f32 %v3357
    %v3414 = vcvt.s32.f32 %v3358
    %v3415 = vcvt.s32.f32 %v3359
    %v3416 = vcvt.s32.f32 %v3360
    %v3417 = vcvt.s32.f32 %v3361
    %v3418 = vcvt.s32.f32 %v3362
    %v3419 = vcvt.s32.f32 %v3363
    %v3420 = vcvt.s32.f32 %v3364
    %v3421 = vcvt.s32.f32 %v3365
    %v3422 = vcvt.s32.f32 %v3366
    %v3423 = vcvt.s32.f32 %v3367
    %v3424 = vcvt.s32.f32 %v3368
    %v3425 = vcvt.s32.f32 %v3369
    %v3426 = vcvt.s32.f32 %v3370
    %v3427 = vcvt.s32.f32 %v3371
    %v3428 = vcvt.s32.f32 %v3372
    %v3429 = vcvt.s32.f32 %v3373
    %v3431 = vsel %vm3068, %v3146, 0
    %3433 = vmatpush.msra.mxu0 %v3389
    %3434 = vmatpush.msra.mxu0 %v3388
    %3435 = vmatpush.msra.mxu0 %v3387
    %3436 = vmatpush.msra.mxu0 %v3386
    %3437 = vmatpush.msra.mxu0 %v3385
    %3438 = vmatpush.msra.mxu0 %v3384
    %3439 = vmatpush.msra.mxu0 %v3383
    %3440 = vmatpush.msra.mxu0 %v3382
    %3441 = vmatpush.msra.mxu0 %v3381
    %3442 = vmatpush.msra.mxu0 %v3380
    %3443 = vmatpush.msra.mxu0 %v3379
    %3444 = vmatpush.msra.mxu0 %v3378
    %3445 = vmatpush.msra.mxu0 %v3377
    %3446 = vmatpush.msra.mxu0 %v3376
    %3447 = vmatpush.msra.mxu0 %v3375
    %3448 = vmatpush.msra.mxu0 %v3374
    %3449 = vmatmul.f32.gmra.mxu0 %v3143
    %v3450 = vpop.f32.mrf.mxu0
    %v3451 = vadd.f32 0.0, %v3450
    %3452 = vdwg.mxu0
    %3453 = vmatpush.msra.mxu0 %v3405
    %3454 = vmatpush.msra.mxu0 %v3404
    %3455 = vmatpush.msra.mxu0 %v3403
    %3456 = vmatpush.msra.mxu0 %v3402
    %3457 = vmatpush.msra.mxu0 %v3401
    %3458 = vmatpush.msra.mxu0 %v3400
    %3459 = vmatpush.msra.mxu0 %v3399
    %3460 = vmatpush.msra.mxu0 %v3398
    %3461 = vmatpush.msra.mxu0 %v3397
    %3462 = vmatpush.msra.mxu0 %v3396
    %3463 = vmatpush.msra.mxu0 %v3395
    %3464 = vmatpush.msra.mxu0 %v3394
    %3465 = vmatpush.msra.mxu0 %v3393
    %3466 = vmatpush.msra.mxu0 %v3392
    %3467 = vmatpush.msra.mxu0 %v3391
    %3468 = vmatpush.msra.mxu0 %v3390
    %3469 = vmatmul.f32.gmra.mxu0 %v3144
    %v3470 = vpop.f32.mrf.mxu0
    %v3471 = vadd.f32 %v3451, %v3470
    %3472 = vdwg.mxu0
    %3473 = vmatpush.msra.mxu0 %v3421
    %3474 = vmatpush.msra.mxu0 %v3420
    %3475 = vmatpush.msra.mxu0 %v3419
    %3476 = vmatpush.msra.mxu0 %v3418
    %3477 = vmatpush.msra.mxu0 %v3417
    %3478 = vmatpush.msra.mxu0 %v3416
    %3479 = vmatpush.msra.mxu0 %v3415
    %3480 = vmatpush.msra.mxu0 %v3414
    %3481 = vmatpush.msra.mxu0 %v3413
    %3482 = vmatpush.msra.mxu0 %v3412
    %3483 = vmatpush.msra.mxu0 %v3411
    %3484 = vmatpush.msra.mxu0 %v3410
    %3485 = vmatpush.msra.mxu0 %v3409
    %3486 = vmatpush.msra.mxu0 %v3408
    %3487 = vmatpush.msra.mxu0 %v3407
    %3488 = vmatpush.msra.mxu0 %v3406
    %3489 = vmatmul.f32.gmra.mxu0 %v3145
    %v3490 = vpop.f32.mrf.mxu0
    %v3491 = vadd.f32 %v3471, %v3490
    %3492 = vdwg.mxu0
    %3493 = vmatpush.msra.mxu0 0.0
    %3494 = vmatpush.msra.mxu0 0.0
    %3495 = vmatpush.msra.mxu0 0.0
    %3496 = vmatpush.msra.mxu0 0.0
    %3497 = vmatpush.msra.mxu0 0.0
    %3498 = vmatpush.msra.mxu0 0.0
    %3499 = vmatpush.msra.mxu0 0.0
    %3500 = vmatpush.msra.mxu0 0.0
    %3501 = vmatpush.msra.mxu0 %v3429
    %3502 = vmatpush.msra.mxu0 %v3428
    %3503 = vmatpush.msra.mxu0 %v3427
    %3504 = vmatpush.msra.mxu0 %v3426
    %3505 = vmatpush.msra.mxu0 %v3425
    %3506 = vmatpush.msra.mxu0 %v3424
    %3507 = vmatpush.msra.mxu0 %v3423
    %3508 = vmatpush.msra.mxu0 %v3422
    %3509 = vmatmul.f32.gmra.mxu0 %v3431
    %v3510 = vpop.f32.mrf.mxu0
    %v3511 = vadd.f32 %v3491, %v3510
    %3512 = vdwg.mxu0
    %v3513 = vmul.f32 %v3511, 0.0025510204
    %v3514 = vmul.f32 %v3513, %v3513
    %v3516 = vrot.slane %v3514, 7
    %v3518 = vsub.f32 %v3513, %v3516
    %v3519 = vmax.f32 %v3518, 0.0
    %v3520 = vadd.f32 %v3519, 1e-05
    %v3521 = vrsqrt.pop %v3520
    %v3522 = vmul.f32 %v3521, %v3520
    %v3523 = vmul.f32 %v3522, %v3521
    %v3524 = vmul.f32 0.5, %v3523
    %v3525 = vsub.f32 1.5, %v3524
    %v3526 = vmul.f32 %v3521, %v3525
    %vm3527 = vweird.f32 %v3520
    %vm3528 = vweird.f32 %v3521
    %vm3529 = vmor %vm3527, %vm3528
    %v3530 = vsel %vm3529, %v3521, %v3526
    %v3532 = vrot.slane %v3530, 1
    %v3534 = vmul.f32 %v2651, %v3532
    %v3535 = vmul.f32 %v3513, %v3534
    %v3536 = vsub.f32 %v2652, %v3535
    %v3538 = vrot.slane %v3536, 7
    %v3540 = vsel %vm3142, %v3534, %v3538
    %v3541 = vadd.s32 %v3205, 128
    %v3542 = vadd.s32 %v3205, 256
    %v3543 = vadd.s32 %v3205, 384
    %v3544 = vand.u32 %v3205, 31
    %v3545 = vand.u32 %v3541, 31
    %v3546 = vand.u32 %v3542, 31
    %v3547 = vand.u32 %v3543, 31
    %vm3548 = vcmp.eq.s32.totalorder %v3148, %v3544
    %vm3549 = vcmp.eq.s32.totalorder %v3148, %v3545
    %vm3550 = vcmp.eq.s32.totalorder %v3148, %v3546
    %vm3551 = vcmp.eq.s32.totalorder %v3148, %v3547
    %vm3552 = vcmp.eq.s32.totalorder %v3149, %v3544
    %vm3553 = vcmp.eq.s32.totalorder %v3149, %v3545
    %vm3554 = vcmp.eq.s32.totalorder %v3149, %v3546
    %vm3555 = vcmp.eq.s32.totalorder %v3149, %v3547
    %vm3556 = vcmp.eq.s32.totalorder %v3150, %v3544
    %vm3557 = vcmp.eq.s32.totalorder %v3150, %v3545
    %vm3558 = vcmp.eq.s32.totalorder %v3150, %v3546
    %vm3559 = vcmp.eq.s32.totalorder %v3150, %v3547
    %vm3560 = vcmp.eq.s32.totalorder %v3151, %v3544
    %vm3561 = vcmp.eq.s32.totalorder %v3151, %v3545
    %vm3562 = vcmp.eq.s32.totalorder %v3151, %v3546
    %vm3563 = vcmp.eq.s32.totalorder %v3151, %v3547
    %v3564 = vsel %vm3548, 1, 0
    %v3565 = vsel %vm3549, 1, 0
    %v3566 = vsel %vm3550, 1, 0
    %v3567 = vsel %vm3551, 1, 0
    %v3568 = vsel %vm3552, 1, 0
    %v3569 = vsel %vm3553, 1, 0
    %v3570 = vsel %vm3554, 1, 0
    %v3571 = vsel %vm3555, 1, 0
    %v3572 = vsel %vm3556, 1, 0
    %v3573 = vsel %vm3557, 1, 0
    %v3574 = vsel %vm3558, 1, 0
    %v3575 = vsel %vm3559, 1, 0
    %v3576 = vsel %vm3560, 1, 0
    %v3577 = vsel %vm3561, 1, 0
    %v3578 = vsel %vm3562, 1, 0
    %v3579 = vsel %vm3563, 1, 0
    %v3580 = vcvt.s32.f32 %v3564
    %v3581 = vcvt.s32.f32 %v3565
    %v3582 = vcvt.s32.f32 %v3566
    %v3583 = vcvt.s32.f32 %v3567
    %v3584 = vcvt.s32.f32 %v3568
    %v3585 = vcvt.s32.f32 %v3569
    %v3586 = vcvt.s32.f32 %v3570
    %v3587 = vcvt.s32.f32 %v3571
    %v3588 = vcvt.s32.f32 %v3572
    %v3589 = vcvt.s32.f32 %v3573
    %v3590 = vcvt.s32.f32 %v3574
    %v3591 = vcvt.s32.f32 %v3575
    %v3592 = vcvt.s32.f32 %v3576
    %v3593 = vcvt.s32.f32 %v3577
    %v3594 = vcvt.s32.f32 %v3578
    %v3595 = vcvt.s32.f32 %v3579
    %vm3596 = vcmask 261120
    %v3598 = vsel %vm3596, %v3540, 0
    %3600 = vmatpush.msra.mxu0 0.0
    %3601 = vmatpush.msra.mxu0 0.0
    %3602 = vmatpush.msra.mxu0 0.0
    %3603 = vmatpush.msra.mxu0 0.0
    %3604 = vmatpush.msra.mxu0 0.0
    %3605 = vmatpush.msra.mxu0 0.0
    %3606 = vmatpush.msra.mxu0 0.0
    %3607 = vmatpush.msra.mxu0 0.0
    %3608 = vmatpush.msra.mxu0 0.0
    %3609 = vmatpush.msra.mxu0 0.0
    %3610 = vmatpush.msra.mxu0 0.0
    %3611 = vmatpush.msra.mxu0 0.0
    %3612 = vmatpush.msra.mxu0 %v3592
    %3613 = vmatpush.msra.mxu0 %v3588
    %3614 = vmatpush.msra.mxu0 %v3584
    %3615 = vmatpush.msra.mxu0 %v3580
    %3616 = vmatmul.f32.gmra.mxu0 %v3598
    %v3617 = vpop.f32.mrf.mxu0
    %v3618 = vadd.f32 0.0, %v3617
    %3619 = vdwg.mxu0
    %3620 = vmatpush.msra.mxu0 0.0
    %3621 = vmatpush.msra.mxu0 0.0
    %3622 = vmatpush.msra.mxu0 0.0
    %3623 = vmatpush.msra.mxu0 0.0
    %3624 = vmatpush.msra.mxu0 0.0
    %3625 = vmatpush.msra.mxu0 0.0
    %3626 = vmatpush.msra.mxu0 0.0
    %3627 = vmatpush.msra.mxu0 0.0
    %3628 = vmatpush.msra.mxu0 0.0
    %3629 = vmatpush.msra.mxu0 0.0
    %3630 = vmatpush.msra.mxu0 0.0
    %3631 = vmatpush.msra.mxu0 0.0
    %3632 = vmatpush.msra.mxu0 %v3593
    %3633 = vmatpush.msra.mxu0 %v3589
    %3634 = vmatpush.msra.mxu0 %v3585
    %3635 = vmatpush.msra.mxu0 %v3581
    %3636 = vmatmul.f32.gmra.mxu0 %v3598
    %v3637 = vpop.f32.mrf.mxu0
    %v3638 = vadd.f32 0.0, %v3637
    %3639 = vdwg.mxu0
    %3640 = vmatpush.msra.mxu0 0.0
    %3641 = vmatpush.msra.mxu0 0.0
    %3642 = vmatpush.msra.mxu0 0.0
    %3643 = vmatpush.msra.mxu0 0.0
    %3644 = vmatpush.msra.mxu0 0.0
    %3645 = vmatpush.msra.mxu0 0.0
    %3646 = vmatpush.msra.mxu0 0.0
    %3647 = vmatpush.msra.mxu0 0.0
    %3648 = vmatpush.msra.mxu0 0.0
    %3649 = vmatpush.msra.mxu0 0.0
    %3650 = vmatpush.msra.mxu0 0.0
    %3651 = vmatpush.msra.mxu0 0.0
    %3652 = vmatpush.msra.mxu0 %v3594
    %3653 = vmatpush.msra.mxu0 %v3590
    %3654 = vmatpush.msra.mxu0 %v3586
    %3655 = vmatpush.msra.mxu0 %v3582
    %3656 = vmatmul.f32.gmra.mxu0 %v3598
    %v3657 = vpop.f32.mrf.mxu0
    %v3658 = vadd.f32 0.0, %v3657
    %3659 = vdwg.mxu0
    %3660 = vmatpush.msra.mxu0 0.0
    %3661 = vmatpush.msra.mxu0 0.0
    %3662 = vmatpush.msra.mxu0 0.0
    %3663 = vmatpush.msra.mxu0 0.0
    %3664 = vmatpush.msra.mxu0 0.0
    %3665 = vmatpush.msra.mxu0 0.0
    %3666 = vmatpush.msra.mxu0 0.0
    %3667 = vmatpush.msra.mxu0 0.0
    %3668 = vmatpush.msra.mxu0 0.0
    %3669 = vmatpush.msra.mxu0 0.0
    %3670 = vmatpush.msra.mxu0 0.0
    %3671 = vmatpush.msra.mxu0 0.0
    %3672 = vmatpush.msra.mxu0 %v3595
    %3673 = vmatpush.msra.mxu0 %v3591
    %3674 = vmatpush.msra.mxu0 %v3587
    %3675 = vmatpush.msra.mxu0 %v3583
    %3676 = vmatmul.f32.gmra.mxu0 %v3598
    %v3677 = vpop.f32.mrf.mxu0
    %v3678 = vadd.f32 0.0, %v3677
    %3679 = vdwg.mxu0
    %v3680 = vperm.slane %v3618, 0
    %v3681 = vperm.slane %v3638, 0
    %v3682 = vperm.slane %v3658, 0
    %v3683 = vperm.slane %v3678, 0
    %v3684 = vmul.f32 %v2852, %v3680
    %v3685 = vmul.f32 %v2910, %v3681
    %v3686 = vmul.f32 %v2968, %v3682
    %v3687 = vmul.f32 %v3026, %v3683
    %v3688 = vmul.f32 %v2855, %v3680
    %v3689 = vmul.f32 %v2913, %v3681
    %v3690 = vmul.f32 %v2971, %v3682
    %v3691 = vmul.f32 %v3029, %v3683
    %v3692 = vmul.f32 %v2858, %v3680
    %v3693 = vmul.f32 %v2916, %v3681
    %v3694 = vmul.f32 %v2974, %v3682
    %v3695 = vmul.f32 %v3032, %v3683
    %v3696 = vmul.f32 %v2861, %v3680
    %v3697 = vmul.f32 %v2919, %v3681
    %v3698 = vmul.f32 %v2977, %v3682
    %v3699 = vmul.f32 %v3035, %v3683
    %v3700 = vperm.slane %v3618, 1
    %v3701 = vperm.slane %v3638, 1
    %v3702 = vperm.slane %v3658, 1
    %v3703 = vperm.slane %v3678, 1
    %v3704 = vadd.f32 %v3684, %v3700
    %v3705 = vadd.f32 %v3685, %v3701
    %v3706 = vadd.f32 %v3686, %v3702
    %v3707 = vadd.f32 %v3687, %v3703
    %v3708 = vadd.f32 %v3688, %v3700
    %v3709 = vadd.f32 %v3689, %v3701
    %v3710 = vadd.f32 %v3690, %v3702
    %v3711 = vadd.f32 %v3691, %v3703
    %v3712 = vadd.f32 %v3692, %v3700
    %v3713 = vadd.f32 %v3693, %v3701
    %v3714 = vadd.f32 %v3694, %v3702
    %v3715 = vadd.f32 %v3695, %v3703
    %v3716 = vadd.f32 %v3696, %v3700
    %v3717 = vadd.f32 %v3697, %v3701
    %v3718 = vadd.f32 %v3698, %v3702
    %v3719 = vadd.f32 %v3699, %v3703
    %vm3720 = vcmp.ge.f32.partialorder %v3704, 0.0
    %vm3721 = vcmp.ge.f32.partialorder %v3705, 0.0
    %vm3722 = vcmp.ge.f32.partialorder %v3706, 0.0
    %vm3723 = vcmp.ge.f32.partialorder %v3707, 0.0
    %vm3724 = vcmp.ge.f32.partialorder %v3708, 0.0
    %vm3725 = vcmp.ge.f32.partialorder %v3709, 0.0
    %vm3726 = vcmp.ge.f32.partialorder %v3710, 0.0
    %vm3727 = vcmp.ge.f32.partialorder %v3711, 0.0
    %vm3728 = vcmp.ge.f32.partialorder %v3712, 0.0
    %vm3729 = vcmp.ge.f32.partialorder %v3713, 0.0
    %vm3730 = vcmp.ge.f32.partialorder %v3714, 0.0
    %vm3731 = vcmp.ge.f32.partialorder %v3715, 0.0
    %vm3732 = vcmp.ge.f32.partialorder %v3716, 0.0
    %vm3733 = vcmp.ge.f32.partialorder %v3717, 0.0
    %vm3734 = vcmp.ge.f32.partialorder %v3718, 0.0
    %vm3735 = vcmp.ge.f32.partialorder %v3719, 0.0
    %v3736 = vmul.f32 %v3704, 0.2
    %v3737 = vmul.f32 %v3705, 0.2
    %v3738 = vmul.f32 %v3706, 0.2
    %v3739 = vmul.f32 %v3707, 0.2
    %v3740 = vmul.f32 %v3708, 0.2
    %v3741 = vmul.f32 %v3709, 0.2
    %v3742 = vmul.f32 %v3710, 0.2
    %v3743 = vmul.f32 %v3711, 0.2
    %v3744 = vmul.f32 %v3712, 0.2
    %v3745 = vmul.f32 %v3713, 0.2
    %v3746 = vmul.f32 %v3714, 0.2
    %v3747 = vmul.f32 %v3715, 0.2
    %v3748 = vmul.f32 %v3716, 0.2
    %v3749 = vmul.f32 %v3717, 0.2
    %v3750 = vmul.f32 %v3718, 0.2
    %v3751 = vmul.f32 %v3719, 0.2
    %v3752 = vsel %vm3720, %v3704, %v3736
    %v3753 = vsel %vm3721, %v3705, %v3737
    %v3754 = vsel %vm3722, %v3706, %v3738
    %v3755 = vsel %vm3723, %v3707, %v3739
    %v3756 = vsel %vm3724, %v3708, %v3740
    %v3757 = vsel %vm3725, %v3709, %v3741
    %v3758 = vsel %vm3726, %v3710, %v3742
    %v3759 = vsel %vm3727, %v3711, %v3743
    %v3760 = vsel %vm3728, %v3712, %v3744
    %v3761 = vsel %vm3729, %v3713, %v3745
    %v3762 = vsel %vm3730, %v3714, %v3746
    %v3763 = vsel %vm3731, %v3715, %v3747
    %v3764 = vsel %vm3732, %v3716, %v3748
    %v3765 = vsel %vm3733, %v3717, %v3749
    %v3766 = vsel %vm3734, %v3718, %v3750
    %v3767 = vsel %vm3735, %v3719, %v3751
    %s3768 = smul.u32 8, 168
    %s3769 = smul.u32 %s3768, 3
    %s3770 = sshll.u32 %s3769, 4
    %3771 = dma.done [#allocation6], %s3770
    %v3772 = vld [vmem:[#allocation2] sm:$0xff]
    %v3773 = vld [vmem:[#allocation2 + $0x8] sm:$0xff]
    %v3774 = vld [vmem:[#allocation2 + $0x10] sm:$0xff]
    %v3775 = vld [vmem:[#allocation2 + $0x18] sm:$0xff]
    %v3776 = vld [vmem:[#allocation2 + $0x20] sm:$0xff]
    %v3777 = vld [vmem:[#allocation2 + $0x28] sm:$0xff]
    %v3778 = vld [vmem:[#allocation2 + $0x30] sm:$0xff]
    %v3779 = vld [vmem:[#allocation2 + $0x38] sm:$0xff]
    %v3780 = vld [vmem:[#allocation2 + $0x40] sm:$0xff]
    %v3781 = vld [vmem:[#allocation2 + $0x48] sm:$0xff]
    %v3782 = vld [vmem:[#allocation2 + $0x50] sm:$0xff]
    %v3783 = vld [vmem:[#allocation2 + $0x58] sm:$0xff]
    %v3784 = vld [vmem:[#allocation2 + $0x60] sm:$0xff]
    %v3785 = vld [vmem:[#allocation2 + $0x68] sm:$0xff]
    %v3786 = vld [vmem:[#allocation2 + $0x70] sm:$0xff]
    %v3787 = vld [vmem:[#allocation2 + $0x78] sm:$0xff]
    %v3788 = vld [vmem:[#allocation2 + $0x80] sm:$0xff]
    %v3789 = vld [vmem:[#allocation2 + $0x88] sm:$0xff]
    %v3790 = vld [vmem:[#allocation2 + $0x90] sm:$0xff]
    %v3791 = vld [vmem:[#allocation2 + $0x98] sm:$0xff]
    %v3792 = vld [vmem:[#allocation2 + $0xa0] sm:$0xff]
    %v3793 = vld [vmem:[#allocation2 + $0xa8] sm:$0xff]
    %v3794 = vld [vmem:[#allocation2 + $0xb0] sm:$0xff]
    %v3795 = vld [vmem:[#allocation2 + $0xb8] sm:$0xff]
    %v3796 = vld [vmem:[#allocation2 + $0xc0] sm:$0xff]
    %v3797 = vld [vmem:[#allocation2 + $0xc8] sm:$0xff]
    %v3798 = vld [vmem:[#allocation2 + $0xd0] sm:$0xff]
    %v3799 = vld [vmem:[#allocation2 + $0xd8] sm:$0xff]
    %v3800 = vld [vmem:[#allocation2 + $0xe0] sm:$0xff]
    %v3801 = vld [vmem:[#allocation2 + $0xe8] sm:$0xff]
    %v3802 = vld [vmem:[#allocation2 + $0xf0] sm:$0xff]
    %v3803 = vld [vmem:[#allocation2 + $0xf8] sm:$0xff]
    %v3804 = vld [vmem:[#allocation2 + $0x100] sm:$0xff]
    %v3805 = vld [vmem:[#allocation2 + $0x108] sm:$0xff]
    %v3806 = vld [vmem:[#allocation2 + $0x110] sm:$0xff]
    %v3807 = vld [vmem:[#allocation2 + $0x118] sm:$0xff]
    %v3808 = vld [vmem:[#allocation2 + $0x120] sm:$0xff]
    %v3809 = vld [vmem:[#allocation2 + $0x128] sm:$0xff]
    %v3810 = vld [vmem:[#allocation2 + $0x130] sm:$0xff]
    %v3811 = vld [vmem:[#allocation2 + $0x138] sm:$0xff]
    %v3812 = vld [vmem:[#allocation2 + $0x140] sm:$0xff]
    %v3813 = vld [vmem:[#allocation2 + $0x148] sm:$0xff]
    %v3814 = vld [vmem:[#allocation2 + $0x150] sm:$0xff]
    %v3815 = vld [vmem:[#allocation2 + $0x158] sm:$0xff]
    %v3816 = vld [vmem:[#allocation2 + $0x160] sm:$0xff]
    %v3817 = vld [vmem:[#allocation2 + $0x168] sm:$0xff]
    %v3818 = vld [vmem:[#allocation2 + $0x170] sm:$0xff]
    %v3819 = vld [vmem:[#allocation2 + $0x178] sm:$0xff]
    %v3820 = vld [vmem:[#allocation2 + $0x180] sm:$0xff]
    %v3821 = vld [vmem:[#allocation2 + $0x188] sm:$0xff]
    %v3822 = vld [vmem:[#allocation2 + $0x190] sm:$0xff]
    %v3823 = vld [vmem:[#allocation2 + $0x198] sm:$0xff]
    %v3824 = vld [vmem:[#allocation2 + $0x1a0] sm:$0xff]
    %v3825 = vld [vmem:[#allocation2 + $0x1a8] sm:$0xff]
    %v3826 = vld [vmem:[#allocation2 + $0x1b0] sm:$0xff]
    %v3827 = vld [vmem:[#allocation2 + $0x1b8] sm:$0xff]
    %v3828 = vld [vmem:[#allocation2 + $0x1c0] sm:$0xff]
    %v3829 = vld [vmem:[#allocation2 + $0x1c8] sm:$0xff]
    %v3830 = vld [vmem:[#allocation2 + $0x1d0] sm:$0xff]
    %v3831 = vld [vmem:[#allocation2 + $0x1d8] sm:$0xff]
    %v3832 = vld [vmem:[#allocation2 + $0x1e0] sm:$0xff]
    %v3833 = vld [vmem:[#allocation2 + $0x1e8] sm:$0xff]
    %v3834 = vld [vmem:[#allocation2 + $0x1f0] sm:$0xff]
    %v3835 = vld [vmem:[#allocation2 + $0x1f8] sm:$0xff]
    %v3836 = vld [vmem:[#allocation2 + $0x200] sm:$0xff]
    %v3837 = vld [vmem:[#allocation2 + $0x208] sm:$0xff]
    %v3838 = vld [vmem:[#allocation2 + $0x210] sm:$0xff]
    %v3839 = vld [vmem:[#allocation2 + $0x218] sm:$0xff]
    %v3840 = vld [vmem:[#allocation2 + $0x220] sm:$0xff]
    %v3841 = vld [vmem:[#allocation2 + $0x228] sm:$0xff]
    %v3842 = vld [vmem:[#allocation2 + $0x230] sm:$0xff]
    %v3843 = vld [vmem:[#allocation2 + $0x238] sm:$0xff]
    %v3844 = vld [vmem:[#allocation2 + $0x240] sm:$0xff]
    %v3845 = vld [vmem:[#allocation2 + $0x248] sm:$0xff]
    %v3846 = vld [vmem:[#allocation2 + $0x250] sm:$0xff]
    %v3847 = vld [vmem:[#allocation2 + $0x258] sm:$0xff]
    %v3848 = vld [vmem:[#allocation2 + $0x260] sm:$0xff]
    %v3849 = vld [vmem:[#allocation2 + $0x268] sm:$0xff]
    %v3850 = vld [vmem:[#allocation2 + $0x270] sm:$0xff]
    %v3851 = vld [vmem:[#allocation2 + $0x278] sm:$0xff]
    %v3852 = vld [vmem:[#allocation2 + $0x280] sm:$0xff]
    %v3853 = vld [vmem:[#allocation2 + $0x288] sm:$0xff]
    %v3854 = vld [vmem:[#allocation2 + $0x290] sm:$0xff]
    %v3855 = vld [vmem:[#allocation2 + $0x298] sm:$0xff]
    %v3856 = vld [vmem:[#allocation2 + $0x2a0] sm:$0xff]
    %v3857 = vld [vmem:[#allocation2 + $0x2a8] sm:$0xff]
    %v3858 = vld [vmem:[#allocation2 + $0x2b0] sm:$0xff]
    %v3859 = vld [vmem:[#allocation2 + $0x2b8] sm:$0xff]
    %v3860 = vld [vmem:[#allocation2 + $0x2c0] sm:$0xff]
    %v3861 = vld [vmem:[#allocation2 + $0x2c8] sm:$0xff]
    %v3862 = vld [vmem:[#allocation2 + $0x2d0] sm:$0xff]
    %v3863 = vld [vmem:[#allocation2 + $0x2d8] sm:$0xff]
    %v3864 = vld [vmem:[#allocation2 + $0x2e0] sm:$0xff]
    %v3865 = vld [vmem:[#allocation2 + $0x2e8] sm:$0xff]
    %v3866 = vld [vmem:[#allocation2 + $0x2f0] sm:$0xff]
    %v3867 = vld [vmem:[#allocation2 + $0x2f8] sm:$0xff]
    %v3868 = vld [vmem:[#allocation2 + $0x300] sm:$0xff]
    %v3869 = vld [vmem:[#allocation2 + $0x308] sm:$0xff]
    %v3870 = vld [vmem:[#allocation2 + $0x310] sm:$0xff]
    %v3871 = vld [vmem:[#allocation2 + $0x318] sm:$0xff]
    %v3872 = vld [vmem:[#allocation2 + $0x320] sm:$0xff]
    %v3873 = vld [vmem:[#allocation2 + $0x328] sm:$0xff]
    %v3874 = vld [vmem:[#allocation2 + $0x330] sm:$0xff]
    %v3875 = vld [vmem:[#allocation2 + $0x338] sm:$0xff]
    %v3876 = vld [vmem:[#allocation2 + $0x340] sm:$0xff]
    %v3877 = vld [vmem:[#allocation2 + $0x348] sm:$0xff]
    %v3878 = vld [vmem:[#allocation2 + $0x350] sm:$0xff]
    %v3879 = vld [vmem:[#allocation2 + $0x358] sm:$0xff]
    %v3880 = vld [vmem:[#allocation2 + $0x360] sm:$0xff]
    %v3881 = vld [vmem:[#allocation2 + $0x368] sm:$0xff]
    %v3882 = vld [vmem:[#allocation2 + $0x370] sm:$0xff]
    %v3883 = vld [vmem:[#allocation2 + $0x378] sm:$0xff]
    %v3884 = vld [vmem:[#allocation2 + $0x380] sm:$0xff]
    %v3885 = vld [vmem:[#allocation2 + $0x388] sm:$0xff]
    %v3886 = vld [vmem:[#allocation2 + $0x390] sm:$0xff]
    %v3887 = vld [vmem:[#allocation2 + $0x398] sm:$0xff]
    %v3888 = vld [vmem:[#allocation2 + $0x3a0] sm:$0xff]
    %v3889 = vld [vmem:[#allocation2 + $0x3a8] sm:$0xff]
    %v3890 = vld [vmem:[#allocation2 + $0x3b0] sm:$0xff]
    %v3891 = vld [vmem:[#allocation2 + $0x3b8] sm:$0xff]
    %v3892 = vld [vmem:[#allocation2 + $0x3c0] sm:$0xff]
    %v3893 = vld [vmem:[#allocation2 + $0x3c8] sm:$0xff]
    %v3894 = vld [vmem:[#allocation2 + $0x3d0] sm:$0xff]
    %v3895 = vld [vmem:[#allocation2 + $0x3d8] sm:$0xff]
    %v3896 = vld [vmem:[#allocation2 + $0x3e0] sm:$0xff]
    %v3897 = vld [vmem:[#allocation2 + $0x3e8] sm:$0xff]
    %v3898 = vld [vmem:[#allocation2 + $0x3f0] sm:$0xff]
    %v3899 = vld [vmem:[#allocation2 + $0x3f8] sm:$0xff]
    %v3900 = vld [vmem:[#allocation2 + $0x400] sm:$0xff]
    %v3901 = vld [vmem:[#allocation2 + $0x408] sm:$0xff]
    %v3902 = vld [vmem:[#allocation2 + $0x410] sm:$0xff]
    %v3903 = vld [vmem:[#allocation2 + $0x418] sm:$0xff]
    %v3904 = vld [vmem:[#allocation2 + $0x420] sm:$0xff]
    %v3905 = vld [vmem:[#allocation2 + $0x428] sm:$0xff]
    %v3906 = vld [vmem:[#allocation2 + $0x430] sm:$0xff]
    %v3907 = vld [vmem:[#allocation2 + $0x438] sm:$0xff]
    %v3908 = vld [vmem:[#allocation2 + $0x440] sm:$0xff]
    %v3909 = vld [vmem:[#allocation2 + $0x448] sm:$0xff]
    %v3910 = vld [vmem:[#allocation2 + $0x450] sm:$0xff]
    %v3911 = vld [vmem:[#allocation2 + $0x458] sm:$0xff]
    %v3912 = vld [vmem:[#allocation2 + $0x460] sm:$0xff]
    %v3913 = vld [vmem:[#allocation2 + $0x468] sm:$0xff]
    %v3914 = vld [vmem:[#allocation2 + $0x470] sm:$0xff]
    %v3915 = vld [vmem:[#allocation2 + $0x478] sm:$0xff]
    %v3916 = vld [vmem:[#allocation2 + $0x480] sm:$0xff]
    %v3917 = vld [vmem:[#allocation2 + $0x488] sm:$0xff]
    %v3918 = vld [vmem:[#allocation2 + $0x490] sm:$0xff]
    %v3919 = vld [vmem:[#allocation2 + $0x498] sm:$0xff]
    %v3920 = vld [vmem:[#allocation2 + $0x4a0] sm:$0xff]
    %v3921 = vld [vmem:[#allocation2 + $0x4a8] sm:$0xff]
    %v3922 = vld [vmem:[#allocation2 + $0x4b0] sm:$0xff]
    %v3923 = vld [vmem:[#allocation2 + $0x4b8] sm:$0xff]
    %v3924 = vld [vmem:[#allocation2 + $0x4c0] sm:$0xff]
    %v3925 = vld [vmem:[#allocation2 + $0x4c8] sm:$0xff]
    %v3926 = vld [vmem:[#allocation2 + $0x4d0] sm:$0xff]
    %v3927 = vld [vmem:[#allocation2 + $0x4d8] sm:$0xff]
    %v3928 = vld [vmem:[#allocation2 + $0x4e0] sm:$0xff]
    %v3929 = vld [vmem:[#allocation2 + $0x4e8] sm:$0xff]
    %v3930 = vld [vmem:[#allocation2 + $0x4f0] sm:$0xff]
    %v3931 = vld [vmem:[#allocation2 + $0x4f8] sm:$0xff]
    %v3932 = vld [vmem:[#allocation2 + $0x500] sm:$0xff]
    %v3933 = vld [vmem:[#allocation2 + $0x508] sm:$0xff]
    %v3934 = vld [vmem:[#allocation2 + $0x510] sm:$0xff]
    %v3935 = vld [vmem:[#allocation2 + $0x518] sm:$0xff]
    %v3936 = vld [vmem:[#allocation2 + $0x520] sm:$0xff]
    %v3937 = vld [vmem:[#allocation2 + $0x528] sm:$0xff]
    %v3938 = vld [vmem:[#allocation2 + $0x530] sm:$0xff]
    %v3939 = vld [vmem:[#allocation2 + $0x538] sm:$0xff]
    %v3940 = vld [vmem:[#allocation2 + $0x540] sm:$0xff]
    %v3941 = vld [vmem:[#allocation2 + $0x548] sm:$0xff]
    %v3942 = vld [vmem:[#allocation2 + $0x550] sm:$0xff]
    %v3943 = vld [vmem:[#allocation2 + $0x558] sm:$0xff]
    %v3944 = vld [vmem:[#allocation2 + $0x560] sm:$0xff]
    %v3945 = vld [vmem:[#allocation2 + $0x568] sm:$0xff]
    %v3946 = vld [vmem:[#allocation2 + $0x570] sm:$0xff]
    %v3947 = vld [vmem:[#allocation2 + $0x578] sm:$0xff]
    %v3948 = vld [vmem:[#allocation2 + $0x580] sm:$0xff]
    %v3949 = vld [vmem:[#allocation2 + $0x588] sm:$0xff]
    %v3950 = vld [vmem:[#allocation2 + $0x590] sm:$0xff]
    %v3951 = vld [vmem:[#allocation2 + $0x598] sm:$0xff]
    %v3952 = vld [vmem:[#allocation2 + $0x5a0] sm:$0xff]
    %v3953 = vld [vmem:[#allocation2 + $0x5a8] sm:$0xff]
    %v3954 = vld [vmem:[#allocation2 + $0x5b0] sm:$0xff]
    %v3955 = vld [vmem:[#allocation2 + $0x5b8] sm:$0xff]
    %v3956 = vld [vmem:[#allocation2 + $0x5c0] sm:$0xff]
    %v3957 = vld [vmem:[#allocation2 + $0x5c8] sm:$0xff]
    %v3958 = vld [vmem:[#allocation2 + $0x5d0] sm:$0xff]
    %v3959 = vld [vmem:[#allocation2 + $0x5d8] sm:$0xff]
    %v3960 = vld [vmem:[#allocation2 + $0x5e0] sm:$0xff]
    %v3961 = vld [vmem:[#allocation2 + $0x5e8] sm:$0xff]
    %v3962 = vld [vmem:[#allocation2 + $0x5f0] sm:$0xff]
    %v3963 = vld [vmem:[#allocation2 + $0x5f8] sm:$0xff]
    %v3964 = vld [vmem:[#allocation2 + $0x600] sm:$0xff]
    %v3965 = vld [vmem:[#allocation2 + $0x608] sm:$0xff]
    %v3966 = vld [vmem:[#allocation2 + $0x610] sm:$0xff]
    %v3967 = vld [vmem:[#allocation2 + $0x618] sm:$0xff]
    %v3968 = vld [vmem:[#allocation2 + $0x620] sm:$0xff]
    %v3969 = vld [vmem:[#allocation2 + $0x628] sm:$0xff]
    %v3970 = vld [vmem:[#allocation2 + $0x630] sm:$0xff]
    %v3971 = vld [vmem:[#allocation2 + $0x638] sm:$0xff]
    %v3972 = vld [vmem:[#allocation2 + $0x640] sm:$0xff]
    %v3973 = vld [vmem:[#allocation2 + $0x648] sm:$0xff]
    %v3974 = vld [vmem:[#allocation2 + $0x650] sm:$0xff]
    %v3975 = vld [vmem:[#allocation2 + $0x658] sm:$0xff]
    %v3976 = vld [vmem:[#allocation2 + $0x660] sm:$0xff]
    %v3977 = vld [vmem:[#allocation2 + $0x668] sm:$0xff]
    %v3978 = vld [vmem:[#allocation2 + $0x670] sm:$0xff]
    %v3979 = vld [vmem:[#allocation2 + $0x678] sm:$0xff]
    %v3980 = vld [vmem:[#allocation2 + $0x680] sm:$0xff]
    %v3981 = vld [vmem:[#allocation2 + $0x688] sm:$0xff]
    %v3982 = vld [vmem:[#allocation2 + $0x690] sm:$0xff]
    %v3983 = vld [vmem:[#allocation2 + $0x698] sm:$0xff]
    %v3984 = vld [vmem:[#allocation2 + $0x6a0] sm:$0xff]
    %v3985 = vld [vmem:[#allocation2 + $0x6a8] sm:$0xff]
    %v3986 = vld [vmem:[#allocation2 + $0x6b0] sm:$0xff]
    %v3987 = vld [vmem:[#allocation2 + $0x6b8] sm:$0xff]
    %v3988 = vld [vmem:[#allocation2 + $0x6c0] sm:$0xff]
    %v3989 = vld [vmem:[#allocation2 + $0x6c8] sm:$0xff]
    %v3990 = vld [vmem:[#allocation2 + $0x6d0] sm:$0xff]
    %v3991 = vld [vmem:[#allocation2 + $0x6d8] sm:$0xff]
    %v3992 = vld [vmem:[#allocation2 + $0x6e0] sm:$0xff]
    %v3993 = vld [vmem:[#allocation2 + $0x6e8] sm:$0xff]
    %v3994 = vld [vmem:[#allocation2 + $0x6f0] sm:$0xff]
    %v3995 = vld [vmem:[#allocation2 + $0x6f8] sm:$0xff]
    %v3996 = vld [vmem:[#allocation2 + $0x700] sm:$0xff]
    %v3997 = vld [vmem:[#allocation2 + $0x708] sm:$0xff]
    %v3998 = vld [vmem:[#allocation2 + $0x710] sm:$0xff]
    %v3999 = vld [vmem:[#allocation2 + $0x718] sm:$0xff]
    %v4000 = vld [vmem:[#allocation2 + $0x720] sm:$0xff]
    %v4001 = vld [vmem:[#allocation2 + $0x728] sm:$0xff]
    %v4002 = vld [vmem:[#allocation2 + $0x730] sm:$0xff]
    %v4003 = vld [vmem:[#allocation2 + $0x738] sm:$0xff]
    %v4004 = vld [vmem:[#allocation2 + $0x740] sm:$0xff]
    %v4005 = vld [vmem:[#allocation2 + $0x748] sm:$0xff]
    %v4006 = vld [vmem:[#allocation2 + $0x750] sm:$0xff]
    %v4007 = vld [vmem:[#allocation2 + $0x758] sm:$0xff]
    %v4008 = vld [vmem:[#allocation2 + $0x760] sm:$0xff]
    %v4009 = vld [vmem:[#allocation2 + $0x768] sm:$0xff]
    %v4010 = vld [vmem:[#allocation2 + $0x770] sm:$0xff]
    %v4011 = vld [vmem:[#allocation2 + $0x778] sm:$0xff]
    %v4012 = vld [vmem:[#allocation2 + $0x780] sm:$0xff]
    %v4013 = vld [vmem:[#allocation2 + $0x788] sm:$0xff]
    %v4014 = vld [vmem:[#allocation2 + $0x790] sm:$0xff]
    %v4015 = vld [vmem:[#allocation2 + $0x798] sm:$0xff]
    %v4016 = vld [vmem:[#allocation2 + $0x7a0] sm:$0xff]
    %v4017 = vld [vmem:[#allocation2 + $0x7a8] sm:$0xff]
    %v4018 = vld [vmem:[#allocation2 + $0x7b0] sm:$0xff]
    %v4019 = vld [vmem:[#allocation2 + $0x7b8] sm:$0xff]
    %v4020 = vld [vmem:[#allocation2 + $0x7c0] sm:$0xff]
    %v4021 = vld [vmem:[#allocation2 + $0x7c8] sm:$0xff]
    %v4022 = vld [vmem:[#allocation2 + $0x7d0] sm:$0xff]
    %v4023 = vld [vmem:[#allocation2 + $0x7d8] sm:$0xff]
    %v4024 = vld [vmem:[#allocation2 + $0x7e0] sm:$0xff]
    %v4025 = vld [vmem:[#allocation2 + $0x7e8] sm:$0xff]
    %v4026 = vld [vmem:[#allocation2 + $0x7f0] sm:$0xff]
    %v4027 = vld [vmem:[#allocation2 + $0x7f8] sm:$0xff]
    %v4028 = vld [vmem:[#allocation2 + $0x800] sm:$0xff]
    %v4029 = vld [vmem:[#allocation2 + $0x808] sm:$0xff]
    %v4030 = vld [vmem:[#allocation2 + $0x810] sm:$0xff]
    %v4031 = vld [vmem:[#allocation2 + $0x818] sm:$0xff]
    %v4032 = vld [vmem:[#allocation2 + $0x820] sm:$0xff]
    %v4033 = vld [vmem:[#allocation2 + $0x828] sm:$0xff]
    %v4034 = vld [vmem:[#allocation2 + $0x830] sm:$0xff]
    %v4035 = vld [vmem:[#allocation2 + $0x838] sm:$0xff]
    %v4036 = vld [vmem:[#allocation2 + $0x840] sm:$0xff]
    %v4037 = vld [vmem:[#allocation2 + $0x848] sm:$0xff]
    %v4038 = vld [vmem:[#allocation2 + $0x850] sm:$0xff]
    %v4039 = vld [vmem:[#allocation2 + $0x858] sm:$0xff]
    %v4040 = vld [vmem:[#allocation2 + $0x860] sm:$0xff]
    %v4041 = vld [vmem:[#allocation2 + $0x868] sm:$0xff]
    %v4042 = vld [vmem:[#allocation2 + $0x870] sm:$0xff]
    %v4043 = vld [vmem:[#allocation2 + $0x878] sm:$0xff]
    %v4044 = vld [vmem:[#allocation2 + $0x880] sm:$0xff]
    %v4045 = vld [vmem:[#allocation2 + $0x888] sm:$0xff]
    %v4046 = vld [vmem:[#allocation2 + $0x890] sm:$0xff]
    %v4047 = vld [vmem:[#allocation2 + $0x898] sm:$0xff]
    %v4048 = vld [vmem:[#allocation2 + $0x8a0] sm:$0xff]
    %v4049 = vld [vmem:[#allocation2 + $0x8a8] sm:$0xff]
    %v4050 = vld [vmem:[#allocation2 + $0x8b0] sm:$0xff]
    %v4051 = vld [vmem:[#allocation2 + $0x8b8] sm:$0xff]
    %v4052 = vld [vmem:[#allocation2 + $0x8c0] sm:$0xff]
    %v4053 = vld [vmem:[#allocation2 + $0x8c8] sm:$0xff]
    %v4054 = vld [vmem:[#allocation2 + $0x8d0] sm:$0xff]
    %v4055 = vld [vmem:[#allocation2 + $0x8d8] sm:$0xff]
    %v4056 = vld [vmem:[#allocation2 + $0x8e0] sm:$0xff]
    %v4057 = vld [vmem:[#allocation2 + $0x8e8] sm:$0xff]
    %v4058 = vld [vmem:[#allocation2 + $0x8f0] sm:$0xff]
    %v4059 = vld [vmem:[#allocation2 + $0x8f8] sm:$0xff]
    %v4060 = vld [vmem:[#allocation2 + $0x900] sm:$0xff]
    %v4061 = vld [vmem:[#allocation2 + $0x908] sm:$0xff]
    %v4062 = vld [vmem:[#allocation2 + $0x910] sm:$0xff]
    %v4063 = vld [vmem:[#allocation2 + $0x918] sm:$0xff]
    %v4064 = vld [vmem:[#allocation2 + $0x920] sm:$0xff]
    %v4065 = vld [vmem:[#allocation2 + $0x928] sm:$0xff]
    %v4066 = vld [vmem:[#allocation2 + $0x930] sm:$0xff]
    %v4067 = vld [vmem:[#allocation2 + $0x938] sm:$0xff]
    %v4068 = vld [vmem:[#allocation2 + $0x940] sm:$0xff]
    %v4069 = vld [vmem:[#allocation2 + $0x948] sm:$0xff]
    %v4070 = vld [vmem:[#allocation2 + $0x950] sm:$0xff]
    %v4071 = vld [vmem:[#allocation2 + $0x958] sm:$0xff]
    %v4072 = vld [vmem:[#allocation2 + $0x960] sm:$0xff]
    %v4073 = vld [vmem:[#allocation2 + $0x968] sm:$0xff]
    %v4074 = vld [vmem:[#allocation2 + $0x970] sm:$0xff]
    %v4075 = vld [vmem:[#allocation2 + $0x978] sm:$0xff]
    %v4076 = vld [vmem:[#allocation2 + $0x980] sm:$0xff]
    %v4077 = vld [vmem:[#allocation2 + $0x988] sm:$0xff]
    %v4078 = vld [vmem:[#allocation2 + $0x990] sm:$0xff]
    %v4079 = vld [vmem:[#allocation2 + $0x998] sm:$0xff]
    %v4080 = vld [vmem:[#allocation2 + $0x9a0] sm:$0xff]
    %v4081 = vld [vmem:[#allocation2 + $0x9a8] sm:$0xff]
    %v4082 = vld [vmem:[#allocation2 + $0x9b0] sm:$0xff]
    %v4083 = vld [vmem:[#allocation2 + $0x9b8] sm:$0xff]
    %v4084 = vld [vmem:[#allocation2 + $0x9c0] sm:$0xff]
    %v4085 = vld [vmem:[#allocation2 + $0x9c8] sm:$0xff]
    %v4086 = vld [vmem:[#allocation2 + $0x9d0] sm:$0xff]
    %v4087 = vld [vmem:[#allocation2 + $0x9d8] sm:$0xff]
    %v4088 = vld [vmem:[#allocation2 + $0x9e0] sm:$0xff]
    %v4089 = vld [vmem:[#allocation2 + $0x9e8] sm:$0xff]
    %v4090 = vld [vmem:[#allocation2 + $0x9f0] sm:$0xff]
    %v4091 = vld [vmem:[#allocation2 + $0x9f8] sm:$0xff]
    %v4092 = vld [vmem:[#allocation2 + $0xa00] sm:$0xff]
    %v4093 = vld [vmem:[#allocation2 + $0xa08] sm:$0xff]
    %v4094 = vld [vmem:[#allocation2 + $0xa10] sm:$0xff]
    %v4095 = vld [vmem:[#allocation2 + $0xa18] sm:$0xff]
    %v4096 = vld [vmem:[#allocation2 + $0xa20] sm:$0xff]
    %v4097 = vld [vmem:[#allocation2 + $0xa28] sm:$0xff]
    %v4098 = vld [vmem:[#allocation2 + $0xa30] sm:$0xff]
    %v4099 = vld [vmem:[#allocation2 + $0xa38] sm:$0xff]
    %v4100 = vld [vmem:[#allocation2 + $0xa40] sm:$0xff]
    %v4101 = vld [vmem:[#allocation2 + $0xa48] sm:$0xff]
    %v4102 = vld [vmem:[#allocation2 + $0xa50] sm:$0xff]
    %v4103 = vld [vmem:[#allocation2 + $0xa58] sm:$0xff]
    %v4104 = vld [vmem:[#allocation2 + $0xa60] sm:$0xff]
    %v4105 = vld [vmem:[#allocation2 + $0xa68] sm:$0xff]
    %v4106 = vld [vmem:[#allocation2 + $0xa70] sm:$0xff]
    %v4107 = vld [vmem:[#allocation2 + $0xa78] sm:$0xff]
    %v4108 = vld [vmem:[#allocation2 + $0xa80] sm:$0xff]
    %v4109 = vld [vmem:[#allocation2 + $0xa88] sm:$0xff]
    %v4110 = vld [vmem:[#allocation2 + $0xa90] sm:$0xff]
    %v4111 = vld [vmem:[#allocation2 + $0xa98] sm:$0xff]
    %v4112 = vld [vmem:[#allocation2 + $0xaa0] sm:$0xff]
    %v4113 = vld [vmem:[#allocation2 + $0xaa8] sm:$0xff]
    %v4114 = vld [vmem:[#allocation2 + $0xab0] sm:$0xff]
    %v4115 = vld [vmem:[#allocation2 + $0xab8] sm:$0xff]
    %v4116 = vld [vmem:[#allocation2 + $0xac0] sm:$0xff]
    %v4117 = vld [vmem:[#allocation2 + $0xac8] sm:$0xff]
    %v4118 = vld [vmem:[#allocation2 + $0xad0] sm:$0xff]
    %v4119 = vld [vmem:[#allocation2 + $0xad8] sm:$0xff]
    %v4120 = vld [vmem:[#allocation2 + $0xae0] sm:$0xff]
    %v4121 = vld [vmem:[#allocation2 + $0xae8] sm:$0xff]
    %v4122 = vld [vmem:[#allocation2 + $0xaf0] sm:$0xff]
    %v4123 = vld [vmem:[#allocation2 + $0xaf8] sm:$0xff]
    %v4124 = vld [vmem:[#allocation2 + $0xb00] sm:$0xff]
    %v4125 = vld [vmem:[#allocation2 + $0xb08] sm:$0xff]
    %v4126 = vld [vmem:[#allocation2 + $0xb10] sm:$0xff]
    %v4127 = vld [vmem:[#allocation2 + $0xb18] sm:$0xff]
    %v4128 = vld [vmem:[#allocation2 + $0xb20] sm:$0xff]
    %v4129 = vld [vmem:[#allocation2 + $0xb28] sm:$0xff]
    %v4130 = vld [vmem:[#allocation2 + $0xb30] sm:$0xff]
    %v4131 = vld [vmem:[#allocation2 + $0xb38] sm:$0xff]
    %v4132 = vld [vmem:[#allocation2 + $0xb40] sm:$0xff]
    %v4133 = vld [vmem:[#allocation2 + $0xb48] sm:$0xff]
    %v4134 = vld [vmem:[#allocation2 + $0xb50] sm:$0xff]
    %v4135 = vld [vmem:[#allocation2 + $0xb58] sm:$0xff]
    %v4136 = vld [vmem:[#allocation2 + $0xb60] sm:$0xff]
    %v4137 = vld [vmem:[#allocation2 + $0xb68] sm:$0xff]
    %v4138 = vld [vmem:[#allocation2 + $0xb70] sm:$0xff]
    %v4139 = vld [vmem:[#allocation2 + $0xb78] sm:$0xff]
    %v4140 = vld [vmem:[#allocation2 + $0xb80] sm:$0xff]
    %v4141 = vld [vmem:[#allocation2 + $0xb88] sm:$0xff]
    %v4142 = vld [vmem:[#allocation2 + $0xb90] sm:$0xff]
    %v4143 = vld [vmem:[#allocation2 + $0xb98] sm:$0xff]
    %v4144 = vld [vmem:[#allocation2 + $0xba0] sm:$0xff]
    %v4145 = vld [vmem:[#allocation2 + $0xba8] sm:$0xff]
    %v4146 = vld [vmem:[#allocation2 + $0xbb0] sm:$0xff]
    %v4147 = vld [vmem:[#allocation2 + $0xbb8] sm:$0xff]
    %v4148 = vld [vmem:[#allocation2 + $0xbc0] sm:$0xff]
    %v4149 = vld [vmem:[#allocation2 + $0xbc8] sm:$0xff]
    %v4150 = vld [vmem:[#allocation2 + $0xbd0] sm:$0xff]
    %v4151 = vld [vmem:[#allocation2 + $0xbd8] sm:$0xff]
    %v4152 = vld [vmem:[#allocation2 + $0xbe0] sm:$0xff]
    %v4153 = vld [vmem:[#allocation2 + $0xbe8] sm:$0xff]
    %v4154 = vld [vmem:[#allocation2 + $0xbf0] sm:$0xff]
    %v4155 = vld [vmem:[#allocation2 + $0xbf8] sm:$0xff]
    %v4156 = vld [vmem:[#allocation2 + $0xc00] sm:$0xff]
    %v4157 = vld [vmem:[#allocation2 + $0xc08] sm:$0xff]
    %v4158 = vld [vmem:[#allocation2 + $0xc10] sm:$0xff]
    %v4159 = vld [vmem:[#allocation2 + $0xc18] sm:$0xff]
    %v4160 = vld [vmem:[#allocation2 + $0xc20] sm:$0xff]
    %v4161 = vld [vmem:[#allocation2 + $0xc28] sm:$0xff]
    %v4162 = vld [vmem:[#allocation2 + $0xc30] sm:$0xff]
    %v4163 = vld [vmem:[#allocation2 + $0xc38] sm:$0xff]
    %v4164 = vld [vmem:[#allocation2 + $0xc40] sm:$0xff]
    %v4165 = vld [vmem:[#allocation2 + $0xc48] sm:$0xff]
    %v4166 = vld [vmem:[#allocation2 + $0xc50] sm:$0xff]
    %v4167 = vld [vmem:[#allocation2 + $0xc58] sm:$0xff]
    %v4168 = vld [vmem:[#allocation2 + $0xc60] sm:$0xff]
    %v4169 = vld [vmem:[#allocation2 + $0xc68] sm:$0xff]
    %v4170 = vld [vmem:[#allocation2 + $0xc70] sm:$0xff]
    %v4171 = vld [vmem:[#allocation2 + $0xc78] sm:$0xff]
    %v4172 = vld [vmem:[#allocation2 + $0xc80] sm:$0xff]
    %v4173 = vld [vmem:[#allocation2 + $0xc88] sm:$0xff]
    %v4174 = vld [vmem:[#allocation2 + $0xc90] sm:$0xff]
    %v4175 = vld [vmem:[#allocation2 + $0xc98] sm:$0xff]
    %v4176 = vld [vmem:[#allocation2 + $0xca0] sm:$0xff]
    %v4177 = vld [vmem:[#allocation2 + $0xca8] sm:$0xff]
    %v4178 = vld [vmem:[#allocation2 + $0xcb0] sm:$0xff]
    %v4179 = vld [vmem:[#allocation2 + $0xcb8] sm:$0xff]
    %v4180 = vld [vmem:[#allocation2 + $0xcc0] sm:$0xff]
    %v4181 = vld [vmem:[#allocation2 + $0xcc8] sm:$0xff]
    %v4182 = vld [vmem:[#allocation2 + $0xcd0] sm:$0xff]
    %v4183 = vld [vmem:[#allocation2 + $0xcd8] sm:$0xff]
    %v4184 = vld [vmem:[#allocation2 + $0xce0] sm:$0xff]
    %v4185 = vld [vmem:[#allocation2 + $0xce8] sm:$0xff]
    %v4186 = vld [vmem:[#allocation2 + $0xcf0] sm:$0xff]
    %v4187 = vld [vmem:[#allocation2 + $0xcf8] sm:$0xff]
    %v4188 = vld [vmem:[#allocation2 + $0xd00] sm:$0xff]
    %v4189 = vld [vmem:[#allocation2 + $0xd08] sm:$0xff]
    %v4190 = vld [vmem:[#allocation2 + $0xd10] sm:$0xff]
    %v4191 = vld [vmem:[#allocation2 + $0xd18] sm:$0xff]
    %v4192 = vld [vmem:[#allocation2 + $0xd20] sm:$0xff]
    %v4193 = vld [vmem:[#allocation2 + $0xd28] sm:$0xff]
    %v4194 = vld [vmem:[#allocation2 + $0xd30] sm:$0xff]
    %v4195 = vld [vmem:[#allocation2 + $0xd38] sm:$0xff]
    %v4196 = vld [vmem:[#allocation2 + $0xd40] sm:$0xff]
    %v4197 = vld [vmem:[#allocation2 + $0xd48] sm:$0xff]
    %v4198 = vld [vmem:[#allocation2 + $0xd50] sm:$0xff]
    %v4199 = vld [vmem:[#allocation2 + $0xd58] sm:$0xff]
    %v4200 = vld [vmem:[#allocation2 + $0xd60] sm:$0xff]
    %v4201 = vld [vmem:[#allocation2 + $0xd68] sm:$0xff]
    %v4202 = vld [vmem:[#allocation2 + $0xd70] sm:$0xff]
    %v4203 = vld [vmem:[#allocation2 + $0xd78] sm:$0xff]
    %v4204 = vld [vmem:[#allocation2 + $0xd80] sm:$0xff]
    %v4205 = vld [vmem:[#allocation2 + $0xd88] sm:$0xff]
    %v4206 = vld [vmem:[#allocation2 + $0xd90] sm:$0xff]
    %v4207 = vld [vmem:[#allocation2 + $0xd98] sm:$0xff]
    %v4208 = vld [vmem:[#allocation2 + $0xda0] sm:$0xff]
    %v4209 = vld [vmem:[#allocation2 + $0xda8] sm:$0xff]
    %v4210 = vld [vmem:[#allocation2 + $0xdb0] sm:$0xff]
    %v4211 = vld [vmem:[#allocation2 + $0xdb8] sm:$0xff]
    %v4212 = vld [vmem:[#allocation2 + $0xdc0] sm:$0xff]
    %v4213 = vld [vmem:[#allocation2 + $0xdc8] sm:$0xff]
    %v4214 = vld [vmem:[#allocation2 + $0xdd0] sm:$0xff]
    %v4215 = vld [vmem:[#allocation2 + $0xdd8] sm:$0xff]
    %v4216 = vld [vmem:[#allocation2 + $0xde0] sm:$0xff]
    %v4217 = vld [vmem:[#allocation2 + $0xde8] sm:$0xff]
    %v4218 = vld [vmem:[#allocation2 + $0xdf0] sm:$0xff]
    %v4219 = vld [vmem:[#allocation2 + $0xdf8] sm:$0xff]
    %v4220 = vld [vmem:[#allocation2 + $0xe00] sm:$0xff]
    %v4221 = vld [vmem:[#allocation2 + $0xe08] sm:$0xff]
    %v4222 = vld [vmem:[#allocation2 + $0xe10] sm:$0xff]
    %v4223 = vld [vmem:[#allocation2 + $0xe18] sm:$0xff]
    %v4224 = vld [vmem:[#allocation2 + $0xe20] sm:$0xff]
    %v4225 = vld [vmem:[#allocation2 + $0xe28] sm:$0xff]
    %v4226 = vld [vmem:[#allocation2 + $0xe30] sm:$0xff]
    %v4227 = vld [vmem:[#allocation2 + $0xe38] sm:$0xff]
    %v4228 = vld [vmem:[#allocation2 + $0xe40] sm:$0xff]
    %v4229 = vld [vmem:[#allocation2 + $0xe48] sm:$0xff]
    %v4230 = vld [vmem:[#allocation2 + $0xe50] sm:$0xff]
    %v4231 = vld [vmem:[#allocation2 + $0xe58] sm:$0xff]
    %v4232 = vld [vmem:[#allocation2 + $0xe60] sm:$0xff]
    %v4233 = vld [vmem:[#allocation2 + $0xe68] sm:$0xff]
    %v4234 = vld [vmem:[#allocation2 + $0xe70] sm:$0xff]
    %v4235 = vld [vmem:[#allocation2 + $0xe78] sm:$0xff]
    %v4236 = vld [vmem:[#allocation2 + $0xe80] sm:$0xff]
    %v4237 = vld [vmem:[#allocation2 + $0xe88] sm:$0xff]
    %v4238 = vld [vmem:[#allocation2 + $0xe90] sm:$0xff]
    %v4239 = vld [vmem:[#allocation2 + $0xe98] sm:$0xff]
    %v4240 = vld [vmem:[#allocation2 + $0xea0] sm:$0xff]
    %v4241 = vld [vmem:[#allocation2 + $0xea8] sm:$0xff]
    %v4242 = vld [vmem:[#allocation2 + $0xeb0] sm:$0xff]
    %v4243 = vld [vmem:[#allocation2 + $0xeb8] sm:$0xff]
    %v4244 = vld [vmem:[#allocation2 + $0xec0] sm:$0xff]
    %v4245 = vld [vmem:[#allocation2 + $0xec8] sm:$0xff]
    %v4246 = vld [vmem:[#allocation2 + $0xed0] sm:$0xff]
    %v4247 = vld [vmem:[#allocation2 + $0xed8] sm:$0xff]
    %v4248 = vld [vmem:[#allocation2 + $0xee0] sm:$0xff]
    %v4249 = vld [vmem:[#allocation2 + $0xee8] sm:$0xff]
    %v4250 = vld [vmem:[#allocation2 + $0xef0] sm:$0xff]
    %v4251 = vld [vmem:[#allocation2 + $0xef8] sm:$0xff]
    %v4252 = vld [vmem:[#allocation2 + $0xf00] sm:$0xff]
    %v4253 = vld [vmem:[#allocation2 + $0xf08] sm:$0xff]
    %v4254 = vld [vmem:[#allocation2 + $0xf10] sm:$0xff]
    %v4255 = vld [vmem:[#allocation2 + $0xf18] sm:$0xff]
    %v4256 = vld [vmem:[#allocation2 + $0xf20] sm:$0xff]
    %v4257 = vld [vmem:[#allocation2 + $0xf28] sm:$0xff]
    %v4258 = vld [vmem:[#allocation2 + $0xf30] sm:$0xff]
    %v4259 = vld [vmem:[#allocation2 + $0xf38] sm:$0xff]
    %v4260 = vld [vmem:[#allocation2 + $0xf40] sm:$0xff]
    %v4261 = vld [vmem:[#allocation2 + $0xf48] sm:$0xff]
    %v4262 = vld [vmem:[#allocation2 + $0xf50] sm:$0xff]
    %v4263 = vld [vmem:[#allocation2 + $0xf58] sm:$0xff]
    %v4264 = vld [vmem:[#allocation2 + $0xf60] sm:$0xff]
    %v4265 = vld [vmem:[#allocation2 + $0xf68] sm:$0xff]
    %v4266 = vld [vmem:[#allocation2 + $0xf70] sm:$0xff]
    %v4267 = vld [vmem:[#allocation2 + $0xf78] sm:$0xff]
    %v4268 = vld [vmem:[#allocation2 + $0xf80] sm:$0xff]
    %v4269 = vld [vmem:[#allocation2 + $0xf88] sm:$0xff]
    %v4270 = vld [vmem:[#allocation2 + $0xf90] sm:$0xff]
    %v4271 = vld [vmem:[#allocation2 + $0xf98] sm:$0xff]
    %v4272 = vld [vmem:[#allocation2 + $0xfa0] sm:$0xff]
    %v4273 = vld [vmem:[#allocation2 + $0xfa8] sm:$0xff]
    %v4274 = vld [vmem:[#allocation2 + $0xfb0] sm:$0xff]
    %v4275 = vld [vmem:[#allocation2 + $0xfb8] sm:$0xff]
    %v4284 = vrot.slane %v3752, 1
    %v4285 = vrot.slane %v3756, 1
    %v4286 = vsel %vm2731, %v4284, %v4285
    %v4287 = vrot.slane %v3753, 1
    %v4288 = vrot.slane %v3757, 1
    %v4289 = vsel %vm2731, %v4287, %v4288
    %v4290 = vrot.slane %v3754, 1
    %v4291 = vrot.slane %v3758, 1
    %v4292 = vsel %vm2731, %v4290, %v4291
    %v4293 = vrot.slane %v3755, 1
    %v4294 = vrot.slane %v3759, 1
    %v4295 = vsel %vm2731, %v4293, %v4294
    %4296 = vrot.lane.b32.xlu0 %v4286, 64
    %v4297 = vpop.permute.xlu0 %4296
    %4298 = vrot.lane.b32.xlu0 %v4289, 64
    %v4299 = vpop.permute.xlu0 %4298
    %4300 = vrot.lane.b32.xlu0 %v4292, 64
    %v4301 = vpop.permute.xlu0 %4300
    %4302 = vrot.lane.b32.xlu0 %v4295, 64
    %v4303 = vpop.permute.xlu0 %4302
    %4304 = vrot.lane.b32.xlu0 %v4285, 64
    %v4305 = vpop.permute.xlu0 %4304
    %4306 = vrot.lane.b32.xlu0 %v4288, 64
    %v4307 = vpop.permute.xlu0 %4306
    %4308 = vrot.lane.b32.xlu0 %v4291, 64
    %v4309 = vpop.permute.xlu0 %4308
    %4310 = vrot.lane.b32.xlu0 %v4294, 64
    %v4311 = vpop.permute.xlu0 %4310
    %v4312 = vsel %vm3068, %v4297, %v4299
    %v4313 = vsel %vm3068, %v4299, %v4301
    %v4314 = vsel %vm3068, %v4301, %v4303
    %v4315 = vsel %vm3068, %v4305, %v4307
    %v4316 = vsel %vm3068, %v4307, %v4309
    %v4317 = vsel %vm3068, %v4309, %v4311
    %v4326 = vrot.slane %v3752, 2
    %v4327 = vrot.slane %v3756, 2
    %v4328 = vsel %vm2741, %v4326, %v4327
    %v4329 = vrot.slane %v3753, 2
    %v4330 = vrot.slane %v3757, 2
    %v4331 = vsel %vm2741, %v4329, %v4330
    %v4332 = vrot.slane %v3754, 2
    %v4333 = vrot.slane %v3758, 2
    %v4334 = vsel %vm2741, %v4332, %v4333
    %v4335 = vrot.slane %v3755, 2
    %v4336 = vrot.slane %v3759, 2
    %v4337 = vsel %vm2741, %v4335, %v4336
    %v4345 = vsel %vm3068, %v3755, %v4297
    %v4346 = vsel %vm3068, %v3759, %v4305
    %v4355 = vrot.slane %v3760, 1
    %v4356 = vsel %vm2731, %v4285, %v4355
    %v4357 = vrot.slane %v3761, 1
    %v4358 = vsel %vm2731, %v4288, %v4357
    %v4359 = vrot.slane %v3762, 1
    %v4360 = vsel %vm2731, %v4291, %v4359
    %v4361 = vrot.slane %v3763, 1
    %v4362 = vsel %vm2731, %v4294, %v4361
    %v4363 = vrot.slane %v3764, 1
    %v4364 = vsel %vm2731, %v4355, %v4363
    %v4365 = vrot.slane %v3765, 1
    %v4366 = vsel %vm2731, %v4357, %v4365
    %v4367 = vrot.slane %v3766, 1
    %v4368 = vsel %vm2731, %v4359, %v4367
    %v4369 = vrot.slane %v3767, 1
    %v4370 = vsel %vm2731, %v4361, %v4369
    %4371 = vrot.lane.b32.xlu0 %v4356, 64
    %v4372 = vpop.permute.xlu0 %4371
    %4373 = vrot.lane.b32.xlu0 %v4358, 64
    %v4374 = vpop.permute.xlu0 %4373
    %4375 = vrot.lane.b32.xlu0 %v4360, 64
    %v4376 = vpop.permute.xlu0 %4375
    %4377 = vrot.lane.b32.xlu0 %v4362, 64
    %v4378 = vpop.permute.xlu0 %4377
    %4379 = vrot.lane.b32.xlu0 %v4364, 64
    %v4380 = vpop.permute.xlu0 %4379
    %4381 = vrot.lane.b32.xlu0 %v4366, 64
    %v4382 = vpop.permute.xlu0 %4381
    %4383 = vrot.lane.b32.xlu0 %v4368, 64
    %v4384 = vpop.permute.xlu0 %4383
    %4385 = vrot.lane.b32.xlu0 %v4370, 64
    %v4386 = vpop.permute.xlu0 %4385
    %4387 = vrot.lane.b32.xlu0 %v4363, 64
    %v4388 = vpop.permute.xlu0 %4387
    %4389 = vrot.lane.b32.xlu0 %v4365, 64
    %v4390 = vpop.permute.xlu0 %4389
    %4391 = vrot.lane.b32.xlu0 %v4367, 64
    %v4392 = vpop.permute.xlu0 %4391
    %4393 = vrot.lane.b32.xlu0 %v4369, 64
    %v4394 = vpop.permute.xlu0 %4393
    %v4395 = vsel %vm3068, %v4372, %v4374
    %v4396 = vsel %vm3068, %v4374, %v4376
    %v4397 = vsel %vm3068, %v4376, %v4378
    %v4398 = vsel %vm3068, %v4380, %v4382
    %v4399 = vsel %vm3068, %v4382, %v4384
    %v4400 = vsel %vm3068, %v4384, %v4386
    %v4401 = vsel %vm3068, %v4388, %v4390
    %v4402 = vsel %vm3068, %v4390, %v4392
    %v4403 = vsel %vm3068, %v4392, %v4394
    %v4407 = vrot.slane %v3760, 2
    %v4408 = vrot.slane %v3761, 2
    %v4409 = vrot.slane %v3762, 2
    %v4410 = vrot.slane %v3763, 2
    %v4411 = vrot.slane %v3764, 2
    %v4412 = vsel %vm2741, %v4407, %v4411
    %v4413 = vrot.slane %v3765, 2
    %v4414 = vsel %vm2741, %v4408, %v4413
    %v4415 = vrot.slane %v3766, 2
    %v4416 = vsel %vm2741, %v4409, %v4415
    %v4417 = vrot.slane %v3767, 2
    %v4418 = vsel %vm2741, %v4410, %v4417
    %v4419 = vsel %vm3068, %v3759, %v4372
    %v4420 = vsel %vm3068, %v3763, %v4380
    %v4421 = vsel %vm3068, %v3767, %v4388
    %v4425 = vsel %vm2741, %v4327, %v4407
    %v4426 = vsel %vm2741, %v4330, %v4408
    %v4427 = vsel %vm2741, %v4333, %v4409
    %v4428 = vrot.slane %v4419, 2
    %v4429 = vrot.slane %v4420, 2
    %v4430 = vsel %vm2741, %v4428, %v4429
    %v4431 = vrot.slane %v4395, 2
    %v4432 = vrot.slane %v4398, 2
    %v4433 = vsel %vm2741, %v4431, %v4432
    %v4434 = vrot.slane %v4396, 2
    %v4435 = vrot.slane %v4399, 2
    %v4436 = vsel %vm2741, %v4434, %v4435
    %v4437 = vrot.slane %v4397, 2
    %v4438 = vrot.slane %v4400, 2
    %v4439 = vsel %vm2741, %v4437, %v4438
    %v4440 = vrot.slane %v4407, 2
    %v4441 = vrot.slane %v4412, 2
    %v4442 = vsel %vm2741, %v4440, %v4441
    %v4443 = vrot.slane %v4408, 2
    %v4444 = vrot.slane %v4414, 2
    %v4445 = vsel %vm2741, %v4443, %v4444
    %v4446 = vrot.slane %v4409, 2
    %v4447 = vrot.slane %v4416, 2
    %v4448 = vsel %vm2741, %v4446, %v4447
    %v4449 = vrot.slane %v4410, 2
    %v4450 = vrot.slane %v4418, 2
    %v4451 = vsel %vm2741, %v4449, %v4450
    %v4452 = vrot.slane %v4421, 2
    %v4453 = vsel %vm2741, %v4429, %v4452
    %v4454 = vrot.slane %v4401, 2
    %v4455 = vsel %vm2741, %v4432, %v4454
    %v4456 = vrot.slane %v4402, 2
    %v4457 = vsel %vm2741, %v4435, %v4456
    %v4458 = vrot.slane %v4403, 2
    %v4459 = vsel %vm2741, %v4438, %v4458
    %v4460 = vrot.slane %v4411, 2
    %v4461 = vsel %vm2741, %v4441, %v4460
    %v4462 = vrot.slane %v4413, 2
    %v4463 = vsel %vm2741, %v4444, %v4462
    %v4464 = vrot.slane %v4415, 2
    %v4465 = vsel %vm2741, %v4447, %v4464
    %v4466 = vrot.slane %v4417, 2
    %v4467 = vsel %vm2741, %v4450, %v4466
    %v4489 = vsel %vm3039, %v3756, %v4425
    %v4490 = vsel %vm3039, %v3757, %v4426
    %v4491 = vsel %vm3039, %v3758, %v4427
    %v4492 = vsel %vm3039, %v4346, %v4430
    %v4493 = vsel %vm3039, %v4315, %v4433
    %v4494 = vsel %vm3039, %v4316, %v4436
    %v4495 = vsel %vm3039, %v4317, %v4439
    %v4496 = vsel %vm3039, %v4327, %v4442
    %v4497 = vsel %vm3039, %v4330, %v4445
    %v4498 = vsel %vm3039, %v4333, %v4448
    %v4499 = vsel %vm3039, %v4336, %v4451
    %v4500 = vsel %vm3068, %v4337, 0
    %v4503 = vsel %vm3068, %v4499, 0
    %v4505 = vsel %vm3068, %v4467, 0
    %4507 = vmatpush.msra.mxu0 %v3817
    %4508 = vmatpush.msra.mxu0 %v3814
    %4509 = vmatpush.msra.mxu0 %v3811
    %4510 = vmatpush.msra.mxu0 %v3808
    %4511 = vmatpush.msra.mxu0 %v3805
    %4512 = vmatpush.msra.mxu0 %v3802
    %4513 = vmatpush.msra.mxu0 %v3799
    %4514 = vmatpush.msra.mxu0 %v3796
    %4515 = vmatpush.msra.mxu0 %v3793
    %4516 = vmatpush.msra.mxu0 %v3790
    %4517 = vmatpush.msra.mxu0 %v3787
    %4518 = vmatpush.msra.mxu0 %v3784
    %4519 = vmatpush.msra.mxu0 %v3781
    %4520 = vmatpush.msra.mxu0 %v3778
    %4521 = vmatpush.msra.mxu0 %v3775
    %4522 = vmatpush.msra.mxu0 %v3772
    %4523 = vmatmul.f32.gmra.mxu0 %v3752
    %v4524 = vpop.f32.mrf.mxu0
    %v4525 = vadd.f32 0.0, %v4524
    %4526 = vmatmul.f32.gmra.mxu0 %v4489
    %v4527 = vpop.f32.mrf.mxu0
    %v4528 = vadd.f32 0.0, %v4527
    %4529 = vmatmul.f32.gmra.mxu0 %v4412
    %v4530 = vpop.f32.mrf.mxu0
    %v4531 = vadd.f32 0.0, %v4530
    %4532 = vdwg.mxu0
    %4533 = vmatpush.msra.mxu0 %v3865
    %4534 = vmatpush.msra.mxu0 %v3862
    %4535 = vmatpush.msra.mxu0 %v3859
    %4536 = vmatpush.msra.mxu0 %v3856
    %4537 = vmatpush.msra.mxu0 %v3853
    %4538 = vmatpush.msra.mxu0 %v3850
    %4539 = vmatpush.msra.mxu0 %v3847
    %4540 = vmatpush.msra.mxu0 %v3844
    %4541 = vmatpush.msra.mxu0 %v3841
    %4542 = vmatpush.msra.mxu0 %v3838
    %4543 = vmatpush.msra.mxu0 %v3835
    %4544 = vmatpush.msra.mxu0 %v3832
    %4545 = vmatpush.msra.mxu0 %v3829
    %4546 = vmatpush.msra.mxu0 %v3826
    %4547 = vmatpush.msra.mxu0 %v3823
    %4548 = vmatpush.msra.mxu0 %v3820
    %4549 = vmatmul.f32.gmra.mxu0 %v3753
    %v4550 = vpop.f32.mrf.mxu0
    %v4551 = vadd.f32 %v4525, %v4550
    %4552 = vmatmul.f32.gmra.mxu0 %v4490
    %v4553 = vpop.f32.mrf.mxu0
    %v4554 = vadd.f32 %v4528, %v4553
    %4555 = vmatmul.f32.gmra.mxu0 %v4414
    %v4556 = vpop.f32.mrf.mxu0
    %v4557 = vadd.f32 %v4531, %v4556
    %4558 = vdwg.mxu0
    %4559 = vmatpush.msra.mxu0 %v3913
    %4560 = vmatpush.msra.mxu0 %v3910
    %4561 = vmatpush.msra.mxu0 %v3907
    %4562 = vmatpush.msra.mxu0 %v3904
    %4563 = vmatpush.msra.mxu0 %v3901
    %4564 = vmatpush.msra.mxu0 %v3898
    %4565 = vmatpush.msra.mxu0 %v3895
    %4566 = vmatpush.msra.mxu0 %v3892
    %4567 = vmatpush.msra.mxu0 %v3889
    %4568 = vmatpush.msra.mxu0 %v3886
    %4569 = vmatpush.msra.mxu0 %v3883
    %4570 = vmatpush.msra.mxu0 %v3880
    %4571 = vmatpush.msra.mxu0 %v3877
    %4572 = vmatpush.msra.mxu0 %v3874
    %4573 = vmatpush.msra.mxu0 %v3871
    %4574 = vmatpush.msra.mxu0 %v3868
    %4575 = vmatmul.f32.gmra.mxu0 %v3754
    %v4576 = vpop.f32.mrf.mxu0
    %v4577 = vadd.f32 %v4551, %v4576
    %4578 = vmatmul.f32.gmra.mxu0 %v4491
    %v4579 = vpop.f32.mrf.mxu0
    %v4580 = vadd.f32 %v4554, %v4579
    %4581 = vmatmul.f32.gmra.mxu0 %v4416
    %v4582 = vpop.f32.mrf.mxu0
    %v4583 = vadd.f32 %v4557, %v4582
    %4584 = vdwg.mxu0
    %4585 = vmatpush.msra.mxu0 %v3961
    %4586 = vmatpush.msra.mxu0 %v3958
    %4587 = vmatpush.msra.mxu0 %v3955
    %4588 = vmatpush.msra.mxu0 %v3952
    %4589 = vmatpush.msra.mxu0 %v3949
    %4590 = vmatpush.msra.mxu0 %v3946
    %4591 = vmatpush.msra.mxu0 %v3943
    %4592 = vmatpush.msra.mxu0 %v3940
    %4593 = vmatpush.msra.mxu0 %v3937
    %4594 = vmatpush.msra.mxu0 %v3934
    %4595 = vmatpush.msra.mxu0 %v3931
    %4596 = vmatpush.msra.mxu0 %v3928
    %4597 = vmatpush.msra.mxu0 %v3925
    %4598 = vmatpush.msra.mxu0 %v3922
    %4599 = vmatpush.msra.mxu0 %v3919
    %4600 = vmatpush.msra.mxu0 %v3916
    %4601 = vmatmul.f32.gmra.mxu0 %v4345
    %v4602 = vpop.f32.mrf.mxu0
    %v4603 = vadd.f32 %v4577, %v4602
    %4604 = vmatmul.f32.gmra.mxu0 %v4492
    %v4605 = vpop.f32.mrf.mxu0
    %v4606 = vadd.f32 %v4580, %v4605
    %4607 = vmatmul.f32.gmra.mxu0 %v4453
    %v4608 = vpop.f32.mrf.mxu0
    %v4609 = vadd.f32 %v4583, %v4608
    %4610 = vdwg.mxu0
    %4611 = vmatpush.msra.mxu0 %v4009
    %4612 = vmatpush.msra.mxu0 %v4006
    %4613 = vmatpush.msra.mxu0 %v4003
    %4614 = vmatpush.msra.mxu0 %v4000
    %4615 = vmatpush.msra.mxu0 %v3997
    %4616 = vmatpush.msra.mxu0 %v3994
    %4617 = vmatpush.msra.mxu0 %v3991
    %4618 = vmatpush.msra.mxu0 %v3988
    %4619 = vmatpush.msra.mxu0 %v3985
    %4620 = vmatpush.msra.mxu0 %v3982
    %4621 = vmatpush.msra.mxu0 %v3979
    %4622 = vmatpush.msra.mxu0 %v3976
    %4623 = vmatpush.msra.mxu0 %v3973
    %4624 = vmatpush.msra.mxu0 %v3970
    %4625 = vmatpush.msra.mxu0 %v3967
    %4626 = vmatpush.msra.mxu0 %v3964
    %4627 = vmatmul.f32.gmra.mxu0 %v4312
    %v4628 = vpop.f32.mrf.mxu0
    %v4629 = vadd.f32 %v4603, %v4628
    %4630 = vmatmul.f32.gmra.mxu0 %v4493
    %v4631 = vpop.f32.mrf.mxu0
    %v4632 = vadd.f32 %v4606, %v4631
    %4633 = vmatmul.f32.gmra.mxu0 %v4455
    %v4634 = vpop.f32.mrf.mxu0
    %v4635 = vadd.f32 %v4609, %v4634
    %4636 = vdwg.mxu0
    %4637 = vmatpush.msra.mxu0 %v4057
    %4638 = vmatpush.msra.mxu0 %v4054
    %4639 = vmatpush.msra.mxu0 %v4051
    %4640 = vmatpush.msra.mxu0 %v4048
    %4641 = vmatpush.msra.mxu0 %v4045
    %4642 = vmatpush.msra.mxu0 %v4042
    %4643 = vmatpush.msra.mxu0 %v4039
    %4644 = vmatpush.msra.mxu0 %v4036
    %4645 = vmatpush.msra.mxu0 %v4033
    %4646 = vmatpush.msra.mxu0 %v4030
    %4647 = vmatpush.msra.mxu0 %v4027
    %4648 = vmatpush.msra.mxu0 %v4024
    %4649 = vmatpush.msra.mxu0 %v4021
    %4650 = vmatpush.msra.mxu0 %v4018
    %4651 = vmatpush.msra.mxu0 %v4015
    %4652 = vmatpush.msra.mxu0 %v4012
    %4653 = vmatmul.f32.gmra.mxu0 %v4313
    %v4654 = vpop.f32.mrf.mxu0
    %v4655 = vadd.f32 %v4629, %v4654
    %4656 = vmatmul.f32.gmra.mxu0 %v4494
    %v4657 = vpop.f32.mrf.mxu0
    %v4658 = vadd.f32 %v4632, %v4657
    %4659 = vmatmul.f32.gmra.mxu0 %v4457
    %v4660 = vpop.f32.mrf.mxu0
    %v4661 = vadd.f32 %v4635, %v4660
    %4662 = vdwg.mxu0
    %4663 = vmatpush.msra.mxu0 %v4105
    %4664 = vmatpush.msra.mxu0 %v4102
    %4665 = vmatpush.msra.mxu0 %v4099
    %4666 = vmatpush.msra.mxu0 %v4096
    %4667 = vmatpush.msra.mxu0 %v4093
    %4668 = vmatpush.msra.mxu0 %v4090
    %4669 = vmatpush.msra.mxu0 %v4087
    %4670 = vmatpush.msra.mxu0 %v4084
    %4671 = vmatpush.msra.mxu0 %v4081
    %4672 = vmatpush.msra.mxu0 %v4078
    %4673 = vmatpush.msra.mxu0 %v4075
    %4674 = vmatpush.msra.mxu0 %v4072
    %4675 = vmatpush.msra.mxu0 %v4069
    %4676 = vmatpush.msra.mxu0 %v4066
    %4677 = vmatpush.msra.mxu0 %v4063
    %4678 = vmatpush.msra.mxu0 %v4060
    %4679 = vmatmul.f32.gmra.mxu0 %v4314
    %v4680 = vpop.f32.mrf.mxu0
    %v4681 = vadd.f32 %v4655, %v4680
    %4682 = vmatmul.f32.gmra.mxu0 %v4495
    %v4683 = vpop.f32.mrf.mxu0
    %v4684 = vadd.f32 %v4658, %v4683
    %4685 = vmatmul.f32.gmra.mxu0 %v4459
    %v4686 = vpop.f32.mrf.mxu0
    %v4687 = vadd.f32 %v4661, %v4686
    %4688 = vdwg.mxu0
    %4689 = vmatpush.msra.mxu0 %v4153
    %4690 = vmatpush.msra.mxu0 %v4150
    %4691 = vmatpush.msra.mxu0 %v4147
    %4692 = vmatpush.msra.mxu0 %v4144
    %4693 = vmatpush.msra.mxu0 %v4141
    %4694 = vmatpush.msra.mxu0 %v4138
    %4695 = vmatpush.msra.mxu0 %v4135
    %4696 = vmatpush.msra.mxu0 %v4132
    %4697 = vmatpush.msra.mxu0 %v4129
    %4698 = vmatpush.msra.mxu0 %v4126
    %4699 = vmatpush.msra.mxu0 %v4123
    %4700 = vmatpush.msra.mxu0 %v4120
    %4701 = vmatpush.msra.mxu0 %v4117
    %4702 = vmatpush.msra.mxu0 %v4114
    %4703 = vmatpush.msra.mxu0 %v4111
    %4704 = vmatpush.msra.mxu0 %v4108
    %4705 = vmatmul.f32.gmra.mxu0 %v4328
    %v4706 = vpop.f32.mrf.mxu0
    %v4707 = vadd.f32 %v4681, %v4706
    %4708 = vmatmul.f32.gmra.mxu0 %v4496
    %v4709 = vpop.f32.mrf.mxu0
    %v4710 = vadd.f32 %v4684, %v4709
    %4711 = vmatmul.f32.gmra.mxu0 %v4461
    %v4712 = vpop.f32.mrf.mxu0
    %v4713 = vadd.f32 %v4687, %v4712
    %4714 = vdwg.mxu0
    %4715 = vmatpush.msra.mxu0 %v4201
    %4716 = vmatpush.msra.mxu0 %v4198
    %4717 = vmatpush.msra.mxu0 %v4195
    %4718 = vmatpush.msra.mxu0 %v4192
    %4719 = vmatpush.msra.mxu0 %v4189
    %4720 = vmatpush.msra.mxu0 %v4186
    %4721 = vmatpush.msra.mxu0 %v4183
    %4722 = vmatpush.msra.mxu0 %v4180
    %4723 = vmatpush.msra.mxu0 %v4177
    %4724 = vmatpush.msra.mxu0 %v4174
    %4725 = vmatpush.msra.mxu0 %v4171
    %4726 = vmatpush.msra.mxu0 %v4168
    %4727 = vmatpush.msra.mxu0 %v4165
    %4728 = vmatpush.msra.mxu0 %v4162
    %4729 = vmatpush.msra.mxu0 %v4159
    %4730 = vmatpush.msra.mxu0 %v4156
    %4731 = vmatmul.f32.gmra.mxu0 %v4331
    %v4732 = vpop.f32.mrf.mxu0
    %v4733 = vadd.f32 %v4707, %v4732
    %4734 = vmatmul.f32.gmra.mxu0 %v4497
    %v4735 = vpop.f32.mrf.mxu0
    %v4736 = vadd.f32 %v4710, %v4735
    %4737 = vmatmul.f32.gmra.mxu0 %v4463
    %v4738 = vpop.f32.mrf.mxu0
    %v4739 = vadd.f32 %v4713, %v4738
    %4740 = vdwg.mxu0
    %4741 = vmatpush.msra.mxu0 %v4249
    %4742 = vmatpush.msra.mxu0 %v4246
    %4743 = vmatpush.msra.mxu0 %v4243
    %4744 = vmatpush.msra.mxu0 %v4240
    %4745 = vmatpush.msra.mxu0 %v4237
    %4746 = vmatpush.msra.mxu0 %v4234
    %4747 = vmatpush.msra.mxu0 %v4231
    %4748 = vmatpush.msra.mxu0 %v4228
    %4749 = vmatpush.msra.mxu0 %v4225
    %4750 = vmatpush.msra.mxu0 %v4222
    %4751 = vmatpush.msra.mxu0 %v4219
    %4752 = vmatpush.msra.mxu0 %v4216
    %4753 = vmatpush.msra.mxu0 %v4213
    %4754 = vmatpush.msra.mxu0 %v4210
    %4755 = vmatpush.msra.mxu0 %v4207
    %4756 = vmatpush.msra.mxu0 %v4204
    %4757 = vmatmul.f32.gmra.mxu0 %v4334
    %v4758 = vpop.f32.mrf.mxu0
    %v4759 = vadd.f32 %v4733, %v4758
    %4760 = vmatmul.f32.gmra.mxu0 %v4498
    %v4761 = vpop.f32.mrf.mxu0
    %v4762 = vadd.f32 %v4736, %v4761
    %4763 = vmatmul.f32.gmra.mxu0 %v4465
    %v4764 = vpop.f32.mrf.mxu0
    %v4765 = vadd.f32 %v4739, %v4764
    %4766 = vdwg.mxu0
    %4767 = vmatpush.msra.mxu0 0.0
    %4768 = vmatpush.msra.mxu0 0.0
    %4769 = vmatpush.msra.mxu0 0.0
    %4770 = vmatpush.msra.mxu0 0.0
    %4771 = vmatpush.msra.mxu0 0.0
    %4772 = vmatpush.msra.mxu0 0.0
    %4773 = vmatpush.msra.mxu0 0.0
    %4774 = vmatpush.msra.mxu0 0.0
    %4775 = vmatpush.msra.mxu0 %v4273
    %4776 = vmatpush.msra.mxu0 %v4270
    %4777 = vmatpush.msra.mxu0 %v4267
    %4778 = vmatpush.msra.mxu0 %v4264
    %4779 = vmatpush.msra.mxu0 %v4261
    %4780 = vmatpush.msra.mxu0 %v4258
    %4781 = vmatpush.msra.mxu0 %v4255
    %4782 = vmatpush.msra.mxu0 %v4252
    %4783 = vmatmul.f32.gmra.mxu0 %v4500
    %v4784 = vpop.f32.mrf.mxu0
    %v4785 = vadd.f32 %v4759, %v4784
    %4786 = vmatmul.f32.gmra.mxu0 %v4503
    %v4787 = vpop.f32.mrf.mxu0
    %v4788 = vadd.f32 %v4762, %v4787
    %4789 = vmatmul.f32.gmra.mxu0 %v4505
    %v4790 = vpop.f32.mrf.mxu0
    %v4791 = vadd.f32 %v4765, %v4790
    %4792 = vdwg.mxu0
    %4793 = vmatpush.msra.mxu0 %v3818
    %4794 = vmatpush.msra.mxu0 %v3815
    %4795 = vmatpush.msra.mxu0 %v3812
    %4796 = vmatpush.msra.mxu0 %v3809
    %4797 = vmatpush.msra.mxu0 %v3806
    %4798 = vmatpush.msra.mxu0 %v3803
    %4799 = vmatpush.msra.mxu0 %v3800
    %4800 = vmatpush.msra.mxu0 %v3797
    %4801 = vmatpush.msra.mxu0 %v3794
    %4802 = vmatpush.msra.mxu0 %v3791
    %4803 = vmatpush.msra.mxu0 %v3788
    %4804 = vmatpush.msra.mxu0 %v3785
    %4805 = vmatpush.msra.mxu0 %v3782
    %4806 = vmatpush.msra.mxu0 %v3779
    %4807 = vmatpush.msra.mxu0 %v3776
    %4808 = vmatpush.msra.mxu0 %v3773
    %4809 = vmatmul.f32.gmra.mxu0 %v3752
    %v4810 = vpop.f32.mrf.mxu0
    %v4811 = vadd.f32 0.0, %v4810
    %4812 = vmatmul.f32.gmra.mxu0 %v4489
    %v4813 = vpop.f32.mrf.mxu0
    %v4814 = vadd.f32 0.0, %v4813
    %4815 = vmatmul.f32.gmra.mxu0 %v4412
    %v4816 = vpop.f32.mrf.mxu0
    %v4817 = vadd.f32 0.0, %v4816
    %4818 = vdwg.mxu0
    %4819 = vmatpush.msra.mxu0 %v3866
    %4820 = vmatpush.msra.mxu0 %v3863
    %4821 = vmatpush.msra.mxu0 %v3860
    %4822 = vmatpush.msra.mxu0 %v3857
    %4823 = vmatpush.msra.mxu0 %v3854
    %4824 = vmatpush.msra.mxu0 %v3851
    %4825 = vmatpush.msra.mxu0 %v3848
    %4826 = vmatpush.msra.mxu0 %v3845
    %4827 = vmatpush.msra.mxu0 %v3842
    %4828 = vmatpush.msra.mxu0 %v3839
    %4829 = vmatpush.msra.mxu0 %v3836
    %4830 = vmatpush.msra.mxu0 %v3833
    %4831 = vmatpush.msra.mxu0 %v3830
    %4832 = vmatpush.msra.mxu0 %v3827
    %4833 = vmatpush.msra.mxu0 %v3824
    %4834 = vmatpush.msra.mxu0 %v3821
    %4835 = vmatmul.f32.gmra.mxu0 %v3753
    %v4836 = vpop.f32.mrf.mxu0
    %v4837 = vadd.f32 %v4811, %v4836
    %4838 = vmatmul.f32.gmra.mxu0 %v4490
    %v4839 = vpop.f32.mrf.mxu0
    %v4840 = vadd.f32 %v4814, %v4839
    %4841 = vmatmul.f32.gmra.mxu0 %v4414
    %v4842 = vpop.f32.mrf.mxu0
    %v4843 = vadd.f32 %v4817, %v4842
    %4844 = vdwg.mxu0
    %4845 = vmatpush.msra.mxu0 %v3914
    %4846 = vmatpush.msra.mxu0 %v3911
    %4847 = vmatpush.msra.mxu0 %v3908
    %4848 = vmatpush.msra.mxu0 %v3905
    %4849 = vmatpush.msra.mxu0 %v3902
    %4850 = vmatpush.msra.mxu0 %v3899
    %4851 = vmatpush.msra.mxu0 %v3896
    %4852 = vmatpush.msra.mxu0 %v3893
    %4853 = vmatpush.msra.mxu0 %v3890
    %4854 = vmatpush.msra.mxu0 %v3887
    %4855 = vmatpush.msra.mxu0 %v3884
    %4856 = vmatpush.msra.mxu0 %v3881
    %4857 = vmatpush.msra.mxu0 %v3878
    %4858 = vmatpush.msra.mxu0 %v3875
    %4859 = vmatpush.msra.mxu0 %v3872
    %4860 = vmatpush.msra.mxu0 %v3869
    %4861 = vmatmul.f32.gmra.mxu0 %v3754
    %v4862 = vpop.f32.mrf.mxu0
    %v4863 = vadd.f32 %v4837, %v4862
    %4864 = vmatmul.f32.gmra.mxu0 %v4491
    %v4865 = vpop.f32.mrf.mxu0
    %v4866 = vadd.f32 %v4840, %v4865
    %4867 = vmatmul.f32.gmra.mxu0 %v4416
    %v4868 = vpop.f32.mrf.mxu0
    %v4869 = vadd.f32 %v4843, %v4868
    %4870 = vdwg.mxu0
    %4871 = vmatpush.msra.mxu0 %v3962
    %4872 = vmatpush.msra.mxu0 %v3959
    %4873 = vmatpush.msra.mxu0 %v3956
    %4874 = vmatpush.msra.mxu0 %v3953
    %4875 = vmatpush.msra.mxu0 %v3950
    %4876 = vmatpush.msra.mxu0 %v3947
    %4877 = vmatpush.msra.mxu0 %v3944
    %4878 = vmatpush.msra.mxu0 %v3941
    %4879 = vmatpush.msra.mxu0 %v3938
    %4880 = vmatpush.msra.mxu0 %v3935
    %4881 = vmatpush.msra.mxu0 %v3932
    %4882 = vmatpush.msra.mxu0 %v3929
    %4883 = vmatpush.msra.mxu0 %v3926
    %4884 = vmatpush.msra.mxu0 %v3923
    %4885 = vmatpush.msra.mxu0 %v3920
    %4886 = vmatpush.msra.mxu0 %v3917
    %4887 = vmatmul.f32.gmra.mxu0 %v4345
    %v4888 = vpop.f32.mrf.mxu0
    %v4889 = vadd.f32 %v4863, %v4888
    %4890 = vmatmul.f32.gmra.mxu0 %v4492
    %v4891 = vpop.f32.mrf.mxu0
    %v4892 = vadd.f32 %v4866, %v4891
    %4893 = vmatmul.f32.gmra.mxu0 %v4453
    %v4894 = vpop.f32.mrf.mxu0
    %v4895 = vadd.f32 %v4869, %v4894
    %4896 = vdwg.mxu0
    %4897 = vmatpush.msra.mxu0 %v4010
    %4898 = vmatpush.msra.mxu0 %v4007
    %4899 = vmatpush.msra.mxu0 %v4004
    %4900 = vmatpush.msra.mxu0 %v4001
    %4901 = vmatpush.msra.mxu0 %v3998
    %4902 = vmatpush.msra.mxu0 %v3995
    %4903 = vmatpush.msra.mxu0 %v3992
    %4904 = vmatpush.msra.mxu0 %v3989
    %4905 = vmatpush.msra.mxu0 %v3986
    %4906 = vmatpush.msra.mxu0 %v3983
    %4907 = vmatpush.msra.mxu0 %v3980
    %4908 = vmatpush.msra.mxu0 %v3977
    %4909 = vmatpush.msra.mxu0 %v3974
    %4910 = vmatpush.msra.mxu0 %v3971
    %4911 = vmatpush.msra.mxu0 %v3968
    %4912 = vmatpush.msra.mxu0 %v3965
    %4913 = vmatmul.f32.gmra.mxu0 %v4312
    %v4914 = vpop.f32.mrf.mxu0
    %v4915 = vadd.f32 %v4889, %v4914
    %4916 = vmatmul.f32.gmra.mxu0 %v4493
    %v4917 = vpop.f32.mrf.mxu0
    %v4918 = vadd.f32 %v4892, %v4917
    %4919 = vmatmul.f32.gmra.mxu0 %v4455
    %v4920 = vpop.f32.mrf.mxu0
    %v4921 = vadd.f32 %v4895, %v4920
    %4922 = vdwg.mxu0
    %4923 = vmatpush.msra.mxu0 %v4058
    %4924 = vmatpush.msra.mxu0 %v4055
    %4925 = vmatpush.msra.mxu0 %v4052
    %4926 = vmatpush.msra.mxu0 %v4049
    %4927 = vmatpush.msra.mxu0 %v4046
    %4928 = vmatpush.msra.mxu0 %v4043
    %4929 = vmatpush.msra.mxu0 %v4040
    %4930 = vmatpush.msra.mxu0 %v4037
    %4931 = vmatpush.msra.mxu0 %v4034
    %4932 = vmatpush.msra.mxu0 %v4031
    %4933 = vmatpush.msra.mxu0 %v4028
    %4934 = vmatpush.msra.mxu0 %v4025
    %4935 = vmatpush.msra.mxu0 %v4022
    %4936 = vmatpush.msra.mxu0 %v4019
    %4937 = vmatpush.msra.mxu0 %v4016
    %4938 = vmatpush.msra.mxu0 %v4013
    %4939 = vmatmul.f32.gmra.mxu0 %v4313
    %v4940 = vpop.f32.mrf.mxu0
    %v4941 = vadd.f32 %v4915, %v4940
    %4942 = vmatmul.f32.gmra.mxu0 %v4494
    %v4943 = vpop.f32.mrf.mxu0
    %v4944 = vadd.f32 %v4918, %v4943
    %4945 = vmatmul.f32.gmra.mxu0 %v4457
    %v4946 = vpop.f32.mrf.mxu0
    %v4947 = vadd.f32 %v4921, %v4946
    %4948 = vdwg.mxu0
    %4949 = vmatpush.msra.mxu0 %v4106
    %4950 = vmatpush.msra.mxu0 %v4103
    %4951 = vmatpush.msra.mxu0 %v4100
    %4952 = vmatpush.msra.mxu0 %v4097
    %4953 = vmatpush.msra.mxu0 %v4094
    %4954 = vmatpush.msra.mxu0 %v4091
    %4955 = vmatpush.msra.mxu0 %v4088
    %4956 = vmatpush.msra.mxu0 %v4085
    %4957 = vmatpush.msra.mxu0 %v4082
    %4958 = vmatpush.msra.mxu0 %v4079
    %4959 = vmatpush.msra.mxu0 %v4076
    %4960 = vmatpush.msra.mxu0 %v4073
    %4961 = vmatpush.msra.mxu0 %v4070
    %4962 = vmatpush.msra.mxu0 %v4067
    %4963 = vmatpush.msra.mxu0 %v4064
    %4964 = vmatpush.msra.mxu0 %v4061
    %4965 = vmatmul.f32.gmra.mxu0 %v4314
    %v4966 = vpop.f32.mrf.mxu0
    %v4967 = vadd.f32 %v4941, %v4966
    %4968 = vmatmul.f32.gmra.mxu0 %v4495
    %v4969 = vpop.f32.mrf.mxu0
    %v4970 = vadd.f32 %v4944, %v4969
    %4971 = vmatmul.f32.gmra.mxu0 %v4459
    %v4972 = vpop.f32.mrf.mxu0
    %v4973 = vadd.f32 %v4947, %v4972
    %4974 = vdwg.mxu0
    %4975 = vmatpush.msra.mxu0 %v4154
    %4976 = vmatpush.msra.mxu0 %v4151
    %4977 = vmatpush.msra.mxu0 %v4148
    %4978 = vmatpush.msra.mxu0 %v4145
    %4979 = vmatpush.msra.mxu0 %v4142
    %4980 = vmatpush.msra.mxu0 %v4139
    %4981 = vmatpush.msra.mxu0 %v4136
    %4982 = vmatpush.msra.mxu0 %v4133
    %4983 = vmatpush.msra.mxu0 %v4130
    %4984 = vmatpush.msra.mxu0 %v4127
    %4985 = vmatpush.msra.mxu0 %v4124
    %4986 = vmatpush.msra.mxu0 %v4121
    %4987 = vmatpush.msra.mxu0 %v4118
    %4988 = vmatpush.msra.mxu0 %v4115
    %4989 = vmatpush.msra.mxu0 %v4112
    %4990 = vmatpush.msra.mxu0 %v4109
    %4991 = vmatmul.f32.gmra.mxu0 %v4328
    %v4992 = vpop.f32.mrf.mxu0
    %v4993 = vadd.f32 %v4967, %v4992
    %4994 = vmatmul.f32.gmra.mxu0 %v4496
    %v4995 = vpop.f32.mrf.mxu0
    %v4996 = vadd.f32 %v4970, %v4995
    %4997 = vmatmul.f32.gmra.mxu0 %v4461
    %v4998 = vpop.f32.mrf.mxu0
    %v4999 = vadd.f32 %v4973, %v4998
    %5000 = vdwg.mxu0
    %5001 = vmatpush.msra.mxu0 %v4202
    %5002 = vmatpush.msra.mxu0 %v4199
    %5003 = vmatpush.msra.mxu0 %v4196
    %5004 = vmatpush.msra.mxu0 %v4193
    %5005 = vmatpush.msra.mxu0 %v4190
    %5006 = vmatpush.msra.mxu0 %v4187
    %5007 = vmatpush.msra.mxu0 %v4184
    %5008 = vmatpush.msra.mxu0 %v4181
    %5009 = vmatpush.msra.mxu0 %v4178
    %5010 = vmatpush.msra.mxu0 %v4175
    %5011 = vmatpush.msra.mxu0 %v4172
    %5012 = vmatpush.msra.mxu0 %v4169
    %5013 = vmatpush.msra.mxu0 %v4166
    %5014 = vmatpush.msra.mxu0 %v4163
    %5015 = vmatpush.msra.mxu0 %v4160
    %5016 = vmatpush.msra.mxu0 %v4157
    %5017 = vmatmul.f32.gmra.mxu0 %v4331
    %v5018 = vpop.f32.mrf.mxu0
    %v5019 = vadd.f32 %v4993, %v5018
    %5020 = vmatmul.f32.gmra.mxu0 %v4497
    %v5021 = vpop.f32.mrf.mxu0
    %v5022 = vadd.f32 %v4996, %v5021
    %5023 = vmatmul.f32.gmra.mxu0 %v4463
    %v5024 = vpop.f32.mrf.mxu0
    %v5025 = vadd.f32 %v4999, %v5024
    %5026 = vdwg.mxu0
    %5027 = vmatpush.msra.mxu0 %v4250
    %5028 = vmatpush.msra.mxu0 %v4247
    %5029 = vmatpush.msra.mxu0 %v4244
    %5030 = vmatpush.msra.mxu0 %v4241
    %5031 = vmatpush.msra.mxu0 %v4238
    %5032 = vmatpush.msra.mxu0 %v4235
    %5033 = vmatpush.msra.mxu0 %v4232
    %5034 = vmatpush.msra.mxu0 %v4229
    %5035 = vmatpush.msra.mxu0 %v4226
    %5036 = vmatpush.msra.mxu0 %v4223
    %5037 = vmatpush.msra.mxu0 %v4220
    %5038 = vmatpush.msra.mxu0 %v4217
    %5039 = vmatpush.msra.mxu0 %v4214
    %5040 = vmatpush.msra.mxu0 %v4211
    %5041 = vmatpush.msra.mxu0 %v4208
    %5042 = vmatpush.msra.mxu0 %v4205
    %5043 = vmatmul.f32.gmra.mxu0 %v4334
    %v5044 = vpop.f32.mrf.mxu0
    %v5045 = vadd.f32 %v5019, %v5044
    %5046 = vmatmul.f32.gmra.mxu0 %v4498
    %v5047 = vpop.f32.mrf.mxu0
    %v5048 = vadd.f32 %v5022, %v5047
    %5049 = vmatmul.f32.gmra.mxu0 %v4465
    %v5050 = vpop.f32.mrf.mxu0
    %v5051 = vadd.f32 %v5025, %v5050
    %5052 = vdwg.mxu0
    %5053 = vmatpush.msra.mxu0 0.0
    %5054 = vmatpush.msra.mxu0 0.0
    %5055 = vmatpush.msra.mxu0 0.0
    %5056 = vmatpush.msra.mxu0 0.0
    %5057 = vmatpush.msra.mxu0 0.0
    %5058 = vmatpush.msra.mxu0 0.0
    %5059 = vmatpush.msra.mxu0 0.0
    %5060 = vmatpush.msra.mxu0 0.0
    %5061 = vmatpush.msra.mxu0 %v4274
    %5062 = vmatpush.msra.mxu0 %v4271
    %5063 = vmatpush.msra.mxu0 %v4268
    %5064 = vmatpush.msra.mxu0 %v4265
    %5065 = vmatpush.msra.mxu0 %v4262
    %5066 = vmatpush.msra.mxu0 %v4259
    %5067 = vmatpush.msra.mxu0 %v4256
    %5068 = vmatpush.msra.mxu0 %v4253
    %5069 = vmatmul.f32.gmra.mxu0 %v4500
    %v5070 = vpop.f32.mrf.mxu0
    %v5071 = vadd.f32 %v5045, %v5070
    %5072 = vmatmul.f32.gmra.mxu0 %v4503
    %v5073 = vpop.f32.mrf.mxu0
    %v5074 = vadd.f32 %v5048, %v5073
    %5075 = vmatmul.f32.gmra.mxu0 %v4505
    %v5076 = vpop.f32.mrf.mxu0
    %v5077 = vadd.f32 %v5051, %v5076
    %5078 = vdwg.mxu0
    %5079 = vmatpush.msra.mxu0 %v3819
    %5080 = vmatpush.msra.mxu0 %v3816
    %5081 = vmatpush.msra.mxu0 %v3813
    %5082 = vmatpush.msra.mxu0 %v3810
    %5083 = vmatpush.msra.mxu0 %v3807
    %5084 = vmatpush.msra.mxu0 %v3804
    %5085 = vmatpush.msra.mxu0 %v3801
    %5086 = vmatpush.msra.mxu0 %v3798
    %5087 = vmatpush.msra.mxu0 %v3795
    %5088 = vmatpush.msra.mxu0 %v3792
    %5089 = vmatpush.msra.mxu0 %v3789
    %5090 = vmatpush.msra.mxu0 %v3786
    %5091 = vmatpush.msra.mxu0 %v3783
    %5092 = vmatpush.msra.mxu0 %v3780
    %5093 = vmatpush.msra.mxu0 %v3777
    %5094 = vmatpush.msra.mxu0 %v3774
    %5095 = vmatmul.f32.gmra.mxu0 %v3752
    %v5096 = vpop.f32.mrf.mxu0
    %v5097 = vadd.f32 0.0, %v5096
    %5098 = vmatmul.f32.gmra.mxu0 %v4489
    %v5099 = vpop.f32.mrf.mxu0
    %v5100 = vadd.f32 0.0, %v5099
    %5101 = vmatmul.f32.gmra.mxu0 %v4412
    %v5102 = vpop.f32.mrf.mxu0
    %v5103 = vadd.f32 0.0, %v5102
    %5104 = vdwg.mxu0
    %5105 = vmatpush.msra.mxu0 %v3867
    %5106 = vmatpush.msra.mxu0 %v3864
    %5107 = vmatpush.msra.mxu0 %v3861
    %5108 = vmatpush.msra.mxu0 %v3858
    %5109 = vmatpush.msra.mxu0 %v3855
    %5110 = vmatpush.msra.mxu0 %v3852
    %5111 = vmatpush.msra.mxu0 %v3849
    %5112 = vmatpush.msra.mxu0 %v3846
    %5113 = vmatpush.msra.mxu0 %v3843
    %5114 = vmatpush.msra.mxu0 %v3840
    %5115 = vmatpush.msra.mxu0 %v3837
    %5116 = vmatpush.msra.mxu0 %v3834
    %5117 = vmatpush.msra.mxu0 %v3831
    %5118 = vmatpush.msra.mxu0 %v3828
    %5119 = vmatpush.msra.mxu0 %v3825
    %5120 = vmatpush.msra.mxu0 %v3822
    %5121 = vmatmul.f32.gmra.mxu0 %v3753
    %v5122 = vpop.f32.mrf.mxu0
    %v5123 = vadd.f32 %v5097, %v5122
    %5124 = vmatmul.f32.gmra.mxu0 %v4490
    %v5125 = vpop.f32.mrf.mxu0
    %v5126 = vadd.f32 %v5100, %v5125
    %5127 = vmatmul.f32.gmra.mxu0 %v4414
    %v5128 = vpop.f32.mrf.mxu0
    %v5129 = vadd.f32 %v5103, %v5128
    %5130 = vdwg.mxu0
    %5131 = vmatpush.msra.mxu0 %v3915
    %5132 = vmatpush.msra.mxu0 %v3912
    %5133 = vmatpush.msra.mxu0 %v3909
    %5134 = vmatpush.msra.mxu0 %v3906
    %5135 = vmatpush.msra.mxu0 %v3903
    %5136 = vmatpush.msra.mxu0 %v3900
    %5137 = vmatpush.msra.mxu0 %v3897
    %5138 = vmatpush.msra.mxu0 %v3894
    %5139 = vmatpush.msra.mxu0 %v3891
    %5140 = vmatpush.msra.mxu0 %v3888
    %5141 = vmatpush.msra.mxu0 %v3885
    %5142 = vmatpush.msra.mxu0 %v3882
    %5143 = vmatpush.msra.mxu0 %v3879
    %5144 = vmatpush.msra.mxu0 %v3876
    %5145 = vmatpush.msra.mxu0 %v3873
    %5146 = vmatpush.msra.mxu0 %v3870
    %5147 = vmatmul.f32.gmra.mxu0 %v3754
    %v5148 = vpop.f32.mrf.mxu0
    %v5149 = vadd.f32 %v5123, %v5148
    %5150 = vmatmul.f32.gmra.mxu0 %v4491
    %v5151 = vpop.f32.mrf.mxu0
    %v5152 = vadd.f32 %v5126, %v5151
    %5153 = vmatmul.f32.gmra.mxu0 %v4416
    %v5154 = vpop.f32.mrf.mxu0
    %v5155 = vadd.f32 %v5129, %v5154
    %5156 = vdwg.mxu0
    %5157 = vmatpush.msra.mxu0 %v3963
    %5158 = vmatpush.msra.mxu0 %v3960
    %5159 = vmatpush.msra.mxu0 %v3957
    %5160 = vmatpush.msra.mxu0 %v3954
    %5161 = vmatpush.msra.mxu0 %v3951
    %5162 = vmatpush.msra.mxu0 %v3948
    %5163 = vmatpush.msra.mxu0 %v3945
    %5164 = vmatpush.msra.mxu0 %v3942
    %5165 = vmatpush.msra.mxu0 %v3939
    %5166 = vmatpush.msra.mxu0 %v3936
    %5167 = vmatpush.msra.mxu0 %v3933
    %5168 = vmatpush.msra.mxu0 %v3930
    %5169 = vmatpush.msra.mxu0 %v3927
    %5170 = vmatpush.msra.mxu0 %v3924
    %5171 = vmatpush.msra.mxu0 %v3921
    %5172 = vmatpush.msra.mxu0 %v3918
    %5173 = vmatmul.f32.gmra.mxu0 %v4345
    %v5174 = vpop.f32.mrf.mxu0
    %v5175 = vadd.f32 %v5149, %v5174
    %5176 = vmatmul.f32.gmra.mxu0 %v4492
    %v5177 = vpop.f32.mrf.mxu0
    %v5178 = vadd.f32 %v5152, %v5177
    %5179 = vmatmul.f32.gmra.mxu0 %v4453
    %v5180 = vpop.f32.mrf.mxu0
    %v5181 = vadd.f32 %v5155, %v5180
    %5182 = vdwg.mxu0
    %5183 = vmatpush.msra.mxu0 %v4011
    %5184 = vmatpush.msra.mxu0 %v4008
    %5185 = vmatpush.msra.mxu0 %v4005
    %5186 = vmatpush.msra.mxu0 %v4002
    %5187 = vmatpush.msra.mxu0 %v3999
    %5188 = vmatpush.msra.mxu0 %v3996
    %5189 = vmatpush.msra.mxu0 %v3993
    %5190 = vmatpush.msra.mxu0 %v3990
    %5191 = vmatpush.msra.mxu0 %v3987
    %5192 = vmatpush.msra.mxu0 %v3984
    %5193 = vmatpush.msra.mxu0 %v3981
    %5194 = vmatpush.msra.mxu0 %v3978
    %5195 = vmatpush.msra.mxu0 %v3975
    %5196 = vmatpush.msra.mxu0 %v3972
    %5197 = vmatpush.msra.mxu0 %v3969
    %5198 = vmatpush.msra.mxu0 %v3966
    %5199 = vmatmul.f32.gmra.mxu0 %v4312
    %v5200 = vpop.f32.mrf.mxu0
    %v5201 = vadd.f32 %v5175, %v5200
    %5202 = vmatmul.f32.gmra.mxu0 %v4493
    %v5203 = vpop.f32.mrf.mxu0
    %v5204 = vadd.f32 %v5178, %v5203
    %5205 = vmatmul.f32.gmra.mxu0 %v4455
    %v5206 = vpop.f32.mrf.mxu0
    %v5207 = vadd.f32 %v5181, %v5206
    %5208 = vdwg.mxu0
    %5209 = vmatpush.msra.mxu0 %v4059
    %5210 = vmatpush.msra.mxu0 %v4056
    %5211 = vmatpush.msra.mxu0 %v4053
    %5212 = vmatpush.msra.mxu0 %v4050
    %5213 = vmatpush.msra.mxu0 %v4047
    %5214 = vmatpush.msra.mxu0 %v4044
    %5215 = vmatpush.msra.mxu0 %v4041
    %5216 = vmatpush.msra.mxu0 %v4038
    %5217 = vmatpush.msra.mxu0 %v4035
    %5218 = vmatpush.msra.mxu0 %v4032
    %5219 = vmatpush.msra.mxu0 %v4029
    %5220 = vmatpush.msra.mxu0 %v4026
    %5221 = vmatpush.msra.mxu0 %v4023
    %5222 = vmatpush.msra.mxu0 %v4020
    %5223 = vmatpush.msra.mxu0 %v4017
    %5224 = vmatpush.msra.mxu0 %v4014
    %5225 = vmatmul.f32.gmra.mxu0 %v4313
    %v5226 = vpop.f32.mrf.mxu0
    %v5227 = vadd.f32 %v5201, %v5226
    %5228 = vmatmul.f32.gmra.mxu0 %v4494
    %v5229 = vpop.f32.mrf.mxu0
    %v5230 = vadd.f32 %v5204, %v5229
    %5231 = vmatmul.f32.gmra.mxu0 %v4457
    %v5232 = vpop.f32.mrf.mxu0
    %v5233 = vadd.f32 %v5207, %v5232
    %5234 = vdwg.mxu0
    %5235 = vmatpush.msra.mxu0 %v4107
    %5236 = vmatpush.msra.mxu0 %v4104
    %5237 = vmatpush.msra.mxu0 %v4101
    %5238 = vmatpush.msra.mxu0 %v4098
    %5239 = vmatpush.msra.mxu0 %v4095
    %5240 = vmatpush.msra.mxu0 %v4092
    %5241 = vmatpush.msra.mxu0 %v4089
    %5242 = vmatpush.msra.mxu0 %v4086
    %5243 = vmatpush.msra.mxu0 %v4083
    %5244 = vmatpush.msra.mxu0 %v4080
    %5245 = vmatpush.msra.mxu0 %v4077
    %5246 = vmatpush.msra.mxu0 %v4074
    %5247 = vmatpush.msra.mxu0 %v4071
    %5248 = vmatpush.msra.mxu0 %v4068
    %5249 = vmatpush.msra.mxu0 %v4065
    %5250 = vmatpush.msra.mxu0 %v4062
    %5251 = vmatmul.f32.gmra.mxu0 %v4314
    %v5252 = vpop.f32.mrf.mxu0
    %v5253 = vadd.f32 %v5227, %v5252
    %5254 = vmatmul.f32.gmra.mxu0 %v4495
    %v5255 = vpop.f32.mrf.mxu0
    %v5256 = vadd.f32 %v5230, %v5255
    %5257 = vmatmul.f32.gmra.mxu0 %v4459
    %v5258 = vpop.f32.mrf.mxu0
    %v5259 = vadd.f32 %v5233, %v5258
    %5260 = vdwg.mxu0
    %5261 = vmatpush.msra.mxu0 %v4155
    %5262 = vmatpush.msra.mxu0 %v4152
    %5263 = vmatpush.msra.mxu0 %v4149
    %5264 = vmatpush.msra.mxu0 %v4146
    %5265 = vmatpush.msra.mxu0 %v4143
    %5266 = vmatpush.msra.mxu0 %v4140
    %5267 = vmatpush.msra.mxu0 %v4137
    %5268 = vmatpush.msra.mxu0 %v4134
    %5269 = vmatpush.msra.mxu0 %v4131
    %5270 = vmatpush.msra.mxu0 %v4128
    %5271 = vmatpush.msra.mxu0 %v4125
    %5272 = vmatpush.msra.mxu0 %v4122
    %5273 = vmatpush.msra.mxu0 %v4119
    %5274 = vmatpush.msra.mxu0 %v4116
    %5275 = vmatpush.msra.mxu0 %v4113
    %5276 = vmatpush.msra.mxu0 %v4110
    %5277 = vmatmul.f32.gmra.mxu0 %v4328
    %v5278 = vpop.f32.mrf.mxu0
    %v5279 = vadd.f32 %v5253, %v5278
    %5280 = vmatmul.f32.gmra.mxu0 %v4496
    %v5281 = vpop.f32.mrf.mxu0
    %v5282 = vadd.f32 %v5256, %v5281
    %5283 = vmatmul.f32.gmra.mxu0 %v4461
    %v5284 = vpop.f32.mrf.mxu0
    %v5285 = vadd.f32 %v5259, %v5284
    %5286 = vdwg.mxu0
    %5287 = vmatpush.msra.mxu0 %v4203
    %5288 = vmatpush.msra.mxu0 %v4200
    %5289 = vmatpush.msra.mxu0 %v4197
    %5290 = vmatpush.msra.mxu0 %v4194
    %5291 = vmatpush.msra.mxu0 %v4191
    %5292 = vmatpush.msra.mxu0 %v4188
    %5293 = vmatpush.msra.mxu0 %v4185
    %5294 = vmatpush.msra.mxu0 %v4182
    %5295 = vmatpush.msra.mxu0 %v4179
    %5296 = vmatpush.msra.mxu0 %v4176
    %5297 = vmatpush.msra.mxu0 %v4173
    %5298 = vmatpush.msra.mxu0 %v4170
    %5299 = vmatpush.msra.mxu0 %v4167
    %5300 = vmatpush.msra.mxu0 %v4164
    %5301 = vmatpush.msra.mxu0 %v4161
    %5302 = vmatpush.msra.mxu0 %v4158
    %5303 = vmatmul.f32.gmra.mxu0 %v4331
    %v5304 = vpop.f32.mrf.mxu0
    %v5305 = vadd.f32 %v5279, %v5304
    %5306 = vmatmul.f32.gmra.mxu0 %v4497
    %v5307 = vpop.f32.mrf.mxu0
    %v5308 = vadd.f32 %v5282, %v5307
    %5309 = vmatmul.f32.gmra.mxu0 %v4463
    %v5310 = vpop.f32.mrf.mxu0
    %v5311 = vadd.f32 %v5285, %v5310
    %5312 = vdwg.mxu0
    %5313 = vmatpush.msra.mxu0 %v4251
    %5314 = vmatpush.msra.mxu0 %v4248
    %5315 = vmatpush.msra.mxu0 %v4245
    %5316 = vmatpush.msra.mxu0 %v4242
    %5317 = vmatpush.msra.mxu0 %v4239
    %5318 = vmatpush.msra.mxu0 %v4236
    %5319 = vmatpush.msra.mxu0 %v4233
    %5320 = vmatpush.msra.mxu0 %v4230
    %5321 = vmatpush.msra.mxu0 %v4227
    %5322 = vmatpush.msra.mxu0 %v4224
    %5323 = vmatpush.msra.mxu0 %v4221
    %5324 = vmatpush.msra.mxu0 %v4218
    %5325 = vmatpush.msra.mxu0 %v4215
    %5326 = vmatpush.msra.mxu0 %v4212
    %5327 = vmatpush.msra.mxu0 %v4209
    %5328 = vmatpush.msra.mxu0 %v4206
    %5329 = vmatmul.f32.gmra.mxu0 %v4334
    %v5330 = vpop.f32.mrf.mxu0
    %v5331 = vadd.f32 %v5305, %v5330
    %5332 = vmatmul.f32.gmra.mxu0 %v4498
    %v5333 = vpop.f32.mrf.mxu0
    %v5334 = vadd.f32 %v5308, %v5333
    %5335 = vmatmul.f32.gmra.mxu0 %v4465
    %v5336 = vpop.f32.mrf.mxu0
    %v5337 = vadd.f32 %v5311, %v5336
    %5338 = vdwg.mxu0
    %5339 = vmatpush.msra.mxu0 0.0
    %5340 = vmatpush.msra.mxu0 0.0
    %5341 = vmatpush.msra.mxu0 0.0
    %5342 = vmatpush.msra.mxu0 0.0
    %5343 = vmatpush.msra.mxu0 0.0
    %5344 = vmatpush.msra.mxu0 0.0
    %5345 = vmatpush.msra.mxu0 0.0
    %5346 = vmatpush.msra.mxu0 0.0
    %5347 = vmatpush.msra.mxu0 %v4275
    %5348 = vmatpush.msra.mxu0 %v4272
    %5349 = vmatpush.msra.mxu0 %v4269
    %5350 = vmatpush.msra.mxu0 %v4266
    %5351 = vmatpush.msra.mxu0 %v4263
    %5352 = vmatpush.msra.mxu0 %v4260
    %5353 = vmatpush.msra.mxu0 %v4257
    %5354 = vmatpush.msra.mxu0 %v4254
    %5355 = vmatmul.f32.gmra.mxu0 %v4500
    %v5356 = vpop.f32.mrf.mxu0
    %v5357 = vadd.f32 %v5331, %v5356
    %5358 = vmatmul.f32.gmra.mxu0 %v4503
    %v5359 = vpop.f32.mrf.mxu0
    %v5360 = vadd.f32 %v5334, %v5359
    %5361 = vmatmul.f32.gmra.mxu0 %v4505
    %v5362 = vpop.f32.mrf.mxu0
    %v5363 = vadd.f32 %v5337, %v5362
    %5364 = vdwg.mxu0
    %v5365 = vadd.f32 %v4785, %v4788
    %v5366 = vadd.f32 %v5365, %v4791
    %v5367 = vrot.slane %v5366, 4
    %v5368 = vadd.f32 %v5366, %v5367
    %v5369 = vrot.slane %v5368, 2
    %v5370 = vadd.f32 %v5368, %v5369
    %v5371 = vrot.slane %v5370, 1
    %v5372 = vadd.f32 %v5370, %v5371
    %v5373 = vadd.f32 %v5071, %v5074
    %v5374 = vadd.f32 %v5373, %v5077
    %v5375 = vrot.slane %v5374, 4
    %v5376 = vadd.f32 %v5374, %v5375
    %v5377 = vrot.slane %v5376, 2
    %v5378 = vadd.f32 %v5376, %v5377
    %v5379 = vrot.slane %v5378, 1
    %v5380 = vadd.f32 %v5378, %v5379
    %v5381 = vadd.f32 %v5357, %v5360
    %v5382 = vadd.f32 %v5381, %v5363
    %v5383 = vrot.slane %v5382, 4
    %v5384 = vadd.f32 %v5382, %v5383
    %v5385 = vrot.slane %v5384, 2
    %v5386 = vadd.f32 %v5384, %v5385
    %v5387 = vrot.slane %v5386, 1
    %v5388 = vadd.f32 %v5386, %v5387
    %v5389 = vmul.f32 %v4785, %v4785
    %v5390 = vmul.f32 %v5071, %v5071
    %v5391 = vmul.f32 %v5357, %v5357
    %v5392 = vmul.f32 %v4788, %v4788
    %v5393 = vmul.f32 %v5074, %v5074
    %v5394 = vmul.f32 %v5360, %v5360
    %v5395 = vmul.f32 %v4791, %v4791
    %v5396 = vmul.f32 %v5077, %v5077
    %v5397 = vmul.f32 %v5363, %v5363
    %v5398 = vadd.f32 %v5389, %v5392
    %v5399 = vadd.f32 %v5398, %v5395
    %v5400 = vrot.slane %v5399, 4
    %v5401 = vadd.f32 %v5399, %v5400
    %v5402 = vrot.slane %v5401, 2
    %v5403 = vadd.f32 %v5401, %v5402
    %v5404 = vrot.slane %v5403, 1
    %v5405 = vadd.f32 %v5403, %v5404
    %v5406 = vadd.f32 %v5390, %v5393
    %v5407 = vadd.f32 %v5406, %v5396
    %v5408 = vrot.slane %v5407, 4
    %v5409 = vadd.f32 %v5407, %v5408
    %v5410 = vrot.slane %v5409, 2
    %v5411 = vadd.f32 %v5409, %v5410
    %v5412 = vrot.slane %v5411, 1
    %v5413 = vadd.f32 %v5411, %v5412
    %v5414 = vadd.f32 %v5391, %v5394
    %v5415 = vadd.f32 %v5414, %v5397
    %v5416 = vrot.slane %v5415, 4
    %v5417 = vadd.f32 %v5415, %v5416
    %v5418 = vrot.slane %v5417, 2
    %v5419 = vadd.f32 %v5417, %v5418
    %v5420 = vrot.slane %v5419, 1
    %v5421 = vadd.f32 %v5419, %v5420
    %v5422 = vsel %vm3142, %v5372, %v5405
    %v5423 = vsel %vm3142, %v5380, %v5413
    %v5424 = vsel %vm3142, %v5388, %v5421
    %5425 = vmatpush.msra.mxu0 %v3389
    %5426 = vmatpush.msra.mxu0 %v3388
    %5427 = vmatpush.msra.mxu0 %v3387
    %5428 = vmatpush.msra.mxu0 %v3386
    %5429 = vmatpush.msra.mxu0 %v3385
    %5430 = vmatpush.msra.mxu0 %v3384
    %5431 = vmatpush.msra.mxu0 %v3383
    %5432 = vmatpush.msra.mxu0 %v3382
    %5433 = vmatpush.msra.mxu0 %v3381
    %5434 = vmatpush.msra.mxu0 %v3380
    %5435 = vmatpush.msra.mxu0 %v3379
    %5436 = vmatpush.msra.mxu0 %v3378
    %5437 = vmatpush.msra.mxu0 %v3377
    %5438 = vmatpush.msra.mxu0 %v3376
    %5439 = vmatpush.msra.mxu0 %v3375
    %5440 = vmatpush.msra.mxu0 %v3374
    %5441 = vmatmul.f32.gmra.mxu0 %v5422
    %v5442 = vpop.f32.mrf.mxu0
    %v5443 = vadd.f32 0.0, %v5442
    %5444 = vdwg.mxu0
    %5445 = vmatpush.msra.mxu0 %v3405
    %5446 = vmatpush.msra.mxu0 %v3404
    %5447 = vmatpush.msra.mxu0 %v3403
    %5448 = vmatpush.msra.mxu0 %v3402
    %5449 = vmatpush.msra.mxu0 %v3401
    %5450 = vmatpush.msra.mxu0 %v3400
    %5451 = vmatpush.msra.mxu0 %v3399
    %5452 = vmatpush.msra.mxu0 %v3398
    %5453 = vmatpush.msra.mxu0 %v3397
    %5454 = vmatpush.msra.mxu0 %v3396
    %5455 = vmatpush.msra.mxu0 %v3395
    %5456 = vmatpush.msra.mxu0 %v3394
    %5457 = vmatpush.msra.mxu0 %v3393
    %5458 = vmatpush.msra.mxu0 %v3392
    %5459 = vmatpush.msra.mxu0 %v3391
    %5460 = vmatpush.msra.mxu0 %v3390
    %5461 = vmatmul.f32.gmra.mxu0 %v5423
    %v5462 = vpop.f32.mrf.mxu0
    %v5463 = vadd.f32 %v5443, %v5462
    %5464 = vdwg.mxu0
    %5465 = vmatpush.msra.mxu0 %v3421
    %5466 = vmatpush.msra.mxu0 %v3420
    %5467 = vmatpush.msra.mxu0 %v3419
    %5468 = vmatpush.msra.mxu0 %v3418
    %5469 = vmatpush.msra.mxu0 %v3417
    %5470 = vmatpush.msra.mxu0 %v3416
    %5471 = vmatpush.msra.mxu0 %v3415
    %5472 = vmatpush.msra.mxu0 %v3414
    %5473 = vmatpush.msra.mxu0 %v3413
    %5474 = vmatpush.msra.mxu0 %v3412
    %5475 = vmatpush.msra.mxu0 %v3411
    %5476 = vmatpush.msra.mxu0 %v3410
    %5477 = vmatpush.msra.mxu0 %v3409
    %5478 = vmatpush.msra.mxu0 %v3408
    %5479 = vmatpush.msra.mxu0 %v3407
    %5480 = vmatpush.msra.mxu0 %v3406
    %5481 = vmatmul.f32.gmra.mxu0 %v5424
    %v5482 = vpop.f32.mrf.mxu0
    %v5483 = vadd.f32 %v5463, %v5482
    %5484 = vdwg.mxu0
    %v5485 = vmul.f32 %v5483, 0.0034722222
    %v5486 = vmul.f32 %v5485, %v5485
    %v5488 = vrot.slane %v5486, 7
    %v5490 = vsub.f32 %v5485, %v5488
    %v5491 = vmax.f32 %v5490, 0.0
    %v5492 = vadd.f32 %v5491, 1e-05
    %v5493 = vrsqrt.pop %v5492
    %v5494 = vmul.f32 %v5493, %v5492
    %v5495 = vmul.f32 %v5494, %v5493
    %v5496 = vmul.f32 0.5, %v5495
    %v5497 = vsub.f32 1.5, %v5496
    %v5498 = vmul.f32 %v5493, %v5497
    %vm5499 = vweird.f32 %v5492
    %vm5500 = vweird.f32 %v5493
    %vm5501 = vmor %vm5499, %vm5500
    %v5502 = vsel %vm5501, %v5493, %v5498
    %v5503 = vmul.f32 %v2651, %v5502
    %v5505 = vrot.slane %v5503, 1
    %v5507 = vmul.f32 %v5485, %v5505
    %v5509 = vrot.slane %v5507, 7
    %v5511 = vsub.f32 %v2652, %v5509
    %v5512 = vsel %vm3142, %v5505, %v5511
    %v5514 = vsel %vm3596, %v5512, 0
    %5516 = vmatpush.msra.mxu0 0.0
    %5517 = vmatpush.msra.mxu0 0.0
    %5518 = vmatpush.msra.mxu0 0.0
    %5519 = vmatpush.msra.mxu0 0.0
    %5520 = vmatpush.msra.mxu0 0.0
    %5521 = vmatpush.msra.mxu0 0.0
    %5522 = vmatpush.msra.mxu0 0.0
    %5523 = vmatpush.msra.mxu0 0.0
    %5524 = vmatpush.msra.mxu0 0.0
    %5525 = vmatpush.msra.mxu0 0.0
    %5526 = vmatpush.msra.mxu0 0.0
    %5527 = vmatpush.msra.mxu0 0.0
    %5528 = vmatpush.msra.mxu0 %v3592
    %5529 = vmatpush.msra.mxu0 %v3588
    %5530 = vmatpush.msra.mxu0 %v3584
    %5531 = vmatpush.msra.mxu0 %v3580
    %5532 = vmatmul.f32.gmra.mxu0 %v5514
    %v5533 = vpop.f32.mrf.mxu0
    %v5534 = vadd.f32 0.0, %v5533
    %5535 = vdwg.mxu0
    %5536 = vmatpush.msra.mxu0 0.0
    %5537 = vmatpush.msra.mxu0 0.0
    %5538 = vmatpush.msra.mxu0 0.0
    %5539 = vmatpush.msra.mxu0 0.0
    %5540 = vmatpush.msra.mxu0 0.0
    %5541 = vmatpush.msra.mxu0 0.0
    %5542 = vmatpush.msra.mxu0 0.0
    %5543 = vmatpush.msra.mxu0 0.0
    %5544 = vmatpush.msra.mxu0 0.0
    %5545 = vmatpush.msra.mxu0 0.0
    %5546 = vmatpush.msra.mxu0 0.0
    %5547 = vmatpush.msra.mxu0 0.0
    %5548 = vmatpush.msra.mxu0 %v3593
    %5549 = vmatpush.msra.mxu0 %v3589
    %5550 = vmatpush.msra.mxu0 %v3585
    %5551 = vmatpush.msra.mxu0 %v3581
    %5552 = vmatmul.f32.gmra.mxu0 %v5514
    %v5553 = vpop.f32.mrf.mxu0
    %v5554 = vadd.f32 0.0, %v5553
    %5555 = vdwg.mxu0
    %5556 = vmatpush.msra.mxu0 0.0
    %5557 = vmatpush.msra.mxu0 0.0
    %5558 = vmatpush.msra.mxu0 0.0
    %5559 = vmatpush.msra.mxu0 0.0
    %5560 = vmatpush.msra.mxu0 0.0
    %5561 = vmatpush.msra.mxu0 0.0
    %5562 = vmatpush.msra.mxu0 0.0
    %5563 = vmatpush.msra.mxu0 0.0
    %5564 = vmatpush.msra.mxu0 0.0
    %5565 = vmatpush.msra.mxu0 0.0
    %5566 = vmatpush.msra.mxu0 0.0
    %5567 = vmatpush.msra.mxu0 0.0
    %5568 = vmatpush.msra.mxu0 %v3594
    %5569 = vmatpush.msra.mxu0 %v3590
    %5570 = vmatpush.msra.mxu0 %v3586
    %5571 = vmatpush.msra.mxu0 %v3582
    %5572 = vmatmul.f32.gmra.mxu0 %v5514
    %v5573 = vpop.f32.mrf.mxu0
    %v5574 = vadd.f32 0.0, %v5573
    %5575 = vdwg.mxu0
    %v5576 = vperm.slane %v5534, 0
    %v5577 = vperm.slane %v5554, 0
    %v5578 = vperm.slane %v5574, 0
    %v5579 = vmul.f32 %v4785, %v5576
    %v5580 = vmul.f32 %v5071, %v5577
    %v5581 = vmul.f32 %v5357, %v5578
    %v5582 = vmul.f32 %v4788, %v5576
    %v5583 = vmul.f32 %v5074, %v5577
    %v5584 = vmul.f32 %v5360, %v5578
    %v5585 = vmul.f32 %v4791, %v5576
    %v5586 = vmul.f32 %v5077, %v5577
    %v5587 = vmul.f32 %v5363, %v5578
    %v5588 = vperm.slane %v5534, 1
    %v5589 = vperm.slane %v5554, 1
    %v5590 = vperm.slane %v5574, 1
    %v5591 = vadd.f32 %v5579, %v5588
    %v5592 = vadd.f32 %v5580, %v5589
    %v5593 = vadd.f32 %v5581, %v5590
    %v5594 = vadd.f32 %v5582, %v5588
    %v5595 = vadd.f32 %v5583, %v5589
    %v5596 = vadd.f32 %v5584, %v5590
    %v5597 = vadd.f32 %v5585, %v5588
    %v5598 = vadd.f32 %v5586, %v5589
    %v5599 = vadd.f32 %v5587, %v5590
    %vm5600 = vcmp.ge.f32.partialorder %v5591, 0.0
    %vm5601 = vcmp.ge.f32.partialorder %v5592, 0.0
    %vm5602 = vcmp.ge.f32.partialorder %v5593, 0.0
    %vm5603 = vcmp.ge.f32.partialorder %v5594, 0.0
    %vm5604 = vcmp.ge.f32.partialorder %v5595, 0.0
    %vm5605 = vcmp.ge.f32.partialorder %v5596, 0.0
    %vm5606 = vcmp.ge.f32.partialorder %v5597, 0.0
    %vm5607 = vcmp.ge.f32.partialorder %v5598, 0.0
    %vm5608 = vcmp.ge.f32.partialorder %v5599, 0.0
    %v5609 = vmul.f32 %v5591, 0.2
    %v5610 = vmul.f32 %v5592, 0.2
    %v5611 = vmul.f32 %v5593, 0.2
    %v5612 = vmul.f32 %v5594, 0.2
    %v5613 = vmul.f32 %v5595, 0.2
    %v5614 = vmul.f32 %v5596, 0.2
    %v5615 = vmul.f32 %v5597, 0.2
    %v5616 = vmul.f32 %v5598, 0.2
    %v5617 = vmul.f32 %v5599, 0.2
    %v5618 = vsel %vm5600, %v5591, %v5609
    %v5619 = vsel %vm5601, %v5592, %v5610
    %v5620 = vsel %vm5602, %v5593, %v5611
    %v5621 = vsel %vm5603, %v5594, %v5612
    %v5622 = vsel %vm5604, %v5595, %v5613
    %v5623 = vsel %vm5605, %v5596, %v5614
    %v5624 = vsel %vm5606, %v5597, %v5615
    %v5625 = vsel %vm5607, %v5598, %v5616
    %v5626 = vsel %vm5608, %v5599, %v5617
    %s5627 = smul.u32 8, 144
    %s5628 = smul.u32 %s5627, 3
    %s5629 = sshll.u32 %s5628, 4
    %5630 = dma.done %s1064, %s5629
    %v5631 = vld [vmem:[#allocation3] sm:$0xff]
    %v5632 = vld [vmem:[#allocation3 + $0x8] sm:$0xff]
    %v5633 = vld [vmem:[#allocation3 + $0x10] sm:$0xff]
    %v5634 = vld [vmem:[#allocation3 + $0x18] sm:$0xff]
    %v5635 = vld [vmem:[#allocation3 + $0x20] sm:$0xff]
    %v5636 = vld [vmem:[#allocation3 + $0x28] sm:$0xff]
    %v5637 = vld [vmem:[#allocation3 + $0x30] sm:$0xff]
    %v5638 = vld [vmem:[#allocation3 + $0x38] sm:$0xff]
    %v5639 = vld [vmem:[#allocation3 + $0x40] sm:$0xff]
    %v5640 = vld [vmem:[#allocation3 + $0x48] sm:$0xff]
    %v5641 = vld [vmem:[#allocation3 + $0x50] sm:$0xff]
    %v5642 = vld [vmem:[#allocation3 + $0x58] sm:$0xff]
    %v5643 = vld [vmem:[#allocation3 + $0x60] sm:$0xff]
    %v5644 = vld [vmem:[#allocation3 + $0x68] sm:$0xff]
    %v5645 = vld [vmem:[#allocation3 + $0x70] sm:$0xff]
    %v5646 = vld [vmem:[#allocation3 + $0x78] sm:$0xff]
    %v5647 = vld [vmem:[#allocation3 + $0x80] sm:$0xff]
    %v5648 = vld [vmem:[#allocation3 + $0x88] sm:$0xff]
    %v5649 = vld [vmem:[#allocation3 + $0x90] sm:$0xff]
    %v5650 = vld [vmem:[#allocation3 + $0x98] sm:$0xff]
    %v5651 = vld [vmem:[#allocation3 + $0xa0] sm:$0xff]
    %v5652 = vld [vmem:[#allocation3 + $0xa8] sm:$0xff]
    %v5653 = vld [vmem:[#allocation3 + $0xb0] sm:$0xff]
    %v5654 = vld [vmem:[#allocation3 + $0xb8] sm:$0xff]
    %v5655 = vld [vmem:[#allocation3 + $0xc0] sm:$0xff]
    %v5656 = vld [vmem:[#allocation3 + $0xc8] sm:$0xff]
    %v5657 = vld [vmem:[#allocation3 + $0xd0] sm:$0xff]
    %v5658 = vld [vmem:[#allocation3 + $0xd8] sm:$0xff]
    %v5659 = vld [vmem:[#allocation3 + $0xe0] sm:$0xff]
    %v5660 = vld [vmem:[#allocation3 + $0xe8] sm:$0xff]
    %v5661 = vld [vmem:[#allocation3 + $0xf0] sm:$0xff]
    %v5662 = vld [vmem:[#allocation3 + $0xf8] sm:$0xff]
    %v5663 = vld [vmem:[#allocation3 + $0x100] sm:$0xff]
    %v5664 = vld [vmem:[#allocation3 + $0x108] sm:$0xff]
    %v5665 = vld [vmem:[#allocation3 + $0x110] sm:$0xff]
    %v5666 = vld [vmem:[#allocation3 + $0x118] sm:$0xff]
    %v5667 = vld [vmem:[#allocation3 + $0x120] sm:$0xff]
    %v5668 = vld [vmem:[#allocation3 + $0x128] sm:$0xff]
    %v5669 = vld [vmem:[#allocation3 + $0x130] sm:$0xff]
    %v5670 = vld [vmem:[#allocation3 + $0x138] sm:$0xff]
    %v5671 = vld [vmem:[#allocation3 + $0x140] sm:$0xff]
    %v5672 = vld [vmem:[#allocation3 + $0x148] sm:$0xff]
    %v5673 = vld [vmem:[#allocation3 + $0x150] sm:$0xff]
    %v5674 = vld [vmem:[#allocation3 + $0x158] sm:$0xff]
    %v5675 = vld [vmem:[#allocation3 + $0x160] sm:$0xff]
    %v5676 = vld [vmem:[#allocation3 + $0x168] sm:$0xff]
    %v5677 = vld [vmem:[#allocation3 + $0x170] sm:$0xff]
    %v5678 = vld [vmem:[#allocation3 + $0x178] sm:$0xff]
    %v5679 = vld [vmem:[#allocation3 + $0x180] sm:$0xff]
    %v5680 = vld [vmem:[#allocation3 + $0x188] sm:$0xff]
    %v5681 = vld [vmem:[#allocation3 + $0x190] sm:$0xff]
    %v5682 = vld [vmem:[#allocation3 + $0x198] sm:$0xff]
    %v5683 = vld [vmem:[#allocation3 + $0x1a0] sm:$0xff]
    %v5684 = vld [vmem:[#allocation3 + $0x1a8] sm:$0xff]
    %v5685 = vld [vmem:[#allocation3 + $0x1b0] sm:$0xff]
    %v5686 = vld [vmem:[#allocation3 + $0x1b8] sm:$0xff]
    %v5687 = vld [vmem:[#allocation3 + $0x1c0] sm:$0xff]
    %v5688 = vld [vmem:[#allocation3 + $0x1c8] sm:$0xff]
    %v5689 = vld [vmem:[#allocation3 + $0x1d0] sm:$0xff]
    %v5690 = vld [vmem:[#allocation3 + $0x1d8] sm:$0xff]
    %v5691 = vld [vmem:[#allocation3 + $0x1e0] sm:$0xff]
    %v5692 = vld [vmem:[#allocation3 + $0x1e8] sm:$0xff]
    %v5693 = vld [vmem:[#allocation3 + $0x1f0] sm:$0xff]
    %v5694 = vld [vmem:[#allocation3 + $0x1f8] sm:$0xff]
    %v5695 = vld [vmem:[#allocation3 + $0x200] sm:$0xff]
    %v5696 = vld [vmem:[#allocation3 + $0x208] sm:$0xff]
    %v5697 = vld [vmem:[#allocation3 + $0x210] sm:$0xff]
    %v5698 = vld [vmem:[#allocation3 + $0x218] sm:$0xff]
    %v5699 = vld [vmem:[#allocation3 + $0x220] sm:$0xff]
    %v5700 = vld [vmem:[#allocation3 + $0x228] sm:$0xff]
    %v5701 = vld [vmem:[#allocation3 + $0x230] sm:$0xff]
    %v5702 = vld [vmem:[#allocation3 + $0x238] sm:$0xff]
    %v5703 = vld [vmem:[#allocation3 + $0x240] sm:$0xff]
    %v5704 = vld [vmem:[#allocation3 + $0x248] sm:$0xff]
    %v5705 = vld [vmem:[#allocation3 + $0x250] sm:$0xff]
    %v5706 = vld [vmem:[#allocation3 + $0x258] sm:$0xff]
    %v5707 = vld [vmem:[#allocation3 + $0x260] sm:$0xff]
    %v5708 = vld [vmem:[#allocation3 + $0x268] sm:$0xff]
    %v5709 = vld [vmem:[#allocation3 + $0x270] sm:$0xff]
    %v5710 = vld [vmem:[#allocation3 + $0x278] sm:$0xff]
    %v5711 = vld [vmem:[#allocation3 + $0x280] sm:$0xff]
    %v5712 = vld [vmem:[#allocation3 + $0x288] sm:$0xff]
    %v5713 = vld [vmem:[#allocation3 + $0x290] sm:$0xff]
    %v5714 = vld [vmem:[#allocation3 + $0x298] sm:$0xff]
    %v5715 = vld [vmem:[#allocation3 + $0x2a0] sm:$0xff]
    %v5716 = vld [vmem:[#allocation3 + $0x2a8] sm:$0xff]
    %v5717 = vld [vmem:[#allocation3 + $0x2b0] sm:$0xff]
    %v5718 = vld [vmem:[#allocation3 + $0x2b8] sm:$0xff]
    %v5719 = vld [vmem:[#allocation3 + $0x2c0] sm:$0xff]
    %v5720 = vld [vmem:[#allocation3 + $0x2c8] sm:$0xff]
    %v5721 = vld [vmem:[#allocation3 + $0x2d0] sm:$0xff]
    %v5722 = vld [vmem:[#allocation3 + $0x2d8] sm:$0xff]
    %v5723 = vld [vmem:[#allocation3 + $0x2e0] sm:$0xff]
    %v5724 = vld [vmem:[#allocation3 + $0x2e8] sm:$0xff]
    %v5725 = vld [vmem:[#allocation3 + $0x2f0] sm:$0xff]
    %v5726 = vld [vmem:[#allocation3 + $0x2f8] sm:$0xff]
    %v5727 = vld [vmem:[#allocation3 + $0x300] sm:$0xff]
    %v5728 = vld [vmem:[#allocation3 + $0x308] sm:$0xff]
    %v5729 = vld [vmem:[#allocation3 + $0x310] sm:$0xff]
    %v5730 = vld [vmem:[#allocation3 + $0x318] sm:$0xff]
    %v5731 = vld [vmem:[#allocation3 + $0x320] sm:$0xff]
    %v5732 = vld [vmem:[#allocation3 + $0x328] sm:$0xff]
    %v5733 = vld [vmem:[#allocation3 + $0x330] sm:$0xff]
    %v5734 = vld [vmem:[#allocation3 + $0x338] sm:$0xff]
    %v5735 = vld [vmem:[#allocation3 + $0x340] sm:$0xff]
    %v5736 = vld [vmem:[#allocation3 + $0x348] sm:$0xff]
    %v5737 = vld [vmem:[#allocation3 + $0x350] sm:$0xff]
    %v5738 = vld [vmem:[#allocation3 + $0x358] sm:$0xff]
    %v5739 = vld [vmem:[#allocation3 + $0x360] sm:$0xff]
    %v5740 = vld [vmem:[#allocation3 + $0x368] sm:$0xff]
    %v5741 = vld [vmem:[#allocation3 + $0x370] sm:$0xff]
    %v5742 = vld [vmem:[#allocation3 + $0x378] sm:$0xff]
    %v5743 = vld [vmem:[#allocation3 + $0x380] sm:$0xff]
    %v5744 = vld [vmem:[#allocation3 + $0x388] sm:$0xff]
    %v5745 = vld [vmem:[#allocation3 + $0x390] sm:$0xff]
    %v5746 = vld [vmem:[#allocation3 + $0x398] sm:$0xff]
    %v5747 = vld [vmem:[#allocation3 + $0x3a0] sm:$0xff]
    %v5748 = vld [vmem:[#allocation3 + $0x3a8] sm:$0xff]
    %v5749 = vld [vmem:[#allocation3 + $0x3b0] sm:$0xff]
    %v5750 = vld [vmem:[#allocation3 + $0x3b8] sm:$0xff]
    %v5751 = vld [vmem:[#allocation3 + $0x3c0] sm:$0xff]
    %v5752 = vld [vmem:[#allocation3 + $0x3c8] sm:$0xff]
    %v5753 = vld [vmem:[#allocation3 + $0x3d0] sm:$0xff]
    %v5754 = vld [vmem:[#allocation3 + $0x3d8] sm:$0xff]
    %v5755 = vld [vmem:[#allocation3 + $0x3e0] sm:$0xff]
    %v5756 = vld [vmem:[#allocation3 + $0x3e8] sm:$0xff]
    %v5757 = vld [vmem:[#allocation3 + $0x3f0] sm:$0xff]
    %v5758 = vld [vmem:[#allocation3 + $0x3f8] sm:$0xff]
    %v5759 = vld [vmem:[#allocation3 + $0x400] sm:$0xff]
    %v5760 = vld [vmem:[#allocation3 + $0x408] sm:$0xff]
    %v5761 = vld [vmem:[#allocation3 + $0x410] sm:$0xff]
    %v5762 = vld [vmem:[#allocation3 + $0x418] sm:$0xff]
    %v5763 = vld [vmem:[#allocation3 + $0x420] sm:$0xff]
    %v5764 = vld [vmem:[#allocation3 + $0x428] sm:$0xff]
    %v5765 = vld [vmem:[#allocation3 + $0x430] sm:$0xff]
    %v5766 = vld [vmem:[#allocation3 + $0x438] sm:$0xff]
    %v5767 = vld [vmem:[#allocation3 + $0x440] sm:$0xff]
    %v5768 = vld [vmem:[#allocation3 + $0x448] sm:$0xff]
    %v5769 = vld [vmem:[#allocation3 + $0x450] sm:$0xff]
    %v5770 = vld [vmem:[#allocation3 + $0x458] sm:$0xff]
    %v5771 = vld [vmem:[#allocation3 + $0x460] sm:$0xff]
    %v5772 = vld [vmem:[#allocation3 + $0x468] sm:$0xff]
    %v5773 = vld [vmem:[#allocation3 + $0x470] sm:$0xff]
    %v5774 = vld [vmem:[#allocation3 + $0x478] sm:$0xff]
    %v5775 = vld [vmem:[#allocation3 + $0x480] sm:$0xff]
    %v5776 = vld [vmem:[#allocation3 + $0x488] sm:$0xff]
    %v5777 = vld [vmem:[#allocation3 + $0x490] sm:$0xff]
    %v5778 = vld [vmem:[#allocation3 + $0x498] sm:$0xff]
    %v5779 = vld [vmem:[#allocation3 + $0x4a0] sm:$0xff]
    %v5780 = vld [vmem:[#allocation3 + $0x4a8] sm:$0xff]
    %v5781 = vld [vmem:[#allocation3 + $0x4b0] sm:$0xff]
    %v5782 = vld [vmem:[#allocation3 + $0x4b8] sm:$0xff]
    %v5783 = vld [vmem:[#allocation3 + $0x4c0] sm:$0xff]
    %v5784 = vld [vmem:[#allocation3 + $0x4c8] sm:$0xff]
    %v5785 = vld [vmem:[#allocation3 + $0x4d0] sm:$0xff]
    %v5786 = vld [vmem:[#allocation3 + $0x4d8] sm:$0xff]
    %v5787 = vld [vmem:[#allocation3 + $0x4e0] sm:$0xff]
    %v5788 = vld [vmem:[#allocation3 + $0x4e8] sm:$0xff]
    %v5789 = vld [vmem:[#allocation3 + $0x4f0] sm:$0xff]
    %v5790 = vld [vmem:[#allocation3 + $0x4f8] sm:$0xff]
    %v5791 = vld [vmem:[#allocation3 + $0x500] sm:$0xff]
    %v5792 = vld [vmem:[#allocation3 + $0x508] sm:$0xff]
    %v5793 = vld [vmem:[#allocation3 + $0x510] sm:$0xff]
    %v5794 = vld [vmem:[#allocation3 + $0x518] sm:$0xff]
    %v5795 = vld [vmem:[#allocation3 + $0x520] sm:$0xff]
    %v5796 = vld [vmem:[#allocation3 + $0x528] sm:$0xff]
    %v5797 = vld [vmem:[#allocation3 + $0x530] sm:$0xff]
    %v5798 = vld [vmem:[#allocation3 + $0x538] sm:$0xff]
    %v5799 = vld [vmem:[#allocation3 + $0x540] sm:$0xff]
    %v5800 = vld [vmem:[#allocation3 + $0x548] sm:$0xff]
    %v5801 = vld [vmem:[#allocation3 + $0x550] sm:$0xff]
    %v5802 = vld [vmem:[#allocation3 + $0x558] sm:$0xff]
    %v5803 = vld [vmem:[#allocation3 + $0x560] sm:$0xff]
    %v5804 = vld [vmem:[#allocation3 + $0x568] sm:$0xff]
    %v5805 = vld [vmem:[#allocation3 + $0x570] sm:$0xff]
    %v5806 = vld [vmem:[#allocation3 + $0x578] sm:$0xff]
    %v5807 = vld [vmem:[#allocation3 + $0x580] sm:$0xff]
    %v5808 = vld [vmem:[#allocation3 + $0x588] sm:$0xff]
    %v5809 = vld [vmem:[#allocation3 + $0x590] sm:$0xff]
    %v5810 = vld [vmem:[#allocation3 + $0x598] sm:$0xff]
    %v5811 = vld [vmem:[#allocation3 + $0x5a0] sm:$0xff]
    %v5812 = vld [vmem:[#allocation3 + $0x5a8] sm:$0xff]
    %v5813 = vld [vmem:[#allocation3 + $0x5b0] sm:$0xff]
    %v5814 = vld [vmem:[#allocation3 + $0x5b8] sm:$0xff]
    %v5815 = vld [vmem:[#allocation3 + $0x5c0] sm:$0xff]
    %v5816 = vld [vmem:[#allocation3 + $0x5c8] sm:$0xff]
    %v5817 = vld [vmem:[#allocation3 + $0x5d0] sm:$0xff]
    %v5818 = vld [vmem:[#allocation3 + $0x5d8] sm:$0xff]
    %v5819 = vld [vmem:[#allocation3 + $0x5e0] sm:$0xff]
    %v5820 = vld [vmem:[#allocation3 + $0x5e8] sm:$0xff]
    %v5821 = vld [vmem:[#allocation3 + $0x5f0] sm:$0xff]
    %v5822 = vld [vmem:[#allocation3 + $0x5f8] sm:$0xff]
    %v5823 = vld [vmem:[#allocation3 + $0x600] sm:$0xff]
    %v5824 = vld [vmem:[#allocation3 + $0x608] sm:$0xff]
    %v5825 = vld [vmem:[#allocation3 + $0x610] sm:$0xff]
    %v5826 = vld [vmem:[#allocation3 + $0x618] sm:$0xff]
    %v5827 = vld [vmem:[#allocation3 + $0x620] sm:$0xff]
    %v5828 = vld [vmem:[#allocation3 + $0x628] sm:$0xff]
    %v5829 = vld [vmem:[#allocation3 + $0x630] sm:$0xff]
    %v5830 = vld [vmem:[#allocation3 + $0x638] sm:$0xff]
    %v5831 = vld [vmem:[#allocation3 + $0x640] sm:$0xff]
    %v5832 = vld [vmem:[#allocation3 + $0x648] sm:$0xff]
    %v5833 = vld [vmem:[#allocation3 + $0x650] sm:$0xff]
    %v5834 = vld [vmem:[#allocation3 + $0x658] sm:$0xff]
    %v5835 = vld [vmem:[#allocation3 + $0x660] sm:$0xff]
    %v5836 = vld [vmem:[#allocation3 + $0x668] sm:$0xff]
    %v5837 = vld [vmem:[#allocation3 + $0x670] sm:$0xff]
    %v5838 = vld [vmem:[#allocation3 + $0x678] sm:$0xff]
    %v5839 = vld [vmem:[#allocation3 + $0x680] sm:$0xff]
    %v5840 = vld [vmem:[#allocation3 + $0x688] sm:$0xff]
    %v5841 = vld [vmem:[#allocation3 + $0x690] sm:$0xff]
    %v5842 = vld [vmem:[#allocation3 + $0x698] sm:$0xff]
    %v5843 = vld [vmem:[#allocation3 + $0x6a0] sm:$0xff]
    %v5844 = vld [vmem:[#allocation3 + $0x6a8] sm:$0xff]
    %v5845 = vld [vmem:[#allocation3 + $0x6b0] sm:$0xff]
    %v5846 = vld [vmem:[#allocation3 + $0x6b8] sm:$0xff]
    %v5847 = vld [vmem:[#allocation3 + $0x6c0] sm:$0xff]
    %v5848 = vld [vmem:[#allocation3 + $0x6c8] sm:$0xff]
    %v5849 = vld [vmem:[#allocation3 + $0x6d0] sm:$0xff]
    %v5850 = vld [vmem:[#allocation3 + $0x6d8] sm:$0xff]
    %v5851 = vld [vmem:[#allocation3 + $0x6e0] sm:$0xff]
    %v5852 = vld [vmem:[#allocation3 + $0x6e8] sm:$0xff]
    %v5853 = vld [vmem:[#allocation3 + $0x6f0] sm:$0xff]
    %v5854 = vld [vmem:[#allocation3 + $0x6f8] sm:$0xff]
    %v5855 = vld [vmem:[#allocation3 + $0x700] sm:$0xff]
    %v5856 = vld [vmem:[#allocation3 + $0x708] sm:$0xff]
    %v5857 = vld [vmem:[#allocation3 + $0x710] sm:$0xff]
    %v5858 = vld [vmem:[#allocation3 + $0x718] sm:$0xff]
    %v5859 = vld [vmem:[#allocation3 + $0x720] sm:$0xff]
    %v5860 = vld [vmem:[#allocation3 + $0x728] sm:$0xff]
    %v5861 = vld [vmem:[#allocation3 + $0x730] sm:$0xff]
    %v5862 = vld [vmem:[#allocation3 + $0x738] sm:$0xff]
    %v5863 = vld [vmem:[#allocation3 + $0x740] sm:$0xff]
    %v5864 = vld [vmem:[#allocation3 + $0x748] sm:$0xff]
    %v5865 = vld [vmem:[#allocation3 + $0x750] sm:$0xff]
    %v5866 = vld [vmem:[#allocation3 + $0x758] sm:$0xff]
    %v5867 = vld [vmem:[#allocation3 + $0x760] sm:$0xff]
    %v5868 = vld [vmem:[#allocation3 + $0x768] sm:$0xff]
    %v5869 = vld [vmem:[#allocation3 + $0x770] sm:$0xff]
    %v5870 = vld [vmem:[#allocation3 + $0x778] sm:$0xff]
    %v5871 = vld [vmem:[#allocation3 + $0x780] sm:$0xff]
    %v5872 = vld [vmem:[#allocation3 + $0x788] sm:$0xff]
    %v5873 = vld [vmem:[#allocation3 + $0x790] sm:$0xff]
    %v5874 = vld [vmem:[#allocation3 + $0x798] sm:$0xff]
    %v5875 = vld [vmem:[#allocation3 + $0x7a0] sm:$0xff]
    %v5876 = vld [vmem:[#allocation3 + $0x7a8] sm:$0xff]
    %v5877 = vld [vmem:[#allocation3 + $0x7b0] sm:$0xff]
    %v5878 = vld [vmem:[#allocation3 + $0x7b8] sm:$0xff]
    %v5879 = vld [vmem:[#allocation3 + $0x7c0] sm:$0xff]
    %v5880 = vld [vmem:[#allocation3 + $0x7c8] sm:$0xff]
    %v5881 = vld [vmem:[#allocation3 + $0x7d0] sm:$0xff]
    %v5882 = vld [vmem:[#allocation3 + $0x7d8] sm:$0xff]
    %v5883 = vld [vmem:[#allocation3 + $0x7e0] sm:$0xff]
    %v5884 = vld [vmem:[#allocation3 + $0x7e8] sm:$0xff]
    %v5885 = vld [vmem:[#allocation3 + $0x7f0] sm:$0xff]
    %v5886 = vld [vmem:[#allocation3 + $0x7f8] sm:$0xff]
    %v5887 = vld [vmem:[#allocation3 + $0x800] sm:$0xff]
    %v5888 = vld [vmem:[#allocation3 + $0x808] sm:$0xff]
    %v5889 = vld [vmem:[#allocation3 + $0x810] sm:$0xff]
    %v5890 = vld [vmem:[#allocation3 + $0x818] sm:$0xff]
    %v5891 = vld [vmem:[#allocation3 + $0x820] sm:$0xff]
    %v5892 = vld [vmem:[#allocation3 + $0x828] sm:$0xff]
    %v5893 = vld [vmem:[#allocation3 + $0x830] sm:$0xff]
    %v5894 = vld [vmem:[#allocation3 + $0x838] sm:$0xff]
    %v5895 = vld [vmem:[#allocation3 + $0x840] sm:$0xff]
    %v5896 = vld [vmem:[#allocation3 + $0x848] sm:$0xff]
    %v5897 = vld [vmem:[#allocation3 + $0x850] sm:$0xff]
    %v5898 = vld [vmem:[#allocation3 + $0x858] sm:$0xff]
    %v5899 = vld [vmem:[#allocation3 + $0x860] sm:$0xff]
    %v5900 = vld [vmem:[#allocation3 + $0x868] sm:$0xff]
    %v5901 = vld [vmem:[#allocation3 + $0x870] sm:$0xff]
    %v5902 = vld [vmem:[#allocation3 + $0x878] sm:$0xff]
    %v5903 = vld [vmem:[#allocation3 + $0x880] sm:$0xff]
    %v5904 = vld [vmem:[#allocation3 + $0x888] sm:$0xff]
    %v5905 = vld [vmem:[#allocation3 + $0x890] sm:$0xff]
    %v5906 = vld [vmem:[#allocation3 + $0x898] sm:$0xff]
    %v5907 = vld [vmem:[#allocation3 + $0x8a0] sm:$0xff]
    %v5908 = vld [vmem:[#allocation3 + $0x8a8] sm:$0xff]
    %v5909 = vld [vmem:[#allocation3 + $0x8b0] sm:$0xff]
    %v5910 = vld [vmem:[#allocation3 + $0x8b8] sm:$0xff]
    %v5911 = vld [vmem:[#allocation3 + $0x8c0] sm:$0xff]
    %v5912 = vld [vmem:[#allocation3 + $0x8c8] sm:$0xff]
    %v5913 = vld [vmem:[#allocation3 + $0x8d0] sm:$0xff]
    %v5914 = vld [vmem:[#allocation3 + $0x8d8] sm:$0xff]
    %v5915 = vld [vmem:[#allocation3 + $0x8e0] sm:$0xff]
    %v5916 = vld [vmem:[#allocation3 + $0x8e8] sm:$0xff]
    %v5917 = vld [vmem:[#allocation3 + $0x8f0] sm:$0xff]
    %v5918 = vld [vmem:[#allocation3 + $0x8f8] sm:$0xff]
    %v5919 = vld [vmem:[#allocation3 + $0x900] sm:$0xff]
    %v5920 = vld [vmem:[#allocation3 + $0x908] sm:$0xff]
    %v5921 = vld [vmem:[#allocation3 + $0x910] sm:$0xff]
    %v5922 = vld [vmem:[#allocation3 + $0x918] sm:$0xff]
    %v5923 = vld [vmem:[#allocation3 + $0x920] sm:$0xff]
    %v5924 = vld [vmem:[#allocation3 + $0x928] sm:$0xff]
    %v5925 = vld [vmem:[#allocation3 + $0x930] sm:$0xff]
    %v5926 = vld [vmem:[#allocation3 + $0x938] sm:$0xff]
    %v5927 = vld [vmem:[#allocation3 + $0x940] sm:$0xff]
    %v5928 = vld [vmem:[#allocation3 + $0x948] sm:$0xff]
    %v5929 = vld [vmem:[#allocation3 + $0x950] sm:$0xff]
    %v5930 = vld [vmem:[#allocation3 + $0x958] sm:$0xff]
    %v5931 = vld [vmem:[#allocation3 + $0x960] sm:$0xff]
    %v5932 = vld [vmem:[#allocation3 + $0x968] sm:$0xff]
    %v5933 = vld [vmem:[#allocation3 + $0x970] sm:$0xff]
    %v5934 = vld [vmem:[#allocation3 + $0x978] sm:$0xff]
    %v5935 = vld [vmem:[#allocation3 + $0x980] sm:$0xff]
    %v5936 = vld [vmem:[#allocation3 + $0x988] sm:$0xff]
    %v5937 = vld [vmem:[#allocation3 + $0x990] sm:$0xff]
    %v5938 = vld [vmem:[#allocation3 + $0x998] sm:$0xff]
    %v5939 = vld [vmem:[#allocation3 + $0x9a0] sm:$0xff]
    %v5940 = vld [vmem:[#allocation3 + $0x9a8] sm:$0xff]
    %v5941 = vld [vmem:[#allocation3 + $0x9b0] sm:$0xff]
    %v5942 = vld [vmem:[#allocation3 + $0x9b8] sm:$0xff]
    %v5943 = vld [vmem:[#allocation3 + $0x9c0] sm:$0xff]
    %v5944 = vld [vmem:[#allocation3 + $0x9c8] sm:$0xff]
    %v5945 = vld [vmem:[#allocation3 + $0x9d0] sm:$0xff]
    %v5946 = vld [vmem:[#allocation3 + $0x9d8] sm:$0xff]
    %v5947 = vld [vmem:[#allocation3 + $0x9e0] sm:$0xff]
    %v5948 = vld [vmem:[#allocation3 + $0x9e8] sm:$0xff]
    %v5949 = vld [vmem:[#allocation3 + $0x9f0] sm:$0xff]
    %v5950 = vld [vmem:[#allocation3 + $0x9f8] sm:$0xff]
    %v5951 = vld [vmem:[#allocation3 + $0xa00] sm:$0xff]
    %v5952 = vld [vmem:[#allocation3 + $0xa08] sm:$0xff]
    %v5953 = vld [vmem:[#allocation3 + $0xa10] sm:$0xff]
    %v5954 = vld [vmem:[#allocation3 + $0xa18] sm:$0xff]
    %v5955 = vld [vmem:[#allocation3 + $0xa20] sm:$0xff]
    %v5956 = vld [vmem:[#allocation3 + $0xa28] sm:$0xff]
    %v5957 = vld [vmem:[#allocation3 + $0xa30] sm:$0xff]
    %v5958 = vld [vmem:[#allocation3 + $0xa38] sm:$0xff]
    %v5959 = vld [vmem:[#allocation3 + $0xa40] sm:$0xff]
    %v5960 = vld [vmem:[#allocation3 + $0xa48] sm:$0xff]
    %v5961 = vld [vmem:[#allocation3 + $0xa50] sm:$0xff]
    %v5962 = vld [vmem:[#allocation3 + $0xa58] sm:$0xff]
    %v5963 = vld [vmem:[#allocation3 + $0xa60] sm:$0xff]
    %v5964 = vld [vmem:[#allocation3 + $0xa68] sm:$0xff]
    %v5965 = vld [vmem:[#allocation3 + $0xa70] sm:$0xff]
    %v5966 = vld [vmem:[#allocation3 + $0xa78] sm:$0xff]
    %v5967 = vld [vmem:[#allocation3 + $0xa80] sm:$0xff]
    %v5968 = vld [vmem:[#allocation3 + $0xa88] sm:$0xff]
    %v5969 = vld [vmem:[#allocation3 + $0xa90] sm:$0xff]
    %v5970 = vld [vmem:[#allocation3 + $0xa98] sm:$0xff]
    %v5971 = vld [vmem:[#allocation3 + $0xaa0] sm:$0xff]
    %v5972 = vld [vmem:[#allocation3 + $0xaa8] sm:$0xff]
    %v5973 = vld [vmem:[#allocation3 + $0xab0] sm:$0xff]
    %v5974 = vld [vmem:[#allocation3 + $0xab8] sm:$0xff]
    %v5975 = vld [vmem:[#allocation3 + $0xac0] sm:$0xff]
    %v5976 = vld [vmem:[#allocation3 + $0xac8] sm:$0xff]
    %v5977 = vld [vmem:[#allocation3 + $0xad0] sm:$0xff]
    %v5978 = vld [vmem:[#allocation3 + $0xad8] sm:$0xff]
    %v5979 = vld [vmem:[#allocation3 + $0xae0] sm:$0xff]
    %v5980 = vld [vmem:[#allocation3 + $0xae8] sm:$0xff]
    %v5981 = vld [vmem:[#allocation3 + $0xaf0] sm:$0xff]
    %v5982 = vld [vmem:[#allocation3 + $0xaf8] sm:$0xff]
    %v5983 = vld [vmem:[#allocation3 + $0xb00] sm:$0xff]
    %v5984 = vld [vmem:[#allocation3 + $0xb08] sm:$0xff]
    %v5985 = vld [vmem:[#allocation3 + $0xb10] sm:$0xff]
    %v5986 = vld [vmem:[#allocation3 + $0xb18] sm:$0xff]
    %v5987 = vld [vmem:[#allocation3 + $0xb20] sm:$0xff]
    %v5988 = vld [vmem:[#allocation3 + $0xb28] sm:$0xff]
    %v5989 = vld [vmem:[#allocation3 + $0xb30] sm:$0xff]
    %v5990 = vld [vmem:[#allocation3 + $0xb38] sm:$0xff]
    %v5991 = vld [vmem:[#allocation3 + $0xb40] sm:$0xff]
    %v5992 = vld [vmem:[#allocation3 + $0xb48] sm:$0xff]
    %v5993 = vld [vmem:[#allocation3 + $0xb50] sm:$0xff]
    %v5994 = vld [vmem:[#allocation3 + $0xb58] sm:$0xff]
    %v5995 = vld [vmem:[#allocation3 + $0xb60] sm:$0xff]
    %v5996 = vld [vmem:[#allocation3 + $0xb68] sm:$0xff]
    %v5997 = vld [vmem:[#allocation3 + $0xb70] sm:$0xff]
    %v5998 = vld [vmem:[#allocation3 + $0xb78] sm:$0xff]
    %v5999 = vld [vmem:[#allocation3 + $0xb80] sm:$0xff]
    %v6000 = vld [vmem:[#allocation3 + $0xb88] sm:$0xff]
    %v6001 = vld [vmem:[#allocation3 + $0xb90] sm:$0xff]
    %v6002 = vld [vmem:[#allocation3 + $0xb98] sm:$0xff]
    %v6003 = vld [vmem:[#allocation3 + $0xba0] sm:$0xff]
    %v6004 = vld [vmem:[#allocation3 + $0xba8] sm:$0xff]
    %v6005 = vld [vmem:[#allocation3 + $0xbb0] sm:$0xff]
    %v6006 = vld [vmem:[#allocation3 + $0xbb8] sm:$0xff]
    %v6007 = vld [vmem:[#allocation3 + $0xbc0] sm:$0xff]
    %v6008 = vld [vmem:[#allocation3 + $0xbc8] sm:$0xff]
    %v6009 = vld [vmem:[#allocation3 + $0xbd0] sm:$0xff]
    %v6010 = vld [vmem:[#allocation3 + $0xbd8] sm:$0xff]
    %v6011 = vld [vmem:[#allocation3 + $0xbe0] sm:$0xff]
    %v6012 = vld [vmem:[#allocation3 + $0xbe8] sm:$0xff]
    %v6013 = vld [vmem:[#allocation3 + $0xbf0] sm:$0xff]
    %v6014 = vld [vmem:[#allocation3 + $0xbf8] sm:$0xff]
    %v6015 = vld [vmem:[#allocation3 + $0xc00] sm:$0xff]
    %v6016 = vld [vmem:[#allocation3 + $0xc08] sm:$0xff]
    %v6017 = vld [vmem:[#allocation3 + $0xc10] sm:$0xff]
    %v6018 = vld [vmem:[#allocation3 + $0xc18] sm:$0xff]
    %v6019 = vld [vmem:[#allocation3 + $0xc20] sm:$0xff]
    %v6020 = vld [vmem:[#allocation3 + $0xc28] sm:$0xff]
    %v6021 = vld [vmem:[#allocation3 + $0xc30] sm:$0xff]
    %v6022 = vld [vmem:[#allocation3 + $0xc38] sm:$0xff]
    %v6023 = vld [vmem:[#allocation3 + $0xc40] sm:$0xff]
    %v6024 = vld [vmem:[#allocation3 + $0xc48] sm:$0xff]
    %v6025 = vld [vmem:[#allocation3 + $0xc50] sm:$0xff]
    %v6026 = vld [vmem:[#allocation3 + $0xc58] sm:$0xff]
    %v6027 = vld [vmem:[#allocation3 + $0xc60] sm:$0xff]
    %v6028 = vld [vmem:[#allocation3 + $0xc68] sm:$0xff]
    %v6029 = vld [vmem:[#allocation3 + $0xc70] sm:$0xff]
    %v6030 = vld [vmem:[#allocation3 + $0xc78] sm:$0xff]
    %v6031 = vld [vmem:[#allocation3 + $0xc80] sm:$0xff]
    %v6032 = vld [vmem:[#allocation3 + $0xc88] sm:$0xff]
    %v6033 = vld [vmem:[#allocation3 + $0xc90] sm:$0xff]
    %v6034 = vld [vmem:[#allocation3 + $0xc98] sm:$0xff]
    %v6035 = vld [vmem:[#allocation3 + $0xca0] sm:$0xff]
    %v6036 = vld [vmem:[#allocation3 + $0xca8] sm:$0xff]
    %v6037 = vld [vmem:[#allocation3 + $0xcb0] sm:$0xff]
    %v6038 = vld [vmem:[#allocation3 + $0xcb8] sm:$0xff]
    %v6039 = vld [vmem:[#allocation3 + $0xcc0] sm:$0xff]
    %v6040 = vld [vmem:[#allocation3 + $0xcc8] sm:$0xff]
    %v6041 = vld [vmem:[#allocation3 + $0xcd0] sm:$0xff]
    %v6042 = vld [vmem:[#allocation3 + $0xcd8] sm:$0xff]
    %v6043 = vld [vmem:[#allocation3 + $0xce0] sm:$0xff]
    %v6044 = vld [vmem:[#allocation3 + $0xce8] sm:$0xff]
    %v6045 = vld [vmem:[#allocation3 + $0xcf0] sm:$0xff]
    %v6046 = vld [vmem:[#allocation3 + $0xcf8] sm:$0xff]
    %v6047 = vld [vmem:[#allocation3 + $0xd00] sm:$0xff]
    %v6048 = vld [vmem:[#allocation3 + $0xd08] sm:$0xff]
    %v6049 = vld [vmem:[#allocation3 + $0xd10] sm:$0xff]
    %v6050 = vld [vmem:[#allocation3 + $0xd18] sm:$0xff]
    %v6051 = vld [vmem:[#allocation3 + $0xd20] sm:$0xff]
    %v6052 = vld [vmem:[#allocation3 + $0xd28] sm:$0xff]
    %v6053 = vld [vmem:[#allocation3 + $0xd30] sm:$0xff]
    %v6054 = vld [vmem:[#allocation3 + $0xd38] sm:$0xff]
    %v6055 = vld [vmem:[#allocation3 + $0xd40] sm:$0xff]
    %v6056 = vld [vmem:[#allocation3 + $0xd48] sm:$0xff]
    %v6057 = vld [vmem:[#allocation3 + $0xd50] sm:$0xff]
    %v6058 = vld [vmem:[#allocation3 + $0xd58] sm:$0xff]
    %v6059 = vld [vmem:[#allocation3 + $0xd60] sm:$0xff]
    %v6060 = vld [vmem:[#allocation3 + $0xd68] sm:$0xff]
    %v6061 = vld [vmem:[#allocation3 + $0xd70] sm:$0xff]
    %v6062 = vld [vmem:[#allocation3 + $0xd78] sm:$0xff]
    %v6069 = vrot.slane %v5618, 1
    %v6070 = vrot.slane %v5621, 1
    %v6071 = vsel %vm2731, %v6069, %v6070
    %v6072 = vrot.slane %v5619, 1
    %v6073 = vrot.slane %v5622, 1
    %v6074 = vsel %vm2731, %v6072, %v6073
    %v6075 = vrot.slane %v5620, 1
    %v6076 = vrot.slane %v5623, 1
    %v6077 = vsel %vm2731, %v6075, %v6076
    %v6084 = vrot.slane %v5618, 2
    %v6085 = vrot.slane %v5621, 2
    %v6086 = vsel %vm2741, %v6084, %v6085
    %v6087 = vrot.slane %v5619, 2
    %v6088 = vrot.slane %v5622, 2
    %v6089 = vsel %vm2741, %v6087, %v6088
    %v6090 = vrot.slane %v5620, 2
    %v6091 = vrot.slane %v5623, 2
    %v6092 = vsel %vm2741, %v6090, %v6091
    %v6102 = vrot.slane %v5624, 1
    %v6103 = vsel %vm2731, %v6070, %v6102
    %v6104 = vrot.slane %v5625, 1
    %v6105 = vsel %vm2731, %v6073, %v6104
    %v6106 = vrot.slane %v5626, 1
    %v6107 = vsel %vm2731, %v6076, %v6106
    %v6108 = vrot.slane %v5624, 2
    %v6109 = vsel %vm2741, %v6085, %v6108
    %v6110 = vrot.slane %v5625, 2
    %v6111 = vsel %vm2741, %v6088, %v6110
    %v6112 = vrot.slane %v5626, 2
    %v6113 = vsel %vm2741, %v6091, %v6112
    %v6114 = vrot.slane %v6103, 2
    %v6115 = vrot.slane %v6102, 2
    %v6116 = vsel %vm2741, %v6114, %v6115
    %v6117 = vrot.slane %v6105, 2
    %v6118 = vrot.slane %v6104, 2
    %v6119 = vsel %vm2741, %v6117, %v6118
    %v6120 = vrot.slane %v6107, 2
    %v6121 = vrot.slane %v6106, 2
    %v6122 = vsel %vm2741, %v6120, %v6121
    %v6123 = vrot.slane %v6109, 2
    %v6124 = vrot.slane %v6108, 2
    %v6125 = vsel %vm2741, %v6123, %v6124
    %v6126 = vrot.slane %v6111, 2
    %v6127 = vrot.slane %v6110, 2
    %v6128 = vsel %vm2741, %v6126, %v6127
    %v6129 = vrot.slane %v6113, 2
    %v6130 = vrot.slane %v6112, 2
    %v6131 = vsel %vm2741, %v6129, %v6130
    %vm6150 = vcmask 1041408
    %v6151 = vsel %vm6150, %v5621, %v6109
    %v6152 = vsel %vm6150, %v5622, %v6111
    %v6153 = vsel %vm6150, %v5623, %v6113
    %v6154 = vsel %vm6150, %v6070, %v6116
    %v6155 = vsel %vm6150, %v6073, %v6119
    %v6156 = vsel %vm6150, %v6076, %v6122
    %v6157 = vsel %vm6150, %v6085, %v6125
    %v6158 = vsel %vm6150, %v6088, %v6128
    %v6159 = vsel %vm6150, %v6091, %v6131
    %6160 = vmatpush.msra.mxu0 %v5676
    %6161 = vmatpush.msra.mxu0 %v5673
    %6162 = vmatpush.msra.mxu0 %v5670
    %6163 = vmatpush.msra.mxu0 %v5667
    %6164 = vmatpush.msra.mxu0 %v5664
    %6165 = vmatpush.msra.mxu0 %v5661
    %6166 = vmatpush.msra.mxu0 %v5658
    %6167 = vmatpush.msra.mxu0 %v5655
    %6168 = vmatpush.msra.mxu0 %v5652
    %6169 = vmatpush.msra.mxu0 %v5649
    %6170 = vmatpush.msra.mxu0 %v5646
    %6171 = vmatpush.msra.mxu0 %v5643
    %6172 = vmatpush.msra.mxu0 %v5640
    %6173 = vmatpush.msra.mxu0 %v5637
    %6174 = vmatpush.msra.mxu0 %v5634
    %6175 = vmatpush.msra.mxu0 %v5631
    %6176 = vmatmul.f32.gmra.mxu0 %v5618
    %v6177 = vpop.f32.mrf.mxu0
    %v6178 = vadd.f32 0.0, %v6177
    %6179 = vmatmul.f32.gmra.mxu0 %v6151
    %v6180 = vpop.f32.mrf.mxu0
    %v6181 = vadd.f32 0.0, %v6180
    %6182 = vmatmul.f32.gmra.mxu0 %v6108
    %v6183 = vpop.f32.mrf.mxu0
    %v6184 = vadd.f32 0.0, %v6183
    %6185 = vdwg.mxu0
    %6186 = vmatpush.msra.mxu0 %v5724
    %6187 = vmatpush.msra.mxu0 %v5721
    %6188 = vmatpush.msra.mxu0 %v5718
    %6189 = vmatpush.msra.mxu0 %v5715
    %6190 = vmatpush.msra.mxu0 %v5712
    %6191 = vmatpush.msra.mxu0 %v5709
    %6192 = vmatpush.msra.mxu0 %v5706
    %6193 = vmatpush.msra.mxu0 %v5703
    %6194 = vmatpush.msra.mxu0 %v5700
    %6195 = vmatpush.msra.mxu0 %v5697
    %6196 = vmatpush.msra.mxu0 %v5694
    %6197 = vmatpush.msra.mxu0 %v5691
    %6198 = vmatpush.msra.mxu0 %v5688
    %6199 = vmatpush.msra.mxu0 %v5685
    %6200 = vmatpush.msra.mxu0 %v5682
    %6201 = vmatpush.msra.mxu0 %v5679
    %6202 = vmatmul.f32.gmra.mxu0 %v5619
    %v6203 = vpop.f32.mrf.mxu0
    %v6204 = vadd.f32 %v6178, %v6203
    %6205 = vmatmul.f32.gmra.mxu0 %v6152
    %v6206 = vpop.f32.mrf.mxu0
    %v6207 = vadd.f32 %v6181, %v6206
    %6208 = vmatmul.f32.gmra.mxu0 %v6110
    %v6209 = vpop.f32.mrf.mxu0
    %v6210 = vadd.f32 %v6184, %v6209
    %6211 = vdwg.mxu0
    %6212 = vmatpush.msra.mxu0 %v5772
    %6213 = vmatpush.msra.mxu0 %v5769
    %6214 = vmatpush.msra.mxu0 %v5766
    %6215 = vmatpush.msra.mxu0 %v5763
    %6216 = vmatpush.msra.mxu0 %v5760
    %6217 = vmatpush.msra.mxu0 %v5757
    %6218 = vmatpush.msra.mxu0 %v5754
    %6219 = vmatpush.msra.mxu0 %v5751
    %6220 = vmatpush.msra.mxu0 %v5748
    %6221 = vmatpush.msra.mxu0 %v5745
    %6222 = vmatpush.msra.mxu0 %v5742
    %6223 = vmatpush.msra.mxu0 %v5739
    %6224 = vmatpush.msra.mxu0 %v5736
    %6225 = vmatpush.msra.mxu0 %v5733
    %6226 = vmatpush.msra.mxu0 %v5730
    %6227 = vmatpush.msra.mxu0 %v5727
    %6228 = vmatmul.f32.gmra.mxu0 %v5620
    %v6229 = vpop.f32.mrf.mxu0
    %v6230 = vadd.f32 %v6204, %v6229
    %6231 = vmatmul.f32.gmra.mxu0 %v6153
    %v6232 = vpop.f32.mrf.mxu0
    %v6233 = vadd.f32 %v6207, %v6232
    %6234 = vmatmul.f32.gmra.mxu0 %v6112
    %v6235 = vpop.f32.mrf.mxu0
    %v6236 = vadd.f32 %v6210, %v6235
    %6237 = vdwg.mxu0
    %6238 = vmatpush.msra.mxu0 %v5820
    %6239 = vmatpush.msra.mxu0 %v5817
    %6240 = vmatpush.msra.mxu0 %v5814
    %6241 = vmatpush.msra.mxu0 %v5811
    %6242 = vmatpush.msra.mxu0 %v5808
    %6243 = vmatpush.msra.mxu0 %v5805
    %6244 = vmatpush.msra.mxu0 %v5802
    %6245 = vmatpush.msra.mxu0 %v5799
    %6246 = vmatpush.msra.mxu0 %v5796
    %6247 = vmatpush.msra.mxu0 %v5793
    %6248 = vmatpush.msra.mxu0 %v5790
    %6249 = vmatpush.msra.mxu0 %v5787
    %6250 = vmatpush.msra.mxu0 %v5784
    %6251 = vmatpush.msra.mxu0 %v5781
    %6252 = vmatpush.msra.mxu0 %v5778
    %6253 = vmatpush.msra.mxu0 %v5775
    %6254 = vmatmul.f32.gmra.mxu0 %v6071
    %v6255 = vpop.f32.mrf.mxu0
    %v6256 = vadd.f32 %v6230, %v6255
    %6257 = vmatmul.f32.gmra.mxu0 %v6154
    %v6258 = vpop.f32.mrf.mxu0
    %v6259 = vadd.f32 %v6233, %v6258
    %6260 = vmatmul.f32.gmra.mxu0 %v6115
    %v6261 = vpop.f32.mrf.mxu0
    %v6262 = vadd.f32 %v6236, %v6261
    %6263 = vdwg.mxu0
    %6264 = vmatpush.msra.mxu0 %v5868
    %6265 = vmatpush.msra.mxu0 %v5865
    %6266 = vmatpush.msra.mxu0 %v5862
    %6267 = vmatpush.msra.mxu0 %v5859
    %6268 = vmatpush.msra.mxu0 %v5856
    %6269 = vmatpush.msra.mxu0 %v5853
    %6270 = vmatpush.msra.mxu0 %v5850
    %6271 = vmatpush.msra.mxu0 %v5847
    %6272 = vmatpush.msra.mxu0 %v5844
    %6273 = vmatpush.msra.mxu0 %v5841
    %6274 = vmatpush.msra.mxu0 %v5838
    %6275 = vmatpush.msra.mxu0 %v5835
    %6276 = vmatpush.msra.mxu0 %v5832
    %6277 = vmatpush.msra.mxu0 %v5829
    %6278 = vmatpush.msra.mxu0 %v5826
    %6279 = vmatpush.msra.mxu0 %v5823
    %6280 = vmatmul.f32.gmra.mxu0 %v6074
    %v6281 = vpop.f32.mrf.mxu0
    %v6282 = vadd.f32 %v6256, %v6281
    %6283 = vmatmul.f32.gmra.mxu0 %v6155
    %v6284 = vpop.f32.mrf.mxu0
    %v6285 = vadd.f32 %v6259, %v6284
    %6286 = vmatmul.f32.gmra.mxu0 %v6118
    %v6287 = vpop.f32.mrf.mxu0
    %v6288 = vadd.f32 %v6262, %v6287
    %6289 = vdwg.mxu0
    %6290 = vmatpush.msra.mxu0 %v5916
    %6291 = vmatpush.msra.mxu0 %v5913
    %6292 = vmatpush.msra.mxu0 %v5910
    %6293 = vmatpush.msra.mxu0 %v5907
    %6294 = vmatpush.msra.mxu0 %v5904
    %6295 = vmatpush.msra.mxu0 %v5901
    %6296 = vmatpush.msra.mxu0 %v5898
    %6297 = vmatpush.msra.mxu0 %v5895
    %6298 = vmatpush.msra.mxu0 %v5892
    %6299 = vmatpush.msra.mxu0 %v5889
    %6300 = vmatpush.msra.mxu0 %v5886
    %6301 = vmatpush.msra.mxu0 %v5883
    %6302 = vmatpush.msra.mxu0 %v5880
    %6303 = vmatpush.msra.mxu0 %v5877
    %6304 = vmatpush.msra.mxu0 %v5874
    %6305 = vmatpush.msra.mxu0 %v5871
    %6306 = vmatmul.f32.gmra.mxu0 %v6077
    %v6307 = vpop.f32.mrf.mxu0
    %v6308 = vadd.f32 %v6282, %v6307
    %6309 = vmatmul.f32.gmra.mxu0 %v6156
    %v6310 = vpop.f32.mrf.mxu0
    %v6311 = vadd.f32 %v6285, %v6310
    %6312 = vmatmul.f32.gmra.mxu0 %v6121
    %v6313 = vpop.f32.mrf.mxu0
    %v6314 = vadd.f32 %v6288, %v6313
    %6315 = vdwg.mxu0
    %6316 = vmatpush.msra.mxu0 %v5964
    %6317 = vmatpush.msra.mxu0 %v5961
    %6318 = vmatpush.msra.mxu0 %v5958
    %6319 = vmatpush.msra.mxu0 %v5955
    %6320 = vmatpush.msra.mxu0 %v5952
    %6321 = vmatpush.msra.mxu0 %v5949
    %6322 = vmatpush.msra.mxu0 %v5946
    %6323 = vmatpush.msra.mxu0 %v5943
    %6324 = vmatpush.msra.mxu0 %v5940
    %6325 = vmatpush.msra.mxu0 %v5937
    %6326 = vmatpush.msra.mxu0 %v5934
    %6327 = vmatpush.msra.mxu0 %v5931
    %6328 = vmatpush.msra.mxu0 %v5928
    %6329 = vmatpush.msra.mxu0 %v5925
    %6330 = vmatpush.msra.mxu0 %v5922
    %6331 = vmatpush.msra.mxu0 %v5919
    %6332 = vmatmul.f32.gmra.mxu0 %v6086
    %v6333 = vpop.f32.mrf.mxu0
    %v6334 = vadd.f32 %v6308, %v6333
    %6335 = vmatmul.f32.gmra.mxu0 %v6157
    %v6336 = vpop.f32.mrf.mxu0
    %v6337 = vadd.f32 %v6311, %v6336
    %6338 = vmatmul.f32.gmra.mxu0 %v6124
    %v6339 = vpop.f32.mrf.mxu0
    %v6340 = vadd.f32 %v6314, %v6339
    %6341 = vdwg.mxu0
    %6342 = vmatpush.msra.mxu0 %v6012
    %6343 = vmatpush.msra.mxu0 %v6009
    %6344 = vmatpush.msra.mxu0 %v6006
    %6345 = vmatpush.msra.mxu0 %v6003
    %6346 = vmatpush.msra.mxu0 %v6000
    %6347 = vmatpush.msra.mxu0 %v5997
    %6348 = vmatpush.msra.mxu0 %v5994
    %6349 = vmatpush.msra.mxu0 %v5991
    %6350 = vmatpush.msra.mxu0 %v5988
    %6351 = vmatpush.msra.mxu0 %v5985
    %6352 = vmatpush.msra.mxu0 %v5982
    %6353 = vmatpush.msra.mxu0 %v5979
    %6354 = vmatpush.msra.mxu0 %v5976
    %6355 = vmatpush.msra.mxu0 %v5973
    %6356 = vmatpush.msra.mxu0 %v5970
    %6357 = vmatpush.msra.mxu0 %v5967
    %6358 = vmatmul.f32.gmra.mxu0 %v6089
    %v6359 = vpop.f32.mrf.mxu0
    %v6360 = vadd.f32 %v6334, %v6359
    %6361 = vmatmul.f32.gmra.mxu0 %v6158
    %v6362 = vpop.f32.mrf.mxu0
    %v6363 = vadd.f32 %v6337, %v6362
    %6364 = vmatmul.f32.gmra.mxu0 %v6127
    %v6365 = vpop.f32.mrf.mxu0
    %v6366 = vadd.f32 %v6340, %v6365
    %6367 = vdwg.mxu0
    %6368 = vmatpush.msra.mxu0 %v6060
    %6369 = vmatpush.msra.mxu0 %v6057
    %6370 = vmatpush.msra.mxu0 %v6054
    %6371 = vmatpush.msra.mxu0 %v6051
    %6372 = vmatpush.msra.mxu0 %v6048
    %6373 = vmatpush.msra.mxu0 %v6045
    %6374 = vmatpush.msra.mxu0 %v6042
    %6375 = vmatpush.msra.mxu0 %v6039
    %6376 = vmatpush.msra.mxu0 %v6036
    %6377 = vmatpush.msra.mxu0 %v6033
    %6378 = vmatpush.msra.mxu0 %v6030
    %6379 = vmatpush.msra.mxu0 %v6027
    %6380 = vmatpush.msra.mxu0 %v6024
    %6381 = vmatpush.msra.mxu0 %v6021
    %6382 = vmatpush.msra.mxu0 %v6018
    %6383 = vmatpush.msra.mxu0 %v6015
    %6384 = vmatmul.f32.gmra.mxu0 %v6092
    %v6385 = vpop.f32.mrf.mxu0
    %v6386 = vadd.f32 %v6360, %v6385
    %6387 = vmatmul.f32.gmra.mxu0 %v6159
    %v6388 = vpop.f32.mrf.mxu0
    %v6389 = vadd.f32 %v6363, %v6388
    %6390 = vmatmul.f32.gmra.mxu0 %v6130
    %v6391 = vpop.f32.mrf.mxu0
    %v6392 = vadd.f32 %v6366, %v6391
    %6393 = vdwg.mxu0
    %6394 = vmatpush.msra.mxu0 %v5677
    %6395 = vmatpush.msra.mxu0 %v5674
    %6396 = vmatpush.msra.mxu0 %v5671
    %6397 = vmatpush.msra.mxu0 %v5668
    %6398 = vmatpush.msra.mxu0 %v5665
    %6399 = vmatpush.msra.mxu0 %v5662
    %6400 = vmatpush.msra.mxu0 %v5659
    %6401 = vmatpush.msra.mxu0 %v5656
    %6402 = vmatpush.msra.mxu0 %v5653
    %6403 = vmatpush.msra.mxu0 %v5650
    %6404 = vmatpush.msra.mxu0 %v5647
    %6405 = vmatpush.msra.mxu0 %v5644
    %6406 = vmatpush.msra.mxu0 %v5641
    %6407 = vmatpush.msra.mxu0 %v5638
    %6408 = vmatpush.msra.mxu0 %v5635
    %6409 = vmatpush.msra.mxu0 %v5632
    %6410 = vmatmul.f32.gmra.mxu0 %v5618
    %v6411 = vpop.f32.mrf.mxu0
    %v6412 = vadd.f32 0.0, %v6411
    %6413 = vmatmul.f32.gmra.mxu0 %v6151
    %v6414 = vpop.f32.mrf.mxu0
    %v6415 = vadd.f32 0.0, %v6414
    %6416 = vmatmul.f32.gmra.mxu0 %v6108
    %v6417 = vpop.f32.mrf.mxu0
    %v6418 = vadd.f32 0.0, %v6417
    %6419 = vdwg.mxu0
    %6420 = vmatpush.msra.mxu0 %v5725
    %6421 = vmatpush.msra.mxu0 %v5722
    %6422 = vmatpush.msra.mxu0 %v5719
    %6423 = vmatpush.msra.mxu0 %v5716
    %6424 = vmatpush.msra.mxu0 %v5713
    %6425 = vmatpush.msra.mxu0 %v5710
    %6426 = vmatpush.msra.mxu0 %v5707
    %6427 = vmatpush.msra.mxu0 %v5704
    %6428 = vmatpush.msra.mxu0 %v5701
    %6429 = vmatpush.msra.mxu0 %v5698
    %6430 = vmatpush.msra.mxu0 %v5695
    %6431 = vmatpush.msra.mxu0 %v5692
    %6432 = vmatpush.msra.mxu0 %v5689
    %6433 = vmatpush.msra.mxu0 %v5686
    %6434 = vmatpush.msra.mxu0 %v5683
    %6435 = vmatpush.msra.mxu0 %v5680
    %6436 = vmatmul.f32.gmra.mxu0 %v5619
    %v6437 = vpop.f32.mrf.mxu0
    %v6438 = vadd.f32 %v6412, %v6437
    %6439 = vmatmul.f32.gmra.mxu0 %v6152
    %v6440 = vpop.f32.mrf.mxu0
    %v6441 = vadd.f32 %v6415, %v6440
    %6442 = vmatmul.f32.gmra.mxu0 %v6110
    %v6443 = vpop.f32.mrf.mxu0
    %v6444 = vadd.f32 %v6418, %v6443
    %6445 = vdwg.mxu0
    %6446 = vmatpush.msra.mxu0 %v5773
    %6447 = vmatpush.msra.mxu0 %v5770
    %6448 = vmatpush.msra.mxu0 %v5767
    %6449 = vmatpush.msra.mxu0 %v5764
    %6450 = vmatpush.msra.mxu0 %v5761
    %6451 = vmatpush.msra.mxu0 %v5758
    %6452 = vmatpush.msra.mxu0 %v5755
    %6453 = vmatpush.msra.mxu0 %v5752
    %6454 = vmatpush.msra.mxu0 %v5749
    %6455 = vmatpush.msra.mxu0 %v5746
    %6456 = vmatpush.msra.mxu0 %v5743
    %6457 = vmatpush.msra.mxu0 %v5740
    %6458 = vmatpush.msra.mxu0 %v5737
    %6459 = vmatpush.msra.mxu0 %v5734
    %6460 = vmatpush.msra.mxu0 %v5731
    %6461 = vmatpush.msra.mxu0 %v5728
    %6462 = vmatmul.f32.gmra.mxu0 %v5620
    %v6463 = vpop.f32.mrf.mxu0
    %v6464 = vadd.f32 %v6438, %v6463
    %6465 = vmatmul.f32.gmra.mxu0 %v6153
    %v6466 = vpop.f32.mrf.mxu0
    %v6467 = vadd.f32 %v6441, %v6466
    %6468 = vmatmul.f32.gmra.mxu0 %v6112
    %v6469 = vpop.f32.mrf.mxu0
    %v6470 = vadd.f32 %v6444, %v6469
    %6471 = vdwg.mxu0
    %6472 = vmatpush.msra.mxu0 %v5821
    %6473 = vmatpush.msra.mxu0 %v5818
    %6474 = vmatpush.msra.mxu0 %v5815
    %6475 = vmatpush.msra.mxu0 %v5812
    %6476 = vmatpush.msra.mxu0 %v5809
    %6477 = vmatpush.msra.mxu0 %v5806
    %6478 = vmatpush.msra.mxu0 %v5803
    %6479 = vmatpush.msra.mxu0 %v5800
    %6480 = vmatpush.msra.mxu0 %v5797
    %6481 = vmatpush.msra.mxu0 %v5794
    %6482 = vmatpush.msra.mxu0 %v5791
    %6483 = vmatpush.msra.mxu0 %v5788
    %6484 = vmatpush.msra.mxu0 %v5785
    %6485 = vmatpush.msra.mxu0 %v5782
    %6486 = vmatpush.msra.mxu0 %v5779
    %6487 = vmatpush.msra.mxu0 %v5776
    %6488 = vmatmul.f32.gmra.mxu0 %v6071
    %v6489 = vpop.f32.mrf.mxu0
    %v6490 = vadd.f32 %v6464, %v6489
    %6491 = vmatmul.f32.gmra.mxu0 %v6154
    %v6492 = vpop.f32.mrf.mxu0
    %v6493 = vadd.f32 %v6467, %v6492
    %6494 = vmatmul.f32.gmra.mxu0 %v6115
    %v6495 = vpop.f32.mrf.mxu0
    %v6496 = vadd.f32 %v6470, %v6495
    %6497 = vdwg.mxu0
    %6498 = vmatpush.msra.mxu0 %v5869
    %6499 = vmatpush.msra.mxu0 %v5866
    %6500 = vmatpush.msra.mxu0 %v5863
    %6501 = vmatpush.msra.mxu0 %v5860
    %6502 = vmatpush.msra.mxu0 %v5857
    %6503 = vmatpush.msra.mxu0 %v5854
    %6504 = vmatpush.msra.mxu0 %v5851
    %6505 = vmatpush.msra.mxu0 %v5848
    %6506 = vmatpush.msra.mxu0 %v5845
    %6507 = vmatpush.msra.mxu0 %v5842
    %6508 = vmatpush.msra.mxu0 %v5839
    %6509 = vmatpush.msra.mxu0 %v5836
    %6510 = vmatpush.msra.mxu0 %v5833
    %6511 = vmatpush.msra.mxu0 %v5830
    %6512 = vmatpush.msra.mxu0 %v5827
    %6513 = vmatpush.msra.mxu0 %v5824
    %6514 = vmatmul.f32.gmra.mxu0 %v6074
    %v6515 = vpop.f32.mrf.mxu0
    %v6516 = vadd.f32 %v6490, %v6515
    %6517 = vmatmul.f32.gmra.mxu0 %v6155
    %v6518 = vpop.f32.mrf.mxu0
    %v6519 = vadd.f32 %v6493, %v6518
    %6520 = vmatmul.f32.gmra.mxu0 %v6118
    %v6521 = vpop.f32.mrf.mxu0
    %v6522 = vadd.f32 %v6496, %v6521
    %6523 = vdwg.mxu0
    %6524 = vmatpush.msra.mxu0 %v5917
    %6525 = vmatpush.msra.mxu0 %v5914
    %6526 = vmatpush.msra.mxu0 %v5911
    %6527 = vmatpush.msra.mxu0 %v5908
    %6528 = vmatpush.msra.mxu0 %v5905
    %6529 = vmatpush.msra.mxu0 %v5902
    %6530 = vmatpush.msra.mxu0 %v5899
    %6531 = vmatpush.msra.mxu0 %v5896
    %6532 = vmatpush.msra.mxu0 %v5893
    %6533 = vmatpush.msra.mxu0 %v5890
    %6534 = vmatpush.msra.mxu0 %v5887
    %6535 = vmatpush.msra.mxu0 %v5884
    %6536 = vmatpush.msra.mxu0 %v5881
    %6537 = vmatpush.msra.mxu0 %v5878
    %6538 = vmatpush.msra.mxu0 %v5875
    %6539 = vmatpush.msra.mxu0 %v5872
    %6540 = vmatmul.f32.gmra.mxu0 %v6077
    %v6541 = vpop.f32.mrf.mxu0
    %v6542 = vadd.f32 %v6516, %v6541
    %6543 = vmatmul.f32.gmra.mxu0 %v6156
    %v6544 = vpop.f32.mrf.mxu0
    %v6545 = vadd.f32 %v6519, %v6544
    %6546 = vmatmul.f32.gmra.mxu0 %v6121
    %v6547 = vpop.f32.mrf.mxu0
    %v6548 = vadd.f32 %v6522, %v6547
    %6549 = vdwg.mxu0
    %6550 = vmatpush.msra.mxu0 %v5965
    %6551 = vmatpush.msra.mxu0 %v5962
    %6552 = vmatpush.msra.mxu0 %v5959
    %6553 = vmatpush.msra.mxu0 %v5956
    %6554 = vmatpush.msra.mxu0 %v5953
    %6555 = vmatpush.msra.mxu0 %v5950
    %6556 = vmatpush.msra.mxu0 %v5947
    %6557 = vmatpush.msra.mxu0 %v5944
    %6558 = vmatpush.msra.mxu0 %v5941
    %6559 = vmatpush.msra.mxu0 %v5938
    %6560 = vmatpush.msra.mxu0 %v5935
    %6561 = vmatpush.msra.mxu0 %v5932
    %6562 = vmatpush.msra.mxu0 %v5929
    %6563 = vmatpush.msra.mxu0 %v5926
    %6564 = vmatpush.msra.mxu0 %v5923
    %6565 = vmatpush.msra.mxu0 %v5920
    %6566 = vmatmul.f32.gmra.mxu0 %v6086
    %v6567 = vpop.f32.mrf.mxu0
    %v6568 = vadd.f32 %v6542, %v6567
    %6569 = vmatmul.f32.gmra.mxu0 %v6157
    %v6570 = vpop.f32.mrf.mxu0
    %v6571 = vadd.f32 %v6545, %v6570
    %6572 = vmatmul.f32.gmra.mxu0 %v6124
    %v6573 = vpop.f32.mrf.mxu0
    %v6574 = vadd.f32 %v6548, %v6573
    %6575 = vdwg.mxu0
    %6576 = vmatpush.msra.mxu0 %v6013
    %6577 = vmatpush.msra.mxu0 %v6010
    %6578 = vmatpush.msra.mxu0 %v6007
    %6579 = vmatpush.msra.mxu0 %v6004
    %6580 = vmatpush.msra.mxu0 %v6001
    %6581 = vmatpush.msra.mxu0 %v5998
    %6582 = vmatpush.msra.mxu0 %v5995
    %6583 = vmatpush.msra.mxu0 %v5992
    %6584 = vmatpush.msra.mxu0 %v5989
    %6585 = vmatpush.msra.mxu0 %v5986
    %6586 = vmatpush.msra.mxu0 %v5983
    %6587 = vmatpush.msra.mxu0 %v5980
    %6588 = vmatpush.msra.mxu0 %v5977
    %6589 = vmatpush.msra.mxu0 %v5974
    %6590 = vmatpush.msra.mxu0 %v5971
    %6591 = vmatpush.msra.mxu0 %v5968
    %6592 = vmatmul.f32.gmra.mxu0 %v6089
    %v6593 = vpop.f32.mrf.mxu0
    %v6594 = vadd.f32 %v6568, %v6593
    %6595 = vmatmul.f32.gmra.mxu0 %v6158
    %v6596 = vpop.f32.mrf.mxu0
    %v6597 = vadd.f32 %v6571, %v6596
    %6598 = vmatmul.f32.gmra.mxu0 %v6127
    %v6599 = vpop.f32.mrf.mxu0
    %v6600 = vadd.f32 %v6574, %v6599
    %6601 = vdwg.mxu0
    %6602 = vmatpush.msra.mxu0 %v6061
    %6603 = vmatpush.msra.mxu0 %v6058
    %6604 = vmatpush.msra.mxu0 %v6055
    %6605 = vmatpush.msra.mxu0 %v6052
    %6606 = vmatpush.msra.mxu0 %v6049
    %6607 = vmatpush.msra.mxu0 %v6046
    %6608 = vmatpush.msra.mxu0 %v6043
    %6609 = vmatpush.msra.mxu0 %v6040
    %6610 = vmatpush.msra.mxu0 %v6037
    %6611 = vmatpush.msra.mxu0 %v6034
    %6612 = vmatpush.msra.mxu0 %v6031
    %6613 = vmatpush.msra.mxu0 %v6028
    %6614 = vmatpush.msra.mxu0 %v6025
    %6615 = vmatpush.msra.mxu0 %v6022
    %6616 = vmatpush.msra.mxu0 %v6019
    %6617 = vmatpush.msra.mxu0 %v6016
    %6618 = vmatmul.f32.gmra.mxu0 %v6092
    %v6619 = vpop.f32.mrf.mxu0
    %v6620 = vadd.f32 %v6594, %v6619
    %6621 = vmatmul.f32.gmra.mxu0 %v6159
    %v6622 = vpop.f32.mrf.mxu0
    %v6623 = vadd.f32 %v6597, %v6622
    %6624 = vmatmul.f32.gmra.mxu0 %v6130
    %v6625 = vpop.f32.mrf.mxu0
    %v6626 = vadd.f32 %v6600, %v6625
    %6627 = vdwg.mxu0
    %6628 = vmatpush.msra.mxu0 %v5678
    %6629 = vmatpush.msra.mxu0 %v5675
    %6630 = vmatpush.msra.mxu0 %v5672
    %6631 = vmatpush.msra.mxu0 %v5669
    %6632 = vmatpush.msra.mxu0 %v5666
    %6633 = vmatpush.msra.mxu0 %v5663
    %6634 = vmatpush.msra.mxu0 %v5660
    %6635 = vmatpush.msra.mxu0 %v5657
    %6636 = vmatpush.msra.mxu0 %v5654
    %6637 = vmatpush.msra.mxu0 %v5651
    %6638 = vmatpush.msra.mxu0 %v5648
    %6639 = vmatpush.msra.mxu0 %v5645
    %6640 = vmatpush.msra.mxu0 %v5642
    %6641 = vmatpush.msra.mxu0 %v5639
    %6642 = vmatpush.msra.mxu0 %v5636
    %6643 = vmatpush.msra.mxu0 %v5633
    %6644 = vmatmul.f32.gmra.mxu0 %v5618
    %v6645 = vpop.f32.mrf.mxu0
    %v6646 = vadd.f32 0.0, %v6645
    %6647 = vmatmul.f32.gmra.mxu0 %v6151
    %v6648 = vpop.f32.mrf.mxu0
    %v6649 = vadd.f32 0.0, %v6648
    %6650 = vmatmul.f32.gmra.mxu0 %v6108
    %v6651 = vpop.f32.mrf.mxu0
    %v6652 = vadd.f32 0.0, %v6651
    %6653 = vdwg.mxu0
    %6654 = vmatpush.msra.mxu0 %v5726
    %6655 = vmatpush.msra.mxu0 %v5723
    %6656 = vmatpush.msra.mxu0 %v5720
    %6657 = vmatpush.msra.mxu0 %v5717
    %6658 = vmatpush.msra.mxu0 %v5714
    %6659 = vmatpush.msra.mxu0 %v5711
    %6660 = vmatpush.msra.mxu0 %v5708
    %6661 = vmatpush.msra.mxu0 %v5705
    %6662 = vmatpush.msra.mxu0 %v5702
    %6663 = vmatpush.msra.mxu0 %v5699
    %6664 = vmatpush.msra.mxu0 %v5696
    %6665 = vmatpush.msra.mxu0 %v5693
    %6666 = vmatpush.msra.mxu0 %v5690
    %6667 = vmatpush.msra.mxu0 %v5687
    %6668 = vmatpush.msra.mxu0 %v5684
    %6669 = vmatpush.msra.mxu0 %v5681
    %6670 = vmatmul.f32.gmra.mxu0 %v5619
    %v6671 = vpop.f32.mrf.mxu0
    %v6672 = vadd.f32 %v6646, %v6671
    %6673 = vmatmul.f32.gmra.mxu0 %v6152
    %v6674 = vpop.f32.mrf.mxu0
    %v6675 = vadd.f32 %v6649, %v6674
    %6676 = vmatmul.f32.gmra.mxu0 %v6110
    %v6677 = vpop.f32.mrf.mxu0
    %v6678 = vadd.f32 %v6652, %v6677
    %6679 = vdwg.mxu0
    %6680 = vmatpush.msra.mxu0 %v5774
    %6681 = vmatpush.msra.mxu0 %v5771
    %6682 = vmatpush.msra.mxu0 %v5768
    %6683 = vmatpush.msra.mxu0 %v5765
    %6684 = vmatpush.msra.mxu0 %v5762
    %6685 = vmatpush.msra.mxu0 %v5759
    %6686 = vmatpush.msra.mxu0 %v5756
    %6687 = vmatpush.msra.mxu0 %v5753
    %6688 = vmatpush.msra.mxu0 %v5750
    %6689 = vmatpush.msra.mxu0 %v5747
    %6690 = vmatpush.msra.mxu0 %v5744
    %6691 = vmatpush.msra.mxu0 %v5741
    %6692 = vmatpush.msra.mxu0 %v5738
    %6693 = vmatpush.msra.mxu0 %v5735
    %6694 = vmatpush.msra.mxu0 %v5732
    %6695 = vmatpush.msra.mxu0 %v5729
    %6696 = vmatmul.f32.gmra.mxu0 %v5620
    %v6697 = vpop.f32.mrf.mxu0
    %v6698 = vadd.f32 %v6672, %v6697
    %6699 = vmatmul.f32.gmra.mxu0 %v6153
    %v6700 = vpop.f32.mrf.mxu0
    %v6701 = vadd.f32 %v6675, %v6700
    %6702 = vmatmul.f32.gmra.mxu0 %v6112
    %v6703 = vpop.f32.mrf.mxu0
    %v6704 = vadd.f32 %v6678, %v6703
    %6705 = vdwg.mxu0
    %6706 = vmatpush.msra.mxu0 %v5822
    %6707 = vmatpush.msra.mxu0 %v5819
    %6708 = vmatpush.msra.mxu0 %v5816
    %6709 = vmatpush.msra.mxu0 %v5813
    %6710 = vmatpush.msra.mxu0 %v5810
    %6711 = vmatpush.msra.mxu0 %v5807
    %6712 = vmatpush.msra.mxu0 %v5804
    %6713 = vmatpush.msra.mxu0 %v5801
    %6714 = vmatpush.msra.mxu0 %v5798
    %6715 = vmatpush.msra.mxu0 %v5795
    %6716 = vmatpush.msra.mxu0 %v5792
    %6717 = vmatpush.msra.mxu0 %v5789
    %6718 = vmatpush.msra.mxu0 %v5786
    %6719 = vmatpush.msra.mxu0 %v5783
    %6720 = vmatpush.msra.mxu0 %v5780
    %6721 = vmatpush.msra.mxu0 %v5777
    %6722 = vmatmul.f32.gmra.mxu0 %v6071
    %v6723 = vpop.f32.mrf.mxu0
    %v6724 = vadd.f32 %v6698, %v6723
    %6725 = vmatmul.f32.gmra.mxu0 %v6154
    %v6726 = vpop.f32.mrf.mxu0
    %v6727 = vadd.f32 %v6701, %v6726
    %6728 = vmatmul.f32.gmra.mxu0 %v6115
    %v6729 = vpop.f32.mrf.mxu0
    %v6730 = vadd.f32 %v6704, %v6729
    %6731 = vdwg.mxu0
    %6732 = vmatpush.msra.mxu0 %v5870
    %6733 = vmatpush.msra.mxu0 %v5867
    %6734 = vmatpush.msra.mxu0 %v5864
    %6735 = vmatpush.msra.mxu0 %v5861
    %6736 = vmatpush.msra.mxu0 %v5858
    %6737 = vmatpush.msra.mxu0 %v5855
    %6738 = vmatpush.msra.mxu0 %v5852
    %6739 = vmatpush.msra.mxu0 %v5849
    %6740 = vmatpush.msra.mxu0 %v5846
    %6741 = vmatpush.msra.mxu0 %v5843
    %6742 = vmatpush.msra.mxu0 %v5840
    %6743 = vmatpush.msra.mxu0 %v5837
    %6744 = vmatpush.msra.mxu0 %v5834
    %6745 = vmatpush.msra.mxu0 %v5831
    %6746 = vmatpush.msra.mxu0 %v5828
    %6747 = vmatpush.msra.mxu0 %v5825
    %6748 = vmatmul.f32.gmra.mxu0 %v6074
    %v6749 = vpop.f32.mrf.mxu0
    %v6750 = vadd.f32 %v6724, %v6749
    %6751 = vmatmul.f32.gmra.mxu0 %v6155
    %v6752 = vpop.f32.mrf.mxu0
    %v6753 = vadd.f32 %v6727, %v6752
    %6754 = vmatmul.f32.gmra.mxu0 %v6118
    %v6755 = vpop.f32.mrf.mxu0
    %v6756 = vadd.f32 %v6730, %v6755
    %6757 = vdwg.mxu0
    %6758 = vmatpush.msra.mxu0 %v5918
    %6759 = vmatpush.msra.mxu0 %v5915
    %6760 = vmatpush.msra.mxu0 %v5912
    %6761 = vmatpush.msra.mxu0 %v5909
    %6762 = vmatpush.msra.mxu0 %v5906
    %6763 = vmatpush.msra.mxu0 %v5903
    %6764 = vmatpush.msra.mxu0 %v5900
    %6765 = vmatpush.msra.mxu0 %v5897
    %6766 = vmatpush.msra.mxu0 %v5894
    %6767 = vmatpush.msra.mxu0 %v5891
    %6768 = vmatpush.msra.mxu0 %v5888
    %6769 = vmatpush.msra.mxu0 %v5885
    %6770 = vmatpush.msra.mxu0 %v5882
    %6771 = vmatpush.msra.mxu0 %v5879
    %6772 = vmatpush.msra.mxu0 %v5876
    %6773 = vmatpush.msra.mxu0 %v5873
    %6774 = vmatmul.f32.gmra.mxu0 %v6077
    %v6775 = vpop.f32.mrf.mxu0
    %v6776 = vadd.f32 %v6750, %v6775
    %6777 = vmatmul.f32.gmra.mxu0 %v6156
    %v6778 = vpop.f32.mrf.mxu0
    %v6779 = vadd.f32 %v6753, %v6778
    %6780 = vmatmul.f32.gmra.mxu0 %v6121
    %v6781 = vpop.f32.mrf.mxu0
    %v6782 = vadd.f32 %v6756, %v6781
    %6783 = vdwg.mxu0
    %6784 = vmatpush.msra.mxu0 %v5966
    %6785 = vmatpush.msra.mxu0 %v5963
    %6786 = vmatpush.msra.mxu0 %v5960
    %6787 = vmatpush.msra.mxu0 %v5957
    %6788 = vmatpush.msra.mxu0 %v5954
    %6789 = vmatpush.msra.mxu0 %v5951
    %6790 = vmatpush.msra.mxu0 %v5948
    %6791 = vmatpush.msra.mxu0 %v5945
    %6792 = vmatpush.msra.mxu0 %v5942
    %6793 = vmatpush.msra.mxu0 %v5939
    %6794 = vmatpush.msra.mxu0 %v5936
    %6795 = vmatpush.msra.mxu0 %v5933
    %6796 = vmatpush.msra.mxu0 %v5930
    %6797 = vmatpush.msra.mxu0 %v5927
    %6798 = vmatpush.msra.mxu0 %v5924
    %6799 = vmatpush.msra.mxu0 %v5921
    %6800 = vmatmul.f32.gmra.mxu0 %v6086
    %v6801 = vpop.f32.mrf.mxu0
    %v6802 = vadd.f32 %v6776, %v6801
    %6803 = vmatmul.f32.gmra.mxu0 %v6157
    %v6804 = vpop.f32.mrf.mxu0
    %v6805 = vadd.f32 %v6779, %v6804
    %6806 = vmatmul.f32.gmra.mxu0 %v6124
    %v6807 = vpop.f32.mrf.mxu0
    %v6808 = vadd.f32 %v6782, %v6807
    %6809 = vdwg.mxu0
    %6810 = vmatpush.msra.mxu0 %v6014
    %6811 = vmatpush.msra.mxu0 %v6011
    %6812 = vmatpush.msra.mxu0 %v6008
    %6813 = vmatpush.msra.mxu0 %v6005
    %6814 = vmatpush.msra.mxu0 %v6002
    %6815 = vmatpush.msra.mxu0 %v5999
    %6816 = vmatpush.msra.mxu0 %v5996
    %6817 = vmatpush.msra.mxu0 %v5993
    %6818 = vmatpush.msra.mxu0 %v5990
    %6819 = vmatpush.msra.mxu0 %v5987
    %6820 = vmatpush.msra.mxu0 %v5984
    %6821 = vmatpush.msra.mxu0 %v5981
    %6822 = vmatpush.msra.mxu0 %v5978
    %6823 = vmatpush.msra.mxu0 %v5975
    %6824 = vmatpush.msra.mxu0 %v5972
    %6825 = vmatpush.msra.mxu0 %v5969
    %6826 = vmatmul.f32.gmra.mxu0 %v6089
    %v6827 = vpop.f32.mrf.mxu0
    %v6828 = vadd.f32 %v6802, %v6827
    %6829 = vmatmul.f32.gmra.mxu0 %v6158
    %v6830 = vpop.f32.mrf.mxu0
    %v6831 = vadd.f32 %v6805, %v6830
    %6832 = vmatmul.f32.gmra.mxu0 %v6127
    %v6833 = vpop.f32.mrf.mxu0
    %v6834 = vadd.f32 %v6808, %v6833
    %6835 = vdwg.mxu0
    %6836 = vmatpush.msra.mxu0 %v6062
    %6837 = vmatpush.msra.mxu0 %v6059
    %6838 = vmatpush.msra.mxu0 %v6056
    %6839 = vmatpush.msra.mxu0 %v6053
    %6840 = vmatpush.msra.mxu0 %v6050
    %6841 = vmatpush.msra.mxu0 %v6047
    %6842 = vmatpush.msra.mxu0 %v6044
    %6843 = vmatpush.msra.mxu0 %v6041
    %6844 = vmatpush.msra.mxu0 %v6038
    %6845 = vmatpush.msra.mxu0 %v6035
    %6846 = vmatpush.msra.mxu0 %v6032
    %6847 = vmatpush.msra.mxu0 %v6029
    %6848 = vmatpush.msra.mxu0 %v6026
    %6849 = vmatpush.msra.mxu0 %v6023
    %6850 = vmatpush.msra.mxu0 %v6020
    %6851 = vmatpush.msra.mxu0 %v6017
    %6852 = vmatmul.f32.gmra.mxu0 %v6092
    %v6853 = vpop.f32.mrf.mxu0
    %v6854 = vadd.f32 %v6828, %v6853
    %6855 = vmatmul.f32.gmra.mxu0 %v6159
    %v6856 = vpop.f32.mrf.mxu0
    %v6857 = vadd.f32 %v6831, %v6856
    %6858 = vmatmul.f32.gmra.mxu0 %v6130
    %v6859 = vpop.f32.mrf.mxu0
    %v6860 = vadd.f32 %v6834, %v6859
    %6861 = vdwg.mxu0
    %v6862 = vadd.f32 %v6386, %v6389
    %v6863 = vsel %vm3039, %v6392, 0.0
    %v6864 = vadd.f32 %v6862, %v6863
    %v6865 = vrot.slane %v6864, 4
    %v6866 = vadd.f32 %v6864, %v6865
    %v6867 = vrot.slane %v6866, 2
    %v6868 = vadd.f32 %v6866, %v6867
    %v6869 = vrot.slane %v6868, 1
    %v6870 = vadd.f32 %v6868, %v6869
    %v6871 = vadd.f32 %v6620, %v6623
    %v6872 = vsel %vm3039, %v6626, 0.0
    %v6873 = vadd.f32 %v6871, %v6872
    %v6874 = vrot.slane %v6873, 4
    %v6875 = vadd.f32 %v6873, %v6874
    %v6876 = vrot.slane %v6875, 2
    %v6877 = vadd.f32 %v6875, %v6876
    %v6878 = vrot.slane %v6877, 1
    %v6879 = vadd.f32 %v6877, %v6878
    %v6880 = vsel %vm3068, %v6854, 0.0
    %v6881 = vsel %vm3068, %v6857, 0.0
    %v6882 = vadd.f32 %v6880, %v6881
    %v6883 = vsel %vm3074, %v6860, 0.0
    %v6884 = vadd.f32 %v6882, %v6883
    %v6885 = vrot.slane %v6884, 4
    %v6886 = vadd.f32 %v6884, %v6885
    %v6887 = vrot.slane %v6886, 2
    %v6888 = vadd.f32 %v6886, %v6887
    %v6889 = vrot.slane %v6888, 1
    %v6890 = vadd.f32 %v6888, %v6889
    %v6891 = vmul.f32 %v6386, %v6386
    %v6892 = vmul.f32 %v6620, %v6620
    %v6893 = vmul.f32 %v6854, %v6854
    %v6894 = vmul.f32 %v6389, %v6389
    %v6895 = vmul.f32 %v6623, %v6623
    %v6896 = vmul.f32 %v6857, %v6857
    %v6897 = vmul.f32 %v6392, %v6392
    %v6898 = vmul.f32 %v6626, %v6626
    %v6899 = vmul.f32 %v6860, %v6860
    %v6900 = vadd.f32 %v6891, %v6894
    %v6901 = vsel %vm3039, %v6897, 0.0
    %v6902 = vadd.f32 %v6900, %v6901
    %v6903 = vrot.slane %v6902, 4
    %v6904 = vadd.f32 %v6902, %v6903
    %v6905 = vrot.slane %v6904, 2
    %v6906 = vadd.f32 %v6904, %v6905
    %v6907 = vrot.slane %v6906, 1
    %v6908 = vadd.f32 %v6906, %v6907
    %v6909 = vadd.f32 %v6892, %v6895
    %v6910 = vsel %vm3039, %v6898, 0.0
    %v6911 = vadd.f32 %v6909, %v6910
    %v6912 = vrot.slane %v6911, 4
    %v6913 = vadd.f32 %v6911, %v6912
    %v6914 = vrot.slane %v6913, 2
    %v6915 = vadd.f32 %v6913, %v6914
    %v6916 = vrot.slane %v6915, 1
    %v6917 = vadd.f32 %v6915, %v6916
    %v6918 = vsel %vm3068, %v6893, 0.0
    %v6919 = vsel %vm3068, %v6896, 0.0
    %v6920 = vadd.f32 %v6918, %v6919
    %v6921 = vsel %vm3074, %v6899, 0.0
    %v6922 = vadd.f32 %v6920, %v6921
    %v6923 = vrot.slane %v6922, 4
    %v6924 = vadd.f32 %v6922, %v6923
    %v6925 = vrot.slane %v6924, 2
    %v6926 = vadd.f32 %v6924, %v6925
    %v6927 = vrot.slane %v6926, 1
    %v6928 = vadd.f32 %v6926, %v6927
    %v6929 = vsel %vm3142, %v6870, %v6908
    %v6930 = vsel %vm3142, %v6879, %v6917
    %v6931 = vsel %vm3142, %v6890, %v6928
    %v6933 = vsel %vm3068, %v6931, 0
    %6935 = vmatpush.msra.mxu0 %v3389
    %6936 = vmatpush.msra.mxu0 %v3388
    %6937 = vmatpush.msra.mxu0 %v3387
    %6938 = vmatpush.msra.mxu0 %v3386
    %6939 = vmatpush.msra.mxu0 %v3385
    %6940 = vmatpush.msra.mxu0 %v3384
    %6941 = vmatpush.msra.mxu0 %v3383
    %6942 = vmatpush.msra.mxu0 %v3382
    %6943 = vmatpush.msra.mxu0 %v3381
    %6944 = vmatpush.msra.mxu0 %v3380
    %6945 = vmatpush.msra.mxu0 %v3379
    %6946 = vmatpush.msra.mxu0 %v3378
    %6947 = vmatpush.msra.mxu0 %v3377
    %6948 = vmatpush.msra.mxu0 %v3376
    %6949 = vmatpush.msra.mxu0 %v3375
    %6950 = vmatpush.msra.mxu0 %v3374
    %6951 = vmatmul.f32.gmra.mxu0 %v6929
    %v6952 = vpop.f32.mrf.mxu0
    %v6953 = vadd.f32 0.0, %v6952
    %6954 = vdwg.mxu0
    %6955 = vmatpush.msra.mxu0 %v3405
    %6956 = vmatpush.msra.mxu0 %v3404
    %6957 = vmatpush.msra.mxu0 %v3403
    %6958 = vmatpush.msra.mxu0 %v3402
    %6959 = vmatpush.msra.mxu0 %v3401
    %6960 = vmatpush.msra.mxu0 %v3400
    %6961 = vmatpush.msra.mxu0 %v3399
    %6962 = vmatpush.msra.mxu0 %v3398
    %6963 = vmatpush.msra.mxu0 %v3397
    %6964 = vmatpush.msra.mxu0 %v3396
    %6965 = vmatpush.msra.mxu0 %v3395
    %6966 = vmatpush.msra.mxu0 %v3394
    %6967 = vmatpush.msra.mxu0 %v3393
    %6968 = vmatpush.msra.mxu0 %v3392
    %6969 = vmatpush.msra.mxu0 %v3391
    %6970 = vmatpush.msra.mxu0 %v3390
    %6971 = vmatmul.f32.gmra.mxu0 %v6930
    %v6972 = vpop.f32.mrf.mxu0
    %v6973 = vadd.f32 %v6953, %v6972
    %6974 = vdwg.mxu0
    %6975 = vmatpush.msra.mxu0 0.0
    %6976 = vmatpush.msra.mxu0 0.0
    %6977 = vmatpush.msra.mxu0 0.0
    %6978 = vmatpush.msra.mxu0 0.0
    %6979 = vmatpush.msra.mxu0 0.0
    %6980 = vmatpush.msra.mxu0 0.0
    %6981 = vmatpush.msra.mxu0 0.0
    %6982 = vmatpush.msra.mxu0 0.0
    %6983 = vmatpush.msra.mxu0 %v3413
    %6984 = vmatpush.msra.mxu0 %v3412
    %6985 = vmatpush.msra.mxu0 %v3411
    %6986 = vmatpush.msra.mxu0 %v3410
    %6987 = vmatpush.msra.mxu0 %v3409
    %6988 = vmatpush.msra.mxu0 %v3408
    %6989 = vmatpush.msra.mxu0 %v3407
    %6990 = vmatpush.msra.mxu0 %v3406
    %6991 = vmatmul.f32.gmra.mxu0 %v6933
    %v6992 = vpop.f32.mrf.mxu0
    %v6993 = vadd.f32 %v6973, %v6992
    %6994 = vdwg.mxu0
    %v6995 = vmul.f32 %v6993, 0.005
    %v6996 = vmul.f32 %v6995, %v6995
    %v6998 = vrot.slane %v6996, 7
    %v7000 = vsub.f32 %v6995, %v6998
    %v7001 = vmax.f32 %v7000, 0.0
    %v7002 = vadd.f32 %v7001, 1e-05
    %v7003 = vrsqrt.pop %v7002
    %v7004 = vmul.f32 %v7003, %v7002
    %v7005 = vmul.f32 %v7004, %v7003
    %v7006 = vmul.f32 0.5, %v7005
    %v7007 = vsub.f32 1.5, %v7006
    %v7008 = vmul.f32 %v7003, %v7007
    %vm7009 = vweird.f32 %v7002
    %vm7010 = vweird.f32 %v7003
    %vm7011 = vmor %vm7009, %vm7010
    %v7012 = vsel %vm7011, %v7003, %v7008
    %v7014 = vrot.slane %v7012, 7
    %v7016 = vmul.f32 %v2651, %v7014
    %v7018 = vrot.slane %v7016, 2
    %v7020 = vmul.f32 %v6995, %v7018
    %v7022 = vrot.slane %v7020, 6
    %v7024 = vsub.f32 %v2652, %v7022
    %v7026 = vrot.slane %v7024, 1
    %v7028 = vsel %vm3142, %v7018, %v7026
    %v7030 = vsel %vm3596, %v7028, 0
    %7032 = vmatpush.msra.mxu0 0.0
    %7033 = vmatpush.msra.mxu0 0.0
    %7034 = vmatpush.msra.mxu0 0.0
    %7035 = vmatpush.msra.mxu0 0.0
    %7036 = vmatpush.msra.mxu0 0.0
    %7037 = vmatpush.msra.mxu0 0.0
    %7038 = vmatpush.msra.mxu0 0.0
    %7039 = vmatpush.msra.mxu0 0.0
    %7040 = vmatpush.msra.mxu0 0.0
    %7041 = vmatpush.msra.mxu0 0.0
    %7042 = vmatpush.msra.mxu0 0.0
    %7043 = vmatpush.msra.mxu0 0.0
    %7044 = vmatpush.msra.mxu0 %v3592
    %7045 = vmatpush.msra.mxu0 %v3588
    %7046 = vmatpush.msra.mxu0 %v3584
    %7047 = vmatpush.msra.mxu0 %v3580
    %7048 = vmatmul.f32.gmra.mxu0 %v7030
    %v7049 = vpop.f32.mrf.mxu0
    %v7050 = vadd.f32 0.0, %v7049
    %7051 = vdwg.mxu0
    %7052 = vmatpush.msra.mxu0 0.0
    %7053 = vmatpush.msra.mxu0 0.0
    %7054 = vmatpush.msra.mxu0 0.0
    %7055 = vmatpush.msra.mxu0 0.0
    %7056 = vmatpush.msra.mxu0 0.0
    %7057 = vmatpush.msra.mxu0 0.0
    %7058 = vmatpush.msra.mxu0 0.0
    %7059 = vmatpush.msra.mxu0 0.0
    %7060 = vmatpush.msra.mxu0 0.0
    %7061 = vmatpush.msra.mxu0 0.0
    %7062 = vmatpush.msra.mxu0 0.0
    %7063 = vmatpush.msra.mxu0 0.0
    %7064 = vmatpush.msra.mxu0 %v3593
    %7065 = vmatpush.msra.mxu0 %v3589
    %7066 = vmatpush.msra.mxu0 %v3585
    %7067 = vmatpush.msra.mxu0 %v3581
    %7068 = vmatmul.f32.gmra.mxu0 %v7030
    %v7069 = vpop.f32.mrf.mxu0
    %v7070 = vadd.f32 0.0, %v7069
    %7071 = vdwg.mxu0
    %7072 = vmatpush.msra.mxu0 0.0
    %7073 = vmatpush.msra.mxu0 0.0
    %7074 = vmatpush.msra.mxu0 0.0
    %7075 = vmatpush.msra.mxu0 0.0
    %7076 = vmatpush.msra.mxu0 0.0
    %7077 = vmatpush.msra.mxu0 0.0
    %7078 = vmatpush.msra.mxu0 0.0
    %7079 = vmatpush.msra.mxu0 0.0
    %7080 = vmatpush.msra.mxu0 0.0
    %7081 = vmatpush.msra.mxu0 0.0
    %7082 = vmatpush.msra.mxu0 0.0
    %7083 = vmatpush.msra.mxu0 0.0
    %7084 = vmatpush.msra.mxu0 %v3594
    %7085 = vmatpush.msra.mxu0 %v3590
    %7086 = vmatpush.msra.mxu0 %v3586
    %7087 = vmatpush.msra.mxu0 %v3582
    %7088 = vmatmul.f32.gmra.mxu0 %v7030
    %v7089 = vpop.f32.mrf.mxu0
    %v7090 = vadd.f32 0.0, %v7089
    %7091 = vdwg.mxu0
    %v7092 = vperm.slane %v7050, 0
    %v7093 = vperm.slane %v7070, 0
    %v7094 = vperm.slane %v7090, 0
    %v7095 = vmul.f32 %v6386, %v7092
    %v7096 = vmul.f32 %v6620, %v7093
    %v7097 = vmul.f32 %v6854, %v7094
    %v7098 = vmul.f32 %v6389, %v7092
    %v7099 = vmul.f32 %v6623, %v7093
    %v7100 = vmul.f32 %v6857, %v7094
    %v7101 = vmul.f32 %v6392, %v7092
    %v7102 = vmul.f32 %v6626, %v7093
    %v7103 = vmul.f32 %v6860, %v7094
    %v7104 = vperm.slane %v7050, 1
    %v7105 = vperm.slane %v7070, 1
    %v7106 = vperm.slane %v7090, 1
    %v7107 = vadd.f32 %v7095, %v7104
    %v7108 = vadd.f32 %v7096, %v7105
    %v7109 = vadd.f32 %v7097, %v7106
    %v7110 = vadd.f32 %v7098, %v7104
    %v7111 = vadd.f32 %v7099, %v7105
    %v7112 = vadd.f32 %v7100, %v7106
    %v7113 = vadd.f32 %v7101, %v7104
    %v7114 = vadd.f32 %v7102, %v7105
    %v7115 = vadd.f32 %v7103, %v7106
    %vm7116 = vcmp.ge.f32.partialorder %v7107, 0.0
    %vm7117 = vcmp.ge.f32.partialorder %v7108, 0.0
    %vm7118 = vcmp.ge.f32.partialorder %v7109, 0.0
    %vm7119 = vcmp.ge.f32.partialorder %v7110, 0.0
    %vm7120 = vcmp.ge.f32.partialorder %v7111, 0.0
    %vm7121 = vcmp.ge.f32.partialorder %v7112, 0.0
    %vm7122 = vcmp.ge.f32.partialorder %v7113, 0.0
    %vm7123 = vcmp.ge.f32.partialorder %v7114, 0.0
    %vm7124 = vcmp.ge.f32.partialorder %v7115, 0.0
    %v7125 = vmul.f32 %v7107, 0.2
    %v7126 = vmul.f32 %v7108, 0.2
    %v7127 = vmul.f32 %v7109, 0.2
    %v7128 = vmul.f32 %v7110, 0.2
    %v7129 = vmul.f32 %v7111, 0.2
    %v7130 = vmul.f32 %v7112, 0.2
    %v7131 = vmul.f32 %v7113, 0.2
    %v7132 = vmul.f32 %v7114, 0.2
    %v7133 = vmul.f32 %v7115, 0.2
    %v7134 = vsel %vm7116, %v7107, %v7125
    %v7135 = vsel %vm7117, %v7108, %v7126
    %v7136 = vsel %vm7118, %v7109, %v7127
    %v7137 = vsel %vm7119, %v7110, %v7128
    %v7138 = vsel %vm7120, %v7111, %v7129
    %v7139 = vsel %vm7121, %v7112, %v7130
    %v7140 = vsel %vm7122, %v7113, %v7131
    %v7141 = vsel %vm7123, %v7114, %v7132
    %v7142 = vsel %vm7124, %v7115, %v7133
    %s7143 = smul.u32 8, 120
    %s7144 = smul.u32 %s7143, 2
    %s7145 = sshll.u32 %s7144, 4
    %7146 = dma.done %s1945, %s7145
    %v7147 = vld [vmem:[#allocation4] sm:$0xff]
    %v7148 = vld [vmem:[#allocation4 + $0x8] sm:$0xff]
    %v7149 = vld [vmem:[#allocation4 + $0x10] sm:$0xff]
    %v7150 = vld [vmem:[#allocation4 + $0x18] sm:$0xff]
    %v7151 = vld [vmem:[#allocation4 + $0x20] sm:$0xff]
    %v7152 = vld [vmem:[#allocation4 + $0x28] sm:$0xff]
    %v7153 = vld [vmem:[#allocation4 + $0x30] sm:$0xff]
    %v7154 = vld [vmem:[#allocation4 + $0x38] sm:$0xff]
    %v7155 = vld [vmem:[#allocation4 + $0x40] sm:$0xff]
    %v7156 = vld [vmem:[#allocation4 + $0x48] sm:$0xff]
    %v7157 = vld [vmem:[#allocation4 + $0x50] sm:$0xff]
    %v7158 = vld [vmem:[#allocation4 + $0x58] sm:$0xff]
    %v7159 = vld [vmem:[#allocation4 + $0x60] sm:$0xff]
    %v7160 = vld [vmem:[#allocation4 + $0x68] sm:$0xff]
    %v7161 = vld [vmem:[#allocation4 + $0x70] sm:$0xff]
    %v7162 = vld [vmem:[#allocation4 + $0x78] sm:$0xff]
    %v7163 = vld [vmem:[#allocation4 + $0x80] sm:$0xff]
    %v7164 = vld [vmem:[#allocation4 + $0x88] sm:$0xff]
    %v7165 = vld [vmem:[#allocation4 + $0x90] sm:$0xff]
    %v7166 = vld [vmem:[#allocation4 + $0x98] sm:$0xff]
    %v7167 = vld [vmem:[#allocation4 + $0xa0] sm:$0xff]
    %v7168 = vld [vmem:[#allocation4 + $0xa8] sm:$0xff]
    %v7169 = vld [vmem:[#allocation4 + $0xb0] sm:$0xff]
    %v7170 = vld [vmem:[#allocation4 + $0xb8] sm:$0xff]
    %v7171 = vld [vmem:[#allocation4 + $0xc0] sm:$0xff]
    %v7172 = vld [vmem:[#allocation4 + $0xc8] sm:$0xff]
    %v7173 = vld [vmem:[#allocation4 + $0xd0] sm:$0xff]
    %v7174 = vld [vmem:[#allocation4 + $0xd8] sm:$0xff]
    %v7175 = vld [vmem:[#allocation4 + $0xe0] sm:$0xff]
    %v7176 = vld [vmem:[#allocation4 + $0xe8] sm:$0xff]
    %v7177 = vld [vmem:[#allocation4 + $0xf0] sm:$0xff]
    %v7178 = vld [vmem:[#allocation4 + $0xf8] sm:$0xff]
    %v7179 = vld [vmem:[#allocation4 + $0x100] sm:$0xff]
    %v7180 = vld [vmem:[#allocation4 + $0x108] sm:$0xff]
    %v7181 = vld [vmem:[#allocation4 + $0x110] sm:$0xff]
    %v7182 = vld [vmem:[#allocation4 + $0x118] sm:$0xff]
    %v7183 = vld [vmem:[#allocation4 + $0x120] sm:$0xff]
    %v7184 = vld [vmem:[#allocation4 + $0x128] sm:$0xff]
    %v7185 = vld [vmem:[#allocation4 + $0x130] sm:$0xff]
    %v7186 = vld [vmem:[#allocation4 + $0x138] sm:$0xff]
    %v7187 = vld [vmem:[#allocation4 + $0x140] sm:$0xff]
    %v7188 = vld [vmem:[#allocation4 + $0x148] sm:$0xff]
    %v7189 = vld [vmem:[#allocation4 + $0x150] sm:$0xff]
    %v7190 = vld [vmem:[#allocation4 + $0x158] sm:$0xff]
    %v7191 = vld [vmem:[#allocation4 + $0x160] sm:$0xff]
    %v7192 = vld [vmem:[#allocation4 + $0x168] sm:$0xff]
    %v7193 = vld [vmem:[#allocation4 + $0x170] sm:$0xff]
    %v7194 = vld [vmem:[#allocation4 + $0x178] sm:$0xff]
    %v7195 = vld [vmem:[#allocation4 + $0x180] sm:$0xff]
    %v7196 = vld [vmem:[#allocation4 + $0x188] sm:$0xff]
    %v7197 = vld [vmem:[#allocation4 + $0x190] sm:$0xff]
    %v7198 = vld [vmem:[#allocation4 + $0x198] sm:$0xff]
    %v7199 = vld [vmem:[#allocation4 + $0x1a0] sm:$0xff]
    %v7200 = vld [vmem:[#allocation4 + $0x1a8] sm:$0xff]
    %v7201 = vld [vmem:[#allocation4 + $0x1b0] sm:$0xff]
    %v7202 = vld [vmem:[#allocation4 + $0x1b8] sm:$0xff]
    %v7203 = vld [vmem:[#allocation4 + $0x1c0] sm:$0xff]
    %v7204 = vld [vmem:[#allocation4 + $0x1c8] sm:$0xff]
    %v7205 = vld [vmem:[#allocation4 + $0x1d0] sm:$0xff]
    %v7206 = vld [vmem:[#allocation4 + $0x1d8] sm:$0xff]
    %v7207 = vld [vmem:[#allocation4 + $0x1e0] sm:$0xff]
    %v7208 = vld [vmem:[#allocation4 + $0x1e8] sm:$0xff]
    %v7209 = vld [vmem:[#allocation4 + $0x1f0] sm:$0xff]
    %v7210 = vld [vmem:[#allocation4 + $0x1f8] sm:$0xff]
    %v7211 = vld [vmem:[#allocation4 + $0x200] sm:$0xff]
    %v7212 = vld [vmem:[#allocation4 + $0x208] sm:$0xff]
    %v7213 = vld [vmem:[#allocation4 + $0x210] sm:$0xff]
    %v7214 = vld [vmem:[#allocation4 + $0x218] sm:$0xff]
    %v7215 = vld [vmem:[#allocation4 + $0x220] sm:$0xff]
    %v7216 = vld [vmem:[#allocation4 + $0x228] sm:$0xff]
    %v7217 = vld [vmem:[#allocation4 + $0x230] sm:$0xff]
    %v7218 = vld [vmem:[#allocation4 + $0x238] sm:$0xff]
    %v7219 = vld [vmem:[#allocation4 + $0x240] sm:$0xff]
    %v7220 = vld [vmem:[#allocation4 + $0x248] sm:$0xff]
    %v7221 = vld [vmem:[#allocation4 + $0x250] sm:$0xff]
    %v7222 = vld [vmem:[#allocation4 + $0x258] sm:$0xff]
    %v7223 = vld [vmem:[#allocation4 + $0x260] sm:$0xff]
    %v7224 = vld [vmem:[#allocation4 + $0x268] sm:$0xff]
    %v7225 = vld [vmem:[#allocation4 + $0x270] sm:$0xff]
    %v7226 = vld [vmem:[#allocation4 + $0x278] sm:$0xff]
    %v7227 = vld [vmem:[#allocation4 + $0x280] sm:$0xff]
    %v7228 = vld [vmem:[#allocation4 + $0x288] sm:$0xff]
    %v7229 = vld [vmem:[#allocation4 + $0x290] sm:$0xff]
    %v7230 = vld [vmem:[#allocation4 + $0x298] sm:$0xff]
    %v7231 = vld [vmem:[#allocation4 + $0x2a0] sm:$0xff]
    %v7232 = vld [vmem:[#allocation4 + $0x2a8] sm:$0xff]
    %v7233 = vld [vmem:[#allocation4 + $0x2b0] sm:$0xff]
    %v7234 = vld [vmem:[#allocation4 + $0x2b8] sm:$0xff]
    %v7235 = vld [vmem:[#allocation4 + $0x2c0] sm:$0xff]
    %v7236 = vld [vmem:[#allocation4 + $0x2c8] sm:$0xff]
    %v7237 = vld [vmem:[#allocation4 + $0x2d0] sm:$0xff]
    %v7238 = vld [vmem:[#allocation4 + $0x2d8] sm:$0xff]
    %v7239 = vld [vmem:[#allocation4 + $0x2e0] sm:$0xff]
    %v7240 = vld [vmem:[#allocation4 + $0x2e8] sm:$0xff]
    %v7241 = vld [vmem:[#allocation4 + $0x2f0] sm:$0xff]
    %v7242 = vld [vmem:[#allocation4 + $0x2f8] sm:$0xff]
    %v7243 = vld [vmem:[#allocation4 + $0x300] sm:$0xff]
    %v7244 = vld [vmem:[#allocation4 + $0x308] sm:$0xff]
    %v7245 = vld [vmem:[#allocation4 + $0x310] sm:$0xff]
    %v7246 = vld [vmem:[#allocation4 + $0x318] sm:$0xff]
    %v7247 = vld [vmem:[#allocation4 + $0x320] sm:$0xff]
    %v7248 = vld [vmem:[#allocation4 + $0x328] sm:$0xff]
    %v7249 = vld [vmem:[#allocation4 + $0x330] sm:$0xff]
    %v7250 = vld [vmem:[#allocation4 + $0x338] sm:$0xff]
    %v7251 = vld [vmem:[#allocation4 + $0x340] sm:$0xff]
    %v7252 = vld [vmem:[#allocation4 + $0x348] sm:$0xff]
    %v7253 = vld [vmem:[#allocation4 + $0x350] sm:$0xff]
    %v7254 = vld [vmem:[#allocation4 + $0x358] sm:$0xff]
    %v7255 = vld [vmem:[#allocation4 + $0x360] sm:$0xff]
    %v7256 = vld [vmem:[#allocation4 + $0x368] sm:$0xff]
    %v7257 = vld [vmem:[#allocation4 + $0x370] sm:$0xff]
    %v7258 = vld [vmem:[#allocation4 + $0x378] sm:$0xff]
    %v7259 = vld [vmem:[#allocation4 + $0x380] sm:$0xff]
    %v7260 = vld [vmem:[#allocation4 + $0x388] sm:$0xff]
    %v7261 = vld [vmem:[#allocation4 + $0x390] sm:$0xff]
    %v7262 = vld [vmem:[#allocation4 + $0x398] sm:$0xff]
    %v7263 = vld [vmem:[#allocation4 + $0x3a0] sm:$0xff]
    %v7264 = vld [vmem:[#allocation4 + $0x3a8] sm:$0xff]
    %v7265 = vld [vmem:[#allocation4 + $0x3b0] sm:$0xff]
    %v7266 = vld [vmem:[#allocation4 + $0x3b8] sm:$0xff]
    %v7267 = vld [vmem:[#allocation4 + $0x3c0] sm:$0xff]
    %v7268 = vld [vmem:[#allocation4 + $0x3c8] sm:$0xff]
    %v7269 = vld [vmem:[#allocation4 + $0x3d0] sm:$0xff]
    %v7270 = vld [vmem:[#allocation4 + $0x3d8] sm:$0xff]
    %v7271 = vld [vmem:[#allocation4 + $0x3e0] sm:$0xff]
    %v7272 = vld [vmem:[#allocation4 + $0x3e8] sm:$0xff]
    %v7273 = vld [vmem:[#allocation4 + $0x3f0] sm:$0xff]
    %v7274 = vld [vmem:[#allocation4 + $0x3f8] sm:$0xff]
    %v7275 = vld [vmem:[#allocation4 + $0x400] sm:$0xff]
    %v7276 = vld [vmem:[#allocation4 + $0x408] sm:$0xff]
    %v7277 = vld [vmem:[#allocation4 + $0x410] sm:$0xff]
    %v7278 = vld [vmem:[#allocation4 + $0x418] sm:$0xff]
    %v7279 = vld [vmem:[#allocation4 + $0x420] sm:$0xff]
    %v7280 = vld [vmem:[#allocation4 + $0x428] sm:$0xff]
    %v7281 = vld [vmem:[#allocation4 + $0x430] sm:$0xff]
    %v7282 = vld [vmem:[#allocation4 + $0x438] sm:$0xff]
    %v7283 = vld [vmem:[#allocation4 + $0x440] sm:$0xff]
    %v7284 = vld [vmem:[#allocation4 + $0x448] sm:$0xff]
    %v7285 = vld [vmem:[#allocation4 + $0x450] sm:$0xff]
    %v7286 = vld [vmem:[#allocation4 + $0x458] sm:$0xff]
    %v7287 = vld [vmem:[#allocation4 + $0x460] sm:$0xff]
    %v7288 = vld [vmem:[#allocation4 + $0x468] sm:$0xff]
    %v7289 = vld [vmem:[#allocation4 + $0x470] sm:$0xff]
    %v7290 = vld [vmem:[#allocation4 + $0x478] sm:$0xff]
    %v7291 = vld [vmem:[#allocation4 + $0x480] sm:$0xff]
    %v7292 = vld [vmem:[#allocation4 + $0x488] sm:$0xff]
    %v7293 = vld [vmem:[#allocation4 + $0x490] sm:$0xff]
    %v7294 = vld [vmem:[#allocation4 + $0x498] sm:$0xff]
    %v7295 = vld [vmem:[#allocation4 + $0x4a0] sm:$0xff]
    %v7296 = vld [vmem:[#allocation4 + $0x4a8] sm:$0xff]
    %v7297 = vld [vmem:[#allocation4 + $0x4b0] sm:$0xff]
    %v7298 = vld [vmem:[#allocation4 + $0x4b8] sm:$0xff]
    %v7299 = vld [vmem:[#allocation4 + $0x4c0] sm:$0xff]
    %v7300 = vld [vmem:[#allocation4 + $0x4c8] sm:$0xff]
    %v7301 = vld [vmem:[#allocation4 + $0x4d0] sm:$0xff]
    %v7302 = vld [vmem:[#allocation4 + $0x4d8] sm:$0xff]
    %v7303 = vld [vmem:[#allocation4 + $0x4e0] sm:$0xff]
    %v7304 = vld [vmem:[#allocation4 + $0x4e8] sm:$0xff]
    %v7305 = vld [vmem:[#allocation4 + $0x4f0] sm:$0xff]
    %v7306 = vld [vmem:[#allocation4 + $0x4f8] sm:$0xff]
    %v7307 = vld [vmem:[#allocation4 + $0x500] sm:$0xff]
    %v7308 = vld [vmem:[#allocation4 + $0x508] sm:$0xff]
    %v7309 = vld [vmem:[#allocation4 + $0x510] sm:$0xff]
    %v7310 = vld [vmem:[#allocation4 + $0x518] sm:$0xff]
    %v7311 = vld [vmem:[#allocation4 + $0x520] sm:$0xff]
    %v7312 = vld [vmem:[#allocation4 + $0x528] sm:$0xff]
    %v7313 = vld [vmem:[#allocation4 + $0x530] sm:$0xff]
    %v7314 = vld [vmem:[#allocation4 + $0x538] sm:$0xff]
    %v7315 = vld [vmem:[#allocation4 + $0x540] sm:$0xff]
    %v7316 = vld [vmem:[#allocation4 + $0x548] sm:$0xff]
    %v7317 = vld [vmem:[#allocation4 + $0x550] sm:$0xff]
    %v7318 = vld [vmem:[#allocation4 + $0x558] sm:$0xff]
    %v7319 = vld [vmem:[#allocation4 + $0x560] sm:$0xff]
    %v7320 = vld [vmem:[#allocation4 + $0x568] sm:$0xff]
    %v7321 = vld [vmem:[#allocation4 + $0x570] sm:$0xff]
    %v7322 = vld [vmem:[#allocation4 + $0x578] sm:$0xff]
    %v7323 = vld [vmem:[#allocation4 + $0x580] sm:$0xff]
    %v7324 = vld [vmem:[#allocation4 + $0x588] sm:$0xff]
    %v7325 = vld [vmem:[#allocation4 + $0x590] sm:$0xff]
    %v7326 = vld [vmem:[#allocation4 + $0x598] sm:$0xff]
    %v7327 = vld [vmem:[#allocation4 + $0x5a0] sm:$0xff]
    %v7328 = vld [vmem:[#allocation4 + $0x5a8] sm:$0xff]
    %v7329 = vld [vmem:[#allocation4 + $0x5b0] sm:$0xff]
    %v7330 = vld [vmem:[#allocation4 + $0x5b8] sm:$0xff]
    %v7331 = vld [vmem:[#allocation4 + $0x5c0] sm:$0xff]
    %v7332 = vld [vmem:[#allocation4 + $0x5c8] sm:$0xff]
    %v7333 = vld [vmem:[#allocation4 + $0x5d0] sm:$0xff]
    %v7334 = vld [vmem:[#allocation4 + $0x5d8] sm:$0xff]
    %v7335 = vld [vmem:[#allocation4 + $0x5e0] sm:$0xff]
    %v7336 = vld [vmem:[#allocation4 + $0x5e8] sm:$0xff]
    %v7337 = vld [vmem:[#allocation4 + $0x5f0] sm:$0xff]
    %v7338 = vld [vmem:[#allocation4 + $0x5f8] sm:$0xff]
    %v7339 = vld [vmem:[#allocation4 + $0x600] sm:$0xff]
    %v7340 = vld [vmem:[#allocation4 + $0x608] sm:$0xff]
    %v7341 = vld [vmem:[#allocation4 + $0x610] sm:$0xff]
    %v7342 = vld [vmem:[#allocation4 + $0x618] sm:$0xff]
    %v7343 = vld [vmem:[#allocation4 + $0x620] sm:$0xff]
    %v7344 = vld [vmem:[#allocation4 + $0x628] sm:$0xff]
    %v7345 = vld [vmem:[#allocation4 + $0x630] sm:$0xff]
    %v7346 = vld [vmem:[#allocation4 + $0x638] sm:$0xff]
    %v7347 = vld [vmem:[#allocation4 + $0x640] sm:$0xff]
    %v7348 = vld [vmem:[#allocation4 + $0x648] sm:$0xff]
    %v7349 = vld [vmem:[#allocation4 + $0x650] sm:$0xff]
    %v7350 = vld [vmem:[#allocation4 + $0x658] sm:$0xff]
    %v7351 = vld [vmem:[#allocation4 + $0x660] sm:$0xff]
    %v7352 = vld [vmem:[#allocation4 + $0x668] sm:$0xff]
    %v7353 = vld [vmem:[#allocation4 + $0x670] sm:$0xff]
    %v7354 = vld [vmem:[#allocation4 + $0x678] sm:$0xff]
    %v7355 = vld [vmem:[#allocation4 + $0x680] sm:$0xff]
    %v7356 = vld [vmem:[#allocation4 + $0x688] sm:$0xff]
    %v7357 = vld [vmem:[#allocation4 + $0x690] sm:$0xff]
    %v7358 = vld [vmem:[#allocation4 + $0x698] sm:$0xff]
    %v7359 = vld [vmem:[#allocation4 + $0x6a0] sm:$0xff]
    %v7360 = vld [vmem:[#allocation4 + $0x6a8] sm:$0xff]
    %v7361 = vld [vmem:[#allocation4 + $0x6b0] sm:$0xff]
    %v7362 = vld [vmem:[#allocation4 + $0x6b8] sm:$0xff]
    %v7363 = vld [vmem:[#allocation4 + $0x6c0] sm:$0xff]
    %v7364 = vld [vmem:[#allocation4 + $0x6c8] sm:$0xff]
    %v7365 = vld [vmem:[#allocation4 + $0x6d0] sm:$0xff]
    %v7366 = vld [vmem:[#allocation4 + $0x6d8] sm:$0xff]
    %v7367 = vld [vmem:[#allocation4 + $0x6e0] sm:$0xff]
    %v7368 = vld [vmem:[#allocation4 + $0x6e8] sm:$0xff]
    %v7369 = vld [vmem:[#allocation4 + $0x6f0] sm:$0xff]
    %v7370 = vld [vmem:[#allocation4 + $0x6f8] sm:$0xff]
    %v7371 = vld [vmem:[#allocation4 + $0x700] sm:$0xff]
    %v7372 = vld [vmem:[#allocation4 + $0x708] sm:$0xff]
    %v7373 = vld [vmem:[#allocation4 + $0x710] sm:$0xff]
    %v7374 = vld [vmem:[#allocation4 + $0x718] sm:$0xff]
    %v7375 = vld [vmem:[#allocation4 + $0x720] sm:$0xff]
    %v7376 = vld [vmem:[#allocation4 + $0x728] sm:$0xff]
    %v7377 = vld [vmem:[#allocation4 + $0x730] sm:$0xff]
    %v7378 = vld [vmem:[#allocation4 + $0x738] sm:$0xff]
    %v7379 = vld [vmem:[#allocation4 + $0x740] sm:$0xff]
    %v7380 = vld [vmem:[#allocation4 + $0x748] sm:$0xff]
    %v7381 = vld [vmem:[#allocation4 + $0x750] sm:$0xff]
    %v7382 = vld [vmem:[#allocation4 + $0x758] sm:$0xff]
    %v7383 = vld [vmem:[#allocation4 + $0x760] sm:$0xff]
    %v7384 = vld [vmem:[#allocation4 + $0x768] sm:$0xff]
    %v7385 = vld [vmem:[#allocation4 + $0x770] sm:$0xff]
    %v7386 = vld [vmem:[#allocation4 + $0x778] sm:$0xff]
    %v7393 = vrot.slane %v7134, 1
    %v7394 = vrot.slane %v7137, 1
    %v7395 = vsel %vm2731, %v7393, %v7394
    %v7396 = vrot.slane %v7135, 1
    %v7397 = vrot.slane %v7138, 1
    %v7398 = vsel %vm2731, %v7396, %v7397
    %v7399 = vrot.slane %v7136, 1
    %v7400 = vrot.slane %v7139, 1
    %v7401 = vsel %vm2731, %v7399, %v7400
    %7402 = vrot.lane.b32.xlu0 %v7395, 64
    %v7403 = vpop.permute.xlu0 %7402
    %7404 = vrot.lane.b32.xlu0 %v7398, 64
    %v7405 = vpop.permute.xlu0 %7404
    %7406 = vrot.lane.b32.xlu0 %v7401, 64
    %v7407 = vpop.permute.xlu0 %7406
    %v7408 = vsel %vm3068, %v7403, %v7405
    %v7409 = vsel %vm3068, %v7405, %v7407
    %v7413 = vrot.slane %v7134, 2
    %v7414 = vrot.slane %v7137, 2
    %v7415 = vsel %vm2741, %v7413, %v7414
    %v7416 = vrot.slane %v7135, 2
    %v7417 = vrot.slane %v7138, 2
    %v7418 = vsel %vm2741, %v7416, %v7417
    %v7419 = vrot.slane %v7136, 2
    %v7420 = vrot.slane %v7139, 2
    %v7421 = vsel %vm2741, %v7419, %v7420
    %v7424 = vsel %vm3068, %v7136, %v7403
    %v7428 = vrot.slane %v7140, 1
    %v7429 = vsel %vm2731, %v7394, %v7428
    %v7430 = vrot.slane %v7141, 1
    %v7431 = vsel %vm2731, %v7397, %v7430
    %v7432 = vrot.slane %v7142, 1
    %v7433 = vsel %vm2731, %v7400, %v7432
    %7434 = vrot.lane.b32.xlu0 %v7429, 64
    %v7435 = vpop.permute.xlu0 %7434
    %7436 = vrot.lane.b32.xlu0 %v7431, 64
    %v7437 = vpop.permute.xlu0 %7436
    %7438 = vrot.lane.b32.xlu0 %v7433, 64
    %v7439 = vpop.permute.xlu0 %7438
    %7440 = vrot.lane.b32.xlu0 %v7428, 64
    %v7441 = vpop.permute.xlu0 %7440
    %7442 = vrot.lane.b32.xlu0 %v7430, 64
    %v7443 = vpop.permute.xlu0 %7442
    %7444 = vrot.lane.b32.xlu0 %v7432, 64
    %v7445 = vpop.permute.xlu0 %7444
    %v7446 = vsel %vm3068, %v7435, %v7437
    %v7447 = vsel %vm3068, %v7437, %v7439
    %v7448 = vsel %vm3068, %v7441, %v7443
    %v7449 = vsel %vm3068, %v7443, %v7445
    %v7452 = vrot.slane %v7140, 2
    %v7453 = vsel %vm2741, %v7414, %v7452
    %v7454 = vrot.slane %v7141, 2
    %v7455 = vsel %vm2741, %v7417, %v7454
    %v7456 = vrot.slane %v7142, 2
    %v7457 = vsel %vm2741, %v7420, %v7456
    %v7458 = vsel %vm3068, %v7139, %v7435
    %v7459 = vsel %vm3068, %v7142, %v7441
    %v7462 = vrot.slane %v7458, 2
    %v7463 = vrot.slane %v7459, 2
    %v7464 = vsel %vm2741, %v7462, %v7463
    %v7465 = vrot.slane %v7446, 2
    %v7466 = vrot.slane %v7448, 2
    %v7467 = vsel %vm2741, %v7465, %v7466
    %v7468 = vrot.slane %v7447, 2
    %v7469 = vrot.slane %v7449, 2
    %v7470 = vsel %vm2741, %v7468, %v7469
    %v7471 = vrot.slane %v7453, 2
    %v7472 = vrot.slane %v7452, 2
    %v7473 = vsel %vm2741, %v7471, %v7472
    %v7474 = vrot.slane %v7455, 2
    %v7475 = vrot.slane %v7454, 2
    %v7476 = vsel %vm2741, %v7474, %v7475
    %v7477 = vrot.slane %v7457, 2
    %v7478 = vrot.slane %v7456, 2
    %v7479 = vsel %vm2741, %v7477, %v7478
    %v7487 = vsel %vm3068, %v7421, 0
    %v7489 = vsel %vm3068, %v7479, 0
    %7491 = vmatpush.msra.mxu0 %v7177
    %7492 = vmatpush.msra.mxu0 %v7175
    %7493 = vmatpush.msra.mxu0 %v7173
    %7494 = vmatpush.msra.mxu0 %v7171
    %7495 = vmatpush.msra.mxu0 %v7169
    %7496 = vmatpush.msra.mxu0 %v7167
    %7497 = vmatpush.msra.mxu0 %v7165
    %7498 = vmatpush.msra.mxu0 %v7163
    %7499 = vmatpush.msra.mxu0 %v7161
    %7500 = vmatpush.msra.mxu0 %v7159
    %7501 = vmatpush.msra.mxu0 %v7157
    %7502 = vmatpush.msra.mxu0 %v7155
    %7503 = vmatpush.msra.mxu0 %v7153
    %7504 = vmatpush.msra.mxu0 %v7151
    %7505 = vmatpush.msra.mxu0 %v7149
    %7506 = vmatpush.msra.mxu0 %v7147
    %7507 = vmatmul.f32.gmra.mxu0 %v7134
    %v7508 = vpop.f32.mrf.mxu0
    %v7509 = vadd.f32 0.0, %v7508
    %7510 = vmatmul.f32.gmra.mxu0 %v7453
    %v7511 = vpop.f32.mrf.mxu0
    %v7512 = vadd.f32 0.0, %v7511
    %7513 = vdwg.mxu0
    %7514 = vmatpush.msra.mxu0 %v7209
    %7515 = vmatpush.msra.mxu0 %v7207
    %7516 = vmatpush.msra.mxu0 %v7205
    %7517 = vmatpush.msra.mxu0 %v7203
    %7518 = vmatpush.msra.mxu0 %v7201
    %7519 = vmatpush.msra.mxu0 %v7199
    %7520 = vmatpush.msra.mxu0 %v7197
    %7521 = vmatpush.msra.mxu0 %v7195
    %7522 = vmatpush.msra.mxu0 %v7193
    %7523 = vmatpush.msra.mxu0 %v7191
    %7524 = vmatpush.msra.mxu0 %v7189
    %7525 = vmatpush.msra.mxu0 %v7187
    %7526 = vmatpush.msra.mxu0 %v7185
    %7527 = vmatpush.msra.mxu0 %v7183
    %7528 = vmatpush.msra.mxu0 %v7181
    %7529 = vmatpush.msra.mxu0 %v7179
    %7530 = vmatmul.f32.gmra.mxu0 %v7135
    %v7531 = vpop.f32.mrf.mxu0
    %v7532 = vadd.f32 %v7509, %v7531
    %7533 = vmatmul.f32.gmra.mxu0 %v7455
    %v7534 = vpop.f32.mrf.mxu0
    %v7535 = vadd.f32 %v7512, %v7534
    %7536 = vdwg.mxu0
    %7537 = vmatpush.msra.mxu0 %v7241
    %7538 = vmatpush.msra.mxu0 %v7239
    %7539 = vmatpush.msra.mxu0 %v7237
    %7540 = vmatpush.msra.mxu0 %v7235
    %7541 = vmatpush.msra.mxu0 %v7233
    %7542 = vmatpush.msra.mxu0 %v7231
    %7543 = vmatpush.msra.mxu0 %v7229
    %7544 = vmatpush.msra.mxu0 %v7227
    %7545 = vmatpush.msra.mxu0 %v7225
    %7546 = vmatpush.msra.mxu0 %v7223
    %7547 = vmatpush.msra.mxu0 %v7221
    %7548 = vmatpush.msra.mxu0 %v7219
    %7549 = vmatpush.msra.mxu0 %v7217
    %7550 = vmatpush.msra.mxu0 %v7215
    %7551 = vmatpush.msra.mxu0 %v7213
    %7552 = vmatpush.msra.mxu0 %v7211
    %7553 = vmatmul.f32.gmra.mxu0 %v7424
    %v7554 = vpop.f32.mrf.mxu0
    %v7555 = vadd.f32 %v7532, %v7554
    %7556 = vmatmul.f32.gmra.mxu0 %v7464
    %v7557 = vpop.f32.mrf.mxu0
    %v7558 = vadd.f32 %v7535, %v7557
    %7559 = vdwg.mxu0
    %7560 = vmatpush.msra.mxu0 %v7273
    %7561 = vmatpush.msra.mxu0 %v7271
    %7562 = vmatpush.msra.mxu0 %v7269
    %7563 = vmatpush.msra.mxu0 %v7267
    %7564 = vmatpush.msra.mxu0 %v7265
    %7565 = vmatpush.msra.mxu0 %v7263
    %7566 = vmatpush.msra.mxu0 %v7261
    %7567 = vmatpush.msra.mxu0 %v7259
    %7568 = vmatpush.msra.mxu0 %v7257
    %7569 = vmatpush.msra.mxu0 %v7255
    %7570 = vmatpush.msra.mxu0 %v7253
    %7571 = vmatpush.msra.mxu0 %v7251
    %7572 = vmatpush.msra.mxu0 %v7249
    %7573 = vmatpush.msra.mxu0 %v7247
    %7574 = vmatpush.msra.mxu0 %v7245
    %7575 = vmatpush.msra.mxu0 %v7243
    %7576 = vmatmul.f32.gmra.mxu0 %v7408
    %v7577 = vpop.f32.mrf.mxu0
    %v7578 = vadd.f32 %v7555, %v7577
    %7579 = vmatmul.f32.gmra.mxu0 %v7467
    %v7580 = vpop.f32.mrf.mxu0
    %v7581 = vadd.f32 %v7558, %v7580
    %7582 = vdwg.mxu0
    %7583 = vmatpush.msra.mxu0 %v7305
    %7584 = vmatpush.msra.mxu0 %v7303
    %7585 = vmatpush.msra.mxu0 %v7301
    %7586 = vmatpush.msra.mxu0 %v7299
    %7587 = vmatpush.msra.mxu0 %v7297
    %7588 = vmatpush.msra.mxu0 %v7295
    %7589 = vmatpush.msra.mxu0 %v7293
    %7590 = vmatpush.msra.mxu0 %v7291
    %7591 = vmatpush.msra.mxu0 %v7289
    %7592 = vmatpush.msra.mxu0 %v7287
    %7593 = vmatpush.msra.mxu0 %v7285
    %7594 = vmatpush.msra.mxu0 %v7283
    %7595 = vmatpush.msra.mxu0 %v7281
    %7596 = vmatpush.msra.mxu0 %v7279
    %7597 = vmatpush.msra.mxu0 %v7277
    %7598 = vmatpush.msra.mxu0 %v7275
    %7599 = vmatmul.f32.gmra.mxu0 %v7409
    %v7600 = vpop.f32.mrf.mxu0
    %v7601 = vadd.f32 %v7578, %v7600
    %7602 = vmatmul.f32.gmra.mxu0 %v7470
    %v7603 = vpop.f32.mrf.mxu0
    %v7604 = vadd.f32 %v7581, %v7603
    %7605 = vdwg.mxu0
    %7606 = vmatpush.msra.mxu0 %v7337
    %7607 = vmatpush.msra.mxu0 %v7335
    %7608 = vmatpush.msra.mxu0 %v7333
    %7609 = vmatpush.msra.mxu0 %v7331
    %7610 = vmatpush.msra.mxu0 %v7329
    %7611 = vmatpush.msra.mxu0 %v7327
    %7612 = vmatpush.msra.mxu0 %v7325
    %7613 = vmatpush.msra.mxu0 %v7323
    %7614 = vmatpush.msra.mxu0 %v7321
    %7615 = vmatpush.msra.mxu0 %v7319
    %7616 = vmatpush.msra.mxu0 %v7317
    %7617 = vmatpush.msra.mxu0 %v7315
    %7618 = vmatpush.msra.mxu0 %v7313
    %7619 = vmatpush.msra.mxu0 %v7311
    %7620 = vmatpush.msra.mxu0 %v7309
    %7621 = vmatpush.msra.mxu0 %v7307
    %7622 = vmatmul.f32.gmra.mxu0 %v7415
    %v7623 = vpop.f32.mrf.mxu0
    %v7624 = vadd.f32 %v7601, %v7623
    %7625 = vmatmul.f32.gmra.mxu0 %v7473
    %v7626 = vpop.f32.mrf.mxu0
    %v7627 = vadd.f32 %v7604, %v7626
    %7628 = vdwg.mxu0
    %7629 = vmatpush.msra.mxu0 %v7369
    %7630 = vmatpush.msra.mxu0 %v7367
    %7631 = vmatpush.msra.mxu0 %v7365
    %7632 = vmatpush.msra.mxu0 %v7363
    %7633 = vmatpush.msra.mxu0 %v7361
    %7634 = vmatpush.msra.mxu0 %v7359
    %7635 = vmatpush.msra.mxu0 %v7357
    %7636 = vmatpush.msra.mxu0 %v7355
    %7637 = vmatpush.msra.mxu0 %v7353
    %7638 = vmatpush.msra.mxu0 %v7351
    %7639 = vmatpush.msra.mxu0 %v7349
    %7640 = vmatpush.msra.mxu0 %v7347
    %7641 = vmatpush.msra.mxu0 %v7345
    %7642 = vmatpush.msra.mxu0 %v7343
    %7643 = vmatpush.msra.mxu0 %v7341
    %7644 = vmatpush.msra.mxu0 %v7339
    %7645 = vmatmul.f32.gmra.mxu0 %v7418
    %v7646 = vpop.f32.mrf.mxu0
    %v7647 = vadd.f32 %v7624, %v7646
    %7648 = vmatmul.f32.gmra.mxu0 %v7476
    %v7649 = vpop.f32.mrf.mxu0
    %v7650 = vadd.f32 %v7627, %v7649
    %7651 = vdwg.mxu0
    %7652 = vmatpush.msra.mxu0 0.0
    %7653 = vmatpush.msra.mxu0 0.0
    %7654 = vmatpush.msra.mxu0 0.0
    %7655 = vmatpush.msra.mxu0 0.0
    %7656 = vmatpush.msra.mxu0 0.0
    %7657 = vmatpush.msra.mxu0 0.0
    %7658 = vmatpush.msra.mxu0 0.0
    %7659 = vmatpush.msra.mxu0 0.0
    %7660 = vmatpush.msra.mxu0 %v7385
    %7661 = vmatpush.msra.mxu0 %v7383
    %7662 = vmatpush.msra.mxu0 %v7381
    %7663 = vmatpush.msra.mxu0 %v7379
    %7664 = vmatpush.msra.mxu0 %v7377
    %7665 = vmatpush.msra.mxu0 %v7375
    %7666 = vmatpush.msra.mxu0 %v7373
    %7667 = vmatpush.msra.mxu0 %v7371
    %7668 = vmatmul.f32.gmra.mxu0 %v7487
    %v7669 = vpop.f32.mrf.mxu0
    %v7670 = vadd.f32 %v7647, %v7669
    %7671 = vmatmul.f32.gmra.mxu0 %v7489
    %v7672 = vpop.f32.mrf.mxu0
    %v7673 = vadd.f32 %v7650, %v7672
    %7674 = vdwg.mxu0
    %7675 = vmatpush.msra.mxu0 %v7178
    %7676 = vmatpush.msra.mxu0 %v7176
    %7677 = vmatpush.msra.mxu0 %v7174
    %7678 = vmatpush.msra.mxu0 %v7172
    %7679 = vmatpush.msra.mxu0 %v7170
    %7680 = vmatpush.msra.mxu0 %v7168
    %7681 = vmatpush.msra.mxu0 %v7166
    %7682 = vmatpush.msra.mxu0 %v7164
    %7683 = vmatpush.msra.mxu0 %v7162
    %7684 = vmatpush.msra.mxu0 %v7160
    %7685 = vmatpush.msra.mxu0 %v7158
    %7686 = vmatpush.msra.mxu0 %v7156
    %7687 = vmatpush.msra.mxu0 %v7154
    %7688 = vmatpush.msra.mxu0 %v7152
    %7689 = vmatpush.msra.mxu0 %v7150
    %7690 = vmatpush.msra.mxu0 %v7148
    %7691 = vmatmul.f32.gmra.mxu0 %v7134
    %v7692 = vpop.f32.mrf.mxu0
    %v7693 = vadd.f32 0.0, %v7692
    %7694 = vmatmul.f32.gmra.mxu0 %v7453
    %v7695 = vpop.f32.mrf.mxu0
    %v7696 = vadd.f32 0.0, %v7695
    %7697 = vdwg.mxu0
    %7698 = vmatpush.msra.mxu0 %v7210
    %7699 = vmatpush.msra.mxu0 %v7208
    %7700 = vmatpush.msra.mxu0 %v7206
    %7701 = vmatpush.msra.mxu0 %v7204
    %7702 = vmatpush.msra.mxu0 %v7202
    %7703 = vmatpush.msra.mxu0 %v7200
    %7704 = vmatpush.msra.mxu0 %v7198
    %7705 = vmatpush.msra.mxu0 %v7196
    %7706 = vmatpush.msra.mxu0 %v7194
    %7707 = vmatpush.msra.mxu0 %v7192
    %7708 = vmatpush.msra.mxu0 %v7190
    %7709 = vmatpush.msra.mxu0 %v7188
    %7710 = vmatpush.msra.mxu0 %v7186
    %7711 = vmatpush.msra.mxu0 %v7184
    %7712 = vmatpush.msra.mxu0 %v7182
    %7713 = vmatpush.msra.mxu0 %v7180
    %7714 = vmatmul.f32.gmra.mxu0 %v7135
    %v7715 = vpop.f32.mrf.mxu0
    %v7716 = vadd.f32 %v7693, %v7715
    %7717 = vmatmul.f32.gmra.mxu0 %v7455
    %v7718 = vpop.f32.mrf.mxu0
    %v7719 = vadd.f32 %v7696, %v7718
    %7720 = vdwg.mxu0
    %7721 = vmatpush.msra.mxu0 %v7242
    %7722 = vmatpush.msra.mxu0 %v7240
    %7723 = vmatpush.msra.mxu0 %v7238
    %7724 = vmatpush.msra.mxu0 %v7236
    %7725 = vmatpush.msra.mxu0 %v7234
    %7726 = vmatpush.msra.mxu0 %v7232
    %7727 = vmatpush.msra.mxu0 %v7230
    %7728 = vmatpush.msra.mxu0 %v7228
    %7729 = vmatpush.msra.mxu0 %v7226
    %7730 = vmatpush.msra.mxu0 %v7224
    %7731 = vmatpush.msra.mxu0 %v7222
    %7732 = vmatpush.msra.mxu0 %v7220
    %7733 = vmatpush.msra.mxu0 %v7218
    %7734 = vmatpush.msra.mxu0 %v7216
    %7735 = vmatpush.msra.mxu0 %v7214
    %7736 = vmatpush.msra.mxu0 %v7212
    %7737 = vmatmul.f32.gmra.mxu0 %v7424
    %v7738 = vpop.f32.mrf.mxu0
    %v7739 = vadd.f32 %v7716, %v7738
    %7740 = vmatmul.f32.gmra.mxu0 %v7464
    %v7741 = vpop.f32.mrf.mxu0
    %v7742 = vadd.f32 %v7719, %v7741
    %7743 = vdwg.mxu0
    %7744 = vmatpush.msra.mxu0 %v7274
    %7745 = vmatpush.msra.mxu0 %v7272
    %7746 = vmatpush.msra.mxu0 %v7270
    %7747 = vmatpush.msra.mxu0 %v7268
    %7748 = vmatpush.msra.mxu0 %v7266
    %7749 = vmatpush.msra.mxu0 %v7264
    %7750 = vmatpush.msra.mxu0 %v7262
    %7751 = vmatpush.msra.mxu0 %v7260
    %7752 = vmatpush.msra.mxu0 %v7258
    %7753 = vmatpush.msra.mxu0 %v7256
    %7754 = vmatpush.msra.mxu0 %v7254
    %7755 = vmatpush.msra.mxu0 %v7252
    %7756 = vmatpush.msra.mxu0 %v7250
    %7757 = vmatpush.msra.mxu0 %v7248
    %7758 = vmatpush.msra.mxu0 %v7246
    %7759 = vmatpush.msra.mxu0 %v7244
    %7760 = vmatmul.f32.gmra.mxu0 %v7408
    %v7761 = vpop.f32.mrf.mxu0
    %v7762 = vadd.f32 %v7739, %v7761
    %7763 = vmatmul.f32.gmra.mxu0 %v7467
    %v7764 = vpop.f32.mrf.mxu0
    %v7765 = vadd.f32 %v7742, %v7764
    %7766 = vdwg.mxu0
    %7767 = vmatpush.msra.mxu0 %v7306
    %7768 = vmatpush.msra.mxu0 %v7304
    %7769 = vmatpush.msra.mxu0 %v7302
    %7770 = vmatpush.msra.mxu0 %v7300
    %7771 = vmatpush.msra.mxu0 %v7298
    %7772 = vmatpush.msra.mxu0 %v7296
    %7773 = vmatpush.msra.mxu0 %v7294
    %7774 = vmatpush.msra.mxu0 %v7292
    %7775 = vmatpush.msra.mxu0 %v7290
    %7776 = vmatpush.msra.mxu0 %v7288
    %7777 = vmatpush.msra.mxu0 %v7286
    %7778 = vmatpush.msra.mxu0 %v7284
    %7779 = vmatpush.msra.mxu0 %v7282
    %7780 = vmatpush.msra.mxu0 %v7280
    %7781 = vmatpush.msra.mxu0 %v7278
    %7782 = vmatpush.msra.mxu0 %v7276
    %7783 = vmatmul.f32.gmra.mxu0 %v7409
    %v7784 = vpop.f32.mrf.mxu0
    %v7785 = vadd.f32 %v7762, %v7784
    %7786 = vmatmul.f32.gmra.mxu0 %v7470
    %v7787 = vpop.f32.mrf.mxu0
    %v7788 = vadd.f32 %v7765, %v7787
    %7789 = vdwg.mxu0
    %7790 = vmatpush.msra.mxu0 %v7338
    %7791 = vmatpush.msra.mxu0 %v7336
    %7792 = vmatpush.msra.mxu0 %v7334
    %7793 = vmatpush.msra.mxu0 %v7332
    %7794 = vmatpush.msra.mxu0 %v7330
    %7795 = vmatpush.msra.mxu0 %v7328
    %7796 = vmatpush.msra.mxu0 %v7326
    %7797 = vmatpush.msra.mxu0 %v7324
    %7798 = vmatpush.msra.mxu0 %v7322
    %7799 = vmatpush.msra.mxu0 %v7320
    %7800 = vmatpush.msra.mxu0 %v7318
    %7801 = vmatpush.msra.mxu0 %v7316
    %7802 = vmatpush.msra.mxu0 %v7314
    %7803 = vmatpush.msra.mxu0 %v7312
    %7804 = vmatpush.msra.mxu0 %v7310
    %7805 = vmatpush.msra.mxu0 %v7308
    %7806 = vmatmul.f32.gmra.mxu0 %v7415
    %v7807 = vpop.f32.mrf.mxu0
    %v7808 = vadd.f32 %v7785, %v7807
    %7809 = vmatmul.f32.gmra.mxu0 %v7473
    %v7810 = vpop.f32.mrf.mxu0
    %v7811 = vadd.f32 %v7788, %v7810
    %7812 = vdwg.mxu0
    %7813 = vmatpush.msra.mxu0 %v7370
    %7814 = vmatpush.msra.mxu0 %v7368
    %7815 = vmatpush.msra.mxu0 %v7366
    %7816 = vmatpush.msra.mxu0 %v7364
    %7817 = vmatpush.msra.mxu0 %v7362
    %7818 = vmatpush.msra.mxu0 %v7360
    %7819 = vmatpush.msra.mxu0 %v7358
    %7820 = vmatpush.msra.mxu0 %v7356
    %7821 = vmatpush.msra.mxu0 %v7354
    %7822 = vmatpush.msra.mxu0 %v7352
    %7823 = vmatpush.msra.mxu0 %v7350
    %7824 = vmatpush.msra.mxu0 %v7348
    %7825 = vmatpush.msra.mxu0 %v7346
    %7826 = vmatpush.msra.mxu0 %v7344
    %7827 = vmatpush.msra.mxu0 %v7342
    %7828 = vmatpush.msra.mxu0 %v7340
    %7829 = vmatmul.f32.gmra.mxu0 %v7418
    %v7830 = vpop.f32.mrf.mxu0
    %v7831 = vadd.f32 %v7808, %v7830
    %7832 = vmatmul.f32.gmra.mxu0 %v7476
    %v7833 = vpop.f32.mrf.mxu0
    %v7834 = vadd.f32 %v7811, %v7833
    %7835 = vdwg.mxu0
    %7836 = vmatpush.msra.mxu0 0.0
    %7837 = vmatpush.msra.mxu0 0.0
    %7838 = vmatpush.msra.mxu0 0.0
    %7839 = vmatpush.msra.mxu0 0.0
    %7840 = vmatpush.msra.mxu0 0.0
    %7841 = vmatpush.msra.mxu0 0.0
    %7842 = vmatpush.msra.mxu0 0.0
    %7843 = vmatpush.msra.mxu0 0.0
    %7844 = vmatpush.msra.mxu0 %v7386
    %7845 = vmatpush.msra.mxu0 %v7384
    %7846 = vmatpush.msra.mxu0 %v7382
    %7847 = vmatpush.msra.mxu0 %v7380
    %7848 = vmatpush.msra.mxu0 %v7378
    %7849 = vmatpush.msra.mxu0 %v7376
    %7850 = vmatpush.msra.mxu0 %v7374
    %7851 = vmatpush.msra.mxu0 %v7372
    %7852 = vmatmul.f32.gmra.mxu0 %v7487
    %v7853 = vpop.f32.mrf.mxu0
    %v7854 = vadd.f32 %v7831, %v7853
    %7855 = vmatmul.f32.gmra.mxu0 %v7489
    %v7856 = vpop.f32.mrf.mxu0
    %v7857 = vadd.f32 %v7834, %v7856
    %7858 = vdwg.mxu0
    %v7859 = vadd.f32 %v7670, %v7673
    %v7860 = vrot.slane %v7859, 4
    %v7861 = vadd.f32 %v7859, %v7860
    %v7862 = vrot.slane %v7861, 2
    %v7863 = vadd.f32 %v7861, %v7862
    %v7864 = vrot.slane %v7863, 1
    %v7865 = vadd.f32 %v7863, %v7864
    %v7866 = vadd.f32 %v7854, %v7857
    %v7867 = vrot.slane %v7866, 4
    %v7868 = vadd.f32 %v7866, %v7867
    %v7869 = vrot.slane %v7868, 2
    %v7870 = vadd.f32 %v7868, %v7869
    %v7871 = vrot.slane %v7870, 1
    %v7872 = vadd.f32 %v7870, %v7871
    %v7873 = vmul.f32 %v7670, %v7670
    %v7874 = vmul.f32 %v7854, %v7854
    %v7875 = vmul.f32 %v7673, %v7673
    %v7876 = vmul.f32 %v7857, %v7857
    %v7877 = vadd.f32 %v7873, %v7875
    %v7878 = vrot.slane %v7877, 4
    %v7879 = vadd.f32 %v7877, %v7878
    %v7880 = vrot.slane %v7879, 2
    %v7881 = vadd.f32 %v7879, %v7880
    %v7882 = vrot.slane %v7881, 1
    %v7883 = vadd.f32 %v7881, %v7882
    %v7884 = vadd.f32 %v7874, %v7876
    %v7885 = vrot.slane %v7884, 4
    %v7886 = vadd.f32 %v7884, %v7885
    %v7887 = vrot.slane %v7886, 2
    %v7888 = vadd.f32 %v7886, %v7887
    %v7889 = vrot.slane %v7888, 1
    %v7890 = vadd.f32 %v7888, %v7889
    %v7891 = vsel %vm3142, %v7865, %v7883
    %v7892 = vsel %vm3142, %v7872, %v7890
    %7893 = vmatpush.msra.mxu0 %v3389
    %7894 = vmatpush.msra.mxu0 %v3388
    %7895 = vmatpush.msra.mxu0 %v3387
    %7896 = vmatpush.msra.mxu0 %v3386
    %7897 = vmatpush.msra.mxu0 %v3385
    %7898 = vmatpush.msra.mxu0 %v3384
    %7899 = vmatpush.msra.mxu0 %v3383
    %7900 = vmatpush.msra.mxu0 %v3382
    %7901 = vmatpush.msra.mxu0 %v3381
    %7902 = vmatpush.msra.mxu0 %v3380
    %7903 = vmatpush.msra.mxu0 %v3379
    %7904 = vmatpush.msra.mxu0 %v3378
    %7905 = vmatpush.msra.mxu0 %v3377
    %7906 = vmatpush.msra.mxu0 %v3376
    %7907 = vmatpush.msra.mxu0 %v3375
    %7908 = vmatpush.msra.mxu0 %v3374
    %7909 = vmatmul.f32.gmra.mxu0 %v7891
    %v7910 = vpop.f32.mrf.mxu0
    %v7911 = vadd.f32 0.0, %v7910
    %7912 = vdwg.mxu0
    %7913 = vmatpush.msra.mxu0 %v3405
    %7914 = vmatpush.msra.mxu0 %v3404
    %7915 = vmatpush.msra.mxu0 %v3403
    %7916 = vmatpush.msra.mxu0 %v3402
    %7917 = vmatpush.msra.mxu0 %v3401
    %7918 = vmatpush.msra.mxu0 %v3400
    %7919 = vmatpush.msra.mxu0 %v3399
    %7920 = vmatpush.msra.mxu0 %v3398
    %7921 = vmatpush.msra.mxu0 %v3397
    %7922 = vmatpush.msra.mxu0 %v3396
    %7923 = vmatpush.msra.mxu0 %v3395
    %7924 = vmatpush.msra.mxu0 %v3394
    %7925 = vmatpush.msra.mxu0 %v3393
    %7926 = vmatpush.msra.mxu0 %v3392
    %7927 = vmatpush.msra.mxu0 %v3391
    %7928 = vmatpush.msra.mxu0 %v3390
    %7929 = vmatmul.f32.gmra.mxu0 %v7892
    %v7930 = vpop.f32.mrf.mxu0
    %v7931 = vadd.f32 %v7911, %v7930
    %7932 = vdwg.mxu0
    %v7933 = vmul.f32 %v7931, 0.0078125
    %v7934 = vmul.f32 %v7933, %v7933
    %v7936 = vrot.slane %v7934, 7
    %v7938 = vsub.f32 %v7933, %v7936
    %v7939 = vmax.f32 %v7938, 0.0
    %v7940 = vadd.f32 %v7939, 1e-05
    %v7941 = vrsqrt.pop %v7940
    %v7942 = vmul.f32 %v7941, %v7940
    %v7943 = vmul.f32 %v7942, %v7941
    %v7944 = vmul.f32 0.5, %v7943
    %v7945 = vsub.f32 1.5, %v7944
    %v7946 = vmul.f32 %v7941, %v7945
    %vm7947 = vweird.f32 %v7940
    %vm7948 = vweird.f32 %v7941
    %vm7949 = vmor %vm7947, %vm7948
    %v7950 = vsel %vm7949, %v7941, %v7946
    %v7952 = vrot.slane %v7950, 6
    %v7954 = vmul.f32 %v2651, %v7952
    %v7956 = vrot.slane %v7954, 3
    %v7958 = vmul.f32 %v7933, %v7956
    %v7960 = vrot.slane %v7958, 5
    %v7962 = vsub.f32 %v2652, %v7960
    %v7964 = vrot.slane %v7962, 2
    %v7966 = vsel %vm3142, %v7956, %v7964
    %v7968 = vsel %vm3596, %v7966, 0
    %7970 = vmatpush.msra.mxu0 0.0
    %7971 = vmatpush.msra.mxu0 0.0
    %7972 = vmatpush.msra.mxu0 0.0
    %7973 = vmatpush.msra.mxu0 0.0
    %7974 = vmatpush.msra.mxu0 0.0
    %7975 = vmatpush.msra.mxu0 0.0
    %7976 = vmatpush.msra.mxu0 0.0
    %7977 = vmatpush.msra.mxu0 0.0
    %7978 = vmatpush.msra.mxu0 0.0
    %7979 = vmatpush.msra.mxu0 0.0
    %7980 = vmatpush.msra.mxu0 0.0
    %7981 = vmatpush.msra.mxu0 0.0
    %7982 = vmatpush.msra.mxu0 %v3592
    %7983 = vmatpush.msra.mxu0 %v3588
    %7984 = vmatpush.msra.mxu0 %v3584
    %7985 = vmatpush.msra.mxu0 %v3580
    %7986 = vmatmul.f32.gmra.mxu0 %v7968
    %v7987 = vpop.f32.mrf.mxu0
    %v7988 = vadd.f32 0.0, %v7987
    %7989 = vdwg.mxu0
    %7990 = vmatpush.msra.mxu0 0.0
    %7991 = vmatpush.msra.mxu0 0.0
    %7992 = vmatpush.msra.mxu0 0.0
    %7993 = vmatpush.msra.mxu0 0.0
    %7994 = vmatpush.msra.mxu0 0.0
    %7995 = vmatpush.msra.mxu0 0.0
    %7996 = vmatpush.msra.mxu0 0.0
    %7997 = vmatpush.msra.mxu0 0.0
    %7998 = vmatpush.msra.mxu0 0.0
    %7999 = vmatpush.msra.mxu0 0.0
    %8000 = vmatpush.msra.mxu0 0.0
    %8001 = vmatpush.msra.mxu0 0.0
    %8002 = vmatpush.msra.mxu0 %v3593
    %8003 = vmatpush.msra.mxu0 %v3589
    %8004 = vmatpush.msra.mxu0 %v3585
    %8005 = vmatpush.msra.mxu0 %v3581
    %8006 = vmatmul.f32.gmra.mxu0 %v7968
    %v8007 = vpop.f32.mrf.mxu0
    %v8008 = vadd.f32 0.0, %v8007
    %8009 = vdwg.mxu0
    %v8010 = vperm.slane %v7988, 0
    %v8011 = vperm.slane %v8008, 0
    %v8012 = vmul.f32 %v7670, %v8010
    %v8013 = vmul.f32 %v7854, %v8011
    %v8014 = vmul.f32 %v7673, %v8010
    %v8015 = vmul.f32 %v7857, %v8011
    %v8016 = vperm.slane %v7988, 1
    %v8017 = vperm.slane %v8008, 1
    %v8018 = vadd.f32 %v8012, %v8016
    %v8019 = vadd.f32 %v8013, %v8017
    %v8020 = vadd.f32 %v8014, %v8016
    %v8021 = vadd.f32 %v8015, %v8017
    %vm8022 = vcmp.ge.f32.partialorder %v8018, 0.0
    %vm8023 = vcmp.ge.f32.partialorder %v8019, 0.0
    %vm8024 = vcmp.ge.f32.partialorder %v8020, 0.0
    %vm8025 = vcmp.ge.f32.partialorder %v8021, 0.0
    %v8026 = vmul.f32 %v8018, 0.2
    %v8027 = vmul.f32 %v8019, 0.2
    %v8028 = vmul.f32 %v8020, 0.2
    %v8029 = vmul.f32 %v8021, 0.2
    %v8030 = vsel %vm8022, %v8018, %v8026
    %v8031 = vsel %vm8023, %v8019, %v8027
    %v8032 = vsel %vm8024, %v8020, %v8028
    %v8033 = vsel %vm8025, %v8021, %v8029
    %s8034 = smul.u32 768, 1
    %s8035 = sshll.u32 %s8034, 4
    %8036 = dma.done %s2442, %s8035
    %v8037 = vld [vmem:[#allocation5] sm:$0xff]
    %v8038 = vld [vmem:[#allocation5 + $0x8] sm:$0xff]
    %v8039 = vld [vmem:[#allocation5 + $0x10] sm:$0xff]
    %v8040 = vld [vmem:[#allocation5 + $0x18] sm:$0xff]
    %v8041 = vld [vmem:[#allocation5 + $0x20] sm:$0xff]
    %v8042 = vld [vmem:[#allocation5 + $0x28] sm:$0xff]
    %v8043 = vld [vmem:[#allocation5 + $0x30] sm:$0xff]
    %v8044 = vld [vmem:[#allocation5 + $0x38] sm:$0xff]
    %v8045 = vld [vmem:[#allocation5 + $0x40] sm:$0xff]
    %v8046 = vld [vmem:[#allocation5 + $0x48] sm:$0xff]
    %v8047 = vld [vmem:[#allocation5 + $0x50] sm:$0xff]
    %v8048 = vld [vmem:[#allocation5 + $0x58] sm:$0xff]
    %v8049 = vld [vmem:[#allocation5 + $0x60] sm:$0xff]
    %v8050 = vld [vmem:[#allocation5 + $0x68] sm:$0xff]
    %v8051 = vld [vmem:[#allocation5 + $0x70] sm:$0xff]
    %v8052 = vld [vmem:[#allocation5 + $0x78] sm:$0xff]
    %v8053 = vld [vmem:[#allocation5 + $0x80] sm:$0xff]
    %v8054 = vld [vmem:[#allocation5 + $0x88] sm:$0xff]
    %v8055 = vld [vmem:[#allocation5 + $0x90] sm:$0xff]
    %v8056 = vld [vmem:[#allocation5 + $0x98] sm:$0xff]
    %v8057 = vld [vmem:[#allocation5 + $0xa0] sm:$0xff]
    %v8058 = vld [vmem:[#allocation5 + $0xa8] sm:$0xff]
    %v8059 = vld [vmem:[#allocation5 + $0xb0] sm:$0xff]
    %v8060 = vld [vmem:[#allocation5 + $0xb8] sm:$0xff]
    %v8061 = vld [vmem:[#allocation5 + $0xc0] sm:$0xff]
    %v8062 = vld [vmem:[#allocation5 + $0xc8] sm:$0xff]
    %v8063 = vld [vmem:[#allocation5 + $0xd0] sm:$0xff]
    %v8064 = vld [vmem:[#allocation5 + $0xd8] sm:$0xff]
    %v8065 = vld [vmem:[#allocation5 + $0xe0] sm:$0xff]
    %v8066 = vld [vmem:[#allocation5 + $0xe8] sm:$0xff]
    %v8067 = vld [vmem:[#allocation5 + $0xf0] sm:$0xff]
    %v8068 = vld [vmem:[#allocation5 + $0xf8] sm:$0xff]
    %v8069 = vld [vmem:[#allocation5 + $0x100] sm:$0xff]
    %v8070 = vld [vmem:[#allocation5 + $0x108] sm:$0xff]
    %v8071 = vld [vmem:[#allocation5 + $0x110] sm:$0xff]
    %v8072 = vld [vmem:[#allocation5 + $0x118] sm:$0xff]
    %v8073 = vld [vmem:[#allocation5 + $0x120] sm:$0xff]
    %v8074 = vld [vmem:[#allocation5 + $0x128] sm:$0xff]
    %v8075 = vld [vmem:[#allocation5 + $0x130] sm:$0xff]
    %v8076 = vld [vmem:[#allocation5 + $0x138] sm:$0xff]
    %v8077 = vld [vmem:[#allocation5 + $0x140] sm:$0xff]
    %v8078 = vld [vmem:[#allocation5 + $0x148] sm:$0xff]
    %v8079 = vld [vmem:[#allocation5 + $0x150] sm:$0xff]
    %v8080 = vld [vmem:[#allocation5 + $0x158] sm:$0xff]
    %v8081 = vld [vmem:[#allocation5 + $0x160] sm:$0xff]
    %v8082 = vld [vmem:[#allocation5 + $0x168] sm:$0xff]
    %v8083 = vld [vmem:[#allocation5 + $0x170] sm:$0xff]
    %v8084 = vld [vmem:[#allocation5 + $0x178] sm:$0xff]
    %v8085 = vld [vmem:[#allocation5 + $0x180] sm:$0xff]
    %v8086 = vld [vmem:[#allocation5 + $0x188] sm:$0xff]
    %v8087 = vld [vmem:[#allocation5 + $0x190] sm:$0xff]
    %v8088 = vld [vmem:[#allocation5 + $0x198] sm:$0xff]
    %v8089 = vld [vmem:[#allocation5 + $0x1a0] sm:$0xff]
    %v8090 = vld [vmem:[#allocation5 + $0x1a8] sm:$0xff]
    %v8091 = vld [vmem:[#allocation5 + $0x1b0] sm:$0xff]
    %v8092 = vld [vmem:[#allocation5 + $0x1b8] sm:$0xff]
    %v8093 = vld [vmem:[#allocation5 + $0x1c0] sm:$0xff]
    %v8094 = vld [vmem:[#allocation5 + $0x1c8] sm:$0xff]
    %v8095 = vld [vmem:[#allocation5 + $0x1d0] sm:$0xff]
    %v8096 = vld [vmem:[#allocation5 + $0x1d8] sm:$0xff]
    %v8097 = vld [vmem:[#allocation5 + $0x1e0] sm:$0xff]
    %v8098 = vld [vmem:[#allocation5 + $0x1e8] sm:$0xff]
    %v8099 = vld [vmem:[#allocation5 + $0x1f0] sm:$0xff]
    %v8100 = vld [vmem:[#allocation5 + $0x1f8] sm:$0xff]
    %v8101 = vld [vmem:[#allocation5 + $0x200] sm:$0xff]
    %v8102 = vld [vmem:[#allocation5 + $0x208] sm:$0xff]
    %v8103 = vld [vmem:[#allocation5 + $0x210] sm:$0xff]
    %v8104 = vld [vmem:[#allocation5 + $0x218] sm:$0xff]
    %v8105 = vld [vmem:[#allocation5 + $0x220] sm:$0xff]
    %v8106 = vld [vmem:[#allocation5 + $0x228] sm:$0xff]
    %v8107 = vld [vmem:[#allocation5 + $0x230] sm:$0xff]
    %v8108 = vld [vmem:[#allocation5 + $0x238] sm:$0xff]
    %v8109 = vld [vmem:[#allocation5 + $0x240] sm:$0xff]
    %v8110 = vld [vmem:[#allocation5 + $0x248] sm:$0xff]
    %v8111 = vld [vmem:[#allocation5 + $0x250] sm:$0xff]
    %v8112 = vld [vmem:[#allocation5 + $0x258] sm:$0xff]
    %v8113 = vld [vmem:[#allocation5 + $0x260] sm:$0xff]
    %v8114 = vld [vmem:[#allocation5 + $0x268] sm:$0xff]
    %v8115 = vld [vmem:[#allocation5 + $0x270] sm:$0xff]
    %v8116 = vld [vmem:[#allocation5 + $0x278] sm:$0xff]
    %v8117 = vld [vmem:[#allocation5 + $0x280] sm:$0xff]
    %v8118 = vld [vmem:[#allocation5 + $0x288] sm:$0xff]
    %v8119 = vld [vmem:[#allocation5 + $0x290] sm:$0xff]
    %v8120 = vld [vmem:[#allocation5 + $0x298] sm:$0xff]
    %v8121 = vld [vmem:[#allocation5 + $0x2a0] sm:$0xff]
    %v8122 = vld [vmem:[#allocation5 + $0x2a8] sm:$0xff]
    %v8123 = vld [vmem:[#allocation5 + $0x2b0] sm:$0xff]
    %v8124 = vld [vmem:[#allocation5 + $0x2b8] sm:$0xff]
    %v8125 = vld [vmem:[#allocation5 + $0x2c0] sm:$0xff]
    %v8126 = vld [vmem:[#allocation5 + $0x2c8] sm:$0xff]
    %v8127 = vld [vmem:[#allocation5 + $0x2d0] sm:$0xff]
    %v8128 = vld [vmem:[#allocation5 + $0x2d8] sm:$0xff]
    %v8129 = vld [vmem:[#allocation5 + $0x2e0] sm:$0xff]
    %v8130 = vld [vmem:[#allocation5 + $0x2e8] sm:$0xff]
    %v8131 = vld [vmem:[#allocation5 + $0x2f0] sm:$0xff]
    %v8132 = vld [vmem:[#allocation5 + $0x2f8] sm:$0xff]
    %v8135 = vrot.slane %v8030, 1
    %v8136 = vrot.slane %v8031, 1
    %v8139 = vrot.slane %v8030, 2
    %v8140 = vrot.slane %v8031, 2
    %v8145 = vrot.slane %v8032, 1
    %v8146 = vrot.slane %v8033, 1
    %v8147 = vrot.slane %v8032, 2
    %v8148 = vrot.slane %v8033, 2
    %v8149 = vrot.slane %v8145, 2
    %v8150 = vrot.slane %v8146, 2
    %v8151 = vrot.slane %v8147, 2
    %v8152 = vrot.slane %v8148, 2
    %v8159 = vsel %vm2741, %v8030, %v8147
    %v8160 = vsel %vm2741, %v8031, %v8148
    %v8161 = vsel %vm2741, %v8135, %v8149
    %v8162 = vsel %vm2741, %v8136, %v8150
    %v8163 = vsel %vm2741, %v8139, %v8151
    %v8164 = vsel %vm2741, %v8140, %v8152
    %v8165 = vld [vmem:[%s4] sm:$0x1]
    %v8167 = vperm.slane %v8165, 0
    %8169 = vmatpush.msra.mxu0 %v8052
    %8170 = vmatpush.msra.mxu0 %v8051
    %8171 = vmatpush.msra.mxu0 %v8050
    %8172 = vmatpush.msra.mxu0 %v8049
    %8173 = vmatpush.msra.mxu0 %v8048
    %8174 = vmatpush.msra.mxu0 %v8047
    %8175 = vmatpush.msra.mxu0 %v8046
    %8176 = vmatpush.msra.mxu0 %v8045
    %8177 = vmatpush.msra.mxu0 %v8044
    %8178 = vmatpush.msra.mxu0 %v8043
    %8179 = vmatpush.msra.mxu0 %v8042
    %8180 = vmatpush.msra.mxu0 %v8041
    %8181 = vmatpush.msra.mxu0 %v8040
    %8182 = vmatpush.msra.mxu0 %v8039
    %8183 = vmatpush.msra.mxu0 %v8038
    %8184 = vmatpush.msra.mxu0 %v8037
    %8185 = vmatmul.f32.gmra.mxu0 %v8159
    %v8186 = vpop.f32.mrf.mxu0
    %v8187 = vadd.f32 %v8167, %v8186
    %8188 = vmatmul.f32.gmra.mxu0 %v8147
    %v8189 = vpop.f32.mrf.mxu0
    %v8190 = vadd.f32 %v8167, %v8189
    %8191 = vdwg.mxu0
    %8192 = vmatpush.msra.mxu0 %v8068
    %8193 = vmatpush.msra.mxu0 %v8067
    %8194 = vmatpush.msra.mxu0 %v8066
    %8195 = vmatpush.msra.mxu0 %v8065
    %8196 = vmatpush.msra.mxu0 %v8064
    %8197 = vmatpush.msra.mxu0 %v8063
    %8198 = vmatpush.msra.mxu0 %v8062
    %8199 = vmatpush.msra.mxu0 %v8061
    %8200 = vmatpush.msra.mxu0 %v8060
    %8201 = vmatpush.msra.mxu0 %v8059
    %8202 = vmatpush.msra.mxu0 %v8058
    %8203 = vmatpush.msra.mxu0 %v8057
    %8204 = vmatpush.msra.mxu0 %v8056
    %8205 = vmatpush.msra.mxu0 %v8055
    %8206 = vmatpush.msra.mxu0 %v8054
    %8207 = vmatpush.msra.mxu0 %v8053
    %8208 = vmatmul.f32.gmra.mxu0 %v8160
    %v8209 = vpop.f32.mrf.mxu0
    %v8210 = vadd.f32 %v8187, %v8209
    %8211 = vmatmul.f32.gmra.mxu0 %v8148
    %v8212 = vpop.f32.mrf.mxu0
    %v8213 = vadd.f32 %v8190, %v8212
    %8214 = vdwg.mxu0
    %8215 = vmatpush.msra.mxu0 %v8084
    %8216 = vmatpush.msra.mxu0 %v8083
    %8217 = vmatpush.msra.mxu0 %v8082
    %8218 = vmatpush.msra.mxu0 %v8081
    %8219 = vmatpush.msra.mxu0 %v8080
    %8220 = vmatpush.msra.mxu0 %v8079
    %8221 = vmatpush.msra.mxu0 %v8078
    %8222 = vmatpush.msra.mxu0 %v8077
    %8223 = vmatpush.msra.mxu0 %v8076
    %8224 = vmatpush.msra.mxu0 %v8075
    %8225 = vmatpush.msra.mxu0 %v8074
    %8226 = vmatpush.msra.mxu0 %v8073
    %8227 = vmatpush.msra.mxu0 %v8072
    %8228 = vmatpush.msra.mxu0 %v8071
    %8229 = vmatpush.msra.mxu0 %v8070
    %8230 = vmatpush.msra.mxu0 %v8069
    %8231 = vmatmul.f32.gmra.mxu0 %v8161
    %v8232 = vpop.f32.mrf.mxu0
    %v8233 = vadd.f32 %v8210, %v8232
    %8234 = vmatmul.f32.gmra.mxu0 %v8149
    %v8235 = vpop.f32.mrf.mxu0
    %v8236 = vadd.f32 %v8213, %v8235
    %8237 = vdwg.mxu0
    %8238 = vmatpush.msra.mxu0 %v8100
    %8239 = vmatpush.msra.mxu0 %v8099
    %8240 = vmatpush.msra.mxu0 %v8098
    %8241 = vmatpush.msra.mxu0 %v8097
    %8242 = vmatpush.msra.mxu0 %v8096
    %8243 = vmatpush.msra.mxu0 %v8095
    %8244 = vmatpush.msra.mxu0 %v8094
    %8245 = vmatpush.msra.mxu0 %v8093
    %8246 = vmatpush.msra.mxu0 %v8092
    %8247 = vmatpush.msra.mxu0 %v8091
    %8248 = vmatpush.msra.mxu0 %v8090
    %8249 = vmatpush.msra.mxu0 %v8089
    %8250 = vmatpush.msra.mxu0 %v8088
    %8251 = vmatpush.msra.mxu0 %v8087
    %8252 = vmatpush.msra.mxu0 %v8086
    %8253 = vmatpush.msra.mxu0 %v8085
    %8254 = vmatmul.f32.gmra.mxu0 %v8162
    %v8255 = vpop.f32.mrf.mxu0
    %v8256 = vadd.f32 %v8233, %v8255
    %8257 = vmatmul.f32.gmra.mxu0 %v8150
    %v8258 = vpop.f32.mrf.mxu0
    %v8259 = vadd.f32 %v8236, %v8258
    %8260 = vdwg.mxu0
    %8261 = vmatpush.msra.mxu0 %v8116
    %8262 = vmatpush.msra.mxu0 %v8115
    %8263 = vmatpush.msra.mxu0 %v8114
    %8264 = vmatpush.msra.mxu0 %v8113
    %8265 = vmatpush.msra.mxu0 %v8112
    %8266 = vmatpush.msra.mxu0 %v8111
    %8267 = vmatpush.msra.mxu0 %v8110
    %8268 = vmatpush.msra.mxu0 %v8109
    %8269 = vmatpush.msra.mxu0 %v8108
    %8270 = vmatpush.msra.mxu0 %v8107
    %8271 = vmatpush.msra.mxu0 %v8106
    %8272 = vmatpush.msra.mxu0 %v8105
    %8273 = vmatpush.msra.mxu0 %v8104
    %8274 = vmatpush.msra.mxu0 %v8103
    %8275 = vmatpush.msra.mxu0 %v8102
    %8276 = vmatpush.msra.mxu0 %v8101
    %8277 = vmatmul.f32.gmra.mxu0 %v8163
    %v8278 = vpop.f32.mrf.mxu0
    %v8279 = vadd.f32 %v8256, %v8278
    %8280 = vmatmul.f32.gmra.mxu0 %v8151
    %v8281 = vpop.f32.mrf.mxu0
    %v8282 = vadd.f32 %v8259, %v8281
    %8283 = vdwg.mxu0
    %8284 = vmatpush.msra.mxu0 %v8132
    %8285 = vmatpush.msra.mxu0 %v8131
    %8286 = vmatpush.msra.mxu0 %v8130
    %8287 = vmatpush.msra.mxu0 %v8129
    %8288 = vmatpush.msra.mxu0 %v8128
    %8289 = vmatpush.msra.mxu0 %v8127
    %8290 = vmatpush.msra.mxu0 %v8126
    %8291 = vmatpush.msra.mxu0 %v8125
    %8292 = vmatpush.msra.mxu0 %v8124
    %8293 = vmatpush.msra.mxu0 %v8123
    %8294 = vmatpush.msra.mxu0 %v8122
    %8295 = vmatpush.msra.mxu0 %v8121
    %8296 = vmatpush.msra.mxu0 %v8120
    %8297 = vmatpush.msra.mxu0 %v8119
    %8298 = vmatpush.msra.mxu0 %v8118
    %8299 = vmatpush.msra.mxu0 %v8117
    %8300 = vmatmul.f32.gmra.mxu0 %v8164
    %v8301 = vpop.f32.mrf.mxu0
    %v8302 = vadd.f32 %v8279, %v8301
    %8303 = vmatmul.f32.gmra.mxu0 %v8152
    %v8304 = vpop.f32.mrf.mxu0
    %v8305 = vadd.f32 %v8282, %v8304
    %8306 = vdwg.mxu0
    %v8307 = vtanh.pop %v8302
    %v8308 = vtanh.pop %v8305
    %8309 = vst [vmem:[%s9] sm:$0xff] %v8307
    %8310 = vst [vmem:[%s9 + $0x8] sm:$0xf] %v8308
    // Predicated region
    $region102: #{generator_forward.1} parent=1 // pred_check
      _
    $region103: #{generator_forward.1} parent=1 // pred_check_branch
      %8312 = sbr.rel (0) target = $region105
    $region104: #{generator_forward.1} parent=1 // pred_region
      _
    $region105: #{generator_forward.1} parent=1 // pred_fallthru
      _
    // Predicated region
    $region106: #{generator_forward.1} parent=1 // pred_check
      _
    $region107: #{generator_forward.1} parent=1 // pred_check_branch
      %8314 = sbr.rel (0) target = $region109
    $region108: #{generator_forward.1} parent=1 // pred_region
      _
    $region109: #{generator_forward.1} parent=1 // pred_fallthru
      _
    %8315 = vsyncpa [#allocation8], 1
  %8316 = vsyncmov [#allocation6]
  %s8317 = vpop.sfrf %8316
  %p8318 = scmp.eq.s32.totalorder %s8317, 0
  %p8319 = pneg %p8318
  %8321 = shalt.err (%p8319)
  %s8322 = scalar_lea.sflag [#allocation6], 1
  %8323 = vsyncmov %s8322
  %s8324 = vpop.sfrf %8323
  %p8325 = scmp.eq.s32.totalorder %s8324, 0
  %p8326 = pneg %p8325
  %8328 = shalt.err (%p8326)
  %s8329 = scalar_lea.sflag [#allocation6], 2
  %8330 = vsyncmov %s8329
  %s8331 = vpop.sfrf %8330
  %p8332 = scmp.eq.s32.totalorder %s8331, 0
  %p8333 = pneg %p8332
  %8335 = shalt.err (%p8333)
  %s8336 = scalar_lea.sflag [#allocation6], 3
  %8337 = vsyncmov %s8336
  %s8338 = vpop.sfrf %8337
  %p8339 = scmp.eq.s32.totalorder %s8338, 0
  %p8340 = pneg %p8339
  %8342 = shalt.err (%p8340)

</llo_original>
